<compile_context>
chip_gen: v5e
topology: v5e:2x2
jax: 0.10.0
libtpu: 0.0.40
codegen_flags: <defaults>
</compile_context>

<pallas_src>
import functools

import jax
import jax.numpy as jnp
import numpy as np
from jax.experimental import pallas as pl
from jax.experimental.pallas import tpu as pltpu


def _fourier_kernel(h_i_ref, h_src_ref, wf_ref, bf_ref, rep_ref, sel_ref,
                    wo_ref, bo_ref, out_ref):
    """One batch tile: (tb, D) activations x resident params -> (tb, F)."""
    mm_dtype = wf_ref.dtype                      # f32 default, bf16 optional
    h_i = h_i_ref[...].astype(mm_dtype)
    h_src = h_src_ref[...].astype(mm_dtype)

    # freqs[b, f*D + d] = (h_i @ Wf^T + bf)[b, f*D + d]                 [tb, F*D]
    freqs = jnp.dot(h_i, wf_ref[...],
                    preferred_element_type=jnp.float32) + bf_ref[...]

    # Lane replication of h_src on the MXU with a 0/1 matrix:
    #   rep[d, f*D + d] = 1   =>   tiled[b, f*D + d] = h_src[b, d]      [tb, F*D]
    h_src_tiled = jnp.dot(h_src, rep_ref[...],
                          preferred_element_type=jnp.float32)

    prod = freqs * h_src_tiled                                          # [tb, F*D]

    # proj[b, f] = sum_d prod[b, f*D + d]  (segment sum via 0/1 matrix) [tb, F]
    proj = jnp.dot(prod.astype(mm_dtype), sel_ref[...],
                   preferred_element_type=jnp.float32)

    # Two EUP transcendentals; 2p / 4p angles via double-angle identities (VPU).
    s1 = jnp.sin(proj)
    c1 = jnp.cos(proj)
    s2 = 2.0 * s1 * c1
    c2 = 1.0 - 2.0 * s1 * s1
    s3 = 2.0 * s2 * c2
    c3 = 1.0 - 2.0 * s2 * s2

    # Single fused output projection: [tb, 6F] @ [6F, F] + bo.
    emb = jnp.concatenate([s1, c1, s2, c2, s3, c3], axis=-1)
    out = jnp.dot(emb.astype(mm_dtype), wo_ref[...],
                  preferred_element_type=jnp.float32) + bo_ref[...]
    out_ref[...] = out.astype(out_ref.dtype)


def prepare_fourier_params(params, in_dim, fourier_dim,
                           matmul_dtype=jnp.float32):
    """One-time parameter prep, hoisted out of the per-call path."""
    D, Fd = in_dim, fourier_dim
    return {
        "wf_t": params["wf"].T.astype(matmul_dtype),                 # [D, F*D]
        "bf": params["bf"].reshape(1, Fd * D).astype(jnp.float32),   # [1, F*D]
        # rep[d, f*D + d] = 1  -> lane-replicates h_src on the MXU.
        "rep": jnp.tile(jnp.eye(D, dtype=matmul_dtype), (1, Fd)),    # [D, F*D]
        # sel[f*D + d, f] = 1  -> segment-sum over d on the MXU.
        "sel": jnp.kron(jnp.eye(Fd, dtype=matmul_dtype),
                        jnp.ones((D, 1), matmul_dtype)),             # [F*D, F]
        "wo_t": params["wo"].T.astype(matmul_dtype),                 # [6F, F]
        "bo": params["bo"].reshape(1, Fd).astype(jnp.float32),       # [1, F]
    }


def fourier_base_dynamic(h_src, h_i, prep, fourier_dim, block_b=None):
    """Pallas implementation of FourierBaseDynamic.forward."""
    B, D = h_src.shape
    Fd = fourier_dim

    # Batch tile: multiple of 8 (f32 sublane tiling), 128-256 rows for MXU row
    # utilization, and >=2 grid steps when possible so BlockSpec pipelining
    # overlaps DMA with compute and v7x can shard the batch across its 2 TCs.
    if block_b is None:
        if B >= 512:
            tb = 256
        elif B >= 128:
            tb = 128
        else:
            tb = max(8, ((B + 7) // 8) * 8)
        # Keep per-tile [tb, F*D] intermediates comfortably inside scoped VMEM
        # when F*D is large (3 live f32 intermediates + double-buffered I/O).
        while tb > 8 and 3 * tb * Fd * D * 4 > (12 << 20):
            tb //= 2
        tb = max(8, (tb // 8) * 8)
    else:
        tb = block_b
    assert tb % 8 == 0, "block_b must be a multiple of 8"

    n_blocks = pl.cdiv(B, tb)
    B_pad = n_blocks * tb
    if B_pad != B:                      # handle B % tb by zero-padding rows
        h_src = jnp.pad(h_src, ((0, B_pad - B), (0, 0)))
        h_i = jnp.pad(h_i, ((0, B_pad - B), (0, 0)))

    def wspec(shape):                   # grid-invariant (weight) operand:
        return pl.BlockSpec(shape, lambda i: (0, 0))   # stays VMEM-resident

    in_specs = [
        pl.BlockSpec((tb, D), lambda i: (i, 0)),     # h_i
        pl.BlockSpec((tb, D), lambda i: (i, 0)),     # h_src (replicated in-kernel)
        wspec((D, Fd * D)),                          # Wf^T
        wspec((1, Fd * D)),                          # bf
        wspec((D, Fd * D)),                          # rep (0/1 lane-replicate)
        wspec((Fd * D, Fd)),                         # sel (0/1 segment-sum)
        wspec((6 * Fd, Fd)),                         # Wo^T (fused output matmul)
        wspec((1, Fd)),                              # bo
    ]
    out_specs = pl.BlockSpec((tb, Fd), lambda i: (i, 0))

    # Advisory cost model for XLA's scheduler around the custom call.
    flops_per_row = (2 * D * Fd * D        # freqs matmul
                     + 2 * D * Fd * D      # replicate matmul
                     + 2 * Fd * D * Fd     # segment-sum matmul
                     + 2 * 6 * Fd * Fd     # fused output matmul
                     + Fd * D + 14 * Fd)   # elementwise mul + trig algebra
    weight_bytes = 4 * (2 * D * Fd * D + Fd * D + Fd * D * Fd
                        + 6 * Fd * Fd + Fd)
    cost = pl.CostEstimate(
        flops=int(B_pad * flops_per_row),
        transcendentals=int(B_pad * 2 * Fd),
        bytes_accessed=int(4 * B_pad * (2 * D + Fd) + weight_bytes),
    )

    out = pl.pallas_call(
        _fourier_kernel,
        out_shape=jax.ShapeDtypeStruct((B_pad, Fd), h_src.dtype),
        grid_spec=pltpu.PrefetchScalarGridSpec(
            num_scalar_prefetch=0,
            grid=(n_blocks,),
            in_specs=in_specs,
            out_specs=out_specs,
        ),
        # Resident weights + per-tile activations are only a few MiB at these
        # shapes, well inside default scoped-VMEM on v5e/v6e/v7x, so no
        # explicit vmem_limit_bytes override is needed.
        compiler_params=pltpu.CompilerParams(
            dimension_semantics=("parallel",)),
        cost_estimate=cost,
    )(h_i, h_src, prep["wf_t"], prep["bf"], prep["rep"], prep["sel"],
      prep["wo_t"], prep["bo"])

    return out[:B] if B_pad != B else out


def ref_forward(h_src, h_i, params, Fd):
    """Pure-JAX reference matching the PyTorch forward exactly."""
    B, D = h_src.shape
    freqs = (h_i @ params["wf"].T + params["bf"]).reshape(B, Fd, D)
    proj = jnp.einsum("bfd,bd->bf", freqs, h_src)
    emb = jnp.concatenate(
        [jnp.sin(proj), jnp.cos(proj),
         jnp.sin(2.0 * proj), jnp.cos(2.0 * proj),
         jnp.sin(4.0 * proj), jnp.cos(4.0 * proj)], axis=-1)
    return emb @ params["wo"].T + params["bo"]


if __name__ == "__main__":
    key = jax.random.PRNGKey(0)
    # E (edges), in_dim, fourier_dim.  B is deliberately not a multiple of the
    # batch tile to exercise the padding path; tb=128 -> grid of 2 steps.
    B, D, Fd = 200, 32, 32
    ks = jax.random.split(key, 8)

    def uni(k, shape, fan_in):   # deterministic nn.Linear-style init
        bound = 1.0 / np.sqrt(fan_in)
        return jax.random.uniform(k, shape, jnp.float32, -bound, bound)

    params = {
        "wf": uni(ks[0], (Fd * D, D), D),        # freq_generator.weight
        "bf": uni(ks[1], (Fd * D,), D),          # freq_generator.bias
        # phase_generator params exist in __init__ but are unused in forward:
        "wp": uni(ks[2], (Fd, D), D),
        "bp": uni(ks[3], (Fd,), D),
        "wo": uni(ks[4], (Fd, 6 * Fd), 6 * Fd),  # out_proj.weight
        "bo": uni(ks[5], (Fd,), 6 * Fd),         # out_proj.bias
    }
    h_src = jax.random.normal(ks[6], (B, D), jnp.float32)
    h_i = jax.random.normal(ks[7], (B, D), jnp.float32)

    # Parameter prep hoisted out of the per-call path (done once).
    prep = prepare_fourier_params(params, D, Fd)
    run = jax.jit(functools.partial(fourier_base_dynamic, fourier_dim=Fd))

    out = jax.block_until_ready(run(h_src, h_i, prep))

    ref = ref_forward(h_src, h_i, params, Fd)
    np.testing.assert_allclose(np.asarray(out), np.asarray(ref),
                               rtol=2e-4, atol=2e-4)
    print("KERNEL_OK")
</pallas_src>

<mosaic_0001>
module attributes {stable_mosaic.version = 11 : i64} {
  func.func @_fourier_kernel(%arg0: i32, %arg1: memref<128x32xf32, #tpu.memory_space<vmem>>, %arg2: memref<128x32xf32, #tpu.memory_space<vmem>>, %arg3: memref<32x1024xf32, #tpu.memory_space<vmem>>, %arg4: memref<1x1024xf32, #tpu.memory_space<vmem>>, %arg5: memref<32x1024xf32, #tpu.memory_space<vmem>>, %arg6: memref<1024x32xf32, #tpu.memory_space<vmem>>, %arg7: memref<192x32xf32, #tpu.memory_space<vmem>>, %arg8: memref<1x32xf32, #tpu.memory_space<vmem>>, %arg9: memref<128x32xf32, #tpu.memory_space<vmem>>) attributes {dimension_semantics = [#tpu.dimension_semantics<parallel>], iteration_bounds = array<i64: 2>, scalar_prefetch = 0 : i64, scratch_operands = 0 : i64, tpu.core_type = #tpu.core_type<tc>, window_params = [{transform_indices = @transform_0, window_bounds = array<i64: 128, 32>}, {transform_indices = @transform_1, window_bounds = array<i64: 128, 32>}, {pipeline_mode = #tpu.pipeline_mode<synchronous>, transform_indices = @transform_2, window_bounds = array<i64: 32, 1024>}, {pipeline_mode = #tpu.pipeline_mode<synchronous>, transform_indices = @transform_3, window_bounds = array<i64: 1, 1024>}, {pipeline_mode = #tpu.pipeline_mode<synchronous>, transform_indices = @transform_4, window_bounds = array<i64: 32, 1024>}, {pipeline_mode = #tpu.pipeline_mode<synchronous>, transform_indices = @transform_5, window_bounds = array<i64: 1024, 32>}, {pipeline_mode = #tpu.pipeline_mode<synchronous>, transform_indices = @transform_6, window_bounds = array<i64: 192, 32>}, {pipeline_mode = #tpu.pipeline_mode<synchronous>, transform_indices = @transform_7, window_bounds = array<i64: 1, 32>}, {transform_indices = @transform_8, window_bounds = array<i64: 128, 32>}]} {
    %c0 = arith.constant 0 : index
    %c0_0 = arith.constant 0 : index
    %0 = vector.load %arg1[%c0, %c0_0] : memref<128x32xf32, #tpu.memory_space<vmem>>, vector<128x32xf32>
    %c0_1 = arith.constant 0 : index
    %c0_2 = arith.constant 0 : index
    %1 = vector.load %arg2[%c0_1, %c0_2] : memref<128x32xf32, #tpu.memory_space<vmem>>, vector<128x32xf32>
    %c0_3 = arith.constant 0 : index
    %c0_4 = arith.constant 0 : index
    %2 = vector.load %arg3[%c0_3, %c0_4] : memref<32x1024xf32, #tpu.memory_space<vmem>>, vector<32x1024xf32>
    %cst = arith.constant dense<0.000000e+00> : vector<128x1024xf32>
    %3 = tpu.matmul %0, %2, %cst {dimension_numbers = #tpu.dot_dimension_numbers<[1], [0], [0], [1], [0, 0, 1, 1], [], []>} : vector<128x32xf32>, vector<32x1024xf32>, vector<128x1024xf32> -> vector<128x1024xf32>
    %c0_5 = arith.constant 0 : index
    %c0_6 = arith.constant 0 : index
    %4 = vector.load %arg4[%c0_5, %c0_6] : memref<1x1024xf32, #tpu.memory_space<vmem>>, vector<1x1024xf32>
    %5 = vector.broadcast %4 : vector<1x1024xf32> to vector<128x1024xf32>
    %6 = arith.addf %3, %5 : vector<128x1024xf32>
    %c0_7 = arith.constant 0 : index
    %c0_8 = arith.constant 0 : index
    %7 = vector.load %arg5[%c0_7, %c0_8] : memref<32x1024xf32, #tpu.memory_space<vmem>>, vector<32x1024xf32>
    %cst_9 = arith.constant dense<0.000000e+00> : vector<128x1024xf32>
    %8 = tpu.matmul %1, %7, %cst_9 {dimension_numbers = #tpu.dot_dimension_numbers<[1], [0], [0], [1], [0, 0, 1, 1], [], []>} : vector<128x32xf32>, vector<32x1024xf32>, vector<128x1024xf32> -> vector<128x1024xf32>
    %9 = arith.mulf %6, %8 : vector<128x1024xf32>
    %c0_10 = arith.constant 0 : index
    %c0_11 = arith.constant 0 : index
    %10 = vector.load %arg6[%c0_10, %c0_11] : memref<1024x32xf32, #tpu.memory_space<vmem>>, vector<1024x32xf32>
    %cst_12 = arith.constant dense<0.000000e+00> : vector<128x32xf32>
    %11 = tpu.matmul %9, %10, %cst_12 {dimension_numbers = #tpu.dot_dimension_numbers<[1], [0], [0], [1], [0, 0, 1, 1], [], []>} : vector<128x1024xf32>, vector<1024x32xf32>, vector<128x32xf32> -> vector<128x32xf32>
    %12 = math.sin %11 : vector<128x32xf32>
    %13 = math.cos %11 : vector<128x32xf32>
    %cst_13 = arith.constant 2.000000e+00 : f32
    %14 = vector.broadcast %cst_13 : f32 to vector<128x32xf32>
    %15 = arith.mulf %14, %12 : vector<128x32xf32>
    %16 = arith.mulf %15, %13 : vector<128x32xf32>
    %cst_14 = arith.constant 2.000000e+00 : f32
    %17 = vector.broadcast %cst_14 : f32 to vector<128x32xf32>
    %18 = arith.mulf %17, %12 : vector<128x32xf32>
    %19 = arith.mulf %18, %12 : vector<128x32xf32>
    %cst_15 = arith.constant 1.000000e+00 : f32
    %20 = vector.broadcast %cst_15 : f32 to vector<128x32xf32>
    %21 = arith.subf %20, %19 : vector<128x32xf32>
    %cst_16 = arith.constant 2.000000e+00 : f32
    %22 = vector.broadcast %cst_16 : f32 to vector<128x32xf32>
    %23 = arith.mulf %22, %16 : vector<128x32xf32>
    %24 = arith.mulf %23, %21 : vector<128x32xf32>
    %cst_17 = arith.constant 2.000000e+00 : f32
    %25 = vector.broadcast %cst_17 : f32 to vector<128x32xf32>
    %26 = arith.mulf %25, %16 : vector<128x32xf32>
    %27 = arith.mulf %26, %16 : vector<128x32xf32>
    %cst_18 = arith.constant 1.000000e+00 : f32
    %28 = vector.broadcast %cst_18 : f32 to vector<128x32xf32>
    %29 = arith.subf %28, %27 : vector<128x32xf32>
    %30 = tpu.concatenate %12, %13, %16, %21, %24, %29 in 1 : vector<128x32xf32>, vector<128x32xf32>, vector<128x32xf32>, vector<128x32xf32>, vector<128x32xf32>, vector<128x32xf32> -> vector<128x192xf32>
    %c0_19 = arith.constant 0 : index
    %c0_20 = arith.constant 0 : index
    %31 = vector.load %arg7[%c0_19, %c0_20] : memref<192x32xf32, #tpu.memory_space<vmem>>, vector<192x32xf32>
    %cst_21 = arith.constant dense<0.000000e+00> : vector<128x32xf32>
    %32 = tpu.matmul %30, %31, %cst_21 {dimension_numbers = #tpu.dot_dimension_numbers<[1], [0], [0], [1], [0, 0, 1, 1], [], []>} : vector<128x192xf32>, vector<192x32xf32>, vector<128x32xf32> -> vector<128x32xf32>
    %c0_22 = arith.constant 0 : index
    %c0_23 = arith.constant 0 : index
    %33 = vector.load %arg8[%c0_22, %c0_23] : memref<1x32xf32, #tpu.memory_space<vmem>>, vector<1x32xf32>
    %34 = vector.broadcast %33 : vector<1x32xf32> to vector<128x32xf32>
    %35 = arith.addf %32, %34 : vector<128x32xf32>
    %c0_24 = arith.constant 0 : index
    %c0_25 = arith.constant 0 : index
    %36 = vector.load %arg9[%c0_24, %c0_25] : memref<128x32xf32, #tpu.memory_space<vmem>>, vector<128x32xf32>
    tpu.vector_store %arg9[%c0_24, %c0_25], %35 {strides = array<i32>} : memref<128x32xf32, #tpu.memory_space<vmem>>, vector<128x32xf32>,
    return
  }
  func.func @transform_0(%arg0: i32) -> (i32, i32) {
    %c0_i32 = arith.constant 0 : i32
    %c0_i32_0 = arith.constant 0 : i32
    return %arg0, %c0_i32 : i32, i32
  }
  func.func @transform_1(%arg0: i32) -> (i32, i32) {
    %c0_i32 = arith.constant 0 : i32
    %c0_i32_0 = arith.constant 0 : i32
    return %arg0, %c0_i32 : i32, i32
  }
  func.func @transform_2(%arg0: i32) -> (i32, i32) {
    %c0_i32 = arith.constant 0 : i32
    %c0_i32_0 = arith.constant 0 : i32
    %c0_i32_1 = arith.constant 0 : i32
    return %c0_i32, %c0_i32_0 : i32, i32
  }
  func.func @transform_3(%arg0: i32) -> (i32, i32) {
    %c0_i32 = arith.constant 0 : i32
    %c0_i32_0 = arith.constant 0 : i32
    %c0_i32_1 = arith.constant 0 : i32
    return %c0_i32, %c0_i32_0 : i32, i32
  }
  func.func @transform_4(%arg0: i32) -> (i32, i32) {
    %c0_i32 = arith.constant 0 : i32
    %c0_i32_0 = arith.constant 0 : i32
    %c0_i32_1 = arith.constant 0 : i32
    return %c0_i32, %c0_i32_0 : i32, i32
  }
  func.func @transform_5(%arg0: i32) -> (i32, i32) {
    %c0_i32 = arith.constant 0 : i32
    %c0_i32_0 = arith.constant 0 : i32
    %c0_i32_1 = arith.constant 0 : i32
    return %c0_i32, %c0_i32_0 : i32, i32
  }
  func.func @transform_6(%arg0: i32) -> (i32, i32) {
    %c0_i32 = arith.constant 0 : i32
    %c0_i32_0 = arith.constant 0 : i32
    %c0_i32_1 = arith.constant 0 : i32
    return %c0_i32, %c0_i32_0 : i32, i32
  }
  func.func @transform_7(%arg0: i32) -> (i32, i32) {
    %c0_i32 = arith.constant 0 : i32
    %c0_i32_0 = arith.constant 0 : i32
    %c0_i32_1 = arith.constant 0 : i32
    return %c0_i32, %c0_i32_0 : i32, i32
  }
  func.func @transform_8(%arg0: i32) -> (i32, i32) {
    %c0_i32 = arith.constant 0 : i32
    %c0_i32_0 = arith.constant 0 : i32
    return %arg0, %c0_i32 : i32, i32
  }
}

</mosaic_0001>

<llo_original>
// kernel: fourier_base_dynamic.1
$region0: #{fourier_base_dynamic.1}
  #allocation0 [shape = 'u32[]', space=smem, size = 0x4, offset = 0x4, fixed_abs, tag = 'smem constant byte address 0x4 - core index']
  #allocation1 [shape = 'u32[72,128]{1,0:T(1,128)}', space=vmem, size = 0x9000, scoped, tag = 'internal scratch']
  %s0 = inlined_call_operand.vmem [shape: f32[256,32], index: 0, kind: input, shape index: {}]
  %s1 = inlined_call_operand.vmem [shape: f32[256,32], index: 1, kind: input, shape index: {}]
  %s2 = inlined_call_operand.vmem [shape: f32[32,1024], index: 2, kind: input, shape index: {}]
  %s3 = inlined_call_operand.vmem [shape: f32[1,1024], index: 3, kind: input, shape index: {}]
  %s4 = inlined_call_operand.vmem [shape: f32[32,1024], index: 4, kind: input, shape index: {}]
  %s5 = inlined_call_operand.vmem [shape: f32[1024,32], index: 5, kind: input, shape index: {}]
  %s6 = inlined_call_operand.vmem [shape: f32[192,32], index: 6, kind: input, shape index: {}]
  %s7 = inlined_call_operand.vmem [shape: f32[1,32], index: 7, kind: input, shape index: {}]
  %s8 = inlined_call_operand.vmem [shape: f32[256,32], index: 8, kind: output, shape index: {}]
  %s9 = sld [smem:[#allocation0]]
  $region65: #{fourier_base_dynamic.1} parent=0
    _
  %s11 = ssub.s32 1, %s9
  %s12 = scalar_select 0, %s11, %s9
  loop: start=0, step=1, limit=4
  $region2: #{fourier_base_dynamic.1} parent=0 // loop_pre_header
    _
  $region3: #{fourier_base_dynamic.1} parent=0 // loop_header
    %s14 = sphi 0, %s18
    %p15 = scmp.ge.s32.totalorder %s14, 4
    %s24 = sphi 0, %s26
    %s27 = sphi 0, %s24
    %s28 = sphi 0, %s27
    %s44 = sphi 0, %s28
    %s50 = sphi 0, %s52
    %s53 = sphi 0, %s50
    %s54 = sphi 0, %s53
    %s70 = sphi 0, %s54
    %s74 = sphi 0, %s74
    %s76 = sphi 0, %s74
    %s77 = sphi 0, %s76
    %s91 = sphi 0, %s77
    %s95 = sphi 0, %s95
    %s97 = sphi 0, %s95
    %s98 = sphi 0, %s97
    %s112 = sphi 0, %s98
    %s116 = sphi 0, %s116
    %s118 = sphi 0, %s116
    %s119 = sphi 0, %s118
    %s133 = sphi 0, %s119
    %s137 = sphi 0, %s137
    %s139 = sphi 0, %s137
    %s140 = sphi 0, %s139
    %s154 = sphi 0, %s140
    %s158 = sphi 0, %s158
    %s160 = sphi 0, %s158
    %s161 = sphi 0, %s160
    %s175 = sphi 0, %s161
    %s179 = sphi 0, %s179
    %s181 = sphi 0, %s179
    %s182 = sphi 0, %s181
    %s196 = sphi 0, %s182
    %s202 = sphi 0, %s204
    %s205 = sphi 0, %s202
    %s206 = sphi 0, %s205
    %s222 = sphi 0, %s206
  $region4: #{fourier_base_dynamic.1} parent=0 // loop_header_branch
    %17 = sbr.rel (%p15) target = $region8
  $region5: #{fourier_base_dynamic.1} parent=0 // loop_body
    %s19 = ssub.s32 %s14, 1
    %s20 = ssub.s32 %s14, 2
    %s21 = sadd.s32 %s14, 1
    %s22 = ssub.s32 %s14, %s21
    %p23 = scmp.eq.s32.totalorder %s22, 0
    %s25 = sadd.s32 %s24, 1
    %s26 = scalar_select %p23, %s24, %s25
    %p29 = pneg %p23
    %p30 = scmp.eq.s32.totalorder %s14, 1
    %p31 = por %p29, %p30
    %p32 = scmp.ne.s32.totalorder %s24, %s27
    %p33 = scmp.eq.s32.totalorder %s14, 0
    %p34 = por %p32, %p33
    %p35 = scmp.ne.s32.totalorder %s24, %s27
    %p36 = scmp.eq.s32.totalorder %s19, 1
    %p37 = por %p35, %p36
    %p38 = scmp.ne.s32.totalorder %s27, %s28
    %p39 = scmp.eq.s32.totalorder %s19, 0
    %p40 = por %p38, %p39
    %p41 = scmp.ne.s32.totalorder %s27, %s28
    %p42 = scmp.eq.s32.totalorder %s20, 1
    %p43 = por %p41, %p42
    %p45 = scmp.ne.s32.totalorder %s28, %s44
    %p46 = scmp.eq.s32.totalorder %s20, 0
    %p47 = por %p45, %p46
    %s48 = ssub.s32 %s14, %s21
    %p49 = scmp.eq.s32.totalorder %s48, 0
    %s51 = sadd.s32 %s50, 1
    %s52 = scalar_select %p49, %s50, %s51
    %p55 = pneg %p49
    %p56 = scmp.eq.s32.totalorder %s14, 1
    %p57 = por %p55, %p56
    %p58 = scmp.ne.s32.totalorder %s50, %s53
    %p59 = scmp.eq.s32.totalorder %s14, 0
    %p60 = por %p58, %p59
    %p61 = scmp.ne.s32.totalorder %s50, %s53
    %p62 = scmp.eq.s32.totalorder %s19, 1
    %p63 = por %p61, %p62
    %p64 = scmp.ne.s32.totalorder %s53, %s54
    %p65 = scmp.eq.s32.totalorder %s19, 0
    %p66 = por %p64, %p65
    %p67 = scmp.ne.s32.totalorder %s53, %s54
    %p68 = scmp.eq.s32.totalorder %s20, 1
    %p69 = por %p67, %p68
    %p71 = scmp.ne.s32.totalorder %s54, %s70
    %p72 = scmp.eq.s32.totalorder %s20, 0
    %p73 = por %p71, %p72
    %s75 = sadd.s32 %s74, 1
    %p78 = scmp.eq.s32.totalorder %s14, 1
    %p79 = scmp.ne.s32.totalorder %s74, %s76
    %p80 = scmp.eq.s32.totalorder %s14, 0
    %p81 = por %p79, %p80
    %p82 = scmp.ne.s32.totalorder %s74, %s76
    %p83 = scmp.eq.s32.totalorder %s19, 1
    %p84 = por %p82, %p83
    %p85 = scmp.ne.s32.totalorder %s76, %s77
    %p86 = scmp.eq.s32.totalorder %s19, 0
    %p87 = por %p85, %p86
    %p88 = scmp.ne.s32.totalorder %s76, %s77
    %p89 = scmp.eq.s32.totalorder %s20, 1
    %p90 = por %p88, %p89
    %p92 = scmp.ne.s32.totalorder %s77, %s91
    %p93 = scmp.eq.s32.totalorder %s20, 0
    %p94 = por %p92, %p93
    %s96 = sadd.s32 %s95, 1
    %p99 = scmp.eq.s32.totalorder %s14, 1
    %p100 = scmp.ne.s32.totalorder %s95, %s97
    %p101 = scmp.eq.s32.totalorder %s14, 0
    %p102 = por %p100, %p101
    %p103 = scmp.ne.s32.totalorder %s95, %s97
    %p104 = scmp.eq.s32.totalorder %s19, 1
    %p105 = por %p103, %p104
    %p106 = scmp.ne.s32.totalorder %s97, %s98
    %p107 = scmp.eq.s32.totalorder %s19, 0
    %p108 = por %p106, %p107
    %p109 = scmp.ne.s32.totalorder %s97, %s98
    %p110 = scmp.eq.s32.totalorder %s20, 1
    %p111 = por %p109, %p110
    %p113 = scmp.ne.s32.totalorder %s98, %s112
    %p114 = scmp.eq.s32.totalorder %s20, 0
    %p115 = por %p113, %p114
    %s117 = sadd.s32 %s116, 1
    %p120 = scmp.eq.s32.totalorder %s14, 1
    %p121 = scmp.ne.s32.totalorder %s116, %s118
    %p122 = scmp.eq.s32.totalorder %s14, 0
    %p123 = por %p121, %p122
    %p124 = scmp.ne.s32.totalorder %s116, %s118
    %p125 = scmp.eq.s32.totalorder %s19, 1
    %p126 = por %p124, %p125
    %p127 = scmp.ne.s32.totalorder %s118, %s119
    %p128 = scmp.eq.s32.totalorder %s19, 0
    %p129 = por %p127, %p128
    %p130 = scmp.ne.s32.totalorder %s118, %s119
    %p131 = scmp.eq.s32.totalorder %s20, 1
    %p132 = por %p130, %p131
    %p134 = scmp.ne.s32.totalorder %s119, %s133
    %p135 = scmp.eq.s32.totalorder %s20, 0
    %p136 = por %p134, %p135
    %s138 = sadd.s32 %s137, 1
    %p141 = scmp.eq.s32.totalorder %s14, 1
    %p142 = scmp.ne.s32.totalorder %s137, %s139
    %p143 = scmp.eq.s32.totalorder %s14, 0
    %p144 = por %p142, %p143
    %p145 = scmp.ne.s32.totalorder %s137, %s139
    %p146 = scmp.eq.s32.totalorder %s19, 1
    %p147 = por %p145, %p146
    %p148 = scmp.ne.s32.totalorder %s139, %s140
    %p149 = scmp.eq.s32.totalorder %s19, 0
    %p150 = por %p148, %p149
    %p151 = scmp.ne.s32.totalorder %s139, %s140
    %p152 = scmp.eq.s32.totalorder %s20, 1
    %p153 = por %p151, %p152
    %p155 = scmp.ne.s32.totalorder %s140, %s154
    %p156 = scmp.eq.s32.totalorder %s20, 0
    %p157 = por %p155, %p156
    %s159 = sadd.s32 %s158, 1
    %p162 = scmp.eq.s32.totalorder %s14, 1
    %p163 = scmp.ne.s32.totalorder %s158, %s160
    %p164 = scmp.eq.s32.totalorder %s14, 0
    %p165 = por %p163, %p164
    %p166 = scmp.ne.s32.totalorder %s158, %s160
    %p167 = scmp.eq.s32.totalorder %s19, 1
    %p168 = por %p166, %p167
    %p169 = scmp.ne.s32.totalorder %s160, %s161
    %p170 = scmp.eq.s32.totalorder %s19, 0
    %p171 = por %p169, %p170
    %p172 = scmp.ne.s32.totalorder %s160, %s161
    %p173 = scmp.eq.s32.totalorder %s20, 1
    %p174 = por %p172, %p173
    %p176 = scmp.ne.s32.totalorder %s161, %s175
    %p177 = scmp.eq.s32.totalorder %s20, 0
    %p178 = por %p176, %p177
    %s180 = sadd.s32 %s179, 1
    %p183 = scmp.eq.s32.totalorder %s14, 1
    %p184 = scmp.ne.s32.totalorder %s179, %s181
    %p185 = scmp.eq.s32.totalorder %s14, 0
    %p186 = por %p184, %p185
    %p187 = scmp.ne.s32.totalorder %s179, %s181
    %p188 = scmp.eq.s32.totalorder %s19, 1
    %p189 = por %p187, %p188
    %p190 = scmp.ne.s32.totalorder %s181, %s182
    %p191 = scmp.eq.s32.totalorder %s19, 0
    %p192 = por %p190, %p191
    %p193 = scmp.ne.s32.totalorder %s181, %s182
    %p194 = scmp.eq.s32.totalorder %s20, 1
    %p195 = por %p193, %p194
    %p197 = scmp.ne.s32.totalorder %s182, %s196
    %p198 = scmp.eq.s32.totalorder %s20, 0
    %p199 = por %p197, %p198
    %s200 = ssub.s32 %s14, %s21
    %p201 = scmp.eq.s32.totalorder %s200, 0
    %s203 = sadd.s32 %s202, 1
    %s204 = scalar_select %p201, %s202, %s203
    %p207 = pneg %p201
    %p208 = scmp.eq.s32.totalorder %s14, 1
    %p209 = por %p207, %p208
    %p210 = scmp.ne.s32.totalorder %s202, %s205
    %p211 = scmp.eq.s32.totalorder %s14, 0
    %p212 = por %p210, %p211
    %p213 = scmp.ne.s32.totalorder %s202, %s205
    %p214 = scmp.eq.s32.totalorder %s19, 1
    %p215 = por %p213, %p214
    %p216 = scmp.ne.s32.totalorder %s205, %s206
    %p217 = scmp.eq.s32.totalorder %s19, 0
    %p218 = por %p216, %p217
    %p219 = scmp.ne.s32.totalorder %s205, %s206
    %p220 = scmp.eq.s32.totalorder %s20, 1
    %p221 = por %p219, %p220
    %p223 = scmp.ne.s32.totalorder %s206, %s222
    %p224 = scmp.eq.s32.totalorder %s20, 0
    %p225 = por %p223, %p224
    %p226 = scmp.le.s32.totalorder 1, %s14
    %p227 = scmp.lt.s32.totalorder %s14, 3
    %p228 = pnand %p226, %p227
    %p229 = pneg %p228
    // Predicated region
    $region9: #{fourier_base_dynamic.1} parent=5 // pred_check
      _
    $region10: #{fourier_base_dynamic.1} parent=5 // pred_check_branch
      %231 = sbr.rel (%p228) target = $region12
    $region11: #{fourier_base_dynamic.1} parent=5 // pred_region
      %s232 = ssub.s32 %s14, 1
      // Predicated region
      $region13: #{fourier_base_dynamic.1} parent=11 // pred_check
        %p233 = pneg %p87
      $region14: #{fourier_base_dynamic.1} parent=11 // pred_check_branch
        %235 = sbr.rel (%p233) target = $region16
      $region15: #{fourier_base_dynamic.1} parent=11 // pred_region
        _
      $region16: #{fourier_base_dynamic.1} parent=11 // pred_fallthru
        _
      // Predicated region
      $region17: #{fourier_base_dynamic.1} parent=11 // pred_check
        %p236 = pneg %p108
      $region18: #{fourier_base_dynamic.1} parent=11 // pred_check_branch
        %238 = sbr.rel (%p236) target = $region20
      $region19: #{fourier_base_dynamic.1} parent=11 // pred_region
        _
      $region20: #{fourier_base_dynamic.1} parent=11 // pred_fallthru
        _
      // Predicated region
      $region21: #{fourier_base_dynamic.1} parent=11 // pred_check
        %p239 = pneg %p129
      $region22: #{fourier_base_dynamic.1} parent=11 // pred_check_branch
        %241 = sbr.rel (%p239) target = $region24
      $region23: #{fourier_base_dynamic.1} parent=11 // pred_region
        _
      $region24: #{fourier_base_dynamic.1} parent=11 // pred_fallthru
        _
      // Predicated region
      $region25: #{fourier_base_dynamic.1} parent=11 // pred_check
        %p242 = pneg %p150
      $region26: #{fourier_base_dynamic.1} parent=11 // pred_check_branch
        %244 = sbr.rel (%p242) target = $region28
      $region27: #{fourier_base_dynamic.1} parent=11 // pred_region
        _
      $region28: #{fourier_base_dynamic.1} parent=11 // pred_fallthru
        _
      // Predicated region
      $region29: #{fourier_base_dynamic.1} parent=11 // pred_check
        %p245 = pneg %p171
      $region30: #{fourier_base_dynamic.1} parent=11 // pred_check_branch
        %247 = sbr.rel (%p245) target = $region32
      $region31: #{fourier_base_dynamic.1} parent=11 // pred_region
        _
      $region32: #{fourier_base_dynamic.1} parent=11 // pred_fallthru
        _
      // Predicated region
      $region33: #{fourier_base_dynamic.1} parent=11 // pred_check
        %p248 = pneg %p192
      $region34: #{fourier_base_dynamic.1} parent=11 // pred_check_branch
        %250 = sbr.rel (%p248) target = $region36
      $region35: #{fourier_base_dynamic.1} parent=11 // pred_region
        _
      $region36: #{fourier_base_dynamic.1} parent=11 // pred_fallthru
        _
    $region12: #{fourier_base_dynamic.1} parent=5 // pred_fallthru
      _
    %p251 = scmp.lt.s32.totalorder %s14, 2
    // Predicated region
    $region37: #{fourier_base_dynamic.1} parent=5 // pred_check
      %p252 = pneg %p251
    $region38: #{fourier_base_dynamic.1} parent=5 // pred_check_branch
      %254 = sbr.rel (%p252) target = $region40
    $region39: #{fourier_base_dynamic.1} parent=5 // pred_region
      // Predicated region
      $region41: #{fourier_base_dynamic.1} parent=39 // pred_check
        %p255 = pneg %p34
      $region42: #{fourier_base_dynamic.1} parent=39 // pred_check_branch
        %257 = sbr.rel (%p255) target = $region44
      $region43: #{fourier_base_dynamic.1} parent=39 // pred_region
        %s258 = smul.u32 16, %s14
        %p259 = scmp.lt.s32.totalorder %s258, 31
        %s260 = scalar_select %p259, %s258, 31
        %s261 = smul.addr %s260, 8
        %s262 = scalar_lea.vmem %s0, %s261
        %s263 = smul.u32 16, %s14
      $region44: #{fourier_base_dynamic.1} parent=39 // pred_fallthru
        _
      // Predicated region
      $region45: #{fourier_base_dynamic.1} parent=39 // pred_check
        %p264 = pneg %p60
      $region46: #{fourier_base_dynamic.1} parent=39 // pred_check_branch
        %266 = sbr.rel (%p264) target = $region48
      $region47: #{fourier_base_dynamic.1} parent=39 // pred_region
        %s267 = smul.u32 16, %s14
        %p268 = scmp.lt.s32.totalorder %s267, 31
        %s269 = scalar_select %p268, %s267, 31
        %s270 = smul.addr %s269, 8
        %s271 = scalar_lea.vmem %s1, %s270
        %s272 = smul.u32 16, %s14
      $region48: #{fourier_base_dynamic.1} parent=39 // pred_fallthru
        _
    $region40: #{fourier_base_dynamic.1} parent=5 // pred_fallthru
      _
    %p273 = scmp.le.s32.totalorder 1, %s14
    %p274 = scmp.lt.s32.totalorder %s14, 3
    %p275 = pnand %p273, %p274
    %p276 = pneg %p275
    // Predicated region
    $region49: #{fourier_base_dynamic.1} parent=5 // pred_check
      _
    $region50: #{fourier_base_dynamic.1} parent=5 // pred_check_branch
      %278 = sbr.rel (%p275) target = $region52
    $region51: #{fourier_base_dynamic.1} parent=5 // pred_region
      %s279 = ssub.s32 %s14, 1
      %s280 = smul.u32 16, %s19
      %p281 = scmp.lt.s32.totalorder %s280, 31
      %s282 = scalar_select %p281, %s280, 31
      %s283 = smul.addr %s282, 8
      %s284 = scalar_lea.vmem %s0, %s283
      %p285 = pneg %p40
      %p286 = pneg %p37
      %s287 = smul.u32 16, %s19
      %p288 = scmp.lt.s32.totalorder %s287, 31
      %s289 = scalar_select %p288, %s287, 31
      %s290 = smul.addr %s289, 8
      %s291 = scalar_lea.vmem %s1, %s290
      %p292 = pneg %p66
      %p293 = pneg %p63
      %p294 = pneg %p87
      %p295 = pneg %p84
      %p296 = pneg %p108
      %p297 = pneg %p105
      %p298 = pneg %p129
      %p299 = pneg %p126
      %p300 = pneg %p150
      %p301 = pneg %p147
      %p302 = pneg %p171
      %p303 = pneg %p168
      %p304 = pneg %p192
      %p305 = pneg %p189
      %p306 = pneg %p218
      %p307 = pneg %p215
      %s308 = smul.u32 16, %s19
      %p309 = scmp.lt.s32.totalorder %s308, 31
      %s310 = scalar_select %p309, %s308, 31
      %s311 = smul.addr %s310, 8
      %s312 = scalar_lea.vmem %s8, %s311
      %s313 = smul.u32 16, %s19
      %p314 = scmp.lt.s32.totalorder %s313, 31
      %s315 = scalar_select %p314, %s313, 31
      %s316 = smul.addr %s315, 8
      %s317 = scalar_lea.vmem %s0, %s316
      %s318 = smul.u32 16, %s19
      %s319 = smul.u32 16, %s19
      %p320 = scmp.lt.s32.totalorder %s319, 31
      %s321 = scalar_select %p320, %s319, 31
      %s322 = smul.addr %s321, 8
      %s323 = scalar_lea.vmem %s1, %s322
      %s324 = smul.u32 16, %s19
      %s325 = smul.u32 16, %s19
      %p326 = scmp.lt.s32.totalorder %s325, 31
      %s327 = scalar_select %p326, %s325, 31
      %s328 = smul.addr %s327, 8
      %s329 = scalar_lea.vmem %s8, %s328
      %s330 = smul.u32 16, %s19
      %v331 = vld [vmem:[%s317] sm:$0xff]
      %v332 = vld [vmem:[%s317 + $0x8] sm:$0xff]
      %v333 = vld [vmem:[%s317 + $0x10] sm:$0xff]
      %v334 = vld [vmem:[%s317 + $0x18] sm:$0xff]
      %v335 = vld [vmem:[%s317 + $0x20] sm:$0xff]
      %v336 = vld [vmem:[%s317 + $0x28] sm:$0xff]
      %v337 = vld [vmem:[%s317 + $0x30] sm:$0xff]
      %v338 = vld [vmem:[%s317 + $0x38] sm:$0xff]
      %v339 = vld [vmem:[%s317 + $0x40] sm:$0xff]
      %v340 = vld [vmem:[%s317 + $0x48] sm:$0xff]
      %v341 = vld [vmem:[%s317 + $0x50] sm:$0xff]
      %v342 = vld [vmem:[%s317 + $0x58] sm:$0xff]
      %v343 = vld [vmem:[%s317 + $0x60] sm:$0xff]
      %v344 = vld [vmem:[%s317 + $0x68] sm:$0xff]
      %v345 = vld [vmem:[%s317 + $0x70] sm:$0xff]
      %v346 = vld [vmem:[%s317 + $0x78] sm:$0xff]
      %v347 = vld [vmem:[%s323] sm:$0xff]
      %v348 = vld [vmem:[%s323 + $0x8] sm:$0xff]
      %v349 = vld [vmem:[%s323 + $0x10] sm:$0xff]
      %v350 = vld [vmem:[%s323 + $0x18] sm:$0xff]
      %v351 = vld [vmem:[%s323 + $0x20] sm:$0xff]
      %v352 = vld [vmem:[%s323 + $0x28] sm:$0xff]
      %v353 = vld [vmem:[%s323 + $0x30] sm:$0xff]
      %v354 = vld [vmem:[%s323 + $0x38] sm:$0xff]
      %v355 = vld [vmem:[%s323 + $0x40] sm:$0xff]
      %v356 = vld [vmem:[%s323 + $0x48] sm:$0xff]
      %v357 = vld [vmem:[%s323 + $0x50] sm:$0xff]
      %v358 = vld [vmem:[%s323 + $0x58] sm:$0xff]
      %v359 = vld [vmem:[%s323 + $0x60] sm:$0xff]
      %v360 = vld [vmem:[%s323 + $0x68] sm:$0xff]
      %v361 = vld [vmem:[%s323 + $0x70] sm:$0xff]
      %v362 = vld [vmem:[%s323 + $0x78] sm:$0xff]
      %v363 = vld [vmem:[%s2] sm:$0xff]
      %v364 = vld [vmem:[%s2 + $0x8] sm:$0xff]
      %v365 = vld [vmem:[%s2 + $0x10] sm:$0xff]
      %v366 = vld [vmem:[%s2 + $0x18] sm:$0xff]
      %v367 = vld [vmem:[%s2 + $0x20] sm:$0xff]
      %v368 = vld [vmem:[%s2 + $0x28] sm:$0xff]
      %v369 = vld [vmem:[%s2 + $0x30] sm:$0xff]
      %v370 = vld [vmem:[%s2 + $0x38] sm:$0xff]
      %v371 = vld [vmem:[%s2 + $0x40] sm:$0xff]
      %v372 = vld [vmem:[%s2 + $0x48] sm:$0xff]
      %v373 = vld [vmem:[%s2 + $0x50] sm:$0xff]
      %v374 = vld [vmem:[%s2 + $0x58] sm:$0xff]
      %v375 = vld [vmem:[%s2 + $0x60] sm:$0xff]
      %v376 = vld [vmem:[%s2 + $0x68] sm:$0xff]
      %v377 = vld [vmem:[%s2 + $0x70] sm:$0xff]
      %v378 = vld [vmem:[%s2 + $0x78] sm:$0xff]
      %v379 = vld [vmem:[%s2 + $0x80] sm:$0xff]
      %v380 = vld [vmem:[%s2 + $0x88] sm:$0xff]
      %v381 = vld [vmem:[%s2 + $0x90] sm:$0xff]
      %v382 = vld [vmem:[%s2 + $0x98] sm:$0xff]
      %v383 = vld [vmem:[%s2 + $0xa0] sm:$0xff]
      %v384 = vld [vmem:[%s2 + $0xa8] sm:$0xff]
      %v385 = vld [vmem:[%s2 + $0xb0] sm:$0xff]
      %v386 = vld [vmem:[%s2 + $0xb8] sm:$0xff]
      %v387 = vld [vmem:[%s2 + $0xc0] sm:$0xff]
      %v388 = vld [vmem:[%s2 + $0xc8] sm:$0xff]
      %v389 = vld [vmem:[%s2 + $0xd0] sm:$0xff]
      %v390 = vld [vmem:[%s2 + $0xd8] sm:$0xff]
      %v391 = vld [vmem:[%s2 + $0xe0] sm:$0xff]
      %v392 = vld [vmem:[%s2 + $0xe8] sm:$0xff]
      %v393 = vld [vmem:[%s2 + $0xf0] sm:$0xff]
      %v394 = vld [vmem:[%s2 + $0xf8] sm:$0xff]
      %v395 = vld [vmem:[%s3] sm:$0xff]
      %v397 = vperm.slane %v395, 0
      %v398 = vperm.slane %v395, 1
      %v399 = vperm.slane %v395, 2
      %v400 = vperm.slane %v395, 3
      %v401 = vperm.slane %v395, 4
      %v402 = vperm.slane %v395, 5
      %v403 = vperm.slane %v395, 6
      %v404 = vperm.slane %v395, 7
      %vm413 = vcmask 261120
      %v415 = vsel %vm413, %v331, 0
      %v418 = vsel %vm413, %v332, 0
      %v421 = vsel %vm413, %v333, 0
      %v424 = vsel %vm413, %v334, 0
      %v427 = vsel %vm413, %v335, 0
      %v430 = vsel %vm413, %v336, 0
      %v433 = vsel %vm413, %v337, 0
      %v436 = vsel %vm413, %v338, 0
      %v439 = vsel %vm413, %v339, 0
      %v442 = vsel %vm413, %v340, 0
      %v445 = vsel %vm413, %v341, 0
      %v448 = vsel %vm413, %v342, 0
      %v451 = vsel %vm413, %v343, 0
      %v454 = vsel %vm413, %v344, 0
      %v457 = vsel %vm413, %v345, 0
      %v460 = vsel %vm413, %v346, 0
      %462 = vmatpush.msra.mxu0 0.0
      %463 = vmatpush.msra.mxu0 0.0
      %464 = vmatpush.msra.mxu0 0.0
      %465 = vmatpush.msra.mxu0 0.0
      %466 = vmatpush.msra.mxu0 0.0
      %467 = vmatpush.msra.mxu0 0.0
      %468 = vmatpush.msra.mxu0 0.0
      %469 = vmatpush.msra.mxu0 0.0
      %470 = vmatpush.msra.mxu0 0.0
      %471 = vmatpush.msra.mxu0 0.0
      %472 = vmatpush.msra.mxu0 0.0
      %473 = vmatpush.msra.mxu0 0.0
      %474 = vmatpush.msra.mxu0 %v387
      %475 = vmatpush.msra.mxu0 %v379
      %476 = vmatpush.msra.mxu0 %v371
      %477 = vmatpush.msra.mxu0 %v363
      %478 = vmatmul.f32.gmra.mxu0 %v415
      %v479 = vpop.f32.mrf.mxu0
      %v480 = vadd.f32 %v397, %v479
      %481 = vmatmul.f32.gmra.mxu0 %v418
      %v482 = vpop.f32.mrf.mxu0
      %v483 = vadd.f32 %v397, %v482
      %484 = vmatmul.f32.gmra.mxu0 %v421
      %v485 = vpop.f32.mrf.mxu0
      %v486 = vadd.f32 %v397, %v485
      %487 = vmatmul.f32.gmra.mxu0 %v424
      %v488 = vpop.f32.mrf.mxu0
      %v489 = vadd.f32 %v397, %v488
      %490 = vmatmul.f32.gmra.mxu0 %v427
      %v491 = vpop.f32.mrf.mxu0
      %v492 = vadd.f32 %v397, %v491
      %493 = vmatmul.f32.gmra.mxu0 %v430
      %v494 = vpop.f32.mrf.mxu0
      %v495 = vadd.f32 %v397, %v494
      %496 = vmatmul.f32.gmra.mxu0 %v433
      %v497 = vpop.f32.mrf.mxu0
      %v498 = vadd.f32 %v397, %v497
      %499 = vmatmul.f32.gmra.mxu0 %v436
      %v500 = vpop.f32.mrf.mxu0
      %v501 = vadd.f32 %v397, %v500
      %502 = vmatmul.f32.gmra.mxu0 %v439
      %v503 = vpop.f32.mrf.mxu0
      %v504 = vadd.f32 %v397, %v503
      %505 = vmatmul.f32.gmra.mxu0 %v442
      %v506 = vpop.f32.mrf.mxu0
      %v507 = vadd.f32 %v397, %v506
      %508 = vmatmul.f32.gmra.mxu0 %v445
      %v509 = vpop.f32.mrf.mxu0
      %v510 = vadd.f32 %v397, %v509
      %511 = vmatmul.f32.gmra.mxu0 %v448
      %v512 = vpop.f32.mrf.mxu0
      %v513 = vadd.f32 %v397, %v512
      %514 = vmatmul.f32.gmra.mxu0 %v451
      %v515 = vpop.f32.mrf.mxu0
      %v516 = vadd.f32 %v397, %v515
      %517 = vmatmul.f32.gmra.mxu0 %v454
      %v518 = vpop.f32.mrf.mxu0
      %v519 = vadd.f32 %v397, %v518
      %520 = vmatmul.f32.gmra.mxu0 %v457
      %v521 = vpop.f32.mrf.mxu0
      %v522 = vadd.f32 %v397, %v521
      %523 = vmatmul.f32.gmra.mxu0 %v460
      %v524 = vpop.f32.mrf.mxu0
      %v525 = vadd.f32 %v397, %v524
      %526 = vdwg.mxu0
      %527 = vmatpush.msra.mxu0 0.0
      %528 = vmatpush.msra.mxu0 0.0
      %529 = vmatpush.msra.mxu0 0.0
      %530 = vmatpush.msra.mxu0 0.0
      %531 = vmatpush.msra.mxu0 0.0
      %532 = vmatpush.msra.mxu0 0.0
      %533 = vmatpush.msra.mxu0 0.0
      %534 = vmatpush.msra.mxu0 0.0
      %535 = vmatpush.msra.mxu0 0.0
      %536 = vmatpush.msra.mxu0 0.0
      %537 = vmatpush.msra.mxu0 0.0
      %538 = vmatpush.msra.mxu0 0.0
      %539 = vmatpush.msra.mxu0 %v388
      %540 = vmatpush.msra.mxu0 %v380
      %541 = vmatpush.msra.mxu0 %v372
      %542 = vmatpush.msra.mxu0 %v364
      %543 = vmatmul.f32.gmra.mxu0 %v415
      %v544 = vpop.f32.mrf.mxu0
      %v545 = vadd.f32 %v398, %v544
      %546 = vmatmul.f32.gmra.mxu0 %v418
      %v547 = vpop.f32.mrf.mxu0
      %v548 = vadd.f32 %v398, %v547
      %549 = vmatmul.f32.gmra.mxu0 %v421
      %v550 = vpop.f32.mrf.mxu0
      %v551 = vadd.f32 %v398, %v550
      %552 = vmatmul.f32.gmra.mxu0 %v424
      %v553 = vpop.f32.mrf.mxu0
      %v554 = vadd.f32 %v398, %v553
      %555 = vmatmul.f32.gmra.mxu0 %v427
      %v556 = vpop.f32.mrf.mxu0
      %v557 = vadd.f32 %v398, %v556
      %558 = vmatmul.f32.gmra.mxu0 %v430
      %v559 = vpop.f32.mrf.mxu0
      %v560 = vadd.f32 %v398, %v559
      %561 = vmatmul.f32.gmra.mxu0 %v433
      %v562 = vpop.f32.mrf.mxu0
      %v563 = vadd.f32 %v398, %v562
      %564 = vmatmul.f32.gmra.mxu0 %v436
      %v565 = vpop.f32.mrf.mxu0
      %v566 = vadd.f32 %v398, %v565
      %567 = vmatmul.f32.gmra.mxu0 %v439
      %v568 = vpop.f32.mrf.mxu0
      %v569 = vadd.f32 %v398, %v568
      %570 = vmatmul.f32.gmra.mxu0 %v442
      %v571 = vpop.f32.mrf.mxu0
      %v572 = vadd.f32 %v398, %v571
      %573 = vmatmul.f32.gmra.mxu0 %v445
      %v574 = vpop.f32.mrf.mxu0
      %v575 = vadd.f32 %v398, %v574
      %576 = vmatmul.f32.gmra.mxu0 %v448
      %v577 = vpop.f32.mrf.mxu0
      %v578 = vadd.f32 %v398, %v577
      %579 = vmatmul.f32.gmra.mxu0 %v451
      %v580 = vpop.f32.mrf.mxu0
      %v581 = vadd.f32 %v398, %v580
      %582 = vmatmul.f32.gmra.mxu0 %v454
      %v583 = vpop.f32.mrf.mxu0
      %v584 = vadd.f32 %v398, %v583
      %585 = vmatmul.f32.gmra.mxu0 %v457
      %v586 = vpop.f32.mrf.mxu0
      %v587 = vadd.f32 %v398, %v586
      %588 = vmatmul.f32.gmra.mxu0 %v460
      %v589 = vpop.f32.mrf.mxu0
      %v590 = vadd.f32 %v398, %v589
      %591 = vdwg.mxu0
      %592 = vmatpush.msra.mxu0 0.0
      %593 = vmatpush.msra.mxu0 0.0
      %594 = vmatpush.msra.mxu0 0.0
      %595 = vmatpush.msra.mxu0 0.0
      %596 = vmatpush.msra.mxu0 0.0
      %597 = vmatpush.msra.mxu0 0.0
      %598 = vmatpush.msra.mxu0 0.0
      %599 = vmatpush.msra.mxu0 0.0
      %600 = vmatpush.msra.mxu0 0.0
      %601 = vmatpush.msra.mxu0 0.0
      %602 = vmatpush.msra.mxu0 0.0
      %603 = vmatpush.msra.mxu0 0.0
      %604 = vmatpush.msra.mxu0 %v389
      %605 = vmatpush.msra.mxu0 %v381
      %606 = vmatpush.msra.mxu0 %v373
      %607 = vmatpush.msra.mxu0 %v365
      %608 = vmatmul.f32.gmra.mxu0 %v415
      %v609 = vpop.f32.mrf.mxu0
      %v610 = vadd.f32 %v399, %v609
      %611 = vmatmul.f32.gmra.mxu0 %v418
      %v612 = vpop.f32.mrf.mxu0
      %v613 = vadd.f32 %v399, %v612
      %614 = vmatmul.f32.gmra.mxu0 %v421
      %v615 = vpop.f32.mrf.mxu0
      %v616 = vadd.f32 %v399, %v615
      %617 = vmatmul.f32.gmra.mxu0 %v424
      %v618 = vpop.f32.mrf.mxu0
      %v619 = vadd.f32 %v399, %v618
      %620 = vmatmul.f32.gmra.mxu0 %v427
      %v621 = vpop.f32.mrf.mxu0
      %v622 = vadd.f32 %v399, %v621
      %623 = vmatmul.f32.gmra.mxu0 %v430
      %v624 = vpop.f32.mrf.mxu0
      %v625 = vadd.f32 %v399, %v624
      %626 = vmatmul.f32.gmra.mxu0 %v433
      %v627 = vpop.f32.mrf.mxu0
      %v628 = vadd.f32 %v399, %v627
      %629 = vmatmul.f32.gmra.mxu0 %v436
      %v630 = vpop.f32.mrf.mxu0
      %v631 = vadd.f32 %v399, %v630
      %632 = vmatmul.f32.gmra.mxu0 %v439
      %v633 = vpop.f32.mrf.mxu0
      %v634 = vadd.f32 %v399, %v633
      %635 = vmatmul.f32.gmra.mxu0 %v442
      %v636 = vpop.f32.mrf.mxu0
      %v637 = vadd.f32 %v399, %v636
      %638 = vmatmul.f32.gmra.mxu0 %v445
      %v639 = vpop.f32.mrf.mxu0
      %v640 = vadd.f32 %v399, %v639
      %641 = vmatmul.f32.gmra.mxu0 %v448
      %v642 = vpop.f32.mrf.mxu0
      %v643 = vadd.f32 %v399, %v642
      %644 = vmatmul.f32.gmra.mxu0 %v451
      %v645 = vpop.f32.mrf.mxu0
      %v646 = vadd.f32 %v399, %v645
      %647 = vmatmul.f32.gmra.mxu0 %v454
      %v648 = vpop.f32.mrf.mxu0
      %v649 = vadd.f32 %v399, %v648
      %650 = vmatmul.f32.gmra.mxu0 %v457
      %v651 = vpop.f32.mrf.mxu0
      %v652 = vadd.f32 %v399, %v651
      %653 = vmatmul.f32.gmra.mxu0 %v460
      %v654 = vpop.f32.mrf.mxu0
      %v655 = vadd.f32 %v399, %v654
      %656 = vdwg.mxu0
      %657 = vmatpush.msra.mxu0 0.0
      %658 = vmatpush.msra.mxu0 0.0
      %659 = vmatpush.msra.mxu0 0.0
      %660 = vmatpush.msra.mxu0 0.0
      %661 = vmatpush.msra.mxu0 0.0
      %662 = vmatpush.msra.mxu0 0.0
      %663 = vmatpush.msra.mxu0 0.0
      %664 = vmatpush.msra.mxu0 0.0
      %665 = vmatpush.msra.mxu0 0.0
      %666 = vmatpush.msra.mxu0 0.0
      %667 = vmatpush.msra.mxu0 0.0
      %668 = vmatpush.msra.mxu0 0.0
      %669 = vmatpush.msra.mxu0 %v390
      %670 = vmatpush.msra.mxu0 %v382
      %671 = vmatpush.msra.mxu0 %v374
      %672 = vmatpush.msra.mxu0 %v366
      %673 = vmatmul.f32.gmra.mxu0 %v415
      %v674 = vpop.f32.mrf.mxu0
      %v675 = vadd.f32 %v400, %v674
      %676 = vmatmul.f32.gmra.mxu0 %v418
      %v677 = vpop.f32.mrf.mxu0
      %v678 = vadd.f32 %v400, %v677
      %679 = vmatmul.f32.gmra.mxu0 %v421
      %v680 = vpop.f32.mrf.mxu0
      %v681 = vadd.f32 %v400, %v680
      %682 = vmatmul.f32.gmra.mxu0 %v424
      %v683 = vpop.f32.mrf.mxu0
      %v684 = vadd.f32 %v400, %v683
      %685 = vmatmul.f32.gmra.mxu0 %v427
      %v686 = vpop.f32.mrf.mxu0
      %v687 = vadd.f32 %v400, %v686
      %688 = vmatmul.f32.gmra.mxu0 %v430
      %v689 = vpop.f32.mrf.mxu0
      %v690 = vadd.f32 %v400, %v689
      %691 = vmatmul.f32.gmra.mxu0 %v433
      %v692 = vpop.f32.mrf.mxu0
      %v693 = vadd.f32 %v400, %v692
      %694 = vmatmul.f32.gmra.mxu0 %v436
      %v695 = vpop.f32.mrf.mxu0
      %v696 = vadd.f32 %v400, %v695
      %697 = vmatmul.f32.gmra.mxu0 %v439
      %v698 = vpop.f32.mrf.mxu0
      %v699 = vadd.f32 %v400, %v698
      %700 = vmatmul.f32.gmra.mxu0 %v442
      %v701 = vpop.f32.mrf.mxu0
      %v702 = vadd.f32 %v400, %v701
      %703 = vmatmul.f32.gmra.mxu0 %v445
      %v704 = vpop.f32.mrf.mxu0
      %v705 = vadd.f32 %v400, %v704
      %706 = vmatmul.f32.gmra.mxu0 %v448
      %v707 = vpop.f32.mrf.mxu0
      %v708 = vadd.f32 %v400, %v707
      %709 = vmatmul.f32.gmra.mxu0 %v451
      %v710 = vpop.f32.mrf.mxu0
      %v711 = vadd.f32 %v400, %v710
      %712 = vmatmul.f32.gmra.mxu0 %v454
      %v713 = vpop.f32.mrf.mxu0
      %v714 = vadd.f32 %v400, %v713
      %715 = vmatmul.f32.gmra.mxu0 %v457
      %v716 = vpop.f32.mrf.mxu0
      %v717 = vadd.f32 %v400, %v716
      %718 = vmatmul.f32.gmra.mxu0 %v460
      %v719 = vpop.f32.mrf.mxu0
      %v720 = vadd.f32 %v400, %v719
      %721 = vdwg.mxu0
      %722 = vmatpush.msra.mxu0 0.0
      %723 = vmatpush.msra.mxu0 0.0
      %724 = vmatpush.msra.mxu0 0.0
      %725 = vmatpush.msra.mxu0 0.0
      %726 = vmatpush.msra.mxu0 0.0
      %727 = vmatpush.msra.mxu0 0.0
      %728 = vmatpush.msra.mxu0 0.0
      %729 = vmatpush.msra.mxu0 0.0
      %730 = vmatpush.msra.mxu0 0.0
      %731 = vmatpush.msra.mxu0 0.0
      %732 = vmatpush.msra.mxu0 0.0
      %733 = vmatpush.msra.mxu0 0.0
      %734 = vmatpush.msra.mxu0 %v391
      %735 = vmatpush.msra.mxu0 %v383
      %736 = vmatpush.msra.mxu0 %v375
      %737 = vmatpush.msra.mxu0 %v367
      %738 = vmatmul.f32.gmra.mxu0 %v415
      %v739 = vpop.f32.mrf.mxu0
      %v740 = vadd.f32 %v401, %v739
      %741 = vmatmul.f32.gmra.mxu0 %v418
      %v742 = vpop.f32.mrf.mxu0
      %v743 = vadd.f32 %v401, %v742
      %744 = vmatmul.f32.gmra.mxu0 %v421
      %v745 = vpop.f32.mrf.mxu0
      %v746 = vadd.f32 %v401, %v745
      %747 = vmatmul.f32.gmra.mxu0 %v424
      %v748 = vpop.f32.mrf.mxu0
      %v749 = vadd.f32 %v401, %v748
      %750 = vmatmul.f32.gmra.mxu0 %v427
      %v751 = vpop.f32.mrf.mxu0
      %v752 = vadd.f32 %v401, %v751
      %753 = vmatmul.f32.gmra.mxu0 %v430
      %v754 = vpop.f32.mrf.mxu0
      %v755 = vadd.f32 %v401, %v754
      %756 = vmatmul.f32.gmra.mxu0 %v433
      %v757 = vpop.f32.mrf.mxu0
      %v758 = vadd.f32 %v401, %v757
      %759 = vmatmul.f32.gmra.mxu0 %v436
      %v760 = vpop.f32.mrf.mxu0
      %v761 = vadd.f32 %v401, %v760
      %762 = vmatmul.f32.gmra.mxu0 %v439
      %v763 = vpop.f32.mrf.mxu0
      %v764 = vadd.f32 %v401, %v763
      %765 = vmatmul.f32.gmra.mxu0 %v442
      %v766 = vpop.f32.mrf.mxu0
      %v767 = vadd.f32 %v401, %v766
      %768 = vmatmul.f32.gmra.mxu0 %v445
      %v769 = vpop.f32.mrf.mxu0
      %v770 = vadd.f32 %v401, %v769
      %771 = vmatmul.f32.gmra.mxu0 %v448
      %v772 = vpop.f32.mrf.mxu0
      %v773 = vadd.f32 %v401, %v772
      %774 = vmatmul.f32.gmra.mxu0 %v451
      %v775 = vpop.f32.mrf.mxu0
      %v776 = vadd.f32 %v401, %v775
      %777 = vmatmul.f32.gmra.mxu0 %v454
      %v778 = vpop.f32.mrf.mxu0
      %v779 = vadd.f32 %v401, %v778
      %780 = vmatmul.f32.gmra.mxu0 %v457
      %v781 = vpop.f32.mrf.mxu0
      %v782 = vadd.f32 %v401, %v781
      %783 = vmatmul.f32.gmra.mxu0 %v460
      %v784 = vpop.f32.mrf.mxu0
      %v785 = vadd.f32 %v401, %v784
      %786 = vdwg.mxu0
      %787 = vmatpush.msra.mxu0 0.0
      %788 = vmatpush.msra.mxu0 0.0
      %789 = vmatpush.msra.mxu0 0.0
      %790 = vmatpush.msra.mxu0 0.0
      %791 = vmatpush.msra.mxu0 0.0
      %792 = vmatpush.msra.mxu0 0.0
      %793 = vmatpush.msra.mxu0 0.0
      %794 = vmatpush.msra.mxu0 0.0
      %795 = vmatpush.msra.mxu0 0.0
      %796 = vmatpush.msra.mxu0 0.0
      %797 = vmatpush.msra.mxu0 0.0
      %798 = vmatpush.msra.mxu0 0.0
      %799 = vmatpush.msra.mxu0 %v392
      %800 = vmatpush.msra.mxu0 %v384
      %801 = vmatpush.msra.mxu0 %v376
      %802 = vmatpush.msra.mxu0 %v368
      %803 = vmatmul.f32.gmra.mxu0 %v415
      %v804 = vpop.f32.mrf.mxu0
      %v805 = vadd.f32 %v402, %v804
      %806 = vmatmul.f32.gmra.mxu0 %v418
      %v807 = vpop.f32.mrf.mxu0
      %v808 = vadd.f32 %v402, %v807
      %809 = vmatmul.f32.gmra.mxu0 %v421
      %v810 = vpop.f32.mrf.mxu0
      %v811 = vadd.f32 %v402, %v810
      %812 = vmatmul.f32.gmra.mxu0 %v424
      %v813 = vpop.f32.mrf.mxu0
      %v814 = vadd.f32 %v402, %v813
      %815 = vmatmul.f32.gmra.mxu0 %v427
      %v816 = vpop.f32.mrf.mxu0
      %v817 = vadd.f32 %v402, %v816
      %818 = vmatmul.f32.gmra.mxu0 %v430
      %v819 = vpop.f32.mrf.mxu0
      %v820 = vadd.f32 %v402, %v819
      %821 = vmatmul.f32.gmra.mxu0 %v433
      %v822 = vpop.f32.mrf.mxu0
      %v823 = vadd.f32 %v402, %v822
      %824 = vmatmul.f32.gmra.mxu0 %v436
      %v825 = vpop.f32.mrf.mxu0
      %v826 = vadd.f32 %v402, %v825
      %827 = vmatmul.f32.gmra.mxu0 %v439
      %v828 = vpop.f32.mrf.mxu0
      %v829 = vadd.f32 %v402, %v828
      %830 = vmatmul.f32.gmra.mxu0 %v442
      %v831 = vpop.f32.mrf.mxu0
      %v832 = vadd.f32 %v402, %v831
      %833 = vmatmul.f32.gmra.mxu0 %v445
      %v834 = vpop.f32.mrf.mxu0
      %v835 = vadd.f32 %v402, %v834
      %836 = vmatmul.f32.gmra.mxu0 %v448
      %v837 = vpop.f32.mrf.mxu0
      %v838 = vadd.f32 %v402, %v837
      %839 = vmatmul.f32.gmra.mxu0 %v451
      %v840 = vpop.f32.mrf.mxu0
      %v841 = vadd.f32 %v402, %v840
      %842 = vmatmul.f32.gmra.mxu0 %v454
      %v843 = vpop.f32.mrf.mxu0
      %v844 = vadd.f32 %v402, %v843
      %845 = vmatmul.f32.gmra.mxu0 %v457
      %v846 = vpop.f32.mrf.mxu0
      %v847 = vadd.f32 %v402, %v846
      %848 = vmatmul.f32.gmra.mxu0 %v460
      %v849 = vpop.f32.mrf.mxu0
      %v850 = vadd.f32 %v402, %v849
      %851 = vdwg.mxu0
      %852 = vmatpush.msra.mxu0 0.0
      %853 = vmatpush.msra.mxu0 0.0
      %854 = vmatpush.msra.mxu0 0.0
      %855 = vmatpush.msra.mxu0 0.0
      %856 = vmatpush.msra.mxu0 0.0
      %857 = vmatpush.msra.mxu0 0.0
      %858 = vmatpush.msra.mxu0 0.0
      %859 = vmatpush.msra.mxu0 0.0
      %860 = vmatpush.msra.mxu0 0.0
      %861 = vmatpush.msra.mxu0 0.0
      %862 = vmatpush.msra.mxu0 0.0
      %863 = vmatpush.msra.mxu0 0.0
      %864 = vmatpush.msra.mxu0 %v393
      %865 = vmatpush.msra.mxu0 %v385
      %866 = vmatpush.msra.mxu0 %v377
      %867 = vmatpush.msra.mxu0 %v369
      %868 = vmatmul.f32.gmra.mxu0 %v415
      %v869 = vpop.f32.mrf.mxu0
      %v870 = vadd.f32 %v403, %v869
      %871 = vmatmul.f32.gmra.mxu0 %v418
      %v872 = vpop.f32.mrf.mxu0
      %v873 = vadd.f32 %v403, %v872
      %874 = vmatmul.f32.gmra.mxu0 %v421
      %v875 = vpop.f32.mrf.mxu0
      %v876 = vadd.f32 %v403, %v875
      %877 = vmatmul.f32.gmra.mxu0 %v424
      %v878 = vpop.f32.mrf.mxu0
      %v879 = vadd.f32 %v403, %v878
      %880 = vmatmul.f32.gmra.mxu0 %v427
      %v881 = vpop.f32.mrf.mxu0
      %v882 = vadd.f32 %v403, %v881
      %883 = vmatmul.f32.gmra.mxu0 %v430
      %v884 = vpop.f32.mrf.mxu0
      %v885 = vadd.f32 %v403, %v884
      %886 = vmatmul.f32.gmra.mxu0 %v433
      %v887 = vpop.f32.mrf.mxu0
      %v888 = vadd.f32 %v403, %v887
      %889 = vmatmul.f32.gmra.mxu0 %v436
      %v890 = vpop.f32.mrf.mxu0
      %v891 = vadd.f32 %v403, %v890
      %892 = vmatmul.f32.gmra.mxu0 %v439
      %v893 = vpop.f32.mrf.mxu0
      %v894 = vadd.f32 %v403, %v893
      %895 = vmatmul.f32.gmra.mxu0 %v442
      %v896 = vpop.f32.mrf.mxu0
      %v897 = vadd.f32 %v403, %v896
      %898 = vmatmul.f32.gmra.mxu0 %v445
      %v899 = vpop.f32.mrf.mxu0
      %v900 = vadd.f32 %v403, %v899
      %901 = vmatmul.f32.gmra.mxu0 %v448
      %v902 = vpop.f32.mrf.mxu0
      %v903 = vadd.f32 %v403, %v902
      %904 = vmatmul.f32.gmra.mxu0 %v451
      %v905 = vpop.f32.mrf.mxu0
      %v906 = vadd.f32 %v403, %v905
      %907 = vmatmul.f32.gmra.mxu0 %v454
      %v908 = vpop.f32.mrf.mxu0
      %v909 = vadd.f32 %v403, %v908
      %910 = vmatmul.f32.gmra.mxu0 %v457
      %v911 = vpop.f32.mrf.mxu0
      %v912 = vadd.f32 %v403, %v911
      %913 = vmatmul.f32.gmra.mxu0 %v460
      %v914 = vpop.f32.mrf.mxu0
      %v915 = vadd.f32 %v403, %v914
      %916 = vdwg.mxu0
      %917 = vmatpush.msra.mxu0 0.0
      %918 = vmatpush.msra.mxu0 0.0
      %919 = vmatpush.msra.mxu0 0.0
      %920 = vmatpush.msra.mxu0 0.0
      %921 = vmatpush.msra.mxu0 0.0
      %922 = vmatpush.msra.mxu0 0.0
      %923 = vmatpush.msra.mxu0 0.0
      %924 = vmatpush.msra.mxu0 0.0
      %925 = vmatpush.msra.mxu0 0.0
      %926 = vmatpush.msra.mxu0 0.0
      %927 = vmatpush.msra.mxu0 0.0
      %928 = vmatpush.msra.mxu0 0.0
      %929 = vmatpush.msra.mxu0 %v394
      %930 = vmatpush.msra.mxu0 %v386
      %931 = vmatpush.msra.mxu0 %v378
      %932 = vmatpush.msra.mxu0 %v370
      %933 = vmatmul.f32.gmra.mxu0 %v415
      %v934 = vpop.f32.mrf.mxu0
      %v935 = vadd.f32 %v404, %v934
      %936 = vmatmul.f32.gmra.mxu0 %v418
      %v937 = vpop.f32.mrf.mxu0
      %v938 = vadd.f32 %v404, %v937
      %939 = vmatmul.f32.gmra.mxu0 %v421
      %v940 = vpop.f32.mrf.mxu0
      %v941 = vadd.f32 %v404, %v940
      %942 = vmatmul.f32.gmra.mxu0 %v424
      %v943 = vpop.f32.mrf.mxu0
      %v944 = vadd.f32 %v404, %v943
      %945 = vmatmul.f32.gmra.mxu0 %v427
      %v946 = vpop.f32.mrf.mxu0
      %v947 = vadd.f32 %v404, %v946
      %948 = vmatmul.f32.gmra.mxu0 %v430
      %v949 = vpop.f32.mrf.mxu0
      %v950 = vadd.f32 %v404, %v949
      %951 = vmatmul.f32.gmra.mxu0 %v433
      %v952 = vpop.f32.mrf.mxu0
      %v953 = vadd.f32 %v404, %v952
      %954 = vmatmul.f32.gmra.mxu0 %v436
      %v955 = vpop.f32.mrf.mxu0
      %v956 = vadd.f32 %v404, %v955
      %957 = vmatmul.f32.gmra.mxu0 %v439
      %v958 = vpop.f32.mrf.mxu0
      %v959 = vadd.f32 %v404, %v958
      %960 = vmatmul.f32.gmra.mxu0 %v442
      %v961 = vpop.f32.mrf.mxu0
      %v962 = vadd.f32 %v404, %v961
      %963 = vmatmul.f32.gmra.mxu0 %v445
      %v964 = vpop.f32.mrf.mxu0
      %v965 = vadd.f32 %v404, %v964
      %966 = vmatmul.f32.gmra.mxu0 %v448
      %v967 = vpop.f32.mrf.mxu0
      %v968 = vadd.f32 %v404, %v967
      %969 = vmatmul.f32.gmra.mxu0 %v451
      %v970 = vpop.f32.mrf.mxu0
      %v971 = vadd.f32 %v404, %v970
      %972 = vmatmul.f32.gmra.mxu0 %v454
      %v973 = vpop.f32.mrf.mxu0
      %v974 = vadd.f32 %v404, %v973
      %975 = vmatmul.f32.gmra.mxu0 %v457
      %v976 = vpop.f32.mrf.mxu0
      %v977 = vadd.f32 %v404, %v976
      %978 = vmatmul.f32.gmra.mxu0 %v460
      %v979 = vpop.f32.mrf.mxu0
      %v980 = vadd.f32 %v404, %v979
      %981 = vdwg.mxu0
      %v982 = vld [vmem:[%s4] sm:$0xff]
      %v983 = vld [vmem:[%s4 + $0x8] sm:$0xff]
      %v984 = vld [vmem:[%s4 + $0x10] sm:$0xff]
      %v985 = vld [vmem:[%s4 + $0x18] sm:$0xff]
      %v986 = vld [vmem:[%s4 + $0x20] sm:$0xff]
      %v987 = vld [vmem:[%s4 + $0x28] sm:$0xff]
      %v988 = vld [vmem:[%s4 + $0x30] sm:$0xff]
      %v989 = vld [vmem:[%s4 + $0x38] sm:$0xff]
      %v990 = vld [vmem:[%s4 + $0x40] sm:$0xff]
      %v991 = vld [vmem:[%s4 + $0x48] sm:$0xff]
      %v992 = vld [vmem:[%s4 + $0x50] sm:$0xff]
      %v993 = vld [vmem:[%s4 + $0x58] sm:$0xff]
      %v994 = vld [vmem:[%s4 + $0x60] sm:$0xff]
      %v995 = vld [vmem:[%s4 + $0x68] sm:$0xff]
      %v996 = vld [vmem:[%s4 + $0x70] sm:$0xff]
      %v997 = vld [vmem:[%s4 + $0x78] sm:$0xff]
      %v998 = vld [vmem:[%s4 + $0x80] sm:$0xff]
      %v999 = vld [vmem:[%s4 + $0x88] sm:$0xff]
      %v1000 = vld [vmem:[%s4 + $0x90] sm:$0xff]
      %v1001 = vld [vmem:[%s4 + $0x98] sm:$0xff]
      %v1002 = vld [vmem:[%s4 + $0xa0] sm:$0xff]
      %v1003 = vld [vmem:[%s4 + $0xa8] sm:$0xff]
      %v1004 = vld [vmem:[%s4 + $0xb0] sm:$0xff]
      %v1005 = vld [vmem:[%s4 + $0xb8] sm:$0xff]
      %v1006 = vld [vmem:[%s4 + $0xc0] sm:$0xff]
      %v1007 = vld [vmem:[%s4 + $0xc8] sm:$0xff]
      %v1008 = vld [vmem:[%s4 + $0xd0] sm:$0xff]
      %v1009 = vld [vmem:[%s4 + $0xd8] sm:$0xff]
      %v1010 = vld [vmem:[%s4 + $0xe0] sm:$0xff]
      %v1011 = vld [vmem:[%s4 + $0xe8] sm:$0xff]
      %v1012 = vld [vmem:[%s4 + $0xf0] sm:$0xff]
      %v1013 = vld [vmem:[%s4 + $0xf8] sm:$0xff]
      %v1015 = vsel %vm413, %v347, 0
      %v1018 = vsel %vm413, %v348, 0
      %v1021 = vsel %vm413, %v349, 0
      %v1024 = vsel %vm413, %v350, 0
      %v1027 = vsel %vm413, %v351, 0
      %v1030 = vsel %vm413, %v352, 0
      %v1033 = vsel %vm413, %v353, 0
      %v1036 = vsel %vm413, %v354, 0
      %v1039 = vsel %vm413, %v355, 0
      %v1042 = vsel %vm413, %v356, 0
      %v1045 = vsel %vm413, %v357, 0
      %v1048 = vsel %vm413, %v358, 0
      %v1051 = vsel %vm413, %v359, 0
      %v1054 = vsel %vm413, %v360, 0
      %v1057 = vsel %vm413, %v361, 0
      %v1060 = vsel %vm413, %v362, 0
      %1062 = vmatpush.msra.mxu0 0.0
      %1063 = vmatpush.msra.mxu0 0.0
      %1064 = vmatpush.msra.mxu0 0.0
      %1065 = vmatpush.msra.mxu0 0.0
      %1066 = vmatpush.msra.mxu0 0.0
      %1067 = vmatpush.msra.mxu0 0.0
      %1068 = vmatpush.msra.mxu0 0.0
      %1069 = vmatpush.msra.mxu0 0.0
      %1070 = vmatpush.msra.mxu0 0.0
      %1071 = vmatpush.msra.mxu0 0.0
      %1072 = vmatpush.msra.mxu0 0.0
      %1073 = vmatpush.msra.mxu0 0.0
      %1074 = vmatpush.msra.mxu0 %v1006
      %1075 = vmatpush.msra.mxu0 %v998
      %1076 = vmatpush.msra.mxu0 %v990
      %1077 = vmatpush.msra.mxu0 %v982
      %1078 = vmatmul.f32.gmra.mxu0 %v1015
      %v1079 = vpop.f32.mrf.mxu0
      %v1080 = vadd.f32 0.0, %v1079
      %1081 = vmatmul.f32.gmra.mxu0 %v1018
      %v1082 = vpop.f32.mrf.mxu0
      %v1083 = vadd.f32 0.0, %v1082
      %1084 = vmatmul.f32.gmra.mxu0 %v1021
      %v1085 = vpop.f32.mrf.mxu0
      %v1086 = vadd.f32 0.0, %v1085
      %1087 = vmatmul.f32.gmra.mxu0 %v1024
      %v1088 = vpop.f32.mrf.mxu0
      %v1089 = vadd.f32 0.0, %v1088
      %1090 = vmatmul.f32.gmra.mxu0 %v1027
      %v1091 = vpop.f32.mrf.mxu0
      %v1092 = vadd.f32 0.0, %v1091
      %1093 = vmatmul.f32.gmra.mxu0 %v1030
      %v1094 = vpop.f32.mrf.mxu0
      %v1095 = vadd.f32 0.0, %v1094
      %1096 = vmatmul.f32.gmra.mxu0 %v1033
      %v1097 = vpop.f32.mrf.mxu0
      %v1098 = vadd.f32 0.0, %v1097
      %1099 = vmatmul.f32.gmra.mxu0 %v1036
      %v1100 = vpop.f32.mrf.mxu0
      %v1101 = vadd.f32 0.0, %v1100
      %1102 = vmatmul.f32.gmra.mxu0 %v1039
      %v1103 = vpop.f32.mrf.mxu0
      %v1104 = vadd.f32 0.0, %v1103
      %1105 = vmatmul.f32.gmra.mxu0 %v1042
      %v1106 = vpop.f32.mrf.mxu0
      %v1107 = vadd.f32 0.0, %v1106
      %1108 = vmatmul.f32.gmra.mxu0 %v1045
      %v1109 = vpop.f32.mrf.mxu0
      %v1110 = vadd.f32 0.0, %v1109
      %1111 = vmatmul.f32.gmra.mxu0 %v1048
      %v1112 = vpop.f32.mrf.mxu0
      %v1113 = vadd.f32 0.0, %v1112
      %1114 = vmatmul.f32.gmra.mxu0 %v1051
      %v1115 = vpop.f32.mrf.mxu0
      %v1116 = vadd.f32 0.0, %v1115
      %1117 = vmatmul.f32.gmra.mxu0 %v1054
      %v1118 = vpop.f32.mrf.mxu0
      %v1119 = vadd.f32 0.0, %v1118
      %1120 = vmatmul.f32.gmra.mxu0 %v1057
      %v1121 = vpop.f32.mrf.mxu0
      %v1122 = vadd.f32 0.0, %v1121
      %1123 = vmatmul.f32.gmra.mxu0 %v1060
      %v1124 = vpop.f32.mrf.mxu0
      %v1125 = vadd.f32 0.0, %v1124
      %1126 = vdwg.mxu0
      %1127 = vmatpush.msra.mxu0 0.0
      %1128 = vmatpush.msra.mxu0 0.0
      %1129 = vmatpush.msra.mxu0 0.0
      %1130 = vmatpush.msra.mxu0 0.0
      %1131 = vmatpush.msra.mxu0 0.0
      %1132 = vmatpush.msra.mxu0 0.0
      %1133 = vmatpush.msra.mxu0 0.0
      %1134 = vmatpush.msra.mxu0 0.0
      %1135 = vmatpush.msra.mxu0 0.0
      %1136 = vmatpush.msra.mxu0 0.0
      %1137 = vmatpush.msra.mxu0 0.0
      %1138 = vmatpush.msra.mxu0 0.0
      %1139 = vmatpush.msra.mxu0 %v1007
      %1140 = vmatpush.msra.mxu0 %v999
      %1141 = vmatpush.msra.mxu0 %v991
      %1142 = vmatpush.msra.mxu0 %v983
      %1143 = vmatmul.f32.gmra.mxu0 %v1015
      %v1144 = vpop.f32.mrf.mxu0
      %v1145 = vadd.f32 0.0, %v1144
      %1146 = vmatmul.f32.gmra.mxu0 %v1018
      %v1147 = vpop.f32.mrf.mxu0
      %v1148 = vadd.f32 0.0, %v1147
      %1149 = vmatmul.f32.gmra.mxu0 %v1021
      %v1150 = vpop.f32.mrf.mxu0
      %v1151 = vadd.f32 0.0, %v1150
      %1152 = vmatmul.f32.gmra.mxu0 %v1024
      %v1153 = vpop.f32.mrf.mxu0
      %v1154 = vadd.f32 0.0, %v1153
      %1155 = vmatmul.f32.gmra.mxu0 %v1027
      %v1156 = vpop.f32.mrf.mxu0
      %v1157 = vadd.f32 0.0, %v1156
      %1158 = vmatmul.f32.gmra.mxu0 %v1030
      %v1159 = vpop.f32.mrf.mxu0
      %v1160 = vadd.f32 0.0, %v1159
      %1161 = vmatmul.f32.gmra.mxu0 %v1033
      %v1162 = vpop.f32.mrf.mxu0
      %v1163 = vadd.f32 0.0, %v1162
      %1164 = vmatmul.f32.gmra.mxu0 %v1036
      %v1165 = vpop.f32.mrf.mxu0
      %v1166 = vadd.f32 0.0, %v1165
      %1167 = vmatmul.f32.gmra.mxu0 %v1039
      %v1168 = vpop.f32.mrf.mxu0
      %v1169 = vadd.f32 0.0, %v1168
      %1170 = vmatmul.f32.gmra.mxu0 %v1042
      %v1171 = vpop.f32.mrf.mxu0
      %v1172 = vadd.f32 0.0, %v1171
      %1173 = vmatmul.f32.gmra.mxu0 %v1045
      %v1174 = vpop.f32.mrf.mxu0
      %v1175 = vadd.f32 0.0, %v1174
      %1176 = vmatmul.f32.gmra.mxu0 %v1048
      %v1177 = vpop.f32.mrf.mxu0
      %v1178 = vadd.f32 0.0, %v1177
      %1179 = vmatmul.f32.gmra.mxu0 %v1051
      %v1180 = vpop.f32.mrf.mxu0
      %v1181 = vadd.f32 0.0, %v1180
      %1182 = vmatmul.f32.gmra.mxu0 %v1054
      %v1183 = vpop.f32.mrf.mxu0
      %v1184 = vadd.f32 0.0, %v1183
      %1185 = vmatmul.f32.gmra.mxu0 %v1057
      %v1186 = vpop.f32.mrf.mxu0
      %v1187 = vadd.f32 0.0, %v1186
      %1188 = vmatmul.f32.gmra.mxu0 %v1060
      %v1189 = vpop.f32.mrf.mxu0
      %v1190 = vadd.f32 0.0, %v1189
      %1191 = vdwg.mxu0
      %1192 = vmatpush.msra.mxu0 0.0
      %1193 = vmatpush.msra.mxu0 0.0
      %1194 = vmatpush.msra.mxu0 0.0
      %1195 = vmatpush.msra.mxu0 0.0
      %1196 = vmatpush.msra.mxu0 0.0
      %1197 = vmatpush.msra.mxu0 0.0
      %1198 = vmatpush.msra.mxu0 0.0
      %1199 = vmatpush.msra.mxu0 0.0
      %1200 = vmatpush.msra.mxu0 0.0
      %1201 = vmatpush.msra.mxu0 0.0
      %1202 = vmatpush.msra.mxu0 0.0
      %1203 = vmatpush.msra.mxu0 0.0
      %1204 = vmatpush.msra.mxu0 %v1008
      %1205 = vmatpush.msra.mxu0 %v1000
      %1206 = vmatpush.msra.mxu0 %v992
      %1207 = vmatpush.msra.mxu0 %v984
      %1208 = vmatmul.f32.gmra.mxu0 %v1015
      %v1209 = vpop.f32.mrf.mxu0
      %v1210 = vadd.f32 0.0, %v1209
      %1211 = vmatmul.f32.gmra.mxu0 %v1018
      %v1212 = vpop.f32.mrf.mxu0
      %v1213 = vadd.f32 0.0, %v1212
      %1214 = vmatmul.f32.gmra.mxu0 %v1021
      %v1215 = vpop.f32.mrf.mxu0
      %v1216 = vadd.f32 0.0, %v1215
      %1217 = vmatmul.f32.gmra.mxu0 %v1024
      %v1218 = vpop.f32.mrf.mxu0
      %v1219 = vadd.f32 0.0, %v1218
      %1220 = vmatmul.f32.gmra.mxu0 %v1027
      %v1221 = vpop.f32.mrf.mxu0
      %v1222 = vadd.f32 0.0, %v1221
      %1223 = vmatmul.f32.gmra.mxu0 %v1030
      %v1224 = vpop.f32.mrf.mxu0
      %v1225 = vadd.f32 0.0, %v1224
      %1226 = vmatmul.f32.gmra.mxu0 %v1033
      %v1227 = vpop.f32.mrf.mxu0
      %v1228 = vadd.f32 0.0, %v1227
      %1229 = vmatmul.f32.gmra.mxu0 %v1036
      %v1230 = vpop.f32.mrf.mxu0
      %v1231 = vadd.f32 0.0, %v1230
      %1232 = vmatmul.f32.gmra.mxu0 %v1039
      %v1233 = vpop.f32.mrf.mxu0
      %v1234 = vadd.f32 0.0, %v1233
      %1235 = vmatmul.f32.gmra.mxu0 %v1042
      %v1236 = vpop.f32.mrf.mxu0
      %v1237 = vadd.f32 0.0, %v1236
      %1238 = vmatmul.f32.gmra.mxu0 %v1045
      %v1239 = vpop.f32.mrf.mxu0
      %v1240 = vadd.f32 0.0, %v1239
      %1241 = vmatmul.f32.gmra.mxu0 %v1048
      %v1242 = vpop.f32.mrf.mxu0
      %v1243 = vadd.f32 0.0, %v1242
      %1244 = vmatmul.f32.gmra.mxu0 %v1051
      %v1245 = vpop.f32.mrf.mxu0
      %v1246 = vadd.f32 0.0, %v1245
      %1247 = vmatmul.f32.gmra.mxu0 %v1054
      %v1248 = vpop.f32.mrf.mxu0
      %v1249 = vadd.f32 0.0, %v1248
      %1250 = vmatmul.f32.gmra.mxu0 %v1057
      %v1251 = vpop.f32.mrf.mxu0
      %v1252 = vadd.f32 0.0, %v1251
      %1253 = vmatmul.f32.gmra.mxu0 %v1060
      %v1254 = vpop.f32.mrf.mxu0
      %v1255 = vadd.f32 0.0, %v1254
      %1256 = vdwg.mxu0
      %1257 = vmatpush.msra.mxu0 0.0
      %1258 = vmatpush.msra.mxu0 0.0
      %1259 = vmatpush.msra.mxu0 0.0
      %1260 = vmatpush.msra.mxu0 0.0
      %1261 = vmatpush.msra.mxu0 0.0
      %1262 = vmatpush.msra.mxu0 0.0
      %1263 = vmatpush.msra.mxu0 0.0
      %1264 = vmatpush.msra.mxu0 0.0
      %1265 = vmatpush.msra.mxu0 0.0
      %1266 = vmatpush.msra.mxu0 0.0
      %1267 = vmatpush.msra.mxu0 0.0
      %1268 = vmatpush.msra.mxu0 0.0
      %1269 = vmatpush.msra.mxu0 %v1009
      %1270 = vmatpush.msra.mxu0 %v1001
      %1271 = vmatpush.msra.mxu0 %v993
      %1272 = vmatpush.msra.mxu0 %v985
      %1273 = vmatmul.f32.gmra.mxu0 %v1015
      %v1274 = vpop.f32.mrf.mxu0
      %v1275 = vadd.f32 0.0, %v1274
      %1276 = vmatmul.f32.gmra.mxu0 %v1018
      %v1277 = vpop.f32.mrf.mxu0
      %v1278 = vadd.f32 0.0, %v1277
      %1279 = vmatmul.f32.gmra.mxu0 %v1021
      %v1280 = vpop.f32.mrf.mxu0
      %v1281 = vadd.f32 0.0, %v1280
      %1282 = vmatmul.f32.gmra.mxu0 %v1024
      %v1283 = vpop.f32.mrf.mxu0
      %v1284 = vadd.f32 0.0, %v1283
      %1285 = vmatmul.f32.gmra.mxu0 %v1027
      %v1286 = vpop.f32.mrf.mxu0
      %v1287 = vadd.f32 0.0, %v1286
      %1288 = vmatmul.f32.gmra.mxu0 %v1030
      %v1289 = vpop.f32.mrf.mxu0
      %v1290 = vadd.f32 0.0, %v1289
      %1291 = vmatmul.f32.gmra.mxu0 %v1033
      %v1292 = vpop.f32.mrf.mxu0
      %v1293 = vadd.f32 0.0, %v1292
      %1294 = vmatmul.f32.gmra.mxu0 %v1036
      %v1295 = vpop.f32.mrf.mxu0
      %v1296 = vadd.f32 0.0, %v1295
      %1297 = vmatmul.f32.gmra.mxu0 %v1039
      %v1298 = vpop.f32.mrf.mxu0
      %v1299 = vadd.f32 0.0, %v1298
      %1300 = vmatmul.f32.gmra.mxu0 %v1042
      %v1301 = vpop.f32.mrf.mxu0
      %v1302 = vadd.f32 0.0, %v1301
      %1303 = vmatmul.f32.gmra.mxu0 %v1045
      %v1304 = vpop.f32.mrf.mxu0
      %v1305 = vadd.f32 0.0, %v1304
      %1306 = vmatmul.f32.gmra.mxu0 %v1048
      %v1307 = vpop.f32.mrf.mxu0
      %v1308 = vadd.f32 0.0, %v1307
      %1309 = vmatmul.f32.gmra.mxu0 %v1051
      %v1310 = vpop.f32.mrf.mxu0
      %v1311 = vadd.f32 0.0, %v1310
      %1312 = vmatmul.f32.gmra.mxu0 %v1054
      %v1313 = vpop.f32.mrf.mxu0
      %v1314 = vadd.f32 0.0, %v1313
      %1315 = vmatmul.f32.gmra.mxu0 %v1057
      %v1316 = vpop.f32.mrf.mxu0
      %v1317 = vadd.f32 0.0, %v1316
      %1318 = vmatmul.f32.gmra.mxu0 %v1060
      %v1319 = vpop.f32.mrf.mxu0
      %v1320 = vadd.f32 0.0, %v1319
      %1321 = vdwg.mxu0
      %1322 = vmatpush.msra.mxu0 0.0
      %1323 = vmatpush.msra.mxu0 0.0
      %1324 = vmatpush.msra.mxu0 0.0
      %1325 = vmatpush.msra.mxu0 0.0
      %1326 = vmatpush.msra.mxu0 0.0
      %1327 = vmatpush.msra.mxu0 0.0
      %1328 = vmatpush.msra.mxu0 0.0
      %1329 = vmatpush.msra.mxu0 0.0
      %1330 = vmatpush.msra.mxu0 0.0
      %1331 = vmatpush.msra.mxu0 0.0
      %1332 = vmatpush.msra.mxu0 0.0
      %1333 = vmatpush.msra.mxu0 0.0
      %1334 = vmatpush.msra.mxu0 %v1010
      %1335 = vmatpush.msra.mxu0 %v1002
      %1336 = vmatpush.msra.mxu0 %v994
      %1337 = vmatpush.msra.mxu0 %v986
      %1338 = vmatmul.f32.gmra.mxu0 %v1015
      %v1339 = vpop.f32.mrf.mxu0
      %v1340 = vadd.f32 0.0, %v1339
      %1341 = vmatmul.f32.gmra.mxu0 %v1018
      %v1342 = vpop.f32.mrf.mxu0
      %v1343 = vadd.f32 0.0, %v1342
      %1344 = vmatmul.f32.gmra.mxu0 %v1021
      %v1345 = vpop.f32.mrf.mxu0
      %v1346 = vadd.f32 0.0, %v1345
      %1347 = vmatmul.f32.gmra.mxu0 %v1024
      %v1348 = vpop.f32.mrf.mxu0
      %v1349 = vadd.f32 0.0, %v1348
      %1350 = vmatmul.f32.gmra.mxu0 %v1027
      %v1351 = vpop.f32.mrf.mxu0
      %v1352 = vadd.f32 0.0, %v1351
      %1353 = vmatmul.f32.gmra.mxu0 %v1030
      %v1354 = vpop.f32.mrf.mxu0
      %v1355 = vadd.f32 0.0, %v1354
      %1356 = vmatmul.f32.gmra.mxu0 %v1033
      %v1357 = vpop.f32.mrf.mxu0
      %v1358 = vadd.f32 0.0, %v1357
      %1359 = vmatmul.f32.gmra.mxu0 %v1036
      %v1360 = vpop.f32.mrf.mxu0
      %v1361 = vadd.f32 0.0, %v1360
      %1362 = vmatmul.f32.gmra.mxu0 %v1039
      %v1363 = vpop.f32.mrf.mxu0
      %v1364 = vadd.f32 0.0, %v1363
      %1365 = vmatmul.f32.gmra.mxu0 %v1042
      %v1366 = vpop.f32.mrf.mxu0
      %v1367 = vadd.f32 0.0, %v1366
      %1368 = vmatmul.f32.gmra.mxu0 %v1045
      %v1369 = vpop.f32.mrf.mxu0
      %v1370 = vadd.f32 0.0, %v1369
      %1371 = vmatmul.f32.gmra.mxu0 %v1048
      %v1372 = vpop.f32.mrf.mxu0
      %v1373 = vadd.f32 0.0, %v1372
      %1374 = vmatmul.f32.gmra.mxu0 %v1051
      %v1375 = vpop.f32.mrf.mxu0
      %v1376 = vadd.f32 0.0, %v1375
      %1377 = vmatmul.f32.gmra.mxu0 %v1054
      %v1378 = vpop.f32.mrf.mxu0
      %v1379 = vadd.f32 0.0, %v1378
      %1380 = vmatmul.f32.gmra.mxu0 %v1057
      %v1381 = vpop.f32.mrf.mxu0
      %v1382 = vadd.f32 0.0, %v1381
      %1383 = vmatmul.f32.gmra.mxu0 %v1060
      %v1384 = vpop.f32.mrf.mxu0
      %v1385 = vadd.f32 0.0, %v1384
      %1386 = vdwg.mxu0
      %1387 = vmatpush.msra.mxu0 0.0
      %1388 = vmatpush.msra.mxu0 0.0
      %1389 = vmatpush.msra.mxu0 0.0
      %1390 = vmatpush.msra.mxu0 0.0
      %1391 = vmatpush.msra.mxu0 0.0
      %1392 = vmatpush.msra.mxu0 0.0
      %1393 = vmatpush.msra.mxu0 0.0
      %1394 = vmatpush.msra.mxu0 0.0
      %1395 = vmatpush.msra.mxu0 0.0
      %1396 = vmatpush.msra.mxu0 0.0
      %1397 = vmatpush.msra.mxu0 0.0
      %1398 = vmatpush.msra.mxu0 0.0
      %1399 = vmatpush.msra.mxu0 %v1011
      %1400 = vmatpush.msra.mxu0 %v1003
      %1401 = vmatpush.msra.mxu0 %v995
      %1402 = vmatpush.msra.mxu0 %v987
      %1403 = vmatmul.f32.gmra.mxu0 %v1015
      %v1404 = vpop.f32.mrf.mxu0
      %v1405 = vadd.f32 0.0, %v1404
      %1406 = vmatmul.f32.gmra.mxu0 %v1018
      %v1407 = vpop.f32.mrf.mxu0
      %v1408 = vadd.f32 0.0, %v1407
      %1409 = vmatmul.f32.gmra.mxu0 %v1021
      %v1410 = vpop.f32.mrf.mxu0
      %v1411 = vadd.f32 0.0, %v1410
      %1412 = vmatmul.f32.gmra.mxu0 %v1024
      %v1413 = vpop.f32.mrf.mxu0
      %v1414 = vadd.f32 0.0, %v1413
      %1415 = vmatmul.f32.gmra.mxu0 %v1027
      %v1416 = vpop.f32.mrf.mxu0
      %v1417 = vadd.f32 0.0, %v1416
      %1418 = vmatmul.f32.gmra.mxu0 %v1030
      %v1419 = vpop.f32.mrf.mxu0
      %v1420 = vadd.f32 0.0, %v1419
      %1421 = vmatmul.f32.gmra.mxu0 %v1033
      %v1422 = vpop.f32.mrf.mxu0
      %v1423 = vadd.f32 0.0, %v1422
      %1424 = vmatmul.f32.gmra.mxu0 %v1036
      %v1425 = vpop.f32.mrf.mxu0
      %v1426 = vadd.f32 0.0, %v1425
      %1427 = vmatmul.f32.gmra.mxu0 %v1039
      %v1428 = vpop.f32.mrf.mxu0
      %v1429 = vadd.f32 0.0, %v1428
      %1430 = vmatmul.f32.gmra.mxu0 %v1042
      %v1431 = vpop.f32.mrf.mxu0
      %v1432 = vadd.f32 0.0, %v1431
      %1433 = vmatmul.f32.gmra.mxu0 %v1045
      %v1434 = vpop.f32.mrf.mxu0
      %v1435 = vadd.f32 0.0, %v1434
      %1436 = vmatmul.f32.gmra.mxu0 %v1048
      %v1437 = vpop.f32.mrf.mxu0
      %v1438 = vadd.f32 0.0, %v1437
      %1439 = vmatmul.f32.gmra.mxu0 %v1051
      %v1440 = vpop.f32.mrf.mxu0
      %v1441 = vadd.f32 0.0, %v1440
      %1442 = vmatmul.f32.gmra.mxu0 %v1054
      %v1443 = vpop.f32.mrf.mxu0
      %v1444 = vadd.f32 0.0, %v1443
      %1445 = vmatmul.f32.gmra.mxu0 %v1057
      %v1446 = vpop.f32.mrf.mxu0
      %v1447 = vadd.f32 0.0, %v1446
      %1448 = vmatmul.f32.gmra.mxu0 %v1060
      %v1449 = vpop.f32.mrf.mxu0
      %v1450 = vadd.f32 0.0, %v1449
      %1451 = vdwg.mxu0
      %1452 = vmatpush.msra.mxu0 0.0
      %1453 = vmatpush.msra.mxu0 0.0
      %1454 = vmatpush.msra.mxu0 0.0
      %1455 = vmatpush.msra.mxu0 0.0
      %1456 = vmatpush.msra.mxu0 0.0
      %1457 = vmatpush.msra.mxu0 0.0
      %1458 = vmatpush.msra.mxu0 0.0
      %1459 = vmatpush.msra.mxu0 0.0
      %1460 = vmatpush.msra.mxu0 0.0
      %1461 = vmatpush.msra.mxu0 0.0
      %1462 = vmatpush.msra.mxu0 0.0
      %1463 = vmatpush.msra.mxu0 0.0
      %1464 = vmatpush.msra.mxu0 %v1012
      %1465 = vmatpush.msra.mxu0 %v1004
      %1466 = vmatpush.msra.mxu0 %v996
      %1467 = vmatpush.msra.mxu0 %v988
      %1468 = vmatmul.f32.gmra.mxu0 %v1015
      %v1469 = vpop.f32.mrf.mxu0
      %v1470 = vadd.f32 0.0, %v1469
      %1471 = vmatmul.f32.gmra.mxu0 %v1018
      %v1472 = vpop.f32.mrf.mxu0
      %v1473 = vadd.f32 0.0, %v1472
      %1474 = vmatmul.f32.gmra.mxu0 %v1021
      %v1475 = vpop.f32.mrf.mxu0
      %v1476 = vadd.f32 0.0, %v1475
      %1477 = vmatmul.f32.gmra.mxu0 %v1024
      %v1478 = vpop.f32.mrf.mxu0
      %v1479 = vadd.f32 0.0, %v1478
      %1480 = vmatmul.f32.gmra.mxu0 %v1027
      %v1481 = vpop.f32.mrf.mxu0
      %v1482 = vadd.f32 0.0, %v1481
      %1483 = vmatmul.f32.gmra.mxu0 %v1030
      %v1484 = vpop.f32.mrf.mxu0
      %v1485 = vadd.f32 0.0, %v1484
      %1486 = vmatmul.f32.gmra.mxu0 %v1033
      %v1487 = vpop.f32.mrf.mxu0
      %v1488 = vadd.f32 0.0, %v1487
      %1489 = vmatmul.f32.gmra.mxu0 %v1036
      %v1490 = vpop.f32.mrf.mxu0
      %v1491 = vadd.f32 0.0, %v1490
      %1492 = vmatmul.f32.gmra.mxu0 %v1039
      %v1493 = vpop.f32.mrf.mxu0
      %v1494 = vadd.f32 0.0, %v1493
      %1495 = vmatmul.f32.gmra.mxu0 %v1042
      %v1496 = vpop.f32.mrf.mxu0
      %v1497 = vadd.f32 0.0, %v1496
      %1498 = vmatmul.f32.gmra.mxu0 %v1045
      %v1499 = vpop.f32.mrf.mxu0
      %v1500 = vadd.f32 0.0, %v1499
      %1501 = vmatmul.f32.gmra.mxu0 %v1048
      %v1502 = vpop.f32.mrf.mxu0
      %v1503 = vadd.f32 0.0, %v1502
      %1504 = vmatmul.f32.gmra.mxu0 %v1051
      %v1505 = vpop.f32.mrf.mxu0
      %v1506 = vadd.f32 0.0, %v1505
      %1507 = vmatmul.f32.gmra.mxu0 %v1054
      %v1508 = vpop.f32.mrf.mxu0
      %v1509 = vadd.f32 0.0, %v1508
      %1510 = vmatmul.f32.gmra.mxu0 %v1057
      %v1511 = vpop.f32.mrf.mxu0
      %v1512 = vadd.f32 0.0, %v1511
      %1513 = vmatmul.f32.gmra.mxu0 %v1060
      %v1514 = vpop.f32.mrf.mxu0
      %v1515 = vadd.f32 0.0, %v1514
      %1516 = vdwg.mxu0
      %1517 = vmatpush.msra.mxu0 0.0
      %1518 = vmatpush.msra.mxu0 0.0
      %1519 = vmatpush.msra.mxu0 0.0
      %1520 = vmatpush.msra.mxu0 0.0
      %1521 = vmatpush.msra.mxu0 0.0
      %1522 = vmatpush.msra.mxu0 0.0
      %1523 = vmatpush.msra.mxu0 0.0
      %1524 = vmatpush.msra.mxu0 0.0
      %1525 = vmatpush.msra.mxu0 0.0
      %1526 = vmatpush.msra.mxu0 0.0
      %1527 = vmatpush.msra.mxu0 0.0
      %1528 = vmatpush.msra.mxu0 0.0
      %1529 = vmatpush.msra.mxu0 %v1013
      %1530 = vmatpush.msra.mxu0 %v1005
      %1531 = vmatpush.msra.mxu0 %v997
      %1532 = vmatpush.msra.mxu0 %v989
      %1533 = vmatmul.f32.gmra.mxu0 %v1015
      %v1534 = vpop.f32.mrf.mxu0
      %v1535 = vadd.f32 0.0, %v1534
      %1536 = vmatmul.f32.gmra.mxu0 %v1018
      %v1537 = vpop.f32.mrf.mxu0
      %v1538 = vadd.f32 0.0, %v1537
      %1539 = vmatmul.f32.gmra.mxu0 %v1021
      %v1540 = vpop.f32.mrf.mxu0
      %v1541 = vadd.f32 0.0, %v1540
      %1542 = vmatmul.f32.gmra.mxu0 %v1024
      %v1543 = vpop.f32.mrf.mxu0
      %v1544 = vadd.f32 0.0, %v1543
      %1545 = vmatmul.f32.gmra.mxu0 %v1027
      %v1546 = vpop.f32.mrf.mxu0
      %v1547 = vadd.f32 0.0, %v1546
      %1548 = vmatmul.f32.gmra.mxu0 %v1030
      %v1549 = vpop.f32.mrf.mxu0
      %v1550 = vadd.f32 0.0, %v1549
      %1551 = vmatmul.f32.gmra.mxu0 %v1033
      %v1552 = vpop.f32.mrf.mxu0
      %v1553 = vadd.f32 0.0, %v1552
      %1554 = vmatmul.f32.gmra.mxu0 %v1036
      %v1555 = vpop.f32.mrf.mxu0
      %v1556 = vadd.f32 0.0, %v1555
      %1557 = vmatmul.f32.gmra.mxu0 %v1039
      %v1558 = vpop.f32.mrf.mxu0
      %v1559 = vadd.f32 0.0, %v1558
      %1560 = vmatmul.f32.gmra.mxu0 %v1042
      %v1561 = vpop.f32.mrf.mxu0
      %v1562 = vadd.f32 0.0, %v1561
      %1563 = vmatmul.f32.gmra.mxu0 %v1045
      %v1564 = vpop.f32.mrf.mxu0
      %v1565 = vadd.f32 0.0, %v1564
      %1566 = vmatmul.f32.gmra.mxu0 %v1048
      %v1567 = vpop.f32.mrf.mxu0
      %v1568 = vadd.f32 0.0, %v1567
      %1569 = vmatmul.f32.gmra.mxu0 %v1051
      %v1570 = vpop.f32.mrf.mxu0
      %v1571 = vadd.f32 0.0, %v1570
      %1572 = vmatmul.f32.gmra.mxu0 %v1054
      %v1573 = vpop.f32.mrf.mxu0
      %v1574 = vadd.f32 0.0, %v1573
      %1575 = vmatmul.f32.gmra.mxu0 %v1057
      %v1576 = vpop.f32.mrf.mxu0
      %v1577 = vadd.f32 0.0, %v1576
      %1578 = vmatmul.f32.gmra.mxu0 %v1060
      %v1579 = vpop.f32.mrf.mxu0
      %v1580 = vadd.f32 0.0, %v1579
      %1581 = vdwg.mxu0
      %v1582 = vmul.f32 %v480, %v1080
      %v1583 = vmul.f32 %v545, %v1145
      %v1584 = vmul.f32 %v610, %v1210
      %v1585 = vmul.f32 %v675, %v1275
      %v1586 = vmul.f32 %v740, %v1340
      %v1587 = vmul.f32 %v805, %v1405
      %v1588 = vmul.f32 %v870, %v1470
      %v1589 = vmul.f32 %v935, %v1535
      %v1590 = vmul.f32 %v483, %v1083
      %v1591 = vmul.f32 %v548, %v1148
      %v1592 = vmul.f32 %v613, %v1213
      %v1593 = vmul.f32 %v678, %v1278
      %v1594 = vmul.f32 %v743, %v1343
      %v1595 = vmul.f32 %v808, %v1408
      %v1596 = vmul.f32 %v873, %v1473
      %v1597 = vmul.f32 %v938, %v1538
      %v1598 = vmul.f32 %v486, %v1086
      %v1599 = vmul.f32 %v551, %v1151
      %v1600 = vmul.f32 %v616, %v1216
      %v1601 = vmul.f32 %v681, %v1281
      %v1602 = vmul.f32 %v746, %v1346
      %v1603 = vmul.f32 %v811, %v1411
      %v1604 = vmul.f32 %v876, %v1476
      %v1605 = vmul.f32 %v941, %v1541
      %v1606 = vmul.f32 %v489, %v1089
      %v1607 = vmul.f32 %v554, %v1154
      %v1608 = vmul.f32 %v619, %v1219
      %v1609 = vmul.f32 %v684, %v1284
      %v1610 = vmul.f32 %v749, %v1349
      %v1611 = vmul.f32 %v814, %v1414
      %v1612 = vmul.f32 %v879, %v1479
      %v1613 = vmul.f32 %v944, %v1544
      %v1614 = vmul.f32 %v492, %v1092
      %v1615 = vmul.f32 %v557, %v1157
      %v1616 = vmul.f32 %v622, %v1222
      %v1617 = vmul.f32 %v687, %v1287
      %v1618 = vmul.f32 %v752, %v1352
      %v1619 = vmul.f32 %v817, %v1417
      %v1620 = vmul.f32 %v882, %v1482
      %v1621 = vmul.f32 %v947, %v1547
      %v1622 = vmul.f32 %v495, %v1095
      %v1623 = vmul.f32 %v560, %v1160
      %v1624 = vmul.f32 %v625, %v1225
      %v1625 = vmul.f32 %v690, %v1290
      %v1626 = vmul.f32 %v755, %v1355
      %v1627 = vmul.f32 %v820, %v1420
      %v1628 = vmul.f32 %v885, %v1485
      %v1629 = vmul.f32 %v950, %v1550
      %v1630 = vmul.f32 %v498, %v1098
      %v1631 = vmul.f32 %v563, %v1163
      %v1632 = vmul.f32 %v628, %v1228
      %v1633 = vmul.f32 %v693, %v1293
      %v1634 = vmul.f32 %v758, %v1358
      %v1635 = vmul.f32 %v823, %v1423
      %v1636 = vmul.f32 %v888, %v1488
      %v1637 = vmul.f32 %v953, %v1553
      %v1638 = vmul.f32 %v501, %v1101
      %v1639 = vmul.f32 %v566, %v1166
      %v1640 = vmul.f32 %v631, %v1231
      %v1641 = vmul.f32 %v696, %v1296
      %v1642 = vmul.f32 %v761, %v1361
      %v1643 = vmul.f32 %v826, %v1426
      %v1644 = vmul.f32 %v891, %v1491
      %v1645 = vmul.f32 %v956, %v1556
      %v1646 = vmul.f32 %v504, %v1104
      %v1647 = vmul.f32 %v569, %v1169
      %v1648 = vmul.f32 %v634, %v1234
      %v1649 = vmul.f32 %v699, %v1299
      %v1650 = vmul.f32 %v764, %v1364
      %v1651 = vmul.f32 %v829, %v1429
      %v1652 = vmul.f32 %v894, %v1494
      %v1653 = vmul.f32 %v959, %v1559
      %v1654 = vmul.f32 %v507, %v1107
      %v1655 = vmul.f32 %v572, %v1172
      %v1656 = vmul.f32 %v637, %v1237
      %v1657 = vmul.f32 %v702, %v1302
      %v1658 = vmul.f32 %v767, %v1367
      %v1659 = vmul.f32 %v832, %v1432
      %v1660 = vmul.f32 %v897, %v1497
      %v1661 = vmul.f32 %v962, %v1562
      %v1662 = vmul.f32 %v510, %v1110
      %v1663 = vmul.f32 %v575, %v1175
      %v1664 = vmul.f32 %v640, %v1240
      %v1665 = vmul.f32 %v705, %v1305
      %v1666 = vmul.f32 %v770, %v1370
      %v1667 = vmul.f32 %v835, %v1435
      %v1668 = vmul.f32 %v900, %v1500
      %v1669 = vmul.f32 %v965, %v1565
      %v1670 = vmul.f32 %v513, %v1113
      %v1671 = vmul.f32 %v578, %v1178
      %v1672 = vmul.f32 %v643, %v1243
      %v1673 = vmul.f32 %v708, %v1308
      %v1674 = vmul.f32 %v773, %v1373
      %v1675 = vmul.f32 %v838, %v1438
      %v1676 = vmul.f32 %v903, %v1503
      %v1677 = vmul.f32 %v968, %v1568
      %v1678 = vmul.f32 %v516, %v1116
      %v1679 = vmul.f32 %v581, %v1181
      %v1680 = vmul.f32 %v646, %v1246
      %v1681 = vmul.f32 %v711, %v1311
      %v1682 = vmul.f32 %v776, %v1376
      %v1683 = vmul.f32 %v841, %v1441
      %v1684 = vmul.f32 %v906, %v1506
      %v1685 = vmul.f32 %v971, %v1571
      %v1686 = vmul.f32 %v519, %v1119
      %v1687 = vmul.f32 %v584, %v1184
      %v1688 = vmul.f32 %v649, %v1249
      %v1689 = vmul.f32 %v714, %v1314
      %v1690 = vmul.f32 %v779, %v1379
      %v1691 = vmul.f32 %v844, %v1444
      %v1692 = vmul.f32 %v909, %v1509
      %v1693 = vmul.f32 %v974, %v1574
      %v1694 = vmul.f32 %v522, %v1122
      %v1695 = vmul.f32 %v587, %v1187
      %v1696 = vmul.f32 %v652, %v1252
      %v1697 = vmul.f32 %v717, %v1317
      %v1698 = vmul.f32 %v782, %v1382
      %v1699 = vmul.f32 %v847, %v1447
      %v1700 = vmul.f32 %v912, %v1512
      %v1701 = vmul.f32 %v977, %v1577
      %v1702 = vmul.f32 %v525, %v1125
      %v1703 = vmul.f32 %v590, %v1190
      %v1704 = vmul.f32 %v655, %v1255
      %v1705 = vmul.f32 %v720, %v1320
      %v1706 = vmul.f32 %v785, %v1385
      %v1707 = vmul.f32 %v850, %v1450
      %v1708 = vmul.f32 %v915, %v1515
      %v1709 = vmul.f32 %v980, %v1580
      %v1710 = vld [vmem:[%s5] sm:$0xff]
      %v1711 = vld [vmem:[%s5 + $0x8] sm:$0xff]
      %v1712 = vld [vmem:[%s5 + $0x10] sm:$0xff]
      %v1713 = vld [vmem:[%s5 + $0x18] sm:$0xff]
      %v1714 = vld [vmem:[%s5 + $0x20] sm:$0xff]
      %v1715 = vld [vmem:[%s5 + $0x28] sm:$0xff]
      %v1716 = vld [vmem:[%s5 + $0x30] sm:$0xff]
      %v1717 = vld [vmem:[%s5 + $0x38] sm:$0xff]
      %v1718 = vld [vmem:[%s5 + $0x40] sm:$0xff]
      %v1719 = vld [vmem:[%s5 + $0x48] sm:$0xff]
      %v1720 = vld [vmem:[%s5 + $0x50] sm:$0xff]
      %v1721 = vld [vmem:[%s5 + $0x58] sm:$0xff]
      %v1722 = vld [vmem:[%s5 + $0x60] sm:$0xff]
      %v1723 = vld [vmem:[%s5 + $0x68] sm:$0xff]
      %v1724 = vld [vmem:[%s5 + $0x70] sm:$0xff]
      %v1725 = vld [vmem:[%s5 + $0x78] sm:$0xff]
      %v1726 = vld [vmem:[%s5 + $0x80] sm:$0xff]
      %v1727 = vld [vmem:[%s5 + $0x88] sm:$0xff]
      %v1728 = vld [vmem:[%s5 + $0x90] sm:$0xff]
      %v1729 = vld [vmem:[%s5 + $0x98] sm:$0xff]
      %v1730 = vld [vmem:[%s5 + $0xa0] sm:$0xff]
      %v1731 = vld [vmem:[%s5 + $0xa8] sm:$0xff]
      %v1732 = vld [vmem:[%s5 + $0xb0] sm:$0xff]
      %v1733 = vld [vmem:[%s5 + $0xb8] sm:$0xff]
      %v1734 = vld [vmem:[%s5 + $0xc0] sm:$0xff]
      %v1735 = vld [vmem:[%s5 + $0xc8] sm:$0xff]
      %v1736 = vld [vmem:[%s5 + $0xd0] sm:$0xff]
      %v1737 = vld [vmem:[%s5 + $0xd8] sm:$0xff]
      %v1738 = vld [vmem:[%s5 + $0xe0] sm:$0xff]
      %v1739 = vld [vmem:[%s5 + $0xe8] sm:$0xff]
      %v1740 = vld [vmem:[%s5 + $0xf0] sm:$0xff]
      %v1741 = vld [vmem:[%s5 + $0xf8] sm:$0xff]
      %v1742 = vld [vmem:[%s5 + $0x100] sm:$0xff]
      %v1743 = vld [vmem:[%s5 + $0x108] sm:$0xff]
      %v1744 = vld [vmem:[%s5 + $0x110] sm:$0xff]
      %v1745 = vld [vmem:[%s5 + $0x118] sm:$0xff]
      %v1746 = vld [vmem:[%s5 + $0x120] sm:$0xff]
      %v1747 = vld [vmem:[%s5 + $0x128] sm:$0xff]
      %v1748 = vld [vmem:[%s5 + $0x130] sm:$0xff]
      %v1749 = vld [vmem:[%s5 + $0x138] sm:$0xff]
      %v1750 = vld [vmem:[%s5 + $0x140] sm:$0xff]
      %v1751 = vld [vmem:[%s5 + $0x148] sm:$0xff]
      %v1752 = vld [vmem:[%s5 + $0x150] sm:$0xff]
      %v1753 = vld [vmem:[%s5 + $0x158] sm:$0xff]
      %v1754 = vld [vmem:[%s5 + $0x160] sm:$0xff]
      %v1755 = vld [vmem:[%s5 + $0x168] sm:$0xff]
      %v1756 = vld [vmem:[%s5 + $0x170] sm:$0xff]
      %v1757 = vld [vmem:[%s5 + $0x178] sm:$0xff]
      %v1758 = vld [vmem:[%s5 + $0x180] sm:$0xff]
      %v1759 = vld [vmem:[%s5 + $0x188] sm:$0xff]
      %v1760 = vld [vmem:[%s5 + $0x190] sm:$0xff]
      %v1761 = vld [vmem:[%s5 + $0x198] sm:$0xff]
      %v1762 = vld [vmem:[%s5 + $0x1a0] sm:$0xff]
      %v1763 = vld [vmem:[%s5 + $0x1a8] sm:$0xff]
      %v1764 = vld [vmem:[%s5 + $0x1b0] sm:$0xff]
      %v1765 = vld [vmem:[%s5 + $0x1b8] sm:$0xff]
      %v1766 = vld [vmem:[%s5 + $0x1c0] sm:$0xff]
      %v1767 = vld [vmem:[%s5 + $0x1c8] sm:$0xff]
      %v1768 = vld [vmem:[%s5 + $0x1d0] sm:$0xff]
      %v1769 = vld [vmem:[%s5 + $0x1d8] sm:$0xff]
      %v1770 = vld [vmem:[%s5 + $0x1e0] sm:$0xff]
      %v1771 = vld [vmem:[%s5 + $0x1e8] sm:$0xff]
      %v1772 = vld [vmem:[%s5 + $0x1f0] sm:$0xff]
      %v1773 = vld [vmem:[%s5 + $0x1f8] sm:$0xff]
      %v1774 = vld [vmem:[%s5 + $0x200] sm:$0xff]
      %v1775 = vld [vmem:[%s5 + $0x208] sm:$0xff]
      %v1776 = vld [vmem:[%s5 + $0x210] sm:$0xff]
      %v1777 = vld [vmem:[%s5 + $0x218] sm:$0xff]
      %v1778 = vld [vmem:[%s5 + $0x220] sm:$0xff]
      %v1779 = vld [vmem:[%s5 + $0x228] sm:$0xff]
      %v1780 = vld [vmem:[%s5 + $0x230] sm:$0xff]
      %v1781 = vld [vmem:[%s5 + $0x238] sm:$0xff]
      %v1782 = vld [vmem:[%s5 + $0x240] sm:$0xff]
      %v1783 = vld [vmem:[%s5 + $0x248] sm:$0xff]
      %v1784 = vld [vmem:[%s5 + $0x250] sm:$0xff]
      %v1785 = vld [vmem:[%s5 + $0x258] sm:$0xff]
      %v1786 = vld [vmem:[%s5 + $0x260] sm:$0xff]
      %v1787 = vld [vmem:[%s5 + $0x268] sm:$0xff]
      %v1788 = vld [vmem:[%s5 + $0x270] sm:$0xff]
      %v1789 = vld [vmem:[%s5 + $0x278] sm:$0xff]
      %v1790 = vld [vmem:[%s5 + $0x280] sm:$0xff]
      %v1791 = vld [vmem:[%s5 + $0x288] sm:$0xff]
      %v1792 = vld [vmem:[%s5 + $0x290] sm:$0xff]
      %v1793 = vld [vmem:[%s5 + $0x298] sm:$0xff]
      %v1794 = vld [vmem:[%s5 + $0x2a0] sm:$0xff]
      %v1795 = vld [vmem:[%s5 + $0x2a8] sm:$0xff]
      %v1796 = vld [vmem:[%s5 + $0x2b0] sm:$0xff]
      %v1797 = vld [vmem:[%s5 + $0x2b8] sm:$0xff]
      %v1798 = vld [vmem:[%s5 + $0x2c0] sm:$0xff]
      %v1799 = vld [vmem:[%s5 + $0x2c8] sm:$0xff]
      %v1800 = vld [vmem:[%s5 + $0x2d0] sm:$0xff]
      %v1801 = vld [vmem:[%s5 + $0x2d8] sm:$0xff]
      %v1802 = vld [vmem:[%s5 + $0x2e0] sm:$0xff]
      %v1803 = vld [vmem:[%s5 + $0x2e8] sm:$0xff]
      %v1804 = vld [vmem:[%s5 + $0x2f0] sm:$0xff]
      %v1805 = vld [vmem:[%s5 + $0x2f8] sm:$0xff]
      %v1806 = vld [vmem:[%s5 + $0x300] sm:$0xff]
      %v1807 = vld [vmem:[%s5 + $0x308] sm:$0xff]
      %v1808 = vld [vmem:[%s5 + $0x310] sm:$0xff]
      %v1809 = vld [vmem:[%s5 + $0x318] sm:$0xff]
      %v1810 = vld [vmem:[%s5 + $0x320] sm:$0xff]
      %v1811 = vld [vmem:[%s5 + $0x328] sm:$0xff]
      %v1812 = vld [vmem:[%s5 + $0x330] sm:$0xff]
      %v1813 = vld [vmem:[%s5 + $0x338] sm:$0xff]
      %v1814 = vld [vmem:[%s5 + $0x340] sm:$0xff]
      %v1815 = vld [vmem:[%s5 + $0x348] sm:$0xff]
      %v1816 = vld [vmem:[%s5 + $0x350] sm:$0xff]
      %v1817 = vld [vmem:[%s5 + $0x358] sm:$0xff]
      %v1818 = vld [vmem:[%s5 + $0x360] sm:$0xff]
      %v1819 = vld [vmem:[%s5 + $0x368] sm:$0xff]
      %v1820 = vld [vmem:[%s5 + $0x370] sm:$0xff]
      %v1821 = vld [vmem:[%s5 + $0x378] sm:$0xff]
      %v1822 = vld [vmem:[%s5 + $0x380] sm:$0xff]
      %v1823 = vld [vmem:[%s5 + $0x388] sm:$0xff]
      %v1824 = vld [vmem:[%s5 + $0x390] sm:$0xff]
      %v1825 = vld [vmem:[%s5 + $0x398] sm:$0xff]
      %v1826 = vld [vmem:[%s5 + $0x3a0] sm:$0xff]
      %v1827 = vld [vmem:[%s5 + $0x3a8] sm:$0xff]
      %v1828 = vld [vmem:[%s5 + $0x3b0] sm:$0xff]
      %v1829 = vld [vmem:[%s5 + $0x3b8] sm:$0xff]
      %v1830 = vld [vmem:[%s5 + $0x3c0] sm:$0xff]
      %v1831 = vld [vmem:[%s5 + $0x3c8] sm:$0xff]
      %v1832 = vld [vmem:[%s5 + $0x3d0] sm:$0xff]
      %v1833 = vld [vmem:[%s5 + $0x3d8] sm:$0xff]
      %v1834 = vld [vmem:[%s5 + $0x3e0] sm:$0xff]
      %v1835 = vld [vmem:[%s5 + $0x3e8] sm:$0xff]
      %v1836 = vld [vmem:[%s5 + $0x3f0] sm:$0xff]
      %v1837 = vld [vmem:[%s5 + $0x3f8] sm:$0xff]
      %1838 = vmatpush.msra.mxu0 %v1725
      %1839 = vmatpush.msra.mxu0 %v1724
      %1840 = vmatpush.msra.mxu0 %v1723
      %1841 = vmatpush.msra.mxu0 %v1722
      %1842 = vmatpush.msra.mxu0 %v1721
      %1843 = vmatpush.msra.mxu0 %v1720
      %1844 = vmatpush.msra.mxu0 %v1719
      %1845 = vmatpush.msra.mxu0 %v1718
      %1846 = vmatpush.msra.mxu0 %v1717
      %1847 = vmatpush.msra.mxu0 %v1716
      %1848 = vmatpush.msra.mxu0 %v1715
      %1849 = vmatpush.msra.mxu0 %v1714
      %1850 = vmatpush.msra.mxu0 %v1713
      %1851 = vmatpush.msra.mxu0 %v1712
      %1852 = vmatpush.msra.mxu0 %v1711
      %1853 = vmatpush.msra.mxu0 %v1710
      %1854 = vmatmul.f32.gmra.mxu0 %v1582
      %v1855 = vpop.f32.mrf.mxu0
      %v1856 = vadd.f32 0.0, %v1855
      %1857 = vmatmul.f32.gmra.mxu0 %v1590
      %v1858 = vpop.f32.mrf.mxu0
      %v1859 = vadd.f32 0.0, %v1858
      %1860 = vmatmul.f32.gmra.mxu0 %v1598
      %v1861 = vpop.f32.mrf.mxu0
      %v1862 = vadd.f32 0.0, %v1861
      %1863 = vmatmul.f32.gmra.mxu0 %v1606
      %v1864 = vpop.f32.mrf.mxu0
      %v1865 = vadd.f32 0.0, %v1864
      %1866 = vmatmul.f32.gmra.mxu0 %v1614
      %v1867 = vpop.f32.mrf.mxu0
      %v1868 = vadd.f32 0.0, %v1867
      %1869 = vmatmul.f32.gmra.mxu0 %v1622
      %v1870 = vpop.f32.mrf.mxu0
      %v1871 = vadd.f32 0.0, %v1870
      %1872 = vmatmul.f32.gmra.mxu0 %v1630
      %v1873 = vpop.f32.mrf.mxu0
      %v1874 = vadd.f32 0.0, %v1873
      %1875 = vmatmul.f32.gmra.mxu0 %v1638
      %v1876 = vpop.f32.mrf.mxu0
      %v1877 = vadd.f32 0.0, %v1876
      %1878 = vmatmul.f32.gmra.mxu0 %v1646
      %v1879 = vpop.f32.mrf.mxu0
      %v1880 = vadd.f32 0.0, %v1879
      %1881 = vmatmul.f32.gmra.mxu0 %v1654
      %v1882 = vpop.f32.mrf.mxu0
      %v1883 = vadd.f32 0.0, %v1882
      %1884 = vmatmul.f32.gmra.mxu0 %v1662
      %v1885 = vpop.f32.mrf.mxu0
      %v1886 = vadd.f32 0.0, %v1885
      %1887 = vmatmul.f32.gmra.mxu0 %v1670
      %v1888 = vpop.f32.mrf.mxu0
      %v1889 = vadd.f32 0.0, %v1888
      %1890 = vmatmul.f32.gmra.mxu0 %v1678
      %v1891 = vpop.f32.mrf.mxu0
      %v1892 = vadd.f32 0.0, %v1891
      %1893 = vmatmul.f32.gmra.mxu0 %v1686
      %v1894 = vpop.f32.mrf.mxu0
      %v1895 = vadd.f32 0.0, %v1894
      %1896 = vmatmul.f32.gmra.mxu0 %v1694
      %v1897 = vpop.f32.mrf.mxu0
      %v1898 = vadd.f32 0.0, %v1897
      %1899 = vmatmul.f32.gmra.mxu0 %v1702
      %v1900 = vpop.f32.mrf.mxu0
      %v1901 = vadd.f32 0.0, %v1900
      %1902 = vdwg.mxu0
      %1903 = vmatpush.msra.mxu0 %v1741
      %1904 = vmatpush.msra.mxu0 %v1740
      %1905 = vmatpush.msra.mxu0 %v1739
      %1906 = vmatpush.msra.mxu0 %v1738
      %1907 = vmatpush.msra.mxu0 %v1737
      %1908 = vmatpush.msra.mxu0 %v1736
      %1909 = vmatpush.msra.mxu0 %v1735
      %1910 = vmatpush.msra.mxu0 %v1734
      %1911 = vmatpush.msra.mxu0 %v1733
      %1912 = vmatpush.msra.mxu0 %v1732
      %1913 = vmatpush.msra.mxu0 %v1731
      %1914 = vmatpush.msra.mxu0 %v1730
      %1915 = vmatpush.msra.mxu0 %v1729
      %1916 = vmatpush.msra.mxu0 %v1728
      %1917 = vmatpush.msra.mxu0 %v1727
      %1918 = vmatpush.msra.mxu0 %v1726
      %1919 = vmatmul.f32.gmra.mxu0 %v1583
      %v1920 = vpop.f32.mrf.mxu0
      %v1921 = vadd.f32 %v1856, %v1920
      %1922 = vmatmul.f32.gmra.mxu0 %v1591
      %v1923 = vpop.f32.mrf.mxu0
      %v1924 = vadd.f32 %v1859, %v1923
      %1925 = vmatmul.f32.gmra.mxu0 %v1599
      %v1926 = vpop.f32.mrf.mxu0
      %v1927 = vadd.f32 %v1862, %v1926
      %1928 = vmatmul.f32.gmra.mxu0 %v1607
      %v1929 = vpop.f32.mrf.mxu0
      %v1930 = vadd.f32 %v1865, %v1929
      %1931 = vmatmul.f32.gmra.mxu0 %v1615
      %v1932 = vpop.f32.mrf.mxu0
      %v1933 = vadd.f32 %v1868, %v1932
      %1934 = vmatmul.f32.gmra.mxu0 %v1623
      %v1935 = vpop.f32.mrf.mxu0
      %v1936 = vadd.f32 %v1871, %v1935
      %1937 = vmatmul.f32.gmra.mxu0 %v1631
      %v1938 = vpop.f32.mrf.mxu0
      %v1939 = vadd.f32 %v1874, %v1938
      %1940 = vmatmul.f32.gmra.mxu0 %v1639
      %v1941 = vpop.f32.mrf.mxu0
      %v1942 = vadd.f32 %v1877, %v1941
      %1943 = vmatmul.f32.gmra.mxu0 %v1647
      %v1944 = vpop.f32.mrf.mxu0
      %v1945 = vadd.f32 %v1880, %v1944
      %1946 = vmatmul.f32.gmra.mxu0 %v1655
      %v1947 = vpop.f32.mrf.mxu0
      %v1948 = vadd.f32 %v1883, %v1947
      %1949 = vmatmul.f32.gmra.mxu0 %v1663
      %v1950 = vpop.f32.mrf.mxu0
      %v1951 = vadd.f32 %v1886, %v1950
      %1952 = vmatmul.f32.gmra.mxu0 %v1671
      %v1953 = vpop.f32.mrf.mxu0
      %v1954 = vadd.f32 %v1889, %v1953
      %1955 = vmatmul.f32.gmra.mxu0 %v1679
      %v1956 = vpop.f32.mrf.mxu0
      %v1957 = vadd.f32 %v1892, %v1956
      %1958 = vmatmul.f32.gmra.mxu0 %v1687
      %v1959 = vpop.f32.mrf.mxu0
      %v1960 = vadd.f32 %v1895, %v1959
      %1961 = vmatmul.f32.gmra.mxu0 %v1695
      %v1962 = vpop.f32.mrf.mxu0
      %v1963 = vadd.f32 %v1898, %v1962
      %1964 = vmatmul.f32.gmra.mxu0 %v1703
      %v1965 = vpop.f32.mrf.mxu0
      %v1966 = vadd.f32 %v1901, %v1965
      %1967 = vdwg.mxu0
      %1968 = vmatpush.msra.mxu0 %v1757
      %1969 = vmatpush.msra.mxu0 %v1756
      %1970 = vmatpush.msra.mxu0 %v1755
      %1971 = vmatpush.msra.mxu0 %v1754
      %1972 = vmatpush.msra.mxu0 %v1753
      %1973 = vmatpush.msra.mxu0 %v1752
      %1974 = vmatpush.msra.mxu0 %v1751
      %1975 = vmatpush.msra.mxu0 %v1750
      %1976 = vmatpush.msra.mxu0 %v1749
      %1977 = vmatpush.msra.mxu0 %v1748
      %1978 = vmatpush.msra.mxu0 %v1747
      %1979 = vmatpush.msra.mxu0 %v1746
      %1980 = vmatpush.msra.mxu0 %v1745
      %1981 = vmatpush.msra.mxu0 %v1744
      %1982 = vmatpush.msra.mxu0 %v1743
      %1983 = vmatpush.msra.mxu0 %v1742
      %1984 = vmatmul.f32.gmra.mxu0 %v1584
      %v1985 = vpop.f32.mrf.mxu0
      %v1986 = vadd.f32 %v1921, %v1985
      %1987 = vmatmul.f32.gmra.mxu0 %v1592
      %v1988 = vpop.f32.mrf.mxu0
      %v1989 = vadd.f32 %v1924, %v1988
      %1990 = vmatmul.f32.gmra.mxu0 %v1600
      %v1991 = vpop.f32.mrf.mxu0
      %v1992 = vadd.f32 %v1927, %v1991
      %1993 = vmatmul.f32.gmra.mxu0 %v1608
      %v1994 = vpop.f32.mrf.mxu0
      %v1995 = vadd.f32 %v1930, %v1994
      %1996 = vmatmul.f32.gmra.mxu0 %v1616
      %v1997 = vpop.f32.mrf.mxu0
      %v1998 = vadd.f32 %v1933, %v1997
      %1999 = vmatmul.f32.gmra.mxu0 %v1624
      %v2000 = vpop.f32.mrf.mxu0
      %v2001 = vadd.f32 %v1936, %v2000
      %2002 = vmatmul.f32.gmra.mxu0 %v1632
      %v2003 = vpop.f32.mrf.mxu0
      %v2004 = vadd.f32 %v1939, %v2003
      %2005 = vmatmul.f32.gmra.mxu0 %v1640
      %v2006 = vpop.f32.mrf.mxu0
      %v2007 = vadd.f32 %v1942, %v2006
      %2008 = vmatmul.f32.gmra.mxu0 %v1648
      %v2009 = vpop.f32.mrf.mxu0
      %v2010 = vadd.f32 %v1945, %v2009
      %2011 = vmatmul.f32.gmra.mxu0 %v1656
      %v2012 = vpop.f32.mrf.mxu0
      %v2013 = vadd.f32 %v1948, %v2012
      %2014 = vmatmul.f32.gmra.mxu0 %v1664
      %v2015 = vpop.f32.mrf.mxu0
      %v2016 = vadd.f32 %v1951, %v2015
      %2017 = vmatmul.f32.gmra.mxu0 %v1672
      %v2018 = vpop.f32.mrf.mxu0
      %v2019 = vadd.f32 %v1954, %v2018
      %2020 = vmatmul.f32.gmra.mxu0 %v1680
      %v2021 = vpop.f32.mrf.mxu0
      %v2022 = vadd.f32 %v1957, %v2021
      %2023 = vmatmul.f32.gmra.mxu0 %v1688
      %v2024 = vpop.f32.mrf.mxu0
      %v2025 = vadd.f32 %v1960, %v2024
      %2026 = vmatmul.f32.gmra.mxu0 %v1696
      %v2027 = vpop.f32.mrf.mxu0
      %v2028 = vadd.f32 %v1963, %v2027
      %2029 = vmatmul.f32.gmra.mxu0 %v1704
      %v2030 = vpop.f32.mrf.mxu0
      %v2031 = vadd.f32 %v1966, %v2030
      %2032 = vdwg.mxu0
      %2033 = vmatpush.msra.mxu0 %v1773
      %2034 = vmatpush.msra.mxu0 %v1772
      %2035 = vmatpush.msra.mxu0 %v1771
      %2036 = vmatpush.msra.mxu0 %v1770
      %2037 = vmatpush.msra.mxu0 %v1769
      %2038 = vmatpush.msra.mxu0 %v1768
      %2039 = vmatpush.msra.mxu0 %v1767
      %2040 = vmatpush.msra.mxu0 %v1766
      %2041 = vmatpush.msra.mxu0 %v1765
      %2042 = vmatpush.msra.mxu0 %v1764
      %2043 = vmatpush.msra.mxu0 %v1763
      %2044 = vmatpush.msra.mxu0 %v1762
      %2045 = vmatpush.msra.mxu0 %v1761
      %2046 = vmatpush.msra.mxu0 %v1760
      %2047 = vmatpush.msra.mxu0 %v1759
      %2048 = vmatpush.msra.mxu0 %v1758
      %2049 = vmatmul.f32.gmra.mxu0 %v1585
      %v2050 = vpop.f32.mrf.mxu0
      %v2051 = vadd.f32 %v1986, %v2050
      %2052 = vmatmul.f32.gmra.mxu0 %v1593
      %v2053 = vpop.f32.mrf.mxu0
      %v2054 = vadd.f32 %v1989, %v2053
      %2055 = vmatmul.f32.gmra.mxu0 %v1601
      %v2056 = vpop.f32.mrf.mxu0
      %v2057 = vadd.f32 %v1992, %v2056
      %2058 = vmatmul.f32.gmra.mxu0 %v1609
      %v2059 = vpop.f32.mrf.mxu0
      %v2060 = vadd.f32 %v1995, %v2059
      %2061 = vmatmul.f32.gmra.mxu0 %v1617
      %v2062 = vpop.f32.mrf.mxu0
      %v2063 = vadd.f32 %v1998, %v2062
      %2064 = vmatmul.f32.gmra.mxu0 %v1625
      %v2065 = vpop.f32.mrf.mxu0
      %v2066 = vadd.f32 %v2001, %v2065
      %2067 = vmatmul.f32.gmra.mxu0 %v1633
      %v2068 = vpop.f32.mrf.mxu0
      %v2069 = vadd.f32 %v2004, %v2068
      %2070 = vmatmul.f32.gmra.mxu0 %v1641
      %v2071 = vpop.f32.mrf.mxu0
      %v2072 = vadd.f32 %v2007, %v2071
      %2073 = vmatmul.f32.gmra.mxu0 %v1649
      %v2074 = vpop.f32.mrf.mxu0
      %v2075 = vadd.f32 %v2010, %v2074
      %2076 = vmatmul.f32.gmra.mxu0 %v1657
      %v2077 = vpop.f32.mrf.mxu0
      %v2078 = vadd.f32 %v2013, %v2077
      %2079 = vmatmul.f32.gmra.mxu0 %v1665
      %v2080 = vpop.f32.mrf.mxu0
      %v2081 = vadd.f32 %v2016, %v2080
      %2082 = vmatmul.f32.gmra.mxu0 %v1673
      %v2083 = vpop.f32.mrf.mxu0
      %v2084 = vadd.f32 %v2019, %v2083
      %2085 = vmatmul.f32.gmra.mxu0 %v1681
      %v2086 = vpop.f32.mrf.mxu0
      %v2087 = vadd.f32 %v2022, %v2086
      %2088 = vmatmul.f32.gmra.mxu0 %v1689
      %v2089 = vpop.f32.mrf.mxu0
      %v2090 = vadd.f32 %v2025, %v2089
      %2091 = vmatmul.f32.gmra.mxu0 %v1697
      %v2092 = vpop.f32.mrf.mxu0
      %v2093 = vadd.f32 %v2028, %v2092
      %2094 = vmatmul.f32.gmra.mxu0 %v1705
      %v2095 = vpop.f32.mrf.mxu0
      %v2096 = vadd.f32 %v2031, %v2095
      %2097 = vdwg.mxu0
      %2098 = vmatpush.msra.mxu0 %v1789
      %2099 = vmatpush.msra.mxu0 %v1788
      %2100 = vmatpush.msra.mxu0 %v1787
      %2101 = vmatpush.msra.mxu0 %v1786
      %2102 = vmatpush.msra.mxu0 %v1785
      %2103 = vmatpush.msra.mxu0 %v1784
      %2104 = vmatpush.msra.mxu0 %v1783
      %2105 = vmatpush.msra.mxu0 %v1782
      %2106 = vmatpush.msra.mxu0 %v1781
      %2107 = vmatpush.msra.mxu0 %v1780
      %2108 = vmatpush.msra.mxu0 %v1779
      %2109 = vmatpush.msra.mxu0 %v1778
      %2110 = vmatpush.msra.mxu0 %v1777
      %2111 = vmatpush.msra.mxu0 %v1776
      %2112 = vmatpush.msra.mxu0 %v1775
      %2113 = vmatpush.msra.mxu0 %v1774
      %2114 = vmatmul.f32.gmra.mxu0 %v1586
      %v2115 = vpop.f32.mrf.mxu0
      %v2116 = vadd.f32 %v2051, %v2115
      %2117 = vmatmul.f32.gmra.mxu0 %v1594
      %v2118 = vpop.f32.mrf.mxu0
      %v2119 = vadd.f32 %v2054, %v2118
      %2120 = vmatmul.f32.gmra.mxu0 %v1602
      %v2121 = vpop.f32.mrf.mxu0
      %v2122 = vadd.f32 %v2057, %v2121
      %2123 = vmatmul.f32.gmra.mxu0 %v1610
      %v2124 = vpop.f32.mrf.mxu0
      %v2125 = vadd.f32 %v2060, %v2124
      %2126 = vmatmul.f32.gmra.mxu0 %v1618
      %v2127 = vpop.f32.mrf.mxu0
      %v2128 = vadd.f32 %v2063, %v2127
      %2129 = vmatmul.f32.gmra.mxu0 %v1626
      %v2130 = vpop.f32.mrf.mxu0
      %v2131 = vadd.f32 %v2066, %v2130
      %2132 = vmatmul.f32.gmra.mxu0 %v1634
      %v2133 = vpop.f32.mrf.mxu0
      %v2134 = vadd.f32 %v2069, %v2133
      %2135 = vmatmul.f32.gmra.mxu0 %v1642
      %v2136 = vpop.f32.mrf.mxu0
      %v2137 = vadd.f32 %v2072, %v2136
      %2138 = vmatmul.f32.gmra.mxu0 %v1650
      %v2139 = vpop.f32.mrf.mxu0
      %v2140 = vadd.f32 %v2075, %v2139
      %2141 = vmatmul.f32.gmra.mxu0 %v1658
      %v2142 = vpop.f32.mrf.mxu0
      %v2143 = vadd.f32 %v2078, %v2142
      %2144 = vmatmul.f32.gmra.mxu0 %v1666
      %v2145 = vpop.f32.mrf.mxu0
      %v2146 = vadd.f32 %v2081, %v2145
      %2147 = vmatmul.f32.gmra.mxu0 %v1674
      %v2148 = vpop.f32.mrf.mxu0
      %v2149 = vadd.f32 %v2084, %v2148
      %2150 = vmatmul.f32.gmra.mxu0 %v1682
      %v2151 = vpop.f32.mrf.mxu0
      %v2152 = vadd.f32 %v2087, %v2151
      %2153 = vmatmul.f32.gmra.mxu0 %v1690
      %v2154 = vpop.f32.mrf.mxu0
      %v2155 = vadd.f32 %v2090, %v2154
      %2156 = vmatmul.f32.gmra.mxu0 %v1698
      %v2157 = vpop.f32.mrf.mxu0
      %v2158 = vadd.f32 %v2093, %v2157
      %2159 = vmatmul.f32.gmra.mxu0 %v1706
      %v2160 = vpop.f32.mrf.mxu0
      %v2161 = vadd.f32 %v2096, %v2160
      %2162 = vdwg.mxu0
      %2163 = vmatpush.msra.mxu0 %v1805
      %2164 = vmatpush.msra.mxu0 %v1804
      %2165 = vmatpush.msra.mxu0 %v1803
      %2166 = vmatpush.msra.mxu0 %v1802
      %2167 = vmatpush.msra.mxu0 %v1801
      %2168 = vmatpush.msra.mxu0 %v1800
      %2169 = vmatpush.msra.mxu0 %v1799
      %2170 = vmatpush.msra.mxu0 %v1798
      %2171 = vmatpush.msra.mxu0 %v1797
      %2172 = vmatpush.msra.mxu0 %v1796
      %2173 = vmatpush.msra.mxu0 %v1795
      %2174 = vmatpush.msra.mxu0 %v1794
      %2175 = vmatpush.msra.mxu0 %v1793
      %2176 = vmatpush.msra.mxu0 %v1792
      %2177 = vmatpush.msra.mxu0 %v1791
      %2178 = vmatpush.msra.mxu0 %v1790
      %2179 = vmatmul.f32.gmra.mxu0 %v1587
      %v2180 = vpop.f32.mrf.mxu0
      %v2181 = vadd.f32 %v2116, %v2180
      %2182 = vmatmul.f32.gmra.mxu0 %v1595
      %v2183 = vpop.f32.mrf.mxu0
      %v2184 = vadd.f32 %v2119, %v2183
      %2185 = vmatmul.f32.gmra.mxu0 %v1603
      %v2186 = vpop.f32.mrf.mxu0
      %v2187 = vadd.f32 %v2122, %v2186
      %2188 = vmatmul.f32.gmra.mxu0 %v1611
      %v2189 = vpop.f32.mrf.mxu0
      %v2190 = vadd.f32 %v2125, %v2189
      %2191 = vmatmul.f32.gmra.mxu0 %v1619
      %v2192 = vpop.f32.mrf.mxu0
      %v2193 = vadd.f32 %v2128, %v2192
      %2194 = vmatmul.f32.gmra.mxu0 %v1627
      %v2195 = vpop.f32.mrf.mxu0
      %v2196 = vadd.f32 %v2131, %v2195
      %2197 = vmatmul.f32.gmra.mxu0 %v1635
      %v2198 = vpop.f32.mrf.mxu0
      %v2199 = vadd.f32 %v2134, %v2198
      %2200 = vmatmul.f32.gmra.mxu0 %v1643
      %v2201 = vpop.f32.mrf.mxu0
      %v2202 = vadd.f32 %v2137, %v2201
      %2203 = vmatmul.f32.gmra.mxu0 %v1651
      %v2204 = vpop.f32.mrf.mxu0
      %v2205 = vadd.f32 %v2140, %v2204
      %2206 = vmatmul.f32.gmra.mxu0 %v1659
      %v2207 = vpop.f32.mrf.mxu0
      %v2208 = vadd.f32 %v2143, %v2207
      %2209 = vmatmul.f32.gmra.mxu0 %v1667
      %v2210 = vpop.f32.mrf.mxu0
      %v2211 = vadd.f32 %v2146, %v2210
      %2212 = vmatmul.f32.gmra.mxu0 %v1675
      %v2213 = vpop.f32.mrf.mxu0
      %v2214 = vadd.f32 %v2149, %v2213
      %2215 = vmatmul.f32.gmra.mxu0 %v1683
      %v2216 = vpop.f32.mrf.mxu0
      %v2217 = vadd.f32 %v2152, %v2216
      %2218 = vmatmul.f32.gmra.mxu0 %v1691
      %v2219 = vpop.f32.mrf.mxu0
      %v2220 = vadd.f32 %v2155, %v2219
      %2221 = vmatmul.f32.gmra.mxu0 %v1699
      %v2222 = vpop.f32.mrf.mxu0
      %v2223 = vadd.f32 %v2158, %v2222
      %2224 = vmatmul.f32.gmra.mxu0 %v1707
      %v2225 = vpop.f32.mrf.mxu0
      %v2226 = vadd.f32 %v2161, %v2225
      %2227 = vdwg.mxu0
      %2228 = vmatpush.msra.mxu0 %v1821
      %2229 = vmatpush.msra.mxu0 %v1820
      %2230 = vmatpush.msra.mxu0 %v1819
      %2231 = vmatpush.msra.mxu0 %v1818
      %2232 = vmatpush.msra.mxu0 %v1817
      %2233 = vmatpush.msra.mxu0 %v1816
      %2234 = vmatpush.msra.mxu0 %v1815
      %2235 = vmatpush.msra.mxu0 %v1814
      %2236 = vmatpush.msra.mxu0 %v1813
      %2237 = vmatpush.msra.mxu0 %v1812
      %2238 = vmatpush.msra.mxu0 %v1811
      %2239 = vmatpush.msra.mxu0 %v1810
      %2240 = vmatpush.msra.mxu0 %v1809
      %2241 = vmatpush.msra.mxu0 %v1808
      %2242 = vmatpush.msra.mxu0 %v1807
      %2243 = vmatpush.msra.mxu0 %v1806
      %2244 = vmatmul.f32.gmra.mxu0 %v1588
      %v2245 = vpop.f32.mrf.mxu0
      %v2246 = vadd.f32 %v2181, %v2245
      %2247 = vmatmul.f32.gmra.mxu0 %v1596
      %v2248 = vpop.f32.mrf.mxu0
      %v2249 = vadd.f32 %v2184, %v2248
      %2250 = vmatmul.f32.gmra.mxu0 %v1604
      %v2251 = vpop.f32.mrf.mxu0
      %v2252 = vadd.f32 %v2187, %v2251
      %2253 = vmatmul.f32.gmra.mxu0 %v1612
      %v2254 = vpop.f32.mrf.mxu0
      %v2255 = vadd.f32 %v2190, %v2254
      %2256 = vmatmul.f32.gmra.mxu0 %v1620
      %v2257 = vpop.f32.mrf.mxu0
      %v2258 = vadd.f32 %v2193, %v2257
      %2259 = vmatmul.f32.gmra.mxu0 %v1628
      %v2260 = vpop.f32.mrf.mxu0
      %v2261 = vadd.f32 %v2196, %v2260
      %2262 = vmatmul.f32.gmra.mxu0 %v1636
      %v2263 = vpop.f32.mrf.mxu0
      %v2264 = vadd.f32 %v2199, %v2263
      %2265 = vmatmul.f32.gmra.mxu0 %v1644
      %v2266 = vpop.f32.mrf.mxu0
      %v2267 = vadd.f32 %v2202, %v2266
      %2268 = vmatmul.f32.gmra.mxu0 %v1652
      %v2269 = vpop.f32.mrf.mxu0
      %v2270 = vadd.f32 %v2205, %v2269
      %2271 = vmatmul.f32.gmra.mxu0 %v1660
      %v2272 = vpop.f32.mrf.mxu0
      %v2273 = vadd.f32 %v2208, %v2272
      %2274 = vmatmul.f32.gmra.mxu0 %v1668
      %v2275 = vpop.f32.mrf.mxu0
      %v2276 = vadd.f32 %v2211, %v2275
      %2277 = vmatmul.f32.gmra.mxu0 %v1676
      %v2278 = vpop.f32.mrf.mxu0
      %v2279 = vadd.f32 %v2214, %v2278
      %2280 = vmatmul.f32.gmra.mxu0 %v1684
      %v2281 = vpop.f32.mrf.mxu0
      %v2282 = vadd.f32 %v2217, %v2281
      %2283 = vmatmul.f32.gmra.mxu0 %v1692
      %v2284 = vpop.f32.mrf.mxu0
      %v2285 = vadd.f32 %v2220, %v2284
      %2286 = vmatmul.f32.gmra.mxu0 %v1700
      %v2287 = vpop.f32.mrf.mxu0
      %v2288 = vadd.f32 %v2223, %v2287
      %2289 = vmatmul.f32.gmra.mxu0 %v1708
      %v2290 = vpop.f32.mrf.mxu0
      %v2291 = vadd.f32 %v2226, %v2290
      %2292 = vdwg.mxu0
      %2293 = vmatpush.msra.mxu0 %v1837
      %2294 = vmatpush.msra.mxu0 %v1836
      %2295 = vmatpush.msra.mxu0 %v1835
      %2296 = vmatpush.msra.mxu0 %v1834
      %2297 = vmatpush.msra.mxu0 %v1833
      %2298 = vmatpush.msra.mxu0 %v1832
      %2299 = vmatpush.msra.mxu0 %v1831
      %2300 = vmatpush.msra.mxu0 %v1830
      %2301 = vmatpush.msra.mxu0 %v1829
      %2302 = vmatpush.msra.mxu0 %v1828
      %2303 = vmatpush.msra.mxu0 %v1827
      %2304 = vmatpush.msra.mxu0 %v1826
      %2305 = vmatpush.msra.mxu0 %v1825
      %2306 = vmatpush.msra.mxu0 %v1824
      %2307 = vmatpush.msra.mxu0 %v1823
      %2308 = vmatpush.msra.mxu0 %v1822
      %2309 = vmatmul.f32.gmra.mxu0 %v1589
      %v2310 = vpop.f32.mrf.mxu0
      %v2311 = vadd.f32 %v2246, %v2310
      %2312 = vmatmul.f32.gmra.mxu0 %v1597
      %v2313 = vpop.f32.mrf.mxu0
      %v2314 = vadd.f32 %v2249, %v2313
      %2315 = vmatmul.f32.gmra.mxu0 %v1605
      %v2316 = vpop.f32.mrf.mxu0
      %v2317 = vadd.f32 %v2252, %v2316
      %2318 = vmatmul.f32.gmra.mxu0 %v1613
      %v2319 = vpop.f32.mrf.mxu0
      %v2320 = vadd.f32 %v2255, %v2319
      %2321 = vmatmul.f32.gmra.mxu0 %v1621
      %v2322 = vpop.f32.mrf.mxu0
      %v2323 = vadd.f32 %v2258, %v2322
      %2324 = vmatmul.f32.gmra.mxu0 %v1629
      %v2325 = vpop.f32.mrf.mxu0
      %v2326 = vadd.f32 %v2261, %v2325
      %2327 = vmatmul.f32.gmra.mxu0 %v1637
      %v2328 = vpop.f32.mrf.mxu0
      %v2329 = vadd.f32 %v2264, %v2328
      %2330 = vmatmul.f32.gmra.mxu0 %v1645
      %v2331 = vpop.f32.mrf.mxu0
      %v2332 = vadd.f32 %v2267, %v2331
      %2333 = vmatmul.f32.gmra.mxu0 %v1653
      %v2334 = vpop.f32.mrf.mxu0
      %v2335 = vadd.f32 %v2270, %v2334
      %2336 = vmatmul.f32.gmra.mxu0 %v1661
      %v2337 = vpop.f32.mrf.mxu0
      %v2338 = vadd.f32 %v2273, %v2337
      %2339 = vmatmul.f32.gmra.mxu0 %v1669
      %v2340 = vpop.f32.mrf.mxu0
      %v2341 = vadd.f32 %v2276, %v2340
      %2342 = vmatmul.f32.gmra.mxu0 %v1677
      %v2343 = vpop.f32.mrf.mxu0
      %v2344 = vadd.f32 %v2279, %v2343
      %2345 = vmatmul.f32.gmra.mxu0 %v1685
      %v2346 = vpop.f32.mrf.mxu0
      %v2347 = vadd.f32 %v2282, %v2346
      %2348 = vmatmul.f32.gmra.mxu0 %v1693
      %v2349 = vpop.f32.mrf.mxu0
      %v2350 = vadd.f32 %v2285, %v2349
      %2351 = vmatmul.f32.gmra.mxu0 %v1701
      %v2352 = vpop.f32.mrf.mxu0
      %v2353 = vadd.f32 %v2288, %v2352
      %2354 = vmatmul.f32.gmra.mxu0 %v1709
      %v2355 = vpop.f32.mrf.mxu0
      %v2356 = vadd.f32 %v2291, %v2355
      %2357 = vdwg.mxu0
      %v2358 = vand.u32 2147483647, %v2311
      %vm2359 = vcmp.le.f32.partialorder %v2358, 0.7853982
      %vm2360 = vcmp.lt.s32.totalorder %v2311, 0
      %v2361 = vand.u32 %v2311, 2139095040
      %v2362 = vshrl.u32 %v2361, 23
      %v2363 = vsub.s32 %v2362, 127
      %v2364 = vand.u32 2147483647, %v2311
      %v2365 = vand.u32 %v2364, 8388607
      %v2366 = vor.u32 %v2365, 8388608
      %v2367 = vsub.s32 0, %v2366
      %v2368 = vadd.s32 %v2363, 1
      %vm2369 = vcmp.gt.s32.totalorder %v2368, 0
      %v2370 = vsel %vm2369, %v2368, 0
      %v2371 = vshrl.u32 %v2370, 5
      %v2372 = vand.u32 %v2370, 31
      %v2373 = vsub.s32 32, %v2372
      %v2374 = vshrl.u32 683565275, %v2373
      %v2375 = vshll.u32 683565275, %v2372
      %v2376 = vshrl.u32 2475754826, %v2373
      %v2377 = vor.u32 %v2375, %v2376
      %v2378 = vshll.u32 2475754826, %v2372
      %v2379 = vshrl.u32 2131351028, %v2373
      %v2380 = vor.u32 %v2378, %v2379
      %v2381 = vshll.u32 2131351028, %v2372
      %v2382 = vshrl.u32 2102212464, %v2373
      %v2383 = vor.u32 %v2381, %v2382
      %v2384 = vshll.u32 2102212464, %v2372
      %v2385 = vshrl.u32 920167782, %v2373
      %v2386 = vor.u32 %v2384, %v2385
      %v2387 = vshll.u32 920167782, %v2372
      %v2388 = vshrl.u32 1326507024, %v2373
      %v2389 = vor.u32 %v2387, %v2388
      %vm2390 = vcmp.lt.s32.totalorder %v2371, 1
      %vm2391 = vcmp.lt.s32.totalorder %v2371, 2
      %vm2392 = vcmp.lt.s32.totalorder %v2371, 3
      %vm2393 = vcmp.lt.s32.totalorder %v2371, 4
      %v2394 = vsel %vm2390, %v2374, %v2377
      %v2395 = vsel %vm2393, %v2383, 2102212464
      %v2396 = vsel %vm2392, %v2380, %v2395
      %v2397 = vsel %vm2391, %v2394, %v2396
      %v2398 = vsel %vm2390, %v2377, %v2380
      %v2399 = vsel %vm2393, %v2386, 920167782
      %v2400 = vsel %vm2392, %v2383, %v2399
      %v2401 = vsel %vm2391, %v2398, %v2400
      %v2402 = vsel %vm2390, %v2380, %v2383
      %v2403 = vsel %vm2393, %v2389, 1326507024
      %v2404 = vsel %vm2392, %v2386, %v2403
      %v2405 = vsel %vm2391, %v2402, %v2404
      %v2406 = vshll.u32 %v2366, 8
      %v2407 = vand.u32 %v2406, 65535
      %v2408 = vshrl.u32 %v2406, 16
      %v2409 = vand.u32 %v2405, 65535
      %v2410 = vshrl.u32 %v2405, 16
      %v2411 = vmul.u32 %v2407, %v2409
      %v2412 = vmul.u32 %v2407, %v2410
      %v2413 = vmul.u32 %v2408, %v2409
      %v2414 = vmul.u32 %v2408, %v2410
      %v2415 = vshll.u32 %v2412, 16
      %v2416 = vshrl.u32 %v2412, 16
      %v2417 = vshll.u32 %v2413, 16
      %v2418 = vshrl.u32 %v2413, 16
      %vm2419 = vc.u32 %v2411, %v2415
      %v2420 = vsel %vm2419, 1, 0
      %v2421 = vadd.s32 %v2411, %v2415
      %v2422 = vadd.s32 %v2414, %v2420
      %vm2423 = vc.u32 %v2421, %v2417
      %v2424 = vsel %vm2423, 1, 0
      %v2425 = vadd.s32 %v2421, %v2417
      %v2426 = vadd.s32 %v2422, %v2424
      %v2427 = vadd.s32 %v2426, %v2416
      %v2428 = vadd.s32 %v2427, %v2418
      %v2429 = vand.u32 %v2406, 65535
      %v2430 = vshrl.u32 %v2406, 16
      %v2431 = vand.u32 %v2401, 65535
      %v2432 = vshrl.u32 %v2401, 16
      %v2433 = vmul.u32 %v2429, %v2431
      %v2434 = vmul.u32 %v2429, %v2432
      %v2435 = vmul.u32 %v2430, %v2431
      %v2436 = vmul.u32 %v2430, %v2432
      %v2437 = vshll.u32 %v2434, 16
      %v2438 = vshrl.u32 %v2434, 16
      %v2439 = vshll.u32 %v2435, 16
      %v2440 = vshrl.u32 %v2435, 16
      %vm2441 = vc.u32 %v2433, %v2437
      %v2442 = vsel %vm2441, 1, 0
      %v2443 = vadd.s32 %v2433, %v2437
      %v2444 = vadd.s32 %v2436, %v2442
      %vm2445 = vc.u32 %v2443, %v2439
      %v2446 = vsel %vm2445, 1, 0
      %v2447 = vadd.s32 %v2443, %v2439
      %v2448 = vadd.s32 %v2444, %v2446
      %v2449 = vadd.s32 %v2448, %v2438
      %v2450 = vadd.s32 %v2449, %v2440
      %v2451 = vmul.u32 %v2406, %v2397
      %v2452 = vadd.s32 %v2428, %v2447
      %vm2453 = vc.u32 %v2428, %v2447
      %v2454 = vadd.s32 %v2450, 1
      %v2455 = vsel %vm2453, %v2454, %v2450
      %v2456 = vadd.s32 %v2451, %v2455
      %v2457 = vadd.s32 %v2456, 536870912
      %v2458 = vshrl.u32 %v2457, 30
      %v2459 = vshll.u32 %v2458, 30
      %v2460 = vsub.s32 %v2456, %v2459
      %vm2461 = vcmp.lt.s32.totalorder %v2460, 0
      %v2462 = vsub.s32 0, %v2460
      %v2463 = vsel %vm2461, %v2462, %v2460
      %v2464 = vclz %v2463
      %v2465 = vsub.s32 %v2464, 2
      %vm2466 = vcmp.gt.s32.totalorder 0, %v2465
      %v2467 = vsel %vm2466, 0, %v2465
      %v2468 = vsub.s32 32, %v2467
      %v2469 = vshll.u32 %v2460, %v2467
      %v2470 = vshrl.u32 %v2452, %v2468
      %v2471 = vor.u32 %v2469, %v2470
      %v2472 = vsub.s32 4294967266, %v2467
      %v2473 = vadd.s32 %v2472, 127
      %v2474 = vshll.u32 %v2473, 23
      %v2475 = vor.u32 4788187, %v2474
      %v2476 = vand.u32 2147483647, %v2475
      %v2478 = vcvt.s32.f32 %v2471
      %v2479 = vmul.f32 %v2478, %v2476
      %v2480 = vxor.u32 %v2479, 2147483648
      %v2481 = vsel %vm2360, %v2480, %v2479
      %v2482 = vsub.s32 4, %v2458
      %v2483 = vsel %vm2360, %v2482, %v2458
      %v2484 = vsel %vm2359, %v2311, %v2481
      %v2485 = vsel %vm2359, 0, %v2483
      %v2486 = vmul.f32 %v2484, %v2484
      %v2487 = vmul.f32 %v2486, -0.001358992
      %v2488 = vadd.f32 %v2487, 0.041655596
      %v2489 = vmul.f32 %v2486, %v2488
      %v2490 = vadd.f32 %v2489, -0.4999988
      %v2491 = vmul.f32 %v2486, %v2490
      %v2492 = vadd.f32 1.0, %v2491
      %v2493 = vmul.f32 %v2484, %v2484
      %v2494 = vmul.f32 %v2493, -0.00019511016
      %v2495 = vadd.f32 %v2494, 0.008332121
      %v2496 = vmul.f32 %v2493, %v2495
      %v2497 = vadd.f32 %v2496, -0.16666654
      %v2498 = vmul.f32 %v2493, %v2497
      %v2499 = vadd.f32 %v2498, 1.0
      %v2500 = vmul.f32 %v2499, %v2484
      %vm2501 = vweird.f32 %v2311
      %v2502 = vadd.s32 %v2485, 3
      %v2503 = vand.u32 %v2502, 3
      %vm2504 = vcmp.lt.s32.totalorder %v2503, 2
      %vm2505 = vcmp.eq.s32.totalorder %v2503, 0
      %v2506 = vxor.u32 %v2500, 2147483648
      %v2507 = vsel %vm2505, %v2492, %v2506
      %vm2508 = vcmp.eq.s32.totalorder %v2503, 2
      %v2509 = vxor.u32 %v2492, 2147483648
      %v2510 = vsel %vm2508, %v2509, %v2500
      %v2511 = vsel %vm2504, %v2507, %v2510
      %v2512 = vsel %vm2501, nan, %v2511
      %v2513 = vand.u32 2147483647, %v2314
      %vm2514 = vcmp.le.f32.partialorder %v2513, 0.7853982
      %vm2515 = vcmp.lt.s32.totalorder %v2314, 0
      %v2516 = vand.u32 %v2314, 2139095040
      %v2517 = vshrl.u32 %v2516, 23
      %v2518 = vsub.s32 %v2517, 127
      %v2519 = vand.u32 2147483647, %v2314
      %v2520 = vand.u32 %v2519, 8388607
      %v2521 = vor.u32 %v2520, 8388608
      %v2522 = vsub.s32 0, %v2521
      %v2523 = vadd.s32 %v2518, 1
      %vm2524 = vcmp.gt.s32.totalorder %v2523, 0
      %v2525 = vsel %vm2524, %v2523, 0
      %v2526 = vshrl.u32 %v2525, 5
      %v2527 = vand.u32 %v2525, 31
      %v2528 = vsub.s32 32, %v2527
      %v2529 = vshrl.u32 683565275, %v2528
      %v2530 = vshll.u32 683565275, %v2527
      %v2531 = vshrl.u32 2475754826, %v2528
      %v2532 = vor.u32 %v2530, %v2531
      %v2533 = vshll.u32 2475754826, %v2527
      %v2534 = vshrl.u32 2131351028, %v2528
      %v2535 = vor.u32 %v2533, %v2534
      %v2536 = vshll.u32 2131351028, %v2527
      %v2537 = vshrl.u32 2102212464, %v2528
      %v2538 = vor.u32 %v2536, %v2537
      %v2539 = vshll.u32 2102212464, %v2527
      %v2540 = vshrl.u32 920167782, %v2528
      %v2541 = vor.u32 %v2539, %v2540
      %v2542 = vshll.u32 920167782, %v2527
      %v2543 = vshrl.u32 1326507024, %v2528
      %v2544 = vor.u32 %v2542, %v2543
      %vm2545 = vcmp.lt.s32.totalorder %v2526, 1
      %vm2546 = vcmp.lt.s32.totalorder %v2526, 2
      %vm2547 = vcmp.lt.s32.totalorder %v2526, 3
      %vm2548 = vcmp.lt.s32.totalorder %v2526, 4
      %v2549 = vsel %vm2545, %v2529, %v2532
      %v2550 = vsel %vm2548, %v2538, 2102212464
      %v2551 = vsel %vm2547, %v2535, %v2550
      %v2552 = vsel %vm2546, %v2549, %v2551
      %v2553 = vsel %vm2545, %v2532, %v2535
      %v2554 = vsel %vm2548, %v2541, 920167782
      %v2555 = vsel %vm2547, %v2538, %v2554
      %v2556 = vsel %vm2546, %v2553, %v2555
      %v2557 = vsel %vm2545, %v2535, %v2538
      %v2558 = vsel %vm2548, %v2544, 1326507024
      %v2559 = vsel %vm2547, %v2541, %v2558
      %v2560 = vsel %vm2546, %v2557, %v2559
      %v2561 = vshll.u32 %v2521, 8
      %v2562 = vand.u32 %v2561, 65535
      %v2563 = vshrl.u32 %v2561, 16
      %v2564 = vand.u32 %v2560, 65535
      %v2565 = vshrl.u32 %v2560, 16
      %v2566 = vmul.u32 %v2562, %v2564
      %v2567 = vmul.u32 %v2562, %v2565
      %v2568 = vmul.u32 %v2563, %v2564
      %v2569 = vmul.u32 %v2563, %v2565
      %v2570 = vshll.u32 %v2567, 16
      %v2571 = vshrl.u32 %v2567, 16
      %v2572 = vshll.u32 %v2568, 16
      %v2573 = vshrl.u32 %v2568, 16
      %vm2574 = vc.u32 %v2566, %v2570
      %v2575 = vsel %vm2574, 1, 0
      %v2576 = vadd.s32 %v2566, %v2570
      %v2577 = vadd.s32 %v2569, %v2575
      %vm2578 = vc.u32 %v2576, %v2572
      %v2579 = vsel %vm2578, 1, 0
      %v2580 = vadd.s32 %v2576, %v2572
      %v2581 = vadd.s32 %v2577, %v2579
      %v2582 = vadd.s32 %v2581, %v2571
      %v2583 = vadd.s32 %v2582, %v2573
      %v2584 = vand.u32 %v2561, 65535
      %v2585 = vshrl.u32 %v2561, 16
      %v2586 = vand.u32 %v2556, 65535
      %v2587 = vshrl.u32 %v2556, 16
      %v2588 = vmul.u32 %v2584, %v2586
      %v2589 = vmul.u32 %v2584, %v2587
      %v2590 = vmul.u32 %v2585, %v2586
      %v2591 = vmul.u32 %v2585, %v2587
      %v2592 = vshll.u32 %v2589, 16
      %v2593 = vshrl.u32 %v2589, 16
      %v2594 = vshll.u32 %v2590, 16
      %v2595 = vshrl.u32 %v2590, 16
      %vm2596 = vc.u32 %v2588, %v2592
      %v2597 = vsel %vm2596, 1, 0
      %v2598 = vadd.s32 %v2588, %v2592
      %v2599 = vadd.s32 %v2591, %v2597
      %vm2600 = vc.u32 %v2598, %v2594
      %v2601 = vsel %vm2600, 1, 0
      %v2602 = vadd.s32 %v2598, %v2594
      %v2603 = vadd.s32 %v2599, %v2601
      %v2604 = vadd.s32 %v2603, %v2593
      %v2605 = vadd.s32 %v2604, %v2595
      %v2606 = vmul.u32 %v2561, %v2552
      %v2607 = vadd.s32 %v2583, %v2602
      %vm2608 = vc.u32 %v2583, %v2602
      %v2609 = vadd.s32 %v2605, 1
      %v2610 = vsel %vm2608, %v2609, %v2605
      %v2611 = vadd.s32 %v2606, %v2610
      %v2612 = vadd.s32 %v2611, 536870912
      %v2613 = vshrl.u32 %v2612, 30
      %v2614 = vshll.u32 %v2613, 30
      %v2615 = vsub.s32 %v2611, %v2614
      %vm2616 = vcmp.lt.s32.totalorder %v2615, 0
      %v2617 = vsub.s32 0, %v2615
      %v2618 = vsel %vm2616, %v2617, %v2615
      %v2619 = vclz %v2618
      %v2620 = vsub.s32 %v2619, 2
      %vm2621 = vcmp.gt.s32.totalorder 0, %v2620
      %v2622 = vsel %vm2621, 0, %v2620
      %v2623 = vsub.s32 32, %v2622
      %v2624 = vshll.u32 %v2615, %v2622
      %v2625 = vshrl.u32 %v2607, %v2623
      %v2626 = vor.u32 %v2624, %v2625
      %v2627 = vsub.s32 4294967266, %v2622
      %v2628 = vadd.s32 %v2627, 127
      %v2629 = vshll.u32 %v2628, 23
      %v2630 = vor.u32 4788187, %v2629
      %v2631 = vand.u32 2147483647, %v2630
      %v2633 = vcvt.s32.f32 %v2626
      %v2634 = vmul.f32 %v2633, %v2631
      %v2635 = vxor.u32 %v2634, 2147483648
      %v2636 = vsel %vm2515, %v2635, %v2634
      %v2637 = vsub.s32 4, %v2613
      %v2638 = vsel %vm2515, %v2637, %v2613
      %v2639 = vsel %vm2514, %v2314, %v2636
      %v2640 = vsel %vm2514, 0, %v2638
      %v2641 = vmul.f32 %v2639, %v2639
      %v2642 = vmul.f32 %v2641, -0.001358992
      %v2643 = vadd.f32 %v2642, 0.041655596
      %v2644 = vmul.f32 %v2641, %v2643
      %v2645 = vadd.f32 %v2644, -0.4999988
      %v2646 = vmul.f32 %v2641, %v2645
      %v2647 = vadd.f32 1.0, %v2646
      %v2648 = vmul.f32 %v2639, %v2639
      %v2649 = vmul.f32 %v2648, -0.00019511016
      %v2650 = vadd.f32 %v2649, 0.008332121
      %v2651 = vmul.f32 %v2648, %v2650
      %v2652 = vadd.f32 %v2651, -0.16666654
      %v2653 = vmul.f32 %v2648, %v2652
      %v2654 = vadd.f32 %v2653, 1.0
      %v2655 = vmul.f32 %v2654, %v2639
      %vm2656 = vweird.f32 %v2314
      %v2657 = vadd.s32 %v2640, 3
      %v2658 = vand.u32 %v2657, 3
      %vm2659 = vcmp.lt.s32.totalorder %v2658, 2
      %vm2660 = vcmp.eq.s32.totalorder %v2658, 0
      %v2661 = vxor.u32 %v2655, 2147483648
      %v2662 = vsel %vm2660, %v2647, %v2661
      %vm2663 = vcmp.eq.s32.totalorder %v2658, 2
      %v2664 = vxor.u32 %v2647, 2147483648
      %v2665 = vsel %vm2663, %v2664, %v2655
      %v2666 = vsel %vm2659, %v2662, %v2665
      %v2667 = vsel %vm2656, nan, %v2666
      %v2668 = vand.u32 2147483647, %v2317
      %vm2669 = vcmp.le.f32.partialorder %v2668, 0.7853982
      %vm2670 = vcmp.lt.s32.totalorder %v2317, 0
      %v2671 = vand.u32 %v2317, 2139095040
      %v2672 = vshrl.u32 %v2671, 23
      %v2673 = vsub.s32 %v2672, 127
      %v2674 = vand.u32 2147483647, %v2317
      %v2675 = vand.u32 %v2674, 8388607
      %v2676 = vor.u32 %v2675, 8388608
      %v2677 = vsub.s32 0, %v2676
      %v2678 = vadd.s32 %v2673, 1
      %vm2679 = vcmp.gt.s32.totalorder %v2678, 0
      %v2680 = vsel %vm2679, %v2678, 0
      %v2681 = vshrl.u32 %v2680, 5
      %v2682 = vand.u32 %v2680, 31
      %v2683 = vsub.s32 32, %v2682
      %v2684 = vshrl.u32 683565275, %v2683
      %v2685 = vshll.u32 683565275, %v2682
      %v2686 = vshrl.u32 2475754826, %v2683
      %v2687 = vor.u32 %v2685, %v2686
      %v2688 = vshll.u32 2475754826, %v2682
      %v2689 = vshrl.u32 2131351028, %v2683
      %v2690 = vor.u32 %v2688, %v2689
      %v2691 = vshll.u32 2131351028, %v2682
      %v2692 = vshrl.u32 2102212464, %v2683
      %v2693 = vor.u32 %v2691, %v2692
      %v2694 = vshll.u32 2102212464, %v2682
      %v2695 = vshrl.u32 920167782, %v2683
      %v2696 = vor.u32 %v2694, %v2695
      %v2697 = vshll.u32 920167782, %v2682
      %v2698 = vshrl.u32 1326507024, %v2683
      %v2699 = vor.u32 %v2697, %v2698
      %vm2700 = vcmp.lt.s32.totalorder %v2681, 1
      %vm2701 = vcmp.lt.s32.totalorder %v2681, 2
      %vm2702 = vcmp.lt.s32.totalorder %v2681, 3
      %vm2703 = vcmp.lt.s32.totalorder %v2681, 4
      %v2704 = vsel %vm2700, %v2684, %v2687
      %v2705 = vsel %vm2703, %v2693, 2102212464
      %v2706 = vsel %vm2702, %v2690, %v2705
      %v2707 = vsel %vm2701, %v2704, %v2706
      %v2708 = vsel %vm2700, %v2687, %v2690
      %v2709 = vsel %vm2703, %v2696, 920167782
      %v2710 = vsel %vm2702, %v2693, %v2709
      %v2711 = vsel %vm2701, %v2708, %v2710
      %v2712 = vsel %vm2700, %v2690, %v2693
      %v2713 = vsel %vm2703, %v2699, 1326507024
      %v2714 = vsel %vm2702, %v2696, %v2713
      %v2715 = vsel %vm2701, %v2712, %v2714
      %v2716 = vshll.u32 %v2676, 8
      %v2717 = vand.u32 %v2716, 65535
      %v2718 = vshrl.u32 %v2716, 16
      %v2719 = vand.u32 %v2715, 65535
      %v2720 = vshrl.u32 %v2715, 16
      %v2721 = vmul.u32 %v2717, %v2719
      %v2722 = vmul.u32 %v2717, %v2720
      %v2723 = vmul.u32 %v2718, %v2719
      %v2724 = vmul.u32 %v2718, %v2720
      %v2725 = vshll.u32 %v2722, 16
      %v2726 = vshrl.u32 %v2722, 16
      %v2727 = vshll.u32 %v2723, 16
      %v2728 = vshrl.u32 %v2723, 16
      %vm2729 = vc.u32 %v2721, %v2725
      %v2730 = vsel %vm2729, 1, 0
      %v2731 = vadd.s32 %v2721, %v2725
      %v2732 = vadd.s32 %v2724, %v2730
      %vm2733 = vc.u32 %v2731, %v2727
      %v2734 = vsel %vm2733, 1, 0
      %v2735 = vadd.s32 %v2731, %v2727
      %v2736 = vadd.s32 %v2732, %v2734
      %v2737 = vadd.s32 %v2736, %v2726
      %v2738 = vadd.s32 %v2737, %v2728
      %v2739 = vand.u32 %v2716, 65535
      %v2740 = vshrl.u32 %v2716, 16
      %v2741 = vand.u32 %v2711, 65535
      %v2742 = vshrl.u32 %v2711, 16
      %v2743 = vmul.u32 %v2739, %v2741
      %v2744 = vmul.u32 %v2739, %v2742
      %v2745 = vmul.u32 %v2740, %v2741
      %v2746 = vmul.u32 %v2740, %v2742
      %v2747 = vshll.u32 %v2744, 16
      %v2748 = vshrl.u32 %v2744, 16
      %v2749 = vshll.u32 %v2745, 16
      %v2750 = vshrl.u32 %v2745, 16
      %vm2751 = vc.u32 %v2743, %v2747
      %v2752 = vsel %vm2751, 1, 0
      %v2753 = vadd.s32 %v2743, %v2747
      %v2754 = vadd.s32 %v2746, %v2752
      %vm2755 = vc.u32 %v2753, %v2749
      %v2756 = vsel %vm2755, 1, 0
      %v2757 = vadd.s32 %v2753, %v2749
      %v2758 = vadd.s32 %v2754, %v2756
      %v2759 = vadd.s32 %v2758, %v2748
      %v2760 = vadd.s32 %v2759, %v2750
      %v2761 = vmul.u32 %v2716, %v2707
      %v2762 = vadd.s32 %v2738, %v2757
      %vm2763 = vc.u32 %v2738, %v2757
      %v2764 = vadd.s32 %v2760, 1
      %v2765 = vsel %vm2763, %v2764, %v2760
      %v2766 = vadd.s32 %v2761, %v2765
      %v2767 = vadd.s32 %v2766, 536870912
      %v2768 = vshrl.u32 %v2767, 30
      %v2769 = vshll.u32 %v2768, 30
      %v2770 = vsub.s32 %v2766, %v2769
      %vm2771 = vcmp.lt.s32.totalorder %v2770, 0
      %v2772 = vsub.s32 0, %v2770
      %v2773 = vsel %vm2771, %v2772, %v2770
      %v2774 = vclz %v2773
      %v2775 = vsub.s32 %v2774, 2
      %vm2776 = vcmp.gt.s32.totalorder 0, %v2775
      %v2777 = vsel %vm2776, 0, %v2775
      %v2778 = vsub.s32 32, %v2777
      %v2779 = vshll.u32 %v2770, %v2777
      %v2780 = vshrl.u32 %v2762, %v2778
      %v2781 = vor.u32 %v2779, %v2780
      %v2782 = vsub.s32 4294967266, %v2777
      %v2783 = vadd.s32 %v2782, 127
      %v2784 = vshll.u32 %v2783, 23
      %v2785 = vor.u32 4788187, %v2784
      %v2786 = vand.u32 2147483647, %v2785
      %v2788 = vcvt.s32.f32 %v2781
      %v2789 = vmul.f32 %v2788, %v2786
      %v2790 = vxor.u32 %v2789, 2147483648
      %v2791 = vsel %vm2670, %v2790, %v2789
      %v2792 = vsub.s32 4, %v2768
      %v2793 = vsel %vm2670, %v2792, %v2768
      %v2794 = vsel %vm2669, %v2317, %v2791
      %v2795 = vsel %vm2669, 0, %v2793
      %v2796 = vmul.f32 %v2794, %v2794
      %v2797 = vmul.f32 %v2796, -0.001358992
      %v2798 = vadd.f32 %v2797, 0.041655596
      %v2799 = vmul.f32 %v2796, %v2798
      %v2800 = vadd.f32 %v2799, -0.4999988
      %v2801 = vmul.f32 %v2796, %v2800
      %v2802 = vadd.f32 1.0, %v2801
      %v2803 = vmul.f32 %v2794, %v2794
      %v2804 = vmul.f32 %v2803, -0.00019511016
      %v2805 = vadd.f32 %v2804, 0.008332121
      %v2806 = vmul.f32 %v2803, %v2805
      %v2807 = vadd.f32 %v2806, -0.16666654
      %v2808 = vmul.f32 %v2803, %v2807
      %v2809 = vadd.f32 %v2808, 1.0
      %v2810 = vmul.f32 %v2809, %v2794
      %vm2811 = vweird.f32 %v2317
      %v2812 = vadd.s32 %v2795, 3
      %v2813 = vand.u32 %v2812, 3
      %vm2814 = vcmp.lt.s32.totalorder %v2813, 2
      %vm2815 = vcmp.eq.s32.totalorder %v2813, 0
      %v2816 = vxor.u32 %v2810, 2147483648
      %v2817 = vsel %vm2815, %v2802, %v2816
      %vm2818 = vcmp.eq.s32.totalorder %v2813, 2
      %v2819 = vxor.u32 %v2802, 2147483648
      %v2820 = vsel %vm2818, %v2819, %v2810
      %v2821 = vsel %vm2814, %v2817, %v2820
      %v2822 = vsel %vm2811, nan, %v2821
      %v2823 = vand.u32 2147483647, %v2320
      %vm2824 = vcmp.le.f32.partialorder %v2823, 0.7853982
      %vm2825 = vcmp.lt.s32.totalorder %v2320, 0
      %v2826 = vand.u32 %v2320, 2139095040
      %v2827 = vshrl.u32 %v2826, 23
      %v2828 = vsub.s32 %v2827, 127
      %v2829 = vand.u32 2147483647, %v2320
      %v2830 = vand.u32 %v2829, 8388607
      %v2831 = vor.u32 %v2830, 8388608
      %v2832 = vsub.s32 0, %v2831
      %v2833 = vadd.s32 %v2828, 1
      %vm2834 = vcmp.gt.s32.totalorder %v2833, 0
      %v2835 = vsel %vm2834, %v2833, 0
      %v2836 = vshrl.u32 %v2835, 5
      %v2837 = vand.u32 %v2835, 31
      %v2838 = vsub.s32 32, %v2837
      %v2839 = vshrl.u32 683565275, %v2838
      %v2840 = vshll.u32 683565275, %v2837
      %v2841 = vshrl.u32 2475754826, %v2838
      %v2842 = vor.u32 %v2840, %v2841
      %v2843 = vshll.u32 2475754826, %v2837
      %v2844 = vshrl.u32 2131351028, %v2838
      %v2845 = vor.u32 %v2843, %v2844
      %v2846 = vshll.u32 2131351028, %v2837
      %v2847 = vshrl.u32 2102212464, %v2838
      %v2848 = vor.u32 %v2846, %v2847
      %v2849 = vshll.u32 2102212464, %v2837
      %v2850 = vshrl.u32 920167782, %v2838
      %v2851 = vor.u32 %v2849, %v2850
      %v2852 = vshll.u32 920167782, %v2837
      %v2853 = vshrl.u32 1326507024, %v2838
      %v2854 = vor.u32 %v2852, %v2853
      %vm2855 = vcmp.lt.s32.totalorder %v2836, 1
      %vm2856 = vcmp.lt.s32.totalorder %v2836, 2
      %vm2857 = vcmp.lt.s32.totalorder %v2836, 3
      %vm2858 = vcmp.lt.s32.totalorder %v2836, 4
      %v2859 = vsel %vm2855, %v2839, %v2842
      %v2860 = vsel %vm2858, %v2848, 2102212464
      %v2861 = vsel %vm2857, %v2845, %v2860
      %v2862 = vsel %vm2856, %v2859, %v2861
      %v2863 = vsel %vm2855, %v2842, %v2845
      %v2864 = vsel %vm2858, %v2851, 920167782
      %v2865 = vsel %vm2857, %v2848, %v2864
      %v2866 = vsel %vm2856, %v2863, %v2865
      %v2867 = vsel %vm2855, %v2845, %v2848
      %v2868 = vsel %vm2858, %v2854, 1326507024
      %v2869 = vsel %vm2857, %v2851, %v2868
      %v2870 = vsel %vm2856, %v2867, %v2869
      %v2871 = vshll.u32 %v2831, 8
      %v2872 = vand.u32 %v2871, 65535
      %v2873 = vshrl.u32 %v2871, 16
      %v2874 = vand.u32 %v2870, 65535
      %v2875 = vshrl.u32 %v2870, 16
      %v2876 = vmul.u32 %v2872, %v2874
      %v2877 = vmul.u32 %v2872, %v2875
      %v2878 = vmul.u32 %v2873, %v2874
      %v2879 = vmul.u32 %v2873, %v2875
      %v2880 = vshll.u32 %v2877, 16
      %v2881 = vshrl.u32 %v2877, 16
      %v2882 = vshll.u32 %v2878, 16
      %v2883 = vshrl.u32 %v2878, 16
      %vm2884 = vc.u32 %v2876, %v2880
      %v2885 = vsel %vm2884, 1, 0
      %v2886 = vadd.s32 %v2876, %v2880
      %v2887 = vadd.s32 %v2879, %v2885
      %vm2888 = vc.u32 %v2886, %v2882
      %v2889 = vsel %vm2888, 1, 0
      %v2890 = vadd.s32 %v2886, %v2882
      %v2891 = vadd.s32 %v2887, %v2889
      %v2892 = vadd.s32 %v2891, %v2881
      %v2893 = vadd.s32 %v2892, %v2883
      %v2894 = vand.u32 %v2871, 65535
      %v2895 = vshrl.u32 %v2871, 16
      %v2896 = vand.u32 %v2866, 65535
      %v2897 = vshrl.u32 %v2866, 16
      %v2898 = vmul.u32 %v2894, %v2896
      %v2899 = vmul.u32 %v2894, %v2897
      %v2900 = vmul.u32 %v2895, %v2896
      %v2901 = vmul.u32 %v2895, %v2897
      %v2902 = vshll.u32 %v2899, 16
      %v2903 = vshrl.u32 %v2899, 16
      %v2904 = vshll.u32 %v2900, 16
      %v2905 = vshrl.u32 %v2900, 16
      %vm2906 = vc.u32 %v2898, %v2902
      %v2907 = vsel %vm2906, 1, 0
      %v2908 = vadd.s32 %v2898, %v2902
      %v2909 = vadd.s32 %v2901, %v2907
      %vm2910 = vc.u32 %v2908, %v2904
      %v2911 = vsel %vm2910, 1, 0
      %v2912 = vadd.s32 %v2908, %v2904
      %v2913 = vadd.s32 %v2909, %v2911
      %v2914 = vadd.s32 %v2913, %v2903
      %v2915 = vadd.s32 %v2914, %v2905
      %v2916 = vmul.u32 %v2871, %v2862
      %v2917 = vadd.s32 %v2893, %v2912
      %vm2918 = vc.u32 %v2893, %v2912
      %v2919 = vadd.s32 %v2915, 1
      %v2920 = vsel %vm2918, %v2919, %v2915
      %v2921 = vadd.s32 %v2916, %v2920
      %v2922 = vadd.s32 %v2921, 536870912
      %v2923 = vshrl.u32 %v2922, 30
      %v2924 = vshll.u32 %v2923, 30
      %v2925 = vsub.s32 %v2921, %v2924
      %vm2926 = vcmp.lt.s32.totalorder %v2925, 0
      %v2927 = vsub.s32 0, %v2925
      %v2928 = vsel %vm2926, %v2927, %v2925
      %v2929 = vclz %v2928
      %v2930 = vsub.s32 %v2929, 2
      %vm2931 = vcmp.gt.s32.totalorder 0, %v2930
      %v2932 = vsel %vm2931, 0, %v2930
      %v2933 = vsub.s32 32, %v2932
      %v2934 = vshll.u32 %v2925, %v2932
      %v2935 = vshrl.u32 %v2917, %v2933
      %v2936 = vor.u32 %v2934, %v2935
      %v2937 = vsub.s32 4294967266, %v2932
      %v2938 = vadd.s32 %v2937, 127
      %v2939 = vshll.u32 %v2938, 23
      %v2940 = vor.u32 4788187, %v2939
      %v2941 = vand.u32 2147483647, %v2940
      %v2943 = vcvt.s32.f32 %v2936
      %v2944 = vmul.f32 %v2943, %v2941
      %v2945 = vxor.u32 %v2944, 2147483648
      %v2946 = vsel %vm2825, %v2945, %v2944
      %v2947 = vsub.s32 4, %v2923
      %v2948 = vsel %vm2825, %v2947, %v2923
      %v2949 = vsel %vm2824, %v2320, %v2946
      %v2950 = vsel %vm2824, 0, %v2948
      %v2951 = vmul.f32 %v2949, %v2949
      %v2952 = vmul.f32 %v2951, -0.001358992
      %v2953 = vadd.f32 %v2952, 0.041655596
      %v2954 = vmul.f32 %v2951, %v2953
      %v2955 = vadd.f32 %v2954, -0.4999988
      %v2956 = vmul.f32 %v2951, %v2955
      %v2957 = vadd.f32 1.0, %v2956
      %v2958 = vmul.f32 %v2949, %v2949
      %v2959 = vmul.f32 %v2958, -0.00019511016
      %v2960 = vadd.f32 %v2959, 0.008332121
      %v2961 = vmul.f32 %v2958, %v2960
      %v2962 = vadd.f32 %v2961, -0.16666654
      %v2963 = vmul.f32 %v2958, %v2962
      %v2964 = vadd.f32 %v2963, 1.0
      %v2965 = vmul.f32 %v2964, %v2949
      %vm2966 = vweird.f32 %v2320
      %v2967 = vadd.s32 %v2950, 3
      %v2968 = vand.u32 %v2967, 3
      %vm2969 = vcmp.lt.s32.totalorder %v2968, 2
      %vm2970 = vcmp.eq.s32.totalorder %v2968, 0
      %v2971 = vxor.u32 %v2965, 2147483648
      %v2972 = vsel %vm2970, %v2957, %v2971
      %vm2973 = vcmp.eq.s32.totalorder %v2968, 2
      %v2974 = vxor.u32 %v2957, 2147483648
      %v2975 = vsel %vm2973, %v2974, %v2965
      %v2976 = vsel %vm2969, %v2972, %v2975
      %v2977 = vsel %vm2966, nan, %v2976
      %v2978 = vand.u32 2147483647, %v2323
      %vm2979 = vcmp.le.f32.partialorder %v2978, 0.7853982
      %vm2980 = vcmp.lt.s32.totalorder %v2323, 0
      %v2981 = vand.u32 %v2323, 2139095040
      %v2982 = vshrl.u32 %v2981, 23
      %v2983 = vsub.s32 %v2982, 127
      %v2984 = vand.u32 2147483647, %v2323
      %v2985 = vand.u32 %v2984, 8388607
      %v2986 = vor.u32 %v2985, 8388608
      %v2987 = vsub.s32 0, %v2986
      %v2988 = vadd.s32 %v2983, 1
      %vm2989 = vcmp.gt.s32.totalorder %v2988, 0
      %v2990 = vsel %vm2989, %v2988, 0
      %v2991 = vshrl.u32 %v2990, 5
      %v2992 = vand.u32 %v2990, 31
      %v2993 = vsub.s32 32, %v2992
      %v2994 = vshrl.u32 683565275, %v2993
      %v2995 = vshll.u32 683565275, %v2992
      %v2996 = vshrl.u32 2475754826, %v2993
      %v2997 = vor.u32 %v2995, %v2996
      %v2998 = vshll.u32 2475754826, %v2992
      %v2999 = vshrl.u32 2131351028, %v2993
      %v3000 = vor.u32 %v2998, %v2999
      %v3001 = vshll.u32 2131351028, %v2992
      %v3002 = vshrl.u32 2102212464, %v2993
      %v3003 = vor.u32 %v3001, %v3002
      %v3004 = vshll.u32 2102212464, %v2992
      %v3005 = vshrl.u32 920167782, %v2993
      %v3006 = vor.u32 %v3004, %v3005
      %v3007 = vshll.u32 920167782, %v2992
      %v3008 = vshrl.u32 1326507024, %v2993
      %v3009 = vor.u32 %v3007, %v3008
      %vm3010 = vcmp.lt.s32.totalorder %v2991, 1
      %vm3011 = vcmp.lt.s32.totalorder %v2991, 2
      %vm3012 = vcmp.lt.s32.totalorder %v2991, 3
      %vm3013 = vcmp.lt.s32.totalorder %v2991, 4
      %v3014 = vsel %vm3010, %v2994, %v2997
      %v3015 = vsel %vm3013, %v3003, 2102212464
      %v3016 = vsel %vm3012, %v3000, %v3015
      %v3017 = vsel %vm3011, %v3014, %v3016
      %v3018 = vsel %vm3010, %v2997, %v3000
      %v3019 = vsel %vm3013, %v3006, 920167782
      %v3020 = vsel %vm3012, %v3003, %v3019
      %v3021 = vsel %vm3011, %v3018, %v3020
      %v3022 = vsel %vm3010, %v3000, %v3003
      %v3023 = vsel %vm3013, %v3009, 1326507024
      %v3024 = vsel %vm3012, %v3006, %v3023
      %v3025 = vsel %vm3011, %v3022, %v3024
      %v3026 = vshll.u32 %v2986, 8
      %v3027 = vand.u32 %v3026, 65535
      %v3028 = vshrl.u32 %v3026, 16
      %v3029 = vand.u32 %v3025, 65535
      %v3030 = vshrl.u32 %v3025, 16
      %v3031 = vmul.u32 %v3027, %v3029
      %v3032 = vmul.u32 %v3027, %v3030
      %v3033 = vmul.u32 %v3028, %v3029
      %v3034 = vmul.u32 %v3028, %v3030
      %v3035 = vshll.u32 %v3032, 16
      %v3036 = vshrl.u32 %v3032, 16
      %v3037 = vshll.u32 %v3033, 16
      %v3038 = vshrl.u32 %v3033, 16
      %vm3039 = vc.u32 %v3031, %v3035
      %v3040 = vsel %vm3039, 1, 0
      %v3041 = vadd.s32 %v3031, %v3035
      %v3042 = vadd.s32 %v3034, %v3040
      %vm3043 = vc.u32 %v3041, %v3037
      %v3044 = vsel %vm3043, 1, 0
      %v3045 = vadd.s32 %v3041, %v3037
      %v3046 = vadd.s32 %v3042, %v3044
      %v3047 = vadd.s32 %v3046, %v3036
      %v3048 = vadd.s32 %v3047, %v3038
      %v3049 = vand.u32 %v3026, 65535
      %v3050 = vshrl.u32 %v3026, 16
      %v3051 = vand.u32 %v3021, 65535
      %v3052 = vshrl.u32 %v3021, 16
      %v3053 = vmul.u32 %v3049, %v3051
      %v3054 = vmul.u32 %v3049, %v3052
      %v3055 = vmul.u32 %v3050, %v3051
      %v3056 = vmul.u32 %v3050, %v3052
      %v3057 = vshll.u32 %v3054, 16
      %v3058 = vshrl.u32 %v3054, 16
      %v3059 = vshll.u32 %v3055, 16
      %v3060 = vshrl.u32 %v3055, 16
      %vm3061 = vc.u32 %v3053, %v3057
      %v3062 = vsel %vm3061, 1, 0
      %v3063 = vadd.s32 %v3053, %v3057
      %v3064 = vadd.s32 %v3056, %v3062
      %vm3065 = vc.u32 %v3063, %v3059
      %v3066 = vsel %vm3065, 1, 0
      %v3067 = vadd.s32 %v3063, %v3059
      %v3068 = vadd.s32 %v3064, %v3066
      %v3069 = vadd.s32 %v3068, %v3058
      %v3070 = vadd.s32 %v3069, %v3060
      %v3071 = vmul.u32 %v3026, %v3017
      %v3072 = vadd.s32 %v3048, %v3067
      %vm3073 = vc.u32 %v3048, %v3067
      %v3074 = vadd.s32 %v3070, 1
      %v3075 = vsel %vm3073, %v3074, %v3070
      %v3076 = vadd.s32 %v3071, %v3075
      %v3077 = vadd.s32 %v3076, 536870912
      %v3078 = vshrl.u32 %v3077, 30
      %v3079 = vshll.u32 %v3078, 30
      %v3080 = vsub.s32 %v3076, %v3079
      %vm3081 = vcmp.lt.s32.totalorder %v3080, 0
      %v3082 = vsub.s32 0, %v3080
      %v3083 = vsel %vm3081, %v3082, %v3080
      %v3084 = vclz %v3083
      %v3085 = vsub.s32 %v3084, 2
      %vm3086 = vcmp.gt.s32.totalorder 0, %v3085
      %v3087 = vsel %vm3086, 0, %v3085
      %v3088 = vsub.s32 32, %v3087
      %v3089 = vshll.u32 %v3080, %v3087
      %v3090 = vshrl.u32 %v3072, %v3088
      %v3091 = vor.u32 %v3089, %v3090
      %v3092 = vsub.s32 4294967266, %v3087
      %v3093 = vadd.s32 %v3092, 127
      %v3094 = vshll.u32 %v3093, 23
      %v3095 = vor.u32 4788187, %v3094
      %v3096 = vand.u32 2147483647, %v3095
      %v3098 = vcvt.s32.f32 %v3091
      %v3099 = vmul.f32 %v3098, %v3096
      %v3100 = vxor.u32 %v3099, 2147483648
      %v3101 = vsel %vm2980, %v3100, %v3099
      %v3102 = vsub.s32 4, %v3078
      %v3103 = vsel %vm2980, %v3102, %v3078
      %v3104 = vsel %vm2979, %v2323, %v3101
      %v3105 = vsel %vm2979, 0, %v3103
      %v3106 = vmul.f32 %v3104, %v3104
      %v3107 = vmul.f32 %v3106, -0.001358992
      %v3108 = vadd.f32 %v3107, 0.041655596
      %v3109 = vmul.f32 %v3106, %v3108
      %v3110 = vadd.f32 %v3109, -0.4999988
      %v3111 = vmul.f32 %v3106, %v3110
      %v3112 = vadd.f32 1.0, %v3111
      %v3113 = vmul.f32 %v3104, %v3104
      %v3114 = vmul.f32 %v3113, -0.00019511016
      %v3115 = vadd.f32 %v3114, 0.008332121
      %v3116 = vmul.f32 %v3113, %v3115
      %v3117 = vadd.f32 %v3116, -0.16666654
      %v3118 = vmul.f32 %v3113, %v3117
      %v3119 = vadd.f32 %v3118, 1.0
      %v3120 = vmul.f32 %v3119, %v3104
      %vm3121 = vweird.f32 %v2323
      %v3122 = vadd.s32 %v3105, 3
      %v3123 = vand.u32 %v3122, 3
      %vm3124 = vcmp.lt.s32.totalorder %v3123, 2
      %vm3125 = vcmp.eq.s32.totalorder %v3123, 0
      %v3126 = vxor.u32 %v3120, 2147483648
      %v3127 = vsel %vm3125, %v3112, %v3126
      %vm3128 = vcmp.eq.s32.totalorder %v3123, 2
      %v3129 = vxor.u32 %v3112, 2147483648
      %v3130 = vsel %vm3128, %v3129, %v3120
      %v3131 = vsel %vm3124, %v3127, %v3130
      %v3132 = vsel %vm3121, nan, %v3131
      %v3133 = vand.u32 2147483647, %v2326
      %vm3134 = vcmp.le.f32.partialorder %v3133, 0.7853982
      %vm3135 = vcmp.lt.s32.totalorder %v2326, 0
      %v3136 = vand.u32 %v2326, 2139095040
      %v3137 = vshrl.u32 %v3136, 23
      %v3138 = vsub.s32 %v3137, 127
      %v3139 = vand.u32 2147483647, %v2326
      %v3140 = vand.u32 %v3139, 8388607
      %v3141 = vor.u32 %v3140, 8388608
      %v3142 = vsub.s32 0, %v3141
      %v3143 = vadd.s32 %v3138, 1
      %vm3144 = vcmp.gt.s32.totalorder %v3143, 0
      %v3145 = vsel %vm3144, %v3143, 0
      %v3146 = vshrl.u32 %v3145, 5
      %v3147 = vand.u32 %v3145, 31
      %v3148 = vsub.s32 32, %v3147
      %v3149 = vshrl.u32 683565275, %v3148
      %v3150 = vshll.u32 683565275, %v3147
      %v3151 = vshrl.u32 2475754826, %v3148
      %v3152 = vor.u32 %v3150, %v3151
      %v3153 = vshll.u32 2475754826, %v3147
      %v3154 = vshrl.u32 2131351028, %v3148
      %v3155 = vor.u32 %v3153, %v3154
      %v3156 = vshll.u32 2131351028, %v3147
      %v3157 = vshrl.u32 2102212464, %v3148
      %v3158 = vor.u32 %v3156, %v3157
      %v3159 = vshll.u32 2102212464, %v3147
      %v3160 = vshrl.u32 920167782, %v3148
      %v3161 = vor.u32 %v3159, %v3160
      %v3162 = vshll.u32 920167782, %v3147
      %v3163 = vshrl.u32 1326507024, %v3148
      %v3164 = vor.u32 %v3162, %v3163
      %vm3165 = vcmp.lt.s32.totalorder %v3146, 1
      %vm3166 = vcmp.lt.s32.totalorder %v3146, 2
      %vm3167 = vcmp.lt.s32.totalorder %v3146, 3
      %vm3168 = vcmp.lt.s32.totalorder %v3146, 4
      %v3169 = vsel %vm3165, %v3149, %v3152
      %v3170 = vsel %vm3168, %v3158, 2102212464
      %v3171 = vsel %vm3167, %v3155, %v3170
      %v3172 = vsel %vm3166, %v3169, %v3171
      %v3173 = vsel %vm3165, %v3152, %v3155
      %v3174 = vsel %vm3168, %v3161, 920167782
      %v3175 = vsel %vm3167, %v3158, %v3174
      %v3176 = vsel %vm3166, %v3173, %v3175
      %v3177 = vsel %vm3165, %v3155, %v3158
      %v3178 = vsel %vm3168, %v3164, 1326507024
      %v3179 = vsel %vm3167, %v3161, %v3178
      %v3180 = vsel %vm3166, %v3177, %v3179
      %v3181 = vshll.u32 %v3141, 8
      %v3182 = vand.u32 %v3181, 65535
      %v3183 = vshrl.u32 %v3181, 16
      %v3184 = vand.u32 %v3180, 65535
      %v3185 = vshrl.u32 %v3180, 16
      %v3186 = vmul.u32 %v3182, %v3184
      %v3187 = vmul.u32 %v3182, %v3185
      %v3188 = vmul.u32 %v3183, %v3184
      %v3189 = vmul.u32 %v3183, %v3185
      %v3190 = vshll.u32 %v3187, 16
      %v3191 = vshrl.u32 %v3187, 16
      %v3192 = vshll.u32 %v3188, 16
      %v3193 = vshrl.u32 %v3188, 16
      %vm3194 = vc.u32 %v3186, %v3190
      %v3195 = vsel %vm3194, 1, 0
      %v3196 = vadd.s32 %v3186, %v3190
      %v3197 = vadd.s32 %v3189, %v3195
      %vm3198 = vc.u32 %v3196, %v3192
      %v3199 = vsel %vm3198, 1, 0
      %v3200 = vadd.s32 %v3196, %v3192
      %v3201 = vadd.s32 %v3197, %v3199
      %v3202 = vadd.s32 %v3201, %v3191
      %v3203 = vadd.s32 %v3202, %v3193
      %v3204 = vand.u32 %v3181, 65535
      %v3205 = vshrl.u32 %v3181, 16
      %v3206 = vand.u32 %v3176, 65535
      %v3207 = vshrl.u32 %v3176, 16
      %v3208 = vmul.u32 %v3204, %v3206
      %v3209 = vmul.u32 %v3204, %v3207
      %v3210 = vmul.u32 %v3205, %v3206
      %v3211 = vmul.u32 %v3205, %v3207
      %v3212 = vshll.u32 %v3209, 16
      %v3213 = vshrl.u32 %v3209, 16
      %v3214 = vshll.u32 %v3210, 16
      %v3215 = vshrl.u32 %v3210, 16
      %vm3216 = vc.u32 %v3208, %v3212
      %v3217 = vsel %vm3216, 1, 0
      %v3218 = vadd.s32 %v3208, %v3212
      %v3219 = vadd.s32 %v3211, %v3217
      %vm3220 = vc.u32 %v3218, %v3214
      %v3221 = vsel %vm3220, 1, 0
      %v3222 = vadd.s32 %v3218, %v3214
      %v3223 = vadd.s32 %v3219, %v3221
      %v3224 = vadd.s32 %v3223, %v3213
      %v3225 = vadd.s32 %v3224, %v3215
      %v3226 = vmul.u32 %v3181, %v3172
      %v3227 = vadd.s32 %v3203, %v3222
      %vm3228 = vc.u32 %v3203, %v3222
      %v3229 = vadd.s32 %v3225, 1
      %v3230 = vsel %vm3228, %v3229, %v3225
      %v3231 = vadd.s32 %v3226, %v3230
      %v3232 = vadd.s32 %v3231, 536870912
      %v3233 = vshrl.u32 %v3232, 30
      %v3234 = vshll.u32 %v3233, 30
      %v3235 = vsub.s32 %v3231, %v3234
      %vm3236 = vcmp.lt.s32.totalorder %v3235, 0
      %v3237 = vsub.s32 0, %v3235
      %v3238 = vsel %vm3236, %v3237, %v3235
      %v3239 = vclz %v3238
      %v3240 = vsub.s32 %v3239, 2
      %vm3241 = vcmp.gt.s32.totalorder 0, %v3240
      %v3242 = vsel %vm3241, 0, %v3240
      %v3243 = vsub.s32 32, %v3242
      %v3244 = vshll.u32 %v3235, %v3242
      %v3245 = vshrl.u32 %v3227, %v3243
      %v3246 = vor.u32 %v3244, %v3245
      %v3247 = vsub.s32 4294967266, %v3242
      %v3248 = vadd.s32 %v3247, 127
      %v3249 = vshll.u32 %v3248, 23
      %v3250 = vor.u32 4788187, %v3249
      %v3251 = vand.u32 2147483647, %v3250
      %v3253 = vcvt.s32.f32 %v3246
      %v3254 = vmul.f32 %v3253, %v3251
      %v3255 = vxor.u32 %v3254, 2147483648
      %v3256 = vsel %vm3135, %v3255, %v3254
      %v3257 = vsub.s32 4, %v3233
      %v3258 = vsel %vm3135, %v3257, %v3233
      %v3259 = vsel %vm3134, %v2326, %v3256
      %v3260 = vsel %vm3134, 0, %v3258
      %v3261 = vmul.f32 %v3259, %v3259
      %v3262 = vmul.f32 %v3261, -0.001358992
      %v3263 = vadd.f32 %v3262, 0.041655596
      %v3264 = vmul.f32 %v3261, %v3263
      %v3265 = vadd.f32 %v3264, -0.4999988
      %v3266 = vmul.f32 %v3261, %v3265
      %v3267 = vadd.f32 1.0, %v3266
      %v3268 = vmul.f32 %v3259, %v3259
      %v3269 = vmul.f32 %v3268, -0.00019511016
      %v3270 = vadd.f32 %v3269, 0.008332121
      %v3271 = vmul.f32 %v3268, %v3270
      %v3272 = vadd.f32 %v3271, -0.16666654
      %v3273 = vmul.f32 %v3268, %v3272
      %v3274 = vadd.f32 %v3273, 1.0
      %v3275 = vmul.f32 %v3274, %v3259
      %vm3276 = vweird.f32 %v2326
      %v3277 = vadd.s32 %v3260, 3
      %v3278 = vand.u32 %v3277, 3
      %vm3279 = vcmp.lt.s32.totalorder %v3278, 2
      %vm3280 = vcmp.eq.s32.totalorder %v3278, 0
      %v3281 = vxor.u32 %v3275, 2147483648
      %v3282 = vsel %vm3280, %v3267, %v3281
      %vm3283 = vcmp.eq.s32.totalorder %v3278, 2
      %v3284 = vxor.u32 %v3267, 2147483648
      %v3285 = vsel %vm3283, %v3284, %v3275
      %v3286 = vsel %vm3279, %v3282, %v3285
      %v3287 = vsel %vm3276, nan, %v3286
      %v3288 = vand.u32 2147483647, %v2329
      %vm3289 = vcmp.le.f32.partialorder %v3288, 0.7853982
      %vm3290 = vcmp.lt.s32.totalorder %v2329, 0
      %v3291 = vand.u32 %v2329, 2139095040
      %v3292 = vshrl.u32 %v3291, 23
      %v3293 = vsub.s32 %v3292, 127
      %v3294 = vand.u32 2147483647, %v2329
      %v3295 = vand.u32 %v3294, 8388607
      %v3296 = vor.u32 %v3295, 8388608
      %v3297 = vsub.s32 0, %v3296
      %v3298 = vadd.s32 %v3293, 1
      %vm3299 = vcmp.gt.s32.totalorder %v3298, 0
      %v3300 = vsel %vm3299, %v3298, 0
      %v3301 = vshrl.u32 %v3300, 5
      %v3302 = vand.u32 %v3300, 31
      %v3303 = vsub.s32 32, %v3302
      %v3304 = vshrl.u32 683565275, %v3303
      %v3305 = vshll.u32 683565275, %v3302
      %v3306 = vshrl.u32 2475754826, %v3303
      %v3307 = vor.u32 %v3305, %v3306
      %v3308 = vshll.u32 2475754826, %v3302
      %v3309 = vshrl.u32 2131351028, %v3303
      %v3310 = vor.u32 %v3308, %v3309
      %v3311 = vshll.u32 2131351028, %v3302
      %v3312 = vshrl.u32 2102212464, %v3303
      %v3313 = vor.u32 %v3311, %v3312
      %v3314 = vshll.u32 2102212464, %v3302
      %v3315 = vshrl.u32 920167782, %v3303
      %v3316 = vor.u32 %v3314, %v3315
      %v3317 = vshll.u32 920167782, %v3302
      %v3318 = vshrl.u32 1326507024, %v3303
      %v3319 = vor.u32 %v3317, %v3318
      %vm3320 = vcmp.lt.s32.totalorder %v3301, 1
      %vm3321 = vcmp.lt.s32.totalorder %v3301, 2
      %vm3322 = vcmp.lt.s32.totalorder %v3301, 3
      %vm3323 = vcmp.lt.s32.totalorder %v3301, 4
      %v3324 = vsel %vm3320, %v3304, %v3307
      %v3325 = vsel %vm3323, %v3313, 2102212464
      %v3326 = vsel %vm3322, %v3310, %v3325
      %v3327 = vsel %vm3321, %v3324, %v3326
      %v3328 = vsel %vm3320, %v3307, %v3310
      %v3329 = vsel %vm3323, %v3316, 920167782
      %v3330 = vsel %vm3322, %v3313, %v3329
      %v3331 = vsel %vm3321, %v3328, %v3330
      %v3332 = vsel %vm3320, %v3310, %v3313
      %v3333 = vsel %vm3323, %v3319, 1326507024
      %v3334 = vsel %vm3322, %v3316, %v3333
      %v3335 = vsel %vm3321, %v3332, %v3334
      %v3336 = vshll.u32 %v3296, 8
      %v3337 = vand.u32 %v3336, 65535
      %v3338 = vshrl.u32 %v3336, 16
      %v3339 = vand.u32 %v3335, 65535
      %v3340 = vshrl.u32 %v3335, 16
      %v3341 = vmul.u32 %v3337, %v3339
      %v3342 = vmul.u32 %v3337, %v3340
      %v3343 = vmul.u32 %v3338, %v3339
      %v3344 = vmul.u32 %v3338, %v3340
      %v3345 = vshll.u32 %v3342, 16
      %v3346 = vshrl.u32 %v3342, 16
      %v3347 = vshll.u32 %v3343, 16
      %v3348 = vshrl.u32 %v3343, 16
      %vm3349 = vc.u32 %v3341, %v3345
      %v3350 = vsel %vm3349, 1, 0
      %v3351 = vadd.s32 %v3341, %v3345
      %v3352 = vadd.s32 %v3344, %v3350
      %vm3353 = vc.u32 %v3351, %v3347
      %v3354 = vsel %vm3353, 1, 0
      %v3355 = vadd.s32 %v3351, %v3347
      %v3356 = vadd.s32 %v3352, %v3354
      %v3357 = vadd.s32 %v3356, %v3346
      %v3358 = vadd.s32 %v3357, %v3348
      %v3359 = vand.u32 %v3336, 65535
      %v3360 = vshrl.u32 %v3336, 16
      %v3361 = vand.u32 %v3331, 65535
      %v3362 = vshrl.u32 %v3331, 16
      %v3363 = vmul.u32 %v3359, %v3361
      %v3364 = vmul.u32 %v3359, %v3362
      %v3365 = vmul.u32 %v3360, %v3361
      %v3366 = vmul.u32 %v3360, %v3362
      %v3367 = vshll.u32 %v3364, 16
      %v3368 = vshrl.u32 %v3364, 16
      %v3369 = vshll.u32 %v3365, 16
      %v3370 = vshrl.u32 %v3365, 16
      %vm3371 = vc.u32 %v3363, %v3367
      %v3372 = vsel %vm3371, 1, 0
      %v3373 = vadd.s32 %v3363, %v3367
      %v3374 = vadd.s32 %v3366, %v3372
      %vm3375 = vc.u32 %v3373, %v3369
      %v3376 = vsel %vm3375, 1, 0
      %v3377 = vadd.s32 %v3373, %v3369
      %v3378 = vadd.s32 %v3374, %v3376
      %v3379 = vadd.s32 %v3378, %v3368
      %v3380 = vadd.s32 %v3379, %v3370
      %v3381 = vmul.u32 %v3336, %v3327
      %v3382 = vadd.s32 %v3358, %v3377
      %vm3383 = vc.u32 %v3358, %v3377
      %v3384 = vadd.s32 %v3380, 1
      %v3385 = vsel %vm3383, %v3384, %v3380
      %v3386 = vadd.s32 %v3381, %v3385
      %v3387 = vadd.s32 %v3386, 536870912
      %v3388 = vshrl.u32 %v3387, 30
      %v3389 = vshll.u32 %v3388, 30
      %v3390 = vsub.s32 %v3386, %v3389
      %vm3391 = vcmp.lt.s32.totalorder %v3390, 0
      %v3392 = vsub.s32 0, %v3390
      %v3393 = vsel %vm3391, %v3392, %v3390
      %v3394 = vclz %v3393
      %v3395 = vsub.s32 %v3394, 2
      %vm3396 = vcmp.gt.s32.totalorder 0, %v3395
      %v3397 = vsel %vm3396, 0, %v3395
      %v3398 = vsub.s32 32, %v3397
      %v3399 = vshll.u32 %v3390, %v3397
      %v3400 = vshrl.u32 %v3382, %v3398
      %v3401 = vor.u32 %v3399, %v3400
      %v3402 = vsub.s32 4294967266, %v3397
      %v3403 = vadd.s32 %v3402, 127
      %v3404 = vshll.u32 %v3403, 23
      %v3405 = vor.u32 4788187, %v3404
      %v3406 = vand.u32 2147483647, %v3405
      %v3408 = vcvt.s32.f32 %v3401
      %v3409 = vmul.f32 %v3408, %v3406
      %v3410 = vxor.u32 %v3409, 2147483648
      %v3411 = vsel %vm3290, %v3410, %v3409
      %v3412 = vsub.s32 4, %v3388
      %v3413 = vsel %vm3290, %v3412, %v3388
      %v3414 = vsel %vm3289, %v2329, %v3411
      %v3415 = vsel %vm3289, 0, %v3413
      %v3416 = vmul.f32 %v3414, %v3414
      %v3417 = vmul.f32 %v3416, -0.001358992
      %v3418 = vadd.f32 %v3417, 0.041655596
      %v3419 = vmul.f32 %v3416, %v3418
      %v3420 = vadd.f32 %v3419, -0.4999988
      %v3421 = vmul.f32 %v3416, %v3420
      %v3422 = vadd.f32 1.0, %v3421
      %v3423 = vmul.f32 %v3414, %v3414
      %v3424 = vmul.f32 %v3423, -0.00019511016
      %v3425 = vadd.f32 %v3424, 0.008332121
      %v3426 = vmul.f32 %v3423, %v3425
      %v3427 = vadd.f32 %v3426, -0.16666654
      %v3428 = vmul.f32 %v3423, %v3427
      %v3429 = vadd.f32 %v3428, 1.0
      %v3430 = vmul.f32 %v3429, %v3414
      %vm3431 = vweird.f32 %v2329
      %v3432 = vadd.s32 %v3415, 3
      %v3433 = vand.u32 %v3432, 3
      %vm3434 = vcmp.lt.s32.totalorder %v3433, 2
      %vm3435 = vcmp.eq.s32.totalorder %v3433, 0
      %v3436 = vxor.u32 %v3430, 2147483648
      %v3437 = vsel %vm3435, %v3422, %v3436
      %vm3438 = vcmp.eq.s32.totalorder %v3433, 2
      %v3439 = vxor.u32 %v3422, 2147483648
      %v3440 = vsel %vm3438, %v3439, %v3430
      %v3441 = vsel %vm3434, %v3437, %v3440
      %v3442 = vsel %vm3431, nan, %v3441
      %v3443 = vand.u32 2147483647, %v2332
      %vm3444 = vcmp.le.f32.partialorder %v3443, 0.7853982
      %vm3445 = vcmp.lt.s32.totalorder %v2332, 0
      %v3446 = vand.u32 %v2332, 2139095040
      %v3447 = vshrl.u32 %v3446, 23
      %v3448 = vsub.s32 %v3447, 127
      %v3449 = vand.u32 2147483647, %v2332
      %v3450 = vand.u32 %v3449, 8388607
      %v3451 = vor.u32 %v3450, 8388608
      %v3452 = vsub.s32 0, %v3451
      %v3453 = vadd.s32 %v3448, 1
      %vm3454 = vcmp.gt.s32.totalorder %v3453, 0
      %v3455 = vsel %vm3454, %v3453, 0
      %v3456 = vshrl.u32 %v3455, 5
      %v3457 = vand.u32 %v3455, 31
      %v3458 = vsub.s32 32, %v3457
      %v3459 = vshrl.u32 683565275, %v3458
      %v3460 = vshll.u32 683565275, %v3457
      %v3461 = vshrl.u32 2475754826, %v3458
      %v3462 = vor.u32 %v3460, %v3461
      %v3463 = vshll.u32 2475754826, %v3457
      %v3464 = vshrl.u32 2131351028, %v3458
      %v3465 = vor.u32 %v3463, %v3464
      %v3466 = vshll.u32 2131351028, %v3457
      %v3467 = vshrl.u32 2102212464, %v3458
      %v3468 = vor.u32 %v3466, %v3467
      %v3469 = vshll.u32 2102212464, %v3457
      %v3470 = vshrl.u32 920167782, %v3458
      %v3471 = vor.u32 %v3469, %v3470
      %v3472 = vshll.u32 920167782, %v3457
      %v3473 = vshrl.u32 1326507024, %v3458
      %v3474 = vor.u32 %v3472, %v3473
      %vm3475 = vcmp.lt.s32.totalorder %v3456, 1
      %vm3476 = vcmp.lt.s32.totalorder %v3456, 2
      %vm3477 = vcmp.lt.s32.totalorder %v3456, 3
      %vm3478 = vcmp.lt.s32.totalorder %v3456, 4
      %v3479 = vsel %vm3475, %v3459, %v3462
      %v3480 = vsel %vm3478, %v3468, 2102212464
      %v3481 = vsel %vm3477, %v3465, %v3480
      %v3482 = vsel %vm3476, %v3479, %v3481
      %v3483 = vsel %vm3475, %v3462, %v3465
      %v3484 = vsel %vm3478, %v3471, 920167782
      %v3485 = vsel %vm3477, %v3468, %v3484
      %v3486 = vsel %vm3476, %v3483, %v3485
      %v3487 = vsel %vm3475, %v3465, %v3468
      %v3488 = vsel %vm3478, %v3474, 1326507024
      %v3489 = vsel %vm3477, %v3471, %v3488
      %v3490 = vsel %vm3476, %v3487, %v3489
      %v3491 = vshll.u32 %v3451, 8
      %v3492 = vand.u32 %v3491, 65535
      %v3493 = vshrl.u32 %v3491, 16
      %v3494 = vand.u32 %v3490, 65535
      %v3495 = vshrl.u32 %v3490, 16
      %v3496 = vmul.u32 %v3492, %v3494
      %v3497 = vmul.u32 %v3492, %v3495
      %v3498 = vmul.u32 %v3493, %v3494
      %v3499 = vmul.u32 %v3493, %v3495
      %v3500 = vshll.u32 %v3497, 16
      %v3501 = vshrl.u32 %v3497, 16
      %v3502 = vshll.u32 %v3498, 16
      %v3503 = vshrl.u32 %v3498, 16
      %vm3504 = vc.u32 %v3496, %v3500
      %v3505 = vsel %vm3504, 1, 0
      %v3506 = vadd.s32 %v3496, %v3500
      %v3507 = vadd.s32 %v3499, %v3505
      %vm3508 = vc.u32 %v3506, %v3502
      %v3509 = vsel %vm3508, 1, 0
      %v3510 = vadd.s32 %v3506, %v3502
      %v3511 = vadd.s32 %v3507, %v3509
      %v3512 = vadd.s32 %v3511, %v3501
      %v3513 = vadd.s32 %v3512, %v3503
      %v3514 = vand.u32 %v3491, 65535
      %v3515 = vshrl.u32 %v3491, 16
      %v3516 = vand.u32 %v3486, 65535
      %v3517 = vshrl.u32 %v3486, 16
      %v3518 = vmul.u32 %v3514, %v3516
      %v3519 = vmul.u32 %v3514, %v3517
      %v3520 = vmul.u32 %v3515, %v3516
      %v3521 = vmul.u32 %v3515, %v3517
      %v3522 = vshll.u32 %v3519, 16
      %v3523 = vshrl.u32 %v3519, 16
      %v3524 = vshll.u32 %v3520, 16
      %v3525 = vshrl.u32 %v3520, 16
      %vm3526 = vc.u32 %v3518, %v3522
      %v3527 = vsel %vm3526, 1, 0
      %v3528 = vadd.s32 %v3518, %v3522
      %v3529 = vadd.s32 %v3521, %v3527
      %vm3530 = vc.u32 %v3528, %v3524
      %v3531 = vsel %vm3530, 1, 0
      %v3532 = vadd.s32 %v3528, %v3524
      %v3533 = vadd.s32 %v3529, %v3531
      %v3534 = vadd.s32 %v3533, %v3523
      %v3535 = vadd.s32 %v3534, %v3525
      %v3536 = vmul.u32 %v3491, %v3482
      %v3537 = vadd.s32 %v3513, %v3532
      %vm3538 = vc.u32 %v3513, %v3532
      %v3539 = vadd.s32 %v3535, 1
      %v3540 = vsel %vm3538, %v3539, %v3535
      %v3541 = vadd.s32 %v3536, %v3540
      %v3542 = vadd.s32 %v3541, 536870912
      %v3543 = vshrl.u32 %v3542, 30
      %v3544 = vshll.u32 %v3543, 30
      %v3545 = vsub.s32 %v3541, %v3544
      %vm3546 = vcmp.lt.s32.totalorder %v3545, 0
      %v3547 = vsub.s32 0, %v3545
      %v3548 = vsel %vm3546, %v3547, %v3545
      %v3549 = vclz %v3548
      %v3550 = vsub.s32 %v3549, 2
      %vm3551 = vcmp.gt.s32.totalorder 0, %v3550
      %v3552 = vsel %vm3551, 0, %v3550
      %v3553 = vsub.s32 32, %v3552
      %v3554 = vshll.u32 %v3545, %v3552
      %v3555 = vshrl.u32 %v3537, %v3553
      %v3556 = vor.u32 %v3554, %v3555
      %v3557 = vsub.s32 4294967266, %v3552
      %v3558 = vadd.s32 %v3557, 127
      %v3559 = vshll.u32 %v3558, 23
      %v3560 = vor.u32 4788187, %v3559
      %v3561 = vand.u32 2147483647, %v3560
      %v3563 = vcvt.s32.f32 %v3556
      %v3564 = vmul.f32 %v3563, %v3561
      %v3565 = vxor.u32 %v3564, 2147483648
      %v3566 = vsel %vm3445, %v3565, %v3564
      %v3567 = vsub.s32 4, %v3543
      %v3568 = vsel %vm3445, %v3567, %v3543
      %v3569 = vsel %vm3444, %v2332, %v3566
      %v3570 = vsel %vm3444, 0, %v3568
      %v3571 = vmul.f32 %v3569, %v3569
      %v3572 = vmul.f32 %v3571, -0.001358992
      %v3573 = vadd.f32 %v3572, 0.041655596
      %v3574 = vmul.f32 %v3571, %v3573
      %v3575 = vadd.f32 %v3574, -0.4999988
      %v3576 = vmul.f32 %v3571, %v3575
      %v3577 = vadd.f32 1.0, %v3576
      %v3578 = vmul.f32 %v3569, %v3569
      %v3579 = vmul.f32 %v3578, -0.00019511016
      %v3580 = vadd.f32 %v3579, 0.008332121
      %v3581 = vmul.f32 %v3578, %v3580
      %v3582 = vadd.f32 %v3581, -0.16666654
      %v3583 = vmul.f32 %v3578, %v3582
      %v3584 = vadd.f32 %v3583, 1.0
      %v3585 = vmul.f32 %v3584, %v3569
      %vm3586 = vweird.f32 %v2332
      %v3587 = vadd.s32 %v3570, 3
      %v3588 = vand.u32 %v3587, 3
      %vm3589 = vcmp.lt.s32.totalorder %v3588, 2
      %vm3590 = vcmp.eq.s32.totalorder %v3588, 0
      %v3591 = vxor.u32 %v3585, 2147483648
      %v3592 = vsel %vm3590, %v3577, %v3591
      %vm3593 = vcmp.eq.s32.totalorder %v3588, 2
      %v3594 = vxor.u32 %v3577, 2147483648
      %v3595 = vsel %vm3593, %v3594, %v3585
      %v3596 = vsel %vm3589, %v3592, %v3595
      %v3597 = vsel %vm3586, nan, %v3596
      %v3598 = vand.u32 2147483647, %v2335
      %vm3599 = vcmp.le.f32.partialorder %v3598, 0.7853982
      %vm3600 = vcmp.lt.s32.totalorder %v2335, 0
      %v3601 = vand.u32 %v2335, 2139095040
      %v3602 = vshrl.u32 %v3601, 23
      %v3603 = vsub.s32 %v3602, 127
      %v3604 = vand.u32 2147483647, %v2335
      %v3605 = vand.u32 %v3604, 8388607
      %v3606 = vor.u32 %v3605, 8388608
      %v3607 = vsub.s32 0, %v3606
      %v3608 = vadd.s32 %v3603, 1
      %vm3609 = vcmp.gt.s32.totalorder %v3608, 0
      %v3610 = vsel %vm3609, %v3608, 0
      %v3611 = vshrl.u32 %v3610, 5
      %v3612 = vand.u32 %v3610, 31
      %v3613 = vsub.s32 32, %v3612
      %v3614 = vshrl.u32 683565275, %v3613
      %v3615 = vshll.u32 683565275, %v3612
      %v3616 = vshrl.u32 2475754826, %v3613
      %v3617 = vor.u32 %v3615, %v3616
      %v3618 = vshll.u32 2475754826, %v3612
      %v3619 = vshrl.u32 2131351028, %v3613
      %v3620 = vor.u32 %v3618, %v3619
      %v3621 = vshll.u32 2131351028, %v3612
      %v3622 = vshrl.u32 2102212464, %v3613
      %v3623 = vor.u32 %v3621, %v3622
      %v3624 = vshll.u32 2102212464, %v3612
      %v3625 = vshrl.u32 920167782, %v3613
      %v3626 = vor.u32 %v3624, %v3625
      %v3627 = vshll.u32 920167782, %v3612
      %v3628 = vshrl.u32 1326507024, %v3613
      %v3629 = vor.u32 %v3627, %v3628
      %vm3630 = vcmp.lt.s32.totalorder %v3611, 1
      %vm3631 = vcmp.lt.s32.totalorder %v3611, 2
      %vm3632 = vcmp.lt.s32.totalorder %v3611, 3
      %vm3633 = vcmp.lt.s32.totalorder %v3611, 4
      %v3634 = vsel %vm3630, %v3614, %v3617
      %v3635 = vsel %vm3633, %v3623, 2102212464
      %v3636 = vsel %vm3632, %v3620, %v3635
      %v3637 = vsel %vm3631, %v3634, %v3636
      %v3638 = vsel %vm3630, %v3617, %v3620
      %v3639 = vsel %vm3633, %v3626, 920167782
      %v3640 = vsel %vm3632, %v3623, %v3639
      %v3641 = vsel %vm3631, %v3638, %v3640
      %v3642 = vsel %vm3630, %v3620, %v3623
      %v3643 = vsel %vm3633, %v3629, 1326507024
      %v3644 = vsel %vm3632, %v3626, %v3643
      %v3645 = vsel %vm3631, %v3642, %v3644
      %v3646 = vshll.u32 %v3606, 8
      %v3647 = vand.u32 %v3646, 65535
      %v3648 = vshrl.u32 %v3646, 16
      %v3649 = vand.u32 %v3645, 65535
      %v3650 = vshrl.u32 %v3645, 16
      %v3651 = vmul.u32 %v3647, %v3649
      %v3652 = vmul.u32 %v3647, %v3650
      %v3653 = vmul.u32 %v3648, %v3649
      %v3654 = vmul.u32 %v3648, %v3650
      %v3655 = vshll.u32 %v3652, 16
      %v3656 = vshrl.u32 %v3652, 16
      %v3657 = vshll.u32 %v3653, 16
      %v3658 = vshrl.u32 %v3653, 16
      %vm3659 = vc.u32 %v3651, %v3655
      %v3660 = vsel %vm3659, 1, 0
      %v3661 = vadd.s32 %v3651, %v3655
      %v3662 = vadd.s32 %v3654, %v3660
      %vm3663 = vc.u32 %v3661, %v3657
      %v3664 = vsel %vm3663, 1, 0
      %v3665 = vadd.s32 %v3661, %v3657
      %v3666 = vadd.s32 %v3662, %v3664
      %v3667 = vadd.s32 %v3666, %v3656
      %v3668 = vadd.s32 %v3667, %v3658
      %v3669 = vand.u32 %v3646, 65535
      %v3670 = vshrl.u32 %v3646, 16
      %v3671 = vand.u32 %v3641, 65535
      %v3672 = vshrl.u32 %v3641, 16
      %v3673 = vmul.u32 %v3669, %v3671
      %v3674 = vmul.u32 %v3669, %v3672
      %v3675 = vmul.u32 %v3670, %v3671
      %v3676 = vmul.u32 %v3670, %v3672
      %v3677 = vshll.u32 %v3674, 16
      %v3678 = vshrl.u32 %v3674, 16
      %v3679 = vshll.u32 %v3675, 16
      %v3680 = vshrl.u32 %v3675, 16
      %vm3681 = vc.u32 %v3673, %v3677
      %v3682 = vsel %vm3681, 1, 0
      %v3683 = vadd.s32 %v3673, %v3677
      %v3684 = vadd.s32 %v3676, %v3682
      %vm3685 = vc.u32 %v3683, %v3679
      %v3686 = vsel %vm3685, 1, 0
      %v3687 = vadd.s32 %v3683, %v3679
      %v3688 = vadd.s32 %v3684, %v3686
      %v3689 = vadd.s32 %v3688, %v3678
      %v3690 = vadd.s32 %v3689, %v3680
      %v3691 = vmul.u32 %v3646, %v3637
      %v3692 = vadd.s32 %v3668, %v3687
      %vm3693 = vc.u32 %v3668, %v3687
      %v3694 = vadd.s32 %v3690, 1
      %v3695 = vsel %vm3693, %v3694, %v3690
      %v3696 = vadd.s32 %v3691, %v3695
      %v3697 = vadd.s32 %v3696, 536870912
      %v3698 = vshrl.u32 %v3697, 30
      %v3699 = vshll.u32 %v3698, 30
      %v3700 = vsub.s32 %v3696, %v3699
      %vm3701 = vcmp.lt.s32.totalorder %v3700, 0
      %v3702 = vsub.s32 0, %v3700
      %v3703 = vsel %vm3701, %v3702, %v3700
      %v3704 = vclz %v3703
      %v3705 = vsub.s32 %v3704, 2
      %vm3706 = vcmp.gt.s32.totalorder 0, %v3705
      %v3707 = vsel %vm3706, 0, %v3705
      %v3708 = vsub.s32 32, %v3707
      %v3709 = vshll.u32 %v3700, %v3707
      %v3710 = vshrl.u32 %v3692, %v3708
      %v3711 = vor.u32 %v3709, %v3710
      %v3712 = vsub.s32 4294967266, %v3707
      %v3713 = vadd.s32 %v3712, 127
      %v3714 = vshll.u32 %v3713, 23
      %v3715 = vor.u32 4788187, %v3714
      %v3716 = vand.u32 2147483647, %v3715
      %v3718 = vcvt.s32.f32 %v3711
      %v3719 = vmul.f32 %v3718, %v3716
      %v3720 = vxor.u32 %v3719, 2147483648
      %v3721 = vsel %vm3600, %v3720, %v3719
      %v3722 = vsub.s32 4, %v3698
      %v3723 = vsel %vm3600, %v3722, %v3698
      %v3724 = vsel %vm3599, %v2335, %v3721
      %v3725 = vsel %vm3599, 0, %v3723
      %v3726 = vmul.f32 %v3724, %v3724
      %v3727 = vmul.f32 %v3726, -0.001358992
      %v3728 = vadd.f32 %v3727, 0.041655596
      %v3729 = vmul.f32 %v3726, %v3728
      %v3730 = vadd.f32 %v3729, -0.4999988
      %v3731 = vmul.f32 %v3726, %v3730
      %v3732 = vadd.f32 1.0, %v3731
      %v3733 = vmul.f32 %v3724, %v3724
      %v3734 = vmul.f32 %v3733, -0.00019511016
      %v3735 = vadd.f32 %v3734, 0.008332121
      %v3736 = vmul.f32 %v3733, %v3735
      %v3737 = vadd.f32 %v3736, -0.16666654
      %v3738 = vmul.f32 %v3733, %v3737
      %v3739 = vadd.f32 %v3738, 1.0
      %v3740 = vmul.f32 %v3739, %v3724
      %vm3741 = vweird.f32 %v2335
      %v3742 = vadd.s32 %v3725, 3
      %v3743 = vand.u32 %v3742, 3
      %vm3744 = vcmp.lt.s32.totalorder %v3743, 2
      %vm3745 = vcmp.eq.s32.totalorder %v3743, 0
      %v3746 = vxor.u32 %v3740, 2147483648
      %v3747 = vsel %vm3745, %v3732, %v3746
      %vm3748 = vcmp.eq.s32.totalorder %v3743, 2
      %v3749 = vxor.u32 %v3732, 2147483648
      %v3750 = vsel %vm3748, %v3749, %v3740
      %v3751 = vsel %vm3744, %v3747, %v3750
      %v3752 = vsel %vm3741, nan, %v3751
      %v3753 = vand.u32 2147483647, %v2338
      %vm3754 = vcmp.le.f32.partialorder %v3753, 0.7853982
      %vm3755 = vcmp.lt.s32.totalorder %v2338, 0
      %v3756 = vand.u32 %v2338, 2139095040
      %v3757 = vshrl.u32 %v3756, 23
      %v3758 = vsub.s32 %v3757, 127
      %v3759 = vand.u32 2147483647, %v2338
      %v3760 = vand.u32 %v3759, 8388607
      %v3761 = vor.u32 %v3760, 8388608
      %v3762 = vsub.s32 0, %v3761
      %v3763 = vadd.s32 %v3758, 1
      %vm3764 = vcmp.gt.s32.totalorder %v3763, 0
      %v3765 = vsel %vm3764, %v3763, 0
      %v3766 = vshrl.u32 %v3765, 5
      %v3767 = vand.u32 %v3765, 31
      %v3768 = vsub.s32 32, %v3767
      %v3769 = vshrl.u32 683565275, %v3768
      %v3770 = vshll.u32 683565275, %v3767
      %v3771 = vshrl.u32 2475754826, %v3768
      %v3772 = vor.u32 %v3770, %v3771
      %v3773 = vshll.u32 2475754826, %v3767
      %v3774 = vshrl.u32 2131351028, %v3768
      %v3775 = vor.u32 %v3773, %v3774
      %v3776 = vshll.u32 2131351028, %v3767
      %v3777 = vshrl.u32 2102212464, %v3768
      %v3778 = vor.u32 %v3776, %v3777
      %v3779 = vshll.u32 2102212464, %v3767
      %v3780 = vshrl.u32 920167782, %v3768
      %v3781 = vor.u32 %v3779, %v3780
      %v3782 = vshll.u32 920167782, %v3767
      %v3783 = vshrl.u32 1326507024, %v3768
      %v3784 = vor.u32 %v3782, %v3783
      %vm3785 = vcmp.lt.s32.totalorder %v3766, 1
      %vm3786 = vcmp.lt.s32.totalorder %v3766, 2
      %vm3787 = vcmp.lt.s32.totalorder %v3766, 3
      %vm3788 = vcmp.lt.s32.totalorder %v3766, 4
      %v3789 = vsel %vm3785, %v3769, %v3772
      %v3790 = vsel %vm3788, %v3778, 2102212464
      %v3791 = vsel %vm3787, %v3775, %v3790
      %v3792 = vsel %vm3786, %v3789, %v3791
      %v3793 = vsel %vm3785, %v3772, %v3775
      %v3794 = vsel %vm3788, %v3781, 920167782
      %v3795 = vsel %vm3787, %v3778, %v3794
      %v3796 = vsel %vm3786, %v3793, %v3795
      %v3797 = vsel %vm3785, %v3775, %v3778
      %v3798 = vsel %vm3788, %v3784, 1326507024
      %v3799 = vsel %vm3787, %v3781, %v3798
      %v3800 = vsel %vm3786, %v3797, %v3799
      %v3801 = vshll.u32 %v3761, 8
      %v3802 = vand.u32 %v3801, 65535
      %v3803 = vshrl.u32 %v3801, 16
      %v3804 = vand.u32 %v3800, 65535
      %v3805 = vshrl.u32 %v3800, 16
      %v3806 = vmul.u32 %v3802, %v3804
      %v3807 = vmul.u32 %v3802, %v3805
      %v3808 = vmul.u32 %v3803, %v3804
      %v3809 = vmul.u32 %v3803, %v3805
      %v3810 = vshll.u32 %v3807, 16
      %v3811 = vshrl.u32 %v3807, 16
      %v3812 = vshll.u32 %v3808, 16
      %v3813 = vshrl.u32 %v3808, 16
      %vm3814 = vc.u32 %v3806, %v3810
      %v3815 = vsel %vm3814, 1, 0
      %v3816 = vadd.s32 %v3806, %v3810
      %v3817 = vadd.s32 %v3809, %v3815
      %vm3818 = vc.u32 %v3816, %v3812
      %v3819 = vsel %vm3818, 1, 0
      %v3820 = vadd.s32 %v3816, %v3812
      %v3821 = vadd.s32 %v3817, %v3819
      %v3822 = vadd.s32 %v3821, %v3811
      %v3823 = vadd.s32 %v3822, %v3813
      %v3824 = vand.u32 %v3801, 65535
      %v3825 = vshrl.u32 %v3801, 16
      %v3826 = vand.u32 %v3796, 65535
      %v3827 = vshrl.u32 %v3796, 16
      %v3828 = vmul.u32 %v3824, %v3826
      %v3829 = vmul.u32 %v3824, %v3827
      %v3830 = vmul.u32 %v3825, %v3826
      %v3831 = vmul.u32 %v3825, %v3827
      %v3832 = vshll.u32 %v3829, 16
      %v3833 = vshrl.u32 %v3829, 16
      %v3834 = vshll.u32 %v3830, 16
      %v3835 = vshrl.u32 %v3830, 16
      %vm3836 = vc.u32 %v3828, %v3832
      %v3837 = vsel %vm3836, 1, 0
      %v3838 = vadd.s32 %v3828, %v3832
      %v3839 = vadd.s32 %v3831, %v3837
      %vm3840 = vc.u32 %v3838, %v3834
      %v3841 = vsel %vm3840, 1, 0
      %v3842 = vadd.s32 %v3838, %v3834
      %v3843 = vadd.s32 %v3839, %v3841
      %v3844 = vadd.s32 %v3843, %v3833
      %v3845 = vadd.s32 %v3844, %v3835
      %v3846 = vmul.u32 %v3801, %v3792
      %v3847 = vadd.s32 %v3823, %v3842
      %vm3848 = vc.u32 %v3823, %v3842
      %v3849 = vadd.s32 %v3845, 1
      %v3850 = vsel %vm3848, %v3849, %v3845
      %v3851 = vadd.s32 %v3846, %v3850
      %v3852 = vadd.s32 %v3851, 536870912
      %v3853 = vshrl.u32 %v3852, 30
      %v3854 = vshll.u32 %v3853, 30
      %v3855 = vsub.s32 %v3851, %v3854
      %vm3856 = vcmp.lt.s32.totalorder %v3855, 0
      %v3857 = vsub.s32 0, %v3855
      %v3858 = vsel %vm3856, %v3857, %v3855
      %v3859 = vclz %v3858
      %v3860 = vsub.s32 %v3859, 2
      %vm3861 = vcmp.gt.s32.totalorder 0, %v3860
      %v3862 = vsel %vm3861, 0, %v3860
      %v3863 = vsub.s32 32, %v3862
      %v3864 = vshll.u32 %v3855, %v3862
      %v3865 = vshrl.u32 %v3847, %v3863
      %v3866 = vor.u32 %v3864, %v3865
      %v3867 = vsub.s32 4294967266, %v3862
      %v3868 = vadd.s32 %v3867, 127
      %v3869 = vshll.u32 %v3868, 23
      %v3870 = vor.u32 4788187, %v3869
      %v3871 = vand.u32 2147483647, %v3870
      %v3873 = vcvt.s32.f32 %v3866
      %v3874 = vmul.f32 %v3873, %v3871
      %v3875 = vxor.u32 %v3874, 2147483648
      %v3876 = vsel %vm3755, %v3875, %v3874
      %v3877 = vsub.s32 4, %v3853
      %v3878 = vsel %vm3755, %v3877, %v3853
      %v3879 = vsel %vm3754, %v2338, %v3876
      %v3880 = vsel %vm3754, 0, %v3878
      %v3881 = vmul.f32 %v3879, %v3879
      %v3882 = vmul.f32 %v3881, -0.001358992
      %v3883 = vadd.f32 %v3882, 0.041655596
      %v3884 = vmul.f32 %v3881, %v3883
      %v3885 = vadd.f32 %v3884, -0.4999988
      %v3886 = vmul.f32 %v3881, %v3885
      %v3887 = vadd.f32 1.0, %v3886
      %v3888 = vmul.f32 %v3879, %v3879
      %v3889 = vmul.f32 %v3888, -0.00019511016
      %v3890 = vadd.f32 %v3889, 0.008332121
      %v3891 = vmul.f32 %v3888, %v3890
      %v3892 = vadd.f32 %v3891, -0.16666654
      %v3893 = vmul.f32 %v3888, %v3892
      %v3894 = vadd.f32 %v3893, 1.0
      %v3895 = vmul.f32 %v3894, %v3879
      %vm3896 = vweird.f32 %v2338
      %v3897 = vadd.s32 %v3880, 3
      %v3898 = vand.u32 %v3897, 3
      %vm3899 = vcmp.lt.s32.totalorder %v3898, 2
      %vm3900 = vcmp.eq.s32.totalorder %v3898, 0
      %v3901 = vxor.u32 %v3895, 2147483648
      %v3902 = vsel %vm3900, %v3887, %v3901
      %vm3903 = vcmp.eq.s32.totalorder %v3898, 2
      %v3904 = vxor.u32 %v3887, 2147483648
      %v3905 = vsel %vm3903, %v3904, %v3895
      %v3906 = vsel %vm3899, %v3902, %v3905
      %v3907 = vsel %vm3896, nan, %v3906
      %v3908 = vand.u32 2147483647, %v2341
      %vm3909 = vcmp.le.f32.partialorder %v3908, 0.7853982
      %vm3910 = vcmp.lt.s32.totalorder %v2341, 0
      %v3911 = vand.u32 %v2341, 2139095040
      %v3912 = vshrl.u32 %v3911, 23
      %v3913 = vsub.s32 %v3912, 127
      %v3914 = vand.u32 2147483647, %v2341
      %v3915 = vand.u32 %v3914, 8388607
      %v3916 = vor.u32 %v3915, 8388608
      %v3917 = vsub.s32 0, %v3916
      %v3918 = vadd.s32 %v3913, 1
      %vm3919 = vcmp.gt.s32.totalorder %v3918, 0
      %v3920 = vsel %vm3919, %v3918, 0
      %v3921 = vshrl.u32 %v3920, 5
      %v3922 = vand.u32 %v3920, 31
      %v3923 = vsub.s32 32, %v3922
      %v3924 = vshrl.u32 683565275, %v3923
      %v3925 = vshll.u32 683565275, %v3922
      %v3926 = vshrl.u32 2475754826, %v3923
      %v3927 = vor.u32 %v3925, %v3926
      %v3928 = vshll.u32 2475754826, %v3922
      %v3929 = vshrl.u32 2131351028, %v3923
      %v3930 = vor.u32 %v3928, %v3929
      %v3931 = vshll.u32 2131351028, %v3922
      %v3932 = vshrl.u32 2102212464, %v3923
      %v3933 = vor.u32 %v3931, %v3932
      %v3934 = vshll.u32 2102212464, %v3922
      %v3935 = vshrl.u32 920167782, %v3923
      %v3936 = vor.u32 %v3934, %v3935
      %v3937 = vshll.u32 920167782, %v3922
      %v3938 = vshrl.u32 1326507024, %v3923
      %v3939 = vor.u32 %v3937, %v3938
      %vm3940 = vcmp.lt.s32.totalorder %v3921, 1
      %vm3941 = vcmp.lt.s32.totalorder %v3921, 2
      %vm3942 = vcmp.lt.s32.totalorder %v3921, 3
      %vm3943 = vcmp.lt.s32.totalorder %v3921, 4
      %v3944 = vsel %vm3940, %v3924, %v3927
      %v3945 = vsel %vm3943, %v3933, 2102212464
      %v3946 = vsel %vm3942, %v3930, %v3945
      %v3947 = vsel %vm3941, %v3944, %v3946
      %v3948 = vsel %vm3940, %v3927, %v3930
      %v3949 = vsel %vm3943, %v3936, 920167782
      %v3950 = vsel %vm3942, %v3933, %v3949
      %v3951 = vsel %vm3941, %v3948, %v3950
      %v3952 = vsel %vm3940, %v3930, %v3933
      %v3953 = vsel %vm3943, %v3939, 1326507024
      %v3954 = vsel %vm3942, %v3936, %v3953
      %v3955 = vsel %vm3941, %v3952, %v3954
      %v3956 = vshll.u32 %v3916, 8
      %v3957 = vand.u32 %v3956, 65535
      %v3958 = vshrl.u32 %v3956, 16
      %v3959 = vand.u32 %v3955, 65535
      %v3960 = vshrl.u32 %v3955, 16
      %v3961 = vmul.u32 %v3957, %v3959
      %v3962 = vmul.u32 %v3957, %v3960
      %v3963 = vmul.u32 %v3958, %v3959
      %v3964 = vmul.u32 %v3958, %v3960
      %v3965 = vshll.u32 %v3962, 16
      %v3966 = vshrl.u32 %v3962, 16
      %v3967 = vshll.u32 %v3963, 16
      %v3968 = vshrl.u32 %v3963, 16
      %vm3969 = vc.u32 %v3961, %v3965
      %v3970 = vsel %vm3969, 1, 0
      %v3971 = vadd.s32 %v3961, %v3965
      %v3972 = vadd.s32 %v3964, %v3970
      %vm3973 = vc.u32 %v3971, %v3967
      %v3974 = vsel %vm3973, 1, 0
      %v3975 = vadd.s32 %v3971, %v3967
      %v3976 = vadd.s32 %v3972, %v3974
      %v3977 = vadd.s32 %v3976, %v3966
      %v3978 = vadd.s32 %v3977, %v3968
      %v3979 = vand.u32 %v3956, 65535
      %v3980 = vshrl.u32 %v3956, 16
      %v3981 = vand.u32 %v3951, 65535
      %v3982 = vshrl.u32 %v3951, 16
      %v3983 = vmul.u32 %v3979, %v3981
      %v3984 = vmul.u32 %v3979, %v3982
      %v3985 = vmul.u32 %v3980, %v3981
      %v3986 = vmul.u32 %v3980, %v3982
      %v3987 = vshll.u32 %v3984, 16
      %v3988 = vshrl.u32 %v3984, 16
      %v3989 = vshll.u32 %v3985, 16
      %v3990 = vshrl.u32 %v3985, 16
      %vm3991 = vc.u32 %v3983, %v3987
      %v3992 = vsel %vm3991, 1, 0
      %v3993 = vadd.s32 %v3983, %v3987
      %v3994 = vadd.s32 %v3986, %v3992
      %vm3995 = vc.u32 %v3993, %v3989
      %v3996 = vsel %vm3995, 1, 0
      %v3997 = vadd.s32 %v3993, %v3989
      %v3998 = vadd.s32 %v3994, %v3996
      %v3999 = vadd.s32 %v3998, %v3988
      %v4000 = vadd.s32 %v3999, %v3990
      %v4001 = vmul.u32 %v3956, %v3947
      %v4002 = vadd.s32 %v3978, %v3997
      %vm4003 = vc.u32 %v3978, %v3997
      %v4004 = vadd.s32 %v4000, 1
      %v4005 = vsel %vm4003, %v4004, %v4000
      %v4006 = vadd.s32 %v4001, %v4005
      %v4007 = vadd.s32 %v4006, 536870912
      %v4008 = vshrl.u32 %v4007, 30
      %v4009 = vshll.u32 %v4008, 30
      %v4010 = vsub.s32 %v4006, %v4009
      %vm4011 = vcmp.lt.s32.totalorder %v4010, 0
      %v4012 = vsub.s32 0, %v4010
      %v4013 = vsel %vm4011, %v4012, %v4010
      %v4014 = vclz %v4013
      %v4015 = vsub.s32 %v4014, 2
      %vm4016 = vcmp.gt.s32.totalorder 0, %v4015
      %v4017 = vsel %vm4016, 0, %v4015
      %v4018 = vsub.s32 32, %v4017
      %v4019 = vshll.u32 %v4010, %v4017
      %v4020 = vshrl.u32 %v4002, %v4018
      %v4021 = vor.u32 %v4019, %v4020
      %v4022 = vsub.s32 4294967266, %v4017
      %v4023 = vadd.s32 %v4022, 127
      %v4024 = vshll.u32 %v4023, 23
      %v4025 = vor.u32 4788187, %v4024
      %v4026 = vand.u32 2147483647, %v4025
      %v4028 = vcvt.s32.f32 %v4021
      %v4029 = vmul.f32 %v4028, %v4026
      %v4030 = vxor.u32 %v4029, 2147483648
      %v4031 = vsel %vm3910, %v4030, %v4029
      %v4032 = vsub.s32 4, %v4008
      %v4033 = vsel %vm3910, %v4032, %v4008
      %v4034 = vsel %vm3909, %v2341, %v4031
      %v4035 = vsel %vm3909, 0, %v4033
      %v4036 = vmul.f32 %v4034, %v4034
      %v4037 = vmul.f32 %v4036, -0.001358992
      %v4038 = vadd.f32 %v4037, 0.041655596
      %v4039 = vmul.f32 %v4036, %v4038
      %v4040 = vadd.f32 %v4039, -0.4999988
      %v4041 = vmul.f32 %v4036, %v4040
      %v4042 = vadd.f32 1.0, %v4041
      %v4043 = vmul.f32 %v4034, %v4034
      %v4044 = vmul.f32 %v4043, -0.00019511016
      %v4045 = vadd.f32 %v4044, 0.008332121
      %v4046 = vmul.f32 %v4043, %v4045
      %v4047 = vadd.f32 %v4046, -0.16666654
      %v4048 = vmul.f32 %v4043, %v4047
      %v4049 = vadd.f32 %v4048, 1.0
      %v4050 = vmul.f32 %v4049, %v4034
      %vm4051 = vweird.f32 %v2341
      %v4052 = vadd.s32 %v4035, 3
      %v4053 = vand.u32 %v4052, 3
      %vm4054 = vcmp.lt.s32.totalorder %v4053, 2
      %vm4055 = vcmp.eq.s32.totalorder %v4053, 0
      %v4056 = vxor.u32 %v4050, 2147483648
      %v4057 = vsel %vm4055, %v4042, %v4056
      %vm4058 = vcmp.eq.s32.totalorder %v4053, 2
      %v4059 = vxor.u32 %v4042, 2147483648
      %v4060 = vsel %vm4058, %v4059, %v4050
      %v4061 = vsel %vm4054, %v4057, %v4060
      %v4062 = vsel %vm4051, nan, %v4061
      %v4063 = vand.u32 2147483647, %v2344
      %vm4064 = vcmp.le.f32.partialorder %v4063, 0.7853982
      %vm4065 = vcmp.lt.s32.totalorder %v2344, 0
      %v4066 = vand.u32 %v2344, 2139095040
      %v4067 = vshrl.u32 %v4066, 23
      %v4068 = vsub.s32 %v4067, 127
      %v4069 = vand.u32 2147483647, %v2344
      %v4070 = vand.u32 %v4069, 8388607
      %v4071 = vor.u32 %v4070, 8388608
      %v4072 = vsub.s32 0, %v4071
      %v4073 = vadd.s32 %v4068, 1
      %vm4074 = vcmp.gt.s32.totalorder %v4073, 0
      %v4075 = vsel %vm4074, %v4073, 0
      %v4076 = vshrl.u32 %v4075, 5
      %v4077 = vand.u32 %v4075, 31
      %v4078 = vsub.s32 32, %v4077
      %v4079 = vshrl.u32 683565275, %v4078
      %v4080 = vshll.u32 683565275, %v4077
      %v4081 = vshrl.u32 2475754826, %v4078
      %v4082 = vor.u32 %v4080, %v4081
      %v4083 = vshll.u32 2475754826, %v4077
      %v4084 = vshrl.u32 2131351028, %v4078
      %v4085 = vor.u32 %v4083, %v4084
      %v4086 = vshll.u32 2131351028, %v4077
      %v4087 = vshrl.u32 2102212464, %v4078
      %v4088 = vor.u32 %v4086, %v4087
      %v4089 = vshll.u32 2102212464, %v4077
      %v4090 = vshrl.u32 920167782, %v4078
      %v4091 = vor.u32 %v4089, %v4090
      %v4092 = vshll.u32 920167782, %v4077
      %v4093 = vshrl.u32 1326507024, %v4078
      %v4094 = vor.u32 %v4092, %v4093
      %vm4095 = vcmp.lt.s32.totalorder %v4076, 1
      %vm4096 = vcmp.lt.s32.totalorder %v4076, 2
      %vm4097 = vcmp.lt.s32.totalorder %v4076, 3
      %vm4098 = vcmp.lt.s32.totalorder %v4076, 4
      %v4099 = vsel %vm4095, %v4079, %v4082
      %v4100 = vsel %vm4098, %v4088, 2102212464
      %v4101 = vsel %vm4097, %v4085, %v4100
      %v4102 = vsel %vm4096, %v4099, %v4101
      %v4103 = vsel %vm4095, %v4082, %v4085
      %v4104 = vsel %vm4098, %v4091, 920167782
      %v4105 = vsel %vm4097, %v4088, %v4104
      %v4106 = vsel %vm4096, %v4103, %v4105
      %v4107 = vsel %vm4095, %v4085, %v4088
      %v4108 = vsel %vm4098, %v4094, 1326507024
      %v4109 = vsel %vm4097, %v4091, %v4108
      %v4110 = vsel %vm4096, %v4107, %v4109
      %v4111 = vshll.u32 %v4071, 8
      %v4112 = vand.u32 %v4111, 65535
      %v4113 = vshrl.u32 %v4111, 16
      %v4114 = vand.u32 %v4110, 65535
      %v4115 = vshrl.u32 %v4110, 16
      %v4116 = vmul.u32 %v4112, %v4114
      %v4117 = vmul.u32 %v4112, %v4115
      %v4118 = vmul.u32 %v4113, %v4114
      %v4119 = vmul.u32 %v4113, %v4115
      %v4120 = vshll.u32 %v4117, 16
      %v4121 = vshrl.u32 %v4117, 16
      %v4122 = vshll.u32 %v4118, 16
      %v4123 = vshrl.u32 %v4118, 16
      %vm4124 = vc.u32 %v4116, %v4120
      %v4125 = vsel %vm4124, 1, 0
      %v4126 = vadd.s32 %v4116, %v4120
      %v4127 = vadd.s32 %v4119, %v4125
      %vm4128 = vc.u32 %v4126, %v4122
      %v4129 = vsel %vm4128, 1, 0
      %v4130 = vadd.s32 %v4126, %v4122
      %v4131 = vadd.s32 %v4127, %v4129
      %v4132 = vadd.s32 %v4131, %v4121
      %v4133 = vadd.s32 %v4132, %v4123
      %v4134 = vand.u32 %v4111, 65535
      %v4135 = vshrl.u32 %v4111, 16
      %v4136 = vand.u32 %v4106, 65535
      %v4137 = vshrl.u32 %v4106, 16
      %v4138 = vmul.u32 %v4134, %v4136
      %v4139 = vmul.u32 %v4134, %v4137
      %v4140 = vmul.u32 %v4135, %v4136
      %v4141 = vmul.u32 %v4135, %v4137
      %v4142 = vshll.u32 %v4139, 16
      %v4143 = vshrl.u32 %v4139, 16
      %v4144 = vshll.u32 %v4140, 16
      %v4145 = vshrl.u32 %v4140, 16
      %vm4146 = vc.u32 %v4138, %v4142
      %v4147 = vsel %vm4146, 1, 0
      %v4148 = vadd.s32 %v4138, %v4142
      %v4149 = vadd.s32 %v4141, %v4147
      %vm4150 = vc.u32 %v4148, %v4144
      %v4151 = vsel %vm4150, 1, 0
      %v4152 = vadd.s32 %v4148, %v4144
      %v4153 = vadd.s32 %v4149, %v4151
      %v4154 = vadd.s32 %v4153, %v4143
      %v4155 = vadd.s32 %v4154, %v4145
      %v4156 = vmul.u32 %v4111, %v4102
      %v4157 = vadd.s32 %v4133, %v4152
      %vm4158 = vc.u32 %v4133, %v4152
      %v4159 = vadd.s32 %v4155, 1
      %v4160 = vsel %vm4158, %v4159, %v4155
      %v4161 = vadd.s32 %v4156, %v4160
      %v4162 = vadd.s32 %v4161, 536870912
      %v4163 = vshrl.u32 %v4162, 30
      %v4164 = vshll.u32 %v4163, 30
      %v4165 = vsub.s32 %v4161, %v4164
      %vm4166 = vcmp.lt.s32.totalorder %v4165, 0
      %v4167 = vsub.s32 0, %v4165
      %v4168 = vsel %vm4166, %v4167, %v4165
      %v4169 = vclz %v4168
      %v4170 = vsub.s32 %v4169, 2
      %vm4171 = vcmp.gt.s32.totalorder 0, %v4170
      %v4172 = vsel %vm4171, 0, %v4170
      %v4173 = vsub.s32 32, %v4172
      %v4174 = vshll.u32 %v4165, %v4172
      %v4175 = vshrl.u32 %v4157, %v4173
      %v4176 = vor.u32 %v4174, %v4175
      %v4177 = vsub.s32 4294967266, %v4172
      %v4178 = vadd.s32 %v4177, 127
      %v4179 = vshll.u32 %v4178, 23
      %v4180 = vor.u32 4788187, %v4179
      %v4181 = vand.u32 2147483647, %v4180
      %v4183 = vcvt.s32.f32 %v4176
      %v4184 = vmul.f32 %v4183, %v4181
      %v4185 = vxor.u32 %v4184, 2147483648
      %v4186 = vsel %vm4065, %v4185, %v4184
      %v4187 = vsub.s32 4, %v4163
      %v4188 = vsel %vm4065, %v4187, %v4163
      %v4189 = vsel %vm4064, %v2344, %v4186
      %v4190 = vsel %vm4064, 0, %v4188
      %v4191 = vmul.f32 %v4189, %v4189
      %v4192 = vmul.f32 %v4191, -0.001358992
      %v4193 = vadd.f32 %v4192, 0.041655596
      %v4194 = vmul.f32 %v4191, %v4193
      %v4195 = vadd.f32 %v4194, -0.4999988
      %v4196 = vmul.f32 %v4191, %v4195
      %v4197 = vadd.f32 1.0, %v4196
      %v4198 = vmul.f32 %v4189, %v4189
      %v4199 = vmul.f32 %v4198, -0.00019511016
      %v4200 = vadd.f32 %v4199, 0.008332121
      %v4201 = vmul.f32 %v4198, %v4200
      %v4202 = vadd.f32 %v4201, -0.16666654
      %v4203 = vmul.f32 %v4198, %v4202
      %v4204 = vadd.f32 %v4203, 1.0
      %v4205 = vmul.f32 %v4204, %v4189
      %vm4206 = vweird.f32 %v2344
      %v4207 = vadd.s32 %v4190, 3
      %v4208 = vand.u32 %v4207, 3
      %vm4209 = vcmp.lt.s32.totalorder %v4208, 2
      %vm4210 = vcmp.eq.s32.totalorder %v4208, 0
      %v4211 = vxor.u32 %v4205, 2147483648
      %v4212 = vsel %vm4210, %v4197, %v4211
      %vm4213 = vcmp.eq.s32.totalorder %v4208, 2
      %v4214 = vxor.u32 %v4197, 2147483648
      %v4215 = vsel %vm4213, %v4214, %v4205
      %v4216 = vsel %vm4209, %v4212, %v4215
      %v4217 = vsel %vm4206, nan, %v4216
      %v4218 = vand.u32 2147483647, %v2347
      %vm4219 = vcmp.le.f32.partialorder %v4218, 0.7853982
      %vm4220 = vcmp.lt.s32.totalorder %v2347, 0
      %v4221 = vand.u32 %v2347, 2139095040
      %v4222 = vshrl.u32 %v4221, 23
      %v4223 = vsub.s32 %v4222, 127
      %v4224 = vand.u32 2147483647, %v2347
      %v4225 = vand.u32 %v4224, 8388607
      %v4226 = vor.u32 %v4225, 8388608
      %v4227 = vsub.s32 0, %v4226
      %v4228 = vadd.s32 %v4223, 1
      %vm4229 = vcmp.gt.s32.totalorder %v4228, 0
      %v4230 = vsel %vm4229, %v4228, 0
      %v4231 = vshrl.u32 %v4230, 5
      %v4232 = vand.u32 %v4230, 31
      %v4233 = vsub.s32 32, %v4232
      %v4234 = vshrl.u32 683565275, %v4233
      %v4235 = vshll.u32 683565275, %v4232
      %v4236 = vshrl.u32 2475754826, %v4233
      %v4237 = vor.u32 %v4235, %v4236
      %v4238 = vshll.u32 2475754826, %v4232
      %v4239 = vshrl.u32 2131351028, %v4233
      %v4240 = vor.u32 %v4238, %v4239
      %v4241 = vshll.u32 2131351028, %v4232
      %v4242 = vshrl.u32 2102212464, %v4233
      %v4243 = vor.u32 %v4241, %v4242
      %v4244 = vshll.u32 2102212464, %v4232
      %v4245 = vshrl.u32 920167782, %v4233
      %v4246 = vor.u32 %v4244, %v4245
      %v4247 = vshll.u32 920167782, %v4232
      %v4248 = vshrl.u32 1326507024, %v4233
      %v4249 = vor.u32 %v4247, %v4248
      %vm4250 = vcmp.lt.s32.totalorder %v4231, 1
      %vm4251 = vcmp.lt.s32.totalorder %v4231, 2
      %vm4252 = vcmp.lt.s32.totalorder %v4231, 3
      %vm4253 = vcmp.lt.s32.totalorder %v4231, 4
      %v4254 = vsel %vm4250, %v4234, %v4237
      %v4255 = vsel %vm4253, %v4243, 2102212464
      %v4256 = vsel %vm4252, %v4240, %v4255
      %v4257 = vsel %vm4251, %v4254, %v4256
      %v4258 = vsel %vm4250, %v4237, %v4240
      %v4259 = vsel %vm4253, %v4246, 920167782
      %v4260 = vsel %vm4252, %v4243, %v4259
      %v4261 = vsel %vm4251, %v4258, %v4260
      %v4262 = vsel %vm4250, %v4240, %v4243
      %v4263 = vsel %vm4253, %v4249, 1326507024
      %v4264 = vsel %vm4252, %v4246, %v4263
      %v4265 = vsel %vm4251, %v4262, %v4264
      %v4266 = vshll.u32 %v4226, 8
      %v4267 = vand.u32 %v4266, 65535
      %v4268 = vshrl.u32 %v4266, 16
      %v4269 = vand.u32 %v4265, 65535
      %v4270 = vshrl.u32 %v4265, 16
      %v4271 = vmul.u32 %v4267, %v4269
      %v4272 = vmul.u32 %v4267, %v4270
      %v4273 = vmul.u32 %v4268, %v4269
      %v4274 = vmul.u32 %v4268, %v4270
      %v4275 = vshll.u32 %v4272, 16
      %v4276 = vshrl.u32 %v4272, 16
      %v4277 = vshll.u32 %v4273, 16
      %v4278 = vshrl.u32 %v4273, 16
      %vm4279 = vc.u32 %v4271, %v4275
      %v4280 = vsel %vm4279, 1, 0
      %v4281 = vadd.s32 %v4271, %v4275
      %v4282 = vadd.s32 %v4274, %v4280
      %vm4283 = vc.u32 %v4281, %v4277
      %v4284 = vsel %vm4283, 1, 0
      %v4285 = vadd.s32 %v4281, %v4277
      %v4286 = vadd.s32 %v4282, %v4284
      %v4287 = vadd.s32 %v4286, %v4276
      %v4288 = vadd.s32 %v4287, %v4278
      %v4289 = vand.u32 %v4266, 65535
      %v4290 = vshrl.u32 %v4266, 16
      %v4291 = vand.u32 %v4261, 65535
      %v4292 = vshrl.u32 %v4261, 16
      %v4293 = vmul.u32 %v4289, %v4291
      %v4294 = vmul.u32 %v4289, %v4292
      %v4295 = vmul.u32 %v4290, %v4291
      %v4296 = vmul.u32 %v4290, %v4292
      %v4297 = vshll.u32 %v4294, 16
      %v4298 = vshrl.u32 %v4294, 16
      %v4299 = vshll.u32 %v4295, 16
      %v4300 = vshrl.u32 %v4295, 16
      %vm4301 = vc.u32 %v4293, %v4297
      %v4302 = vsel %vm4301, 1, 0
      %v4303 = vadd.s32 %v4293, %v4297
      %v4304 = vadd.s32 %v4296, %v4302
      %vm4305 = vc.u32 %v4303, %v4299
      %v4306 = vsel %vm4305, 1, 0
      %v4307 = vadd.s32 %v4303, %v4299
      %v4308 = vadd.s32 %v4304, %v4306
      %v4309 = vadd.s32 %v4308, %v4298
      %v4310 = vadd.s32 %v4309, %v4300
      %v4311 = vmul.u32 %v4266, %v4257
      %v4312 = vadd.s32 %v4288, %v4307
      %vm4313 = vc.u32 %v4288, %v4307
      %v4314 = vadd.s32 %v4310, 1
      %v4315 = vsel %vm4313, %v4314, %v4310
      %v4316 = vadd.s32 %v4311, %v4315
      %v4317 = vadd.s32 %v4316, 536870912
      %v4318 = vshrl.u32 %v4317, 30
      %v4319 = vshll.u32 %v4318, 30
      %v4320 = vsub.s32 %v4316, %v4319
      %vm4321 = vcmp.lt.s32.totalorder %v4320, 0
      %v4322 = vsub.s32 0, %v4320
      %v4323 = vsel %vm4321, %v4322, %v4320
      %v4324 = vclz %v4323
      %v4325 = vsub.s32 %v4324, 2
      %vm4326 = vcmp.gt.s32.totalorder 0, %v4325
      %v4327 = vsel %vm4326, 0, %v4325
      %v4328 = vsub.s32 32, %v4327
      %v4329 = vshll.u32 %v4320, %v4327
      %v4330 = vshrl.u32 %v4312, %v4328
      %v4331 = vor.u32 %v4329, %v4330
      %v4332 = vsub.s32 4294967266, %v4327
      %v4333 = vadd.s32 %v4332, 127
      %v4334 = vshll.u32 %v4333, 23
      %v4335 = vor.u32 4788187, %v4334
      %v4336 = vand.u32 2147483647, %v4335
      %v4338 = vcvt.s32.f32 %v4331
      %v4339 = vmul.f32 %v4338, %v4336
      %v4340 = vxor.u32 %v4339, 2147483648
      %v4341 = vsel %vm4220, %v4340, %v4339
      %v4342 = vsub.s32 4, %v4318
      %v4343 = vsel %vm4220, %v4342, %v4318
      %v4344 = vsel %vm4219, %v2347, %v4341
      %v4345 = vsel %vm4219, 0, %v4343
      %v4346 = vmul.f32 %v4344, %v4344
      %v4347 = vmul.f32 %v4346, -0.001358992
      %v4348 = vadd.f32 %v4347, 0.041655596
      %v4349 = vmul.f32 %v4346, %v4348
      %v4350 = vadd.f32 %v4349, -0.4999988
      %v4351 = vmul.f32 %v4346, %v4350
      %v4352 = vadd.f32 1.0, %v4351
      %v4353 = vmul.f32 %v4344, %v4344
      %v4354 = vmul.f32 %v4353, -0.00019511016
      %v4355 = vadd.f32 %v4354, 0.008332121
      %v4356 = vmul.f32 %v4353, %v4355
      %v4357 = vadd.f32 %v4356, -0.16666654
      %v4358 = vmul.f32 %v4353, %v4357
      %v4359 = vadd.f32 %v4358, 1.0
      %v4360 = vmul.f32 %v4359, %v4344
      %vm4361 = vweird.f32 %v2347
      %v4362 = vadd.s32 %v4345, 3
      %v4363 = vand.u32 %v4362, 3
      %vm4364 = vcmp.lt.s32.totalorder %v4363, 2
      %vm4365 = vcmp.eq.s32.totalorder %v4363, 0
      %v4366 = vxor.u32 %v4360, 2147483648
      %v4367 = vsel %vm4365, %v4352, %v4366
      %vm4368 = vcmp.eq.s32.totalorder %v4363, 2
      %v4369 = vxor.u32 %v4352, 2147483648
      %v4370 = vsel %vm4368, %v4369, %v4360
      %v4371 = vsel %vm4364, %v4367, %v4370
      %v4372 = vsel %vm4361, nan, %v4371
      %v4373 = vand.u32 2147483647, %v2350
      %vm4374 = vcmp.le.f32.partialorder %v4373, 0.7853982
      %vm4375 = vcmp.lt.s32.totalorder %v2350, 0
      %v4376 = vand.u32 %v2350, 2139095040
      %v4377 = vshrl.u32 %v4376, 23
      %v4378 = vsub.s32 %v4377, 127
      %v4379 = vand.u32 2147483647, %v2350
      %v4380 = vand.u32 %v4379, 8388607
      %v4381 = vor.u32 %v4380, 8388608
      %v4382 = vsub.s32 0, %v4381
      %v4383 = vadd.s32 %v4378, 1
      %vm4384 = vcmp.gt.s32.totalorder %v4383, 0
      %v4385 = vsel %vm4384, %v4383, 0
      %v4386 = vshrl.u32 %v4385, 5
      %v4387 = vand.u32 %v4385, 31
      %v4388 = vsub.s32 32, %v4387
      %v4389 = vshrl.u32 683565275, %v4388
      %v4390 = vshll.u32 683565275, %v4387
      %v4391 = vshrl.u32 2475754826, %v4388
      %v4392 = vor.u32 %v4390, %v4391
      %v4393 = vshll.u32 2475754826, %v4387
      %v4394 = vshrl.u32 2131351028, %v4388
      %v4395 = vor.u32 %v4393, %v4394
      %v4396 = vshll.u32 2131351028, %v4387
      %v4397 = vshrl.u32 2102212464, %v4388
      %v4398 = vor.u32 %v4396, %v4397
      %v4399 = vshll.u32 2102212464, %v4387
      %v4400 = vshrl.u32 920167782, %v4388
      %v4401 = vor.u32 %v4399, %v4400
      %v4402 = vshll.u32 920167782, %v4387
      %v4403 = vshrl.u32 1326507024, %v4388
      %v4404 = vor.u32 %v4402, %v4403
      %vm4405 = vcmp.lt.s32.totalorder %v4386, 1
      %vm4406 = vcmp.lt.s32.totalorder %v4386, 2
      %vm4407 = vcmp.lt.s32.totalorder %v4386, 3
      %vm4408 = vcmp.lt.s32.totalorder %v4386, 4
      %v4409 = vsel %vm4405, %v4389, %v4392
      %v4410 = vsel %vm4408, %v4398, 2102212464
      %v4411 = vsel %vm4407, %v4395, %v4410
      %v4412 = vsel %vm4406, %v4409, %v4411
      %v4413 = vsel %vm4405, %v4392, %v4395
      %v4414 = vsel %vm4408, %v4401, 920167782
      %v4415 = vsel %vm4407, %v4398, %v4414
      %v4416 = vsel %vm4406, %v4413, %v4415
      %v4417 = vsel %vm4405, %v4395, %v4398
      %v4418 = vsel %vm4408, %v4404, 1326507024
      %v4419 = vsel %vm4407, %v4401, %v4418
      %v4420 = vsel %vm4406, %v4417, %v4419
      %v4421 = vshll.u32 %v4381, 8
      %v4422 = vand.u32 %v4421, 65535
      %v4423 = vshrl.u32 %v4421, 16
      %v4424 = vand.u32 %v4420, 65535
      %v4425 = vshrl.u32 %v4420, 16
      %v4426 = vmul.u32 %v4422, %v4424
      %v4427 = vmul.u32 %v4422, %v4425
      %v4428 = vmul.u32 %v4423, %v4424
      %v4429 = vmul.u32 %v4423, %v4425
      %v4430 = vshll.u32 %v4427, 16
      %v4431 = vshrl.u32 %v4427, 16
      %v4432 = vshll.u32 %v4428, 16
      %v4433 = vshrl.u32 %v4428, 16
      %vm4434 = vc.u32 %v4426, %v4430
      %v4435 = vsel %vm4434, 1, 0
      %v4436 = vadd.s32 %v4426, %v4430
      %v4437 = vadd.s32 %v4429, %v4435
      %vm4438 = vc.u32 %v4436, %v4432
      %v4439 = vsel %vm4438, 1, 0
      %v4440 = vadd.s32 %v4436, %v4432
      %v4441 = vadd.s32 %v4437, %v4439
      %v4442 = vadd.s32 %v4441, %v4431
      %v4443 = vadd.s32 %v4442, %v4433
      %v4444 = vand.u32 %v4421, 65535
      %v4445 = vshrl.u32 %v4421, 16
      %v4446 = vand.u32 %v4416, 65535
      %v4447 = vshrl.u32 %v4416, 16
      %v4448 = vmul.u32 %v4444, %v4446
      %v4449 = vmul.u32 %v4444, %v4447
      %v4450 = vmul.u32 %v4445, %v4446
      %v4451 = vmul.u32 %v4445, %v4447
      %v4452 = vshll.u32 %v4449, 16
      %v4453 = vshrl.u32 %v4449, 16
      %v4454 = vshll.u32 %v4450, 16
      %v4455 = vshrl.u32 %v4450, 16
      %vm4456 = vc.u32 %v4448, %v4452
      %v4457 = vsel %vm4456, 1, 0
      %v4458 = vadd.s32 %v4448, %v4452
      %v4459 = vadd.s32 %v4451, %v4457
      %vm4460 = vc.u32 %v4458, %v4454
      %v4461 = vsel %vm4460, 1, 0
      %v4462 = vadd.s32 %v4458, %v4454
      %v4463 = vadd.s32 %v4459, %v4461
      %v4464 = vadd.s32 %v4463, %v4453
      %v4465 = vadd.s32 %v4464, %v4455
      %v4466 = vmul.u32 %v4421, %v4412
      %v4467 = vadd.s32 %v4443, %v4462
      %vm4468 = vc.u32 %v4443, %v4462
      %v4469 = vadd.s32 %v4465, 1
      %v4470 = vsel %vm4468, %v4469, %v4465
      %v4471 = vadd.s32 %v4466, %v4470
      %v4472 = vadd.s32 %v4471, 536870912
      %v4473 = vshrl.u32 %v4472, 30
      %v4474 = vshll.u32 %v4473, 30
      %v4475 = vsub.s32 %v4471, %v4474
      %vm4476 = vcmp.lt.s32.totalorder %v4475, 0
      %v4477 = vsub.s32 0, %v4475
      %v4478 = vsel %vm4476, %v4477, %v4475
      %v4479 = vclz %v4478
      %v4480 = vsub.s32 %v4479, 2
      %vm4481 = vcmp.gt.s32.totalorder 0, %v4480
      %v4482 = vsel %vm4481, 0, %v4480
      %v4483 = vsub.s32 32, %v4482
      %v4484 = vshll.u32 %v4475, %v4482
      %v4485 = vshrl.u32 %v4467, %v4483
      %v4486 = vor.u32 %v4484, %v4485
      %v4487 = vsub.s32 4294967266, %v4482
      %v4488 = vadd.s32 %v4487, 127
      %v4489 = vshll.u32 %v4488, 23
      %v4490 = vor.u32 4788187, %v4489
      %v4491 = vand.u32 2147483647, %v4490
      %v4493 = vcvt.s32.f32 %v4486
      %v4494 = vmul.f32 %v4493, %v4491
      %v4495 = vxor.u32 %v4494, 2147483648
      %v4496 = vsel %vm4375, %v4495, %v4494
      %v4497 = vsub.s32 4, %v4473
      %v4498 = vsel %vm4375, %v4497, %v4473
      %v4499 = vsel %vm4374, %v2350, %v4496
      %v4500 = vsel %vm4374, 0, %v4498
      %v4501 = vmul.f32 %v4499, %v4499
      %v4502 = vmul.f32 %v4501, -0.001358992
      %v4503 = vadd.f32 %v4502, 0.041655596
      %v4504 = vmul.f32 %v4501, %v4503
      %v4505 = vadd.f32 %v4504, -0.4999988
      %v4506 = vmul.f32 %v4501, %v4505
      %v4507 = vadd.f32 1.0, %v4506
      %v4508 = vmul.f32 %v4499, %v4499
      %v4509 = vmul.f32 %v4508, -0.00019511016
      %v4510 = vadd.f32 %v4509, 0.008332121
      %v4511 = vmul.f32 %v4508, %v4510
      %v4512 = vadd.f32 %v4511, -0.16666654
      %v4513 = vmul.f32 %v4508, %v4512
      %v4514 = vadd.f32 %v4513, 1.0
      %v4515 = vmul.f32 %v4514, %v4499
      %vm4516 = vweird.f32 %v2350
      %v4517 = vadd.s32 %v4500, 3
      %v4518 = vand.u32 %v4517, 3
      %vm4519 = vcmp.lt.s32.totalorder %v4518, 2
      %vm4520 = vcmp.eq.s32.totalorder %v4518, 0
      %v4521 = vxor.u32 %v4515, 2147483648
      %v4522 = vsel %vm4520, %v4507, %v4521
      %vm4523 = vcmp.eq.s32.totalorder %v4518, 2
      %v4524 = vxor.u32 %v4507, 2147483648
      %v4525 = vsel %vm4523, %v4524, %v4515
      %v4526 = vsel %vm4519, %v4522, %v4525
      %v4527 = vsel %vm4516, nan, %v4526
      %v4528 = vand.u32 2147483647, %v2353
      %vm4529 = vcmp.le.f32.partialorder %v4528, 0.7853982
      %vm4530 = vcmp.lt.s32.totalorder %v2353, 0
      %v4531 = vand.u32 %v2353, 2139095040
      %v4532 = vshrl.u32 %v4531, 23
      %v4533 = vsub.s32 %v4532, 127
      %v4534 = vand.u32 2147483647, %v2353
      %v4535 = vand.u32 %v4534, 8388607
      %v4536 = vor.u32 %v4535, 8388608
      %v4537 = vsub.s32 0, %v4536
      %v4538 = vadd.s32 %v4533, 1
      %vm4539 = vcmp.gt.s32.totalorder %v4538, 0
      %v4540 = vsel %vm4539, %v4538, 0
      %v4541 = vshrl.u32 %v4540, 5
      %v4542 = vand.u32 %v4540, 31
      %v4543 = vsub.s32 32, %v4542
      %v4544 = vshrl.u32 683565275, %v4543
      %v4545 = vshll.u32 683565275, %v4542
      %v4546 = vshrl.u32 2475754826, %v4543
      %v4547 = vor.u32 %v4545, %v4546
      %v4548 = vshll.u32 2475754826, %v4542
      %v4549 = vshrl.u32 2131351028, %v4543
      %v4550 = vor.u32 %v4548, %v4549
      %v4551 = vshll.u32 2131351028, %v4542
      %v4552 = vshrl.u32 2102212464, %v4543
      %v4553 = vor.u32 %v4551, %v4552
      %v4554 = vshll.u32 2102212464, %v4542
      %v4555 = vshrl.u32 920167782, %v4543
      %v4556 = vor.u32 %v4554, %v4555
      %v4557 = vshll.u32 920167782, %v4542
      %v4558 = vshrl.u32 1326507024, %v4543
      %v4559 = vor.u32 %v4557, %v4558
      %vm4560 = vcmp.lt.s32.totalorder %v4541, 1
      %vm4561 = vcmp.lt.s32.totalorder %v4541, 2
      %vm4562 = vcmp.lt.s32.totalorder %v4541, 3
      %vm4563 = vcmp.lt.s32.totalorder %v4541, 4
      %v4564 = vsel %vm4560, %v4544, %v4547
      %v4565 = vsel %vm4563, %v4553, 2102212464
      %v4566 = vsel %vm4562, %v4550, %v4565
      %v4567 = vsel %vm4561, %v4564, %v4566
      %v4568 = vsel %vm4560, %v4547, %v4550
      %v4569 = vsel %vm4563, %v4556, 920167782
      %v4570 = vsel %vm4562, %v4553, %v4569
      %v4571 = vsel %vm4561, %v4568, %v4570
      %v4572 = vsel %vm4560, %v4550, %v4553
      %v4573 = vsel %vm4563, %v4559, 1326507024
      %v4574 = vsel %vm4562, %v4556, %v4573
      %v4575 = vsel %vm4561, %v4572, %v4574
      %v4576 = vshll.u32 %v4536, 8
      %v4577 = vand.u32 %v4576, 65535
      %v4578 = vshrl.u32 %v4576, 16
      %v4579 = vand.u32 %v4575, 65535
      %v4580 = vshrl.u32 %v4575, 16
      %v4581 = vmul.u32 %v4577, %v4579
      %v4582 = vmul.u32 %v4577, %v4580
      %v4583 = vmul.u32 %v4578, %v4579
      %v4584 = vmul.u32 %v4578, %v4580
      %v4585 = vshll.u32 %v4582, 16
      %v4586 = vshrl.u32 %v4582, 16
      %v4587 = vshll.u32 %v4583, 16
      %v4588 = vshrl.u32 %v4583, 16
      %vm4589 = vc.u32 %v4581, %v4585
      %v4590 = vsel %vm4589, 1, 0
      %v4591 = vadd.s32 %v4581, %v4585
      %v4592 = vadd.s32 %v4584, %v4590
      %vm4593 = vc.u32 %v4591, %v4587
      %v4594 = vsel %vm4593, 1, 0
      %v4595 = vadd.s32 %v4591, %v4587
      %v4596 = vadd.s32 %v4592, %v4594
      %v4597 = vadd.s32 %v4596, %v4586
      %v4598 = vadd.s32 %v4597, %v4588
      %v4599 = vand.u32 %v4576, 65535
      %v4600 = vshrl.u32 %v4576, 16
      %v4601 = vand.u32 %v4571, 65535
      %v4602 = vshrl.u32 %v4571, 16
      %v4603 = vmul.u32 %v4599, %v4601
      %v4604 = vmul.u32 %v4599, %v4602
      %v4605 = vmul.u32 %v4600, %v4601
      %v4606 = vmul.u32 %v4600, %v4602
      %v4607 = vshll.u32 %v4604, 16
      %v4608 = vshrl.u32 %v4604, 16
      %v4609 = vshll.u32 %v4605, 16
      %v4610 = vshrl.u32 %v4605, 16
      %vm4611 = vc.u32 %v4603, %v4607
      %v4612 = vsel %vm4611, 1, 0
      %v4613 = vadd.s32 %v4603, %v4607
      %v4614 = vadd.s32 %v4606, %v4612
      %vm4615 = vc.u32 %v4613, %v4609
      %v4616 = vsel %vm4615, 1, 0
      %v4617 = vadd.s32 %v4613, %v4609
      %v4618 = vadd.s32 %v4614, %v4616
      %v4619 = vadd.s32 %v4618, %v4608
      %v4620 = vadd.s32 %v4619, %v4610
      %v4621 = vmul.u32 %v4576, %v4567
      %v4622 = vadd.s32 %v4598, %v4617
      %vm4623 = vc.u32 %v4598, %v4617
      %v4624 = vadd.s32 %v4620, 1
      %v4625 = vsel %vm4623, %v4624, %v4620
      %v4626 = vadd.s32 %v4621, %v4625
      %v4627 = vadd.s32 %v4626, 536870912
      %v4628 = vshrl.u32 %v4627, 30
      %v4629 = vshll.u32 %v4628, 30
      %v4630 = vsub.s32 %v4626, %v4629
      %vm4631 = vcmp.lt.s32.totalorder %v4630, 0
      %v4632 = vsub.s32 0, %v4630
      %v4633 = vsel %vm4631, %v4632, %v4630
      %v4634 = vclz %v4633
      %v4635 = vsub.s32 %v4634, 2
      %vm4636 = vcmp.gt.s32.totalorder 0, %v4635
      %v4637 = vsel %vm4636, 0, %v4635
      %v4638 = vsub.s32 32, %v4637
      %v4639 = vshll.u32 %v4630, %v4637
      %v4640 = vshrl.u32 %v4622, %v4638
      %v4641 = vor.u32 %v4639, %v4640
      %v4642 = vsub.s32 4294967266, %v4637
      %v4643 = vadd.s32 %v4642, 127
      %v4644 = vshll.u32 %v4643, 23
      %v4645 = vor.u32 4788187, %v4644
      %v4646 = vand.u32 2147483647, %v4645
      %v4648 = vcvt.s32.f32 %v4641
      %v4649 = vmul.f32 %v4648, %v4646
      %v4650 = vxor.u32 %v4649, 2147483648
      %v4651 = vsel %vm4530, %v4650, %v4649
      %v4652 = vsub.s32 4, %v4628
      %v4653 = vsel %vm4530, %v4652, %v4628
      %v4654 = vsel %vm4529, %v2353, %v4651
      %v4655 = vsel %vm4529, 0, %v4653
      %v4656 = vmul.f32 %v4654, %v4654
      %v4657 = vmul.f32 %v4656, -0.001358992
      %v4658 = vadd.f32 %v4657, 0.041655596
      %v4659 = vmul.f32 %v4656, %v4658
      %v4660 = vadd.f32 %v4659, -0.4999988
      %v4661 = vmul.f32 %v4656, %v4660
      %v4662 = vadd.f32 1.0, %v4661
      %v4663 = vmul.f32 %v4654, %v4654
      %v4664 = vmul.f32 %v4663, -0.00019511016
      %v4665 = vadd.f32 %v4664, 0.008332121
      %v4666 = vmul.f32 %v4663, %v4665
      %v4667 = vadd.f32 %v4666, -0.16666654
      %v4668 = vmul.f32 %v4663, %v4667
      %v4669 = vadd.f32 %v4668, 1.0
      %v4670 = vmul.f32 %v4669, %v4654
      %vm4671 = vweird.f32 %v2353
      %v4672 = vadd.s32 %v4655, 3
      %v4673 = vand.u32 %v4672, 3
      %vm4674 = vcmp.lt.s32.totalorder %v4673, 2
      %vm4675 = vcmp.eq.s32.totalorder %v4673, 0
      %v4676 = vxor.u32 %v4670, 2147483648
      %v4677 = vsel %vm4675, %v4662, %v4676
      %vm4678 = vcmp.eq.s32.totalorder %v4673, 2
      %v4679 = vxor.u32 %v4662, 2147483648
      %v4680 = vsel %vm4678, %v4679, %v4670
      %v4681 = vsel %vm4674, %v4677, %v4680
      %v4682 = vsel %vm4671, nan, %v4681
      %v4683 = vand.u32 2147483647, %v2356
      %vm4684 = vcmp.le.f32.partialorder %v4683, 0.7853982
      %vm4685 = vcmp.lt.s32.totalorder %v2356, 0
      %v4686 = vand.u32 %v2356, 2139095040
      %v4687 = vshrl.u32 %v4686, 23
      %v4688 = vsub.s32 %v4687, 127
      %v4689 = vand.u32 2147483647, %v2356
      %v4690 = vand.u32 %v4689, 8388607
      %v4691 = vor.u32 %v4690, 8388608
      %v4692 = vsub.s32 0, %v4691
      %v4693 = vadd.s32 %v4688, 1
      %vm4694 = vcmp.gt.s32.totalorder %v4693, 0
      %v4695 = vsel %vm4694, %v4693, 0
      %v4696 = vshrl.u32 %v4695, 5
      %v4697 = vand.u32 %v4695, 31
      %v4698 = vsub.s32 32, %v4697
      %v4699 = vshrl.u32 683565275, %v4698
      %v4700 = vshll.u32 683565275, %v4697
      %v4701 = vshrl.u32 2475754826, %v4698
      %v4702 = vor.u32 %v4700, %v4701
      %v4703 = vshll.u32 2475754826, %v4697
      %v4704 = vshrl.u32 2131351028, %v4698
      %v4705 = vor.u32 %v4703, %v4704
      %v4706 = vshll.u32 2131351028, %v4697
      %v4707 = vshrl.u32 2102212464, %v4698
      %v4708 = vor.u32 %v4706, %v4707
      %v4709 = vshll.u32 2102212464, %v4697
      %v4710 = vshrl.u32 920167782, %v4698
      %v4711 = vor.u32 %v4709, %v4710
      %v4712 = vshll.u32 920167782, %v4697
      %v4713 = vshrl.u32 1326507024, %v4698
      %v4714 = vor.u32 %v4712, %v4713
      %vm4715 = vcmp.lt.s32.totalorder %v4696, 1
      %vm4716 = vcmp.lt.s32.totalorder %v4696, 2
      %vm4717 = vcmp.lt.s32.totalorder %v4696, 3
      %vm4718 = vcmp.lt.s32.totalorder %v4696, 4
      %v4719 = vsel %vm4715, %v4699, %v4702
      %v4720 = vsel %vm4718, %v4708, 2102212464
      %v4721 = vsel %vm4717, %v4705, %v4720
      %v4722 = vsel %vm4716, %v4719, %v4721
      %v4723 = vsel %vm4715, %v4702, %v4705
      %v4724 = vsel %vm4718, %v4711, 920167782
      %v4725 = vsel %vm4717, %v4708, %v4724
      %v4726 = vsel %vm4716, %v4723, %v4725
      %v4727 = vsel %vm4715, %v4705, %v4708
      %v4728 = vsel %vm4718, %v4714, 1326507024
      %v4729 = vsel %vm4717, %v4711, %v4728
      %v4730 = vsel %vm4716, %v4727, %v4729
      %v4731 = vshll.u32 %v4691, 8
      %v4732 = vand.u32 %v4731, 65535
      %v4733 = vshrl.u32 %v4731, 16
      %v4734 = vand.u32 %v4730, 65535
      %v4735 = vshrl.u32 %v4730, 16
      %v4736 = vmul.u32 %v4732, %v4734
      %v4737 = vmul.u32 %v4732, %v4735
      %v4738 = vmul.u32 %v4733, %v4734
      %v4739 = vmul.u32 %v4733, %v4735
      %v4740 = vshll.u32 %v4737, 16
      %v4741 = vshrl.u32 %v4737, 16
      %v4742 = vshll.u32 %v4738, 16
      %v4743 = vshrl.u32 %v4738, 16
      %vm4744 = vc.u32 %v4736, %v4740
      %v4745 = vsel %vm4744, 1, 0
      %v4746 = vadd.s32 %v4736, %v4740
      %v4747 = vadd.s32 %v4739, %v4745
      %vm4748 = vc.u32 %v4746, %v4742
      %v4749 = vsel %vm4748, 1, 0
      %v4750 = vadd.s32 %v4746, %v4742
      %v4751 = vadd.s32 %v4747, %v4749
      %v4752 = vadd.s32 %v4751, %v4741
      %v4753 = vadd.s32 %v4752, %v4743
      %v4754 = vand.u32 %v4731, 65535
      %v4755 = vshrl.u32 %v4731, 16
      %v4756 = vand.u32 %v4726, 65535
      %v4757 = vshrl.u32 %v4726, 16
      %v4758 = vmul.u32 %v4754, %v4756
      %v4759 = vmul.u32 %v4754, %v4757
      %v4760 = vmul.u32 %v4755, %v4756
      %v4761 = vmul.u32 %v4755, %v4757
      %v4762 = vshll.u32 %v4759, 16
      %v4763 = vshrl.u32 %v4759, 16
      %v4764 = vshll.u32 %v4760, 16
      %v4765 = vshrl.u32 %v4760, 16
      %vm4766 = vc.u32 %v4758, %v4762
      %v4767 = vsel %vm4766, 1, 0
      %v4768 = vadd.s32 %v4758, %v4762
      %v4769 = vadd.s32 %v4761, %v4767
      %vm4770 = vc.u32 %v4768, %v4764
      %v4771 = vsel %vm4770, 1, 0
      %v4772 = vadd.s32 %v4768, %v4764
      %v4773 = vadd.s32 %v4769, %v4771
      %v4774 = vadd.s32 %v4773, %v4763
      %v4775 = vadd.s32 %v4774, %v4765
      %v4776 = vmul.u32 %v4731, %v4722
      %v4777 = vadd.s32 %v4753, %v4772
      %vm4778 = vc.u32 %v4753, %v4772
      %v4779 = vadd.s32 %v4775, 1
      %v4780 = vsel %vm4778, %v4779, %v4775
      %v4781 = vadd.s32 %v4776, %v4780
      %v4782 = vadd.s32 %v4781, 536870912
      %v4783 = vshrl.u32 %v4782, 30
      %v4784 = vshll.u32 %v4783, 30
      %v4785 = vsub.s32 %v4781, %v4784
      %vm4786 = vcmp.lt.s32.totalorder %v4785, 0
      %v4787 = vsub.s32 0, %v4785
      %v4788 = vsel %vm4786, %v4787, %v4785
      %v4789 = vclz %v4788
      %v4790 = vsub.s32 %v4789, 2
      %vm4791 = vcmp.gt.s32.totalorder 0, %v4790
      %v4792 = vsel %vm4791, 0, %v4790
      %v4793 = vsub.s32 32, %v4792
      %v4794 = vshll.u32 %v4785, %v4792
      %v4795 = vshrl.u32 %v4777, %v4793
      %v4796 = vor.u32 %v4794, %v4795
      %v4797 = vsub.s32 4294967266, %v4792
      %v4798 = vadd.s32 %v4797, 127
      %v4799 = vshll.u32 %v4798, 23
      %v4800 = vor.u32 4788187, %v4799
      %v4801 = vand.u32 2147483647, %v4800
      %v4803 = vcvt.s32.f32 %v4796
      %v4804 = vmul.f32 %v4803, %v4801
      %v4805 = vxor.u32 %v4804, 2147483648
      %v4806 = vsel %vm4685, %v4805, %v4804
      %v4807 = vsub.s32 4, %v4783
      %v4808 = vsel %vm4685, %v4807, %v4783
      %v4809 = vsel %vm4684, %v2356, %v4806
      %v4810 = vsel %vm4684, 0, %v4808
      %v4811 = vmul.f32 %v4809, %v4809
      %v4812 = vmul.f32 %v4811, -0.001358992
      %v4813 = vadd.f32 %v4812, 0.041655596
      %v4814 = vmul.f32 %v4811, %v4813
      %v4815 = vadd.f32 %v4814, -0.4999988
      %v4816 = vmul.f32 %v4811, %v4815
      %v4817 = vadd.f32 1.0, %v4816
      %v4818 = vmul.f32 %v4809, %v4809
      %v4819 = vmul.f32 %v4818, -0.00019511016
      %v4820 = vadd.f32 %v4819, 0.008332121
      %v4821 = vmul.f32 %v4818, %v4820
      %v4822 = vadd.f32 %v4821, -0.16666654
      %v4823 = vmul.f32 %v4818, %v4822
      %v4824 = vadd.f32 %v4823, 1.0
      %v4825 = vmul.f32 %v4824, %v4809
      %vm4826 = vweird.f32 %v2356
      %v4827 = vadd.s32 %v4810, 3
      %v4828 = vand.u32 %v4827, 3
      %vm4829 = vcmp.lt.s32.totalorder %v4828, 2
      %vm4830 = vcmp.eq.s32.totalorder %v4828, 0
      %v4831 = vxor.u32 %v4825, 2147483648
      %v4832 = vsel %vm4830, %v4817, %v4831
      %vm4833 = vcmp.eq.s32.totalorder %v4828, 2
      %v4834 = vxor.u32 %v4817, 2147483648
      %v4835 = vsel %vm4833, %v4834, %v4825
      %v4836 = vsel %vm4829, %v4832, %v4835
      %v4837 = vsel %vm4826, nan, %v4836
      %v4838 = vand.u32 2147483647, %v2311
      %vm4839 = vcmp.le.f32.partialorder %v4838, 0.7853982
      %vm4840 = vcmp.lt.s32.totalorder %v2311, 0
      %v4841 = vand.u32 %v2311, 2139095040
      %v4842 = vshrl.u32 %v4841, 23
      %v4843 = vsub.s32 %v4842, 127
      %v4844 = vand.u32 2147483647, %v2311
      %v4845 = vand.u32 %v4844, 8388607
      %v4846 = vor.u32 %v4845, 8388608
      %v4847 = vsub.s32 0, %v4846
      %v4848 = vadd.s32 %v4843, 1
      %vm4849 = vcmp.gt.s32.totalorder %v4848, 0
      %v4850 = vsel %vm4849, %v4848, 0
      %v4851 = vshrl.u32 %v4850, 5
      %v4852 = vand.u32 %v4850, 31
      %v4853 = vsub.s32 32, %v4852
      %v4854 = vshrl.u32 683565275, %v4853
      %v4855 = vshll.u32 683565275, %v4852
      %v4856 = vshrl.u32 2475754826, %v4853
      %v4857 = vor.u32 %v4855, %v4856
      %v4858 = vshll.u32 2475754826, %v4852
      %v4859 = vshrl.u32 2131351028, %v4853
      %v4860 = vor.u32 %v4858, %v4859
      %v4861 = vshll.u32 2131351028, %v4852
      %v4862 = vshrl.u32 2102212464, %v4853
      %v4863 = vor.u32 %v4861, %v4862
      %v4864 = vshll.u32 2102212464, %v4852
      %v4865 = vshrl.u32 920167782, %v4853
      %v4866 = vor.u32 %v4864, %v4865
      %v4867 = vshll.u32 920167782, %v4852
      %v4868 = vshrl.u32 1326507024, %v4853
      %v4869 = vor.u32 %v4867, %v4868
      %vm4870 = vcmp.lt.s32.totalorder %v4851, 1
      %vm4871 = vcmp.lt.s32.totalorder %v4851, 2
      %vm4872 = vcmp.lt.s32.totalorder %v4851, 3
      %vm4873 = vcmp.lt.s32.totalorder %v4851, 4
      %v4874 = vsel %vm4870, %v4854, %v4857
      %v4875 = vsel %vm4873, %v4863, 2102212464
      %v4876 = vsel %vm4872, %v4860, %v4875
      %v4877 = vsel %vm4871, %v4874, %v4876
      %v4878 = vsel %vm4870, %v4857, %v4860
      %v4879 = vsel %vm4873, %v4866, 920167782
      %v4880 = vsel %vm4872, %v4863, %v4879
      %v4881 = vsel %vm4871, %v4878, %v4880
      %v4882 = vsel %vm4870, %v4860, %v4863
      %v4883 = vsel %vm4873, %v4869, 1326507024
      %v4884 = vsel %vm4872, %v4866, %v4883
      %v4885 = vsel %vm4871, %v4882, %v4884
      %v4886 = vshll.u32 %v4846, 8
      %v4887 = vand.u32 %v4886, 65535
      %v4888 = vshrl.u32 %v4886, 16
      %v4889 = vand.u32 %v4885, 65535
      %v4890 = vshrl.u32 %v4885, 16
      %v4891 = vmul.u32 %v4887, %v4889
      %v4892 = vmul.u32 %v4887, %v4890
      %v4893 = vmul.u32 %v4888, %v4889
      %v4894 = vmul.u32 %v4888, %v4890
      %v4895 = vshll.u32 %v4892, 16
      %v4896 = vshrl.u32 %v4892, 16
      %v4897 = vshll.u32 %v4893, 16
      %v4898 = vshrl.u32 %v4893, 16
      %vm4899 = vc.u32 %v4891, %v4895
      %v4900 = vsel %vm4899, 1, 0
      %v4901 = vadd.s32 %v4891, %v4895
      %v4902 = vadd.s32 %v4894, %v4900
      %vm4903 = vc.u32 %v4901, %v4897
      %v4904 = vsel %vm4903, 1, 0
      %v4905 = vadd.s32 %v4901, %v4897
      %v4906 = vadd.s32 %v4902, %v4904
      %v4907 = vadd.s32 %v4906, %v4896
      %v4908 = vadd.s32 %v4907, %v4898
      %v4909 = vand.u32 %v4886, 65535
      %v4910 = vshrl.u32 %v4886, 16
      %v4911 = vand.u32 %v4881, 65535
      %v4912 = vshrl.u32 %v4881, 16
      %v4913 = vmul.u32 %v4909, %v4911
      %v4914 = vmul.u32 %v4909, %v4912
      %v4915 = vmul.u32 %v4910, %v4911
      %v4916 = vmul.u32 %v4910, %v4912
      %v4917 = vshll.u32 %v4914, 16
      %v4918 = vshrl.u32 %v4914, 16
      %v4919 = vshll.u32 %v4915, 16
      %v4920 = vshrl.u32 %v4915, 16
      %vm4921 = vc.u32 %v4913, %v4917
      %v4922 = vsel %vm4921, 1, 0
      %v4923 = vadd.s32 %v4913, %v4917
      %v4924 = vadd.s32 %v4916, %v4922
      %vm4925 = vc.u32 %v4923, %v4919
      %v4926 = vsel %vm4925, 1, 0
      %v4927 = vadd.s32 %v4923, %v4919
      %v4928 = vadd.s32 %v4924, %v4926
      %v4929 = vadd.s32 %v4928, %v4918
      %v4930 = vadd.s32 %v4929, %v4920
      %v4931 = vmul.u32 %v4886, %v4877
      %v4932 = vadd.s32 %v4908, %v4927
      %vm4933 = vc.u32 %v4908, %v4927
      %v4934 = vadd.s32 %v4930, 1
      %v4935 = vsel %vm4933, %v4934, %v4930
      %v4936 = vadd.s32 %v4931, %v4935
      %v4937 = vadd.s32 %v4936, 536870912
      %v4938 = vshrl.u32 %v4937, 30
      %v4939 = vshll.u32 %v4938, 30
      %v4940 = vsub.s32 %v4936, %v4939
      %vm4941 = vcmp.lt.s32.totalorder %v4940, 0
      %v4942 = vsub.s32 0, %v4940
      %v4943 = vsel %vm4941, %v4942, %v4940
      %v4944 = vclz %v4943
      %v4945 = vsub.s32 %v4944, 2
      %vm4946 = vcmp.gt.s32.totalorder 0, %v4945
      %v4947 = vsel %vm4946, 0, %v4945
      %v4948 = vsub.s32 32, %v4947
      %v4949 = vshll.u32 %v4940, %v4947
      %v4950 = vshrl.u32 %v4932, %v4948
      %v4951 = vor.u32 %v4949, %v4950
      %v4952 = vsub.s32 4294967266, %v4947
      %v4953 = vadd.s32 %v4952, 127
      %v4954 = vshll.u32 %v4953, 23
      %v4955 = vor.u32 4788187, %v4954
      %v4956 = vand.u32 2147483647, %v4955
      %v4958 = vcvt.s32.f32 %v4951
      %v4959 = vmul.f32 %v4958, %v4956
      %v4960 = vxor.u32 %v4959, 2147483648
      %v4961 = vsel %vm4840, %v4960, %v4959
      %v4962 = vsub.s32 4, %v4938
      %v4963 = vsel %vm4840, %v4962, %v4938
      %v4964 = vsel %vm4839, %v2311, %v4961
      %v4965 = vsel %vm4839, 0, %v4963
      %v4966 = vmul.f32 %v4964, %v4964
      %v4967 = vmul.f32 %v4966, -0.001358992
      %v4968 = vadd.f32 %v4967, 0.041655596
      %v4969 = vmul.f32 %v4966, %v4968
      %v4970 = vadd.f32 %v4969, -0.4999988
      %v4971 = vmul.f32 %v4966, %v4970
      %v4972 = vadd.f32 1.0, %v4971
      %v4973 = vmul.f32 %v4964, %v4964
      %v4974 = vmul.f32 %v4973, -0.00019511016
      %v4975 = vadd.f32 %v4974, 0.008332121
      %v4976 = vmul.f32 %v4973, %v4975
      %v4977 = vadd.f32 %v4976, -0.16666654
      %v4978 = vmul.f32 %v4973, %v4977
      %v4979 = vadd.f32 %v4978, 1.0
      %v4980 = vmul.f32 %v4979, %v4964
      %vm4981 = vweird.f32 %v2311
      %v4982 = vand.u32 %v4965, 3
      %vm4983 = vcmp.lt.s32.totalorder %v4982, 2
      %vm4984 = vcmp.eq.s32.totalorder %v4982, 0
      %v4985 = vxor.u32 %v4980, 2147483648
      %v4986 = vsel %vm4984, %v4972, %v4985
      %vm4987 = vcmp.eq.s32.totalorder %v4982, 2
      %v4988 = vxor.u32 %v4972, 2147483648
      %v4989 = vsel %vm4987, %v4988, %v4980
      %v4990 = vsel %vm4983, %v4986, %v4989
      %v4991 = vsel %vm4981, nan, %v4990
      %v4992 = vand.u32 2147483647, %v2314
      %vm4993 = vcmp.le.f32.partialorder %v4992, 0.7853982
      %vm4994 = vcmp.lt.s32.totalorder %v2314, 0
      %v4995 = vand.u32 %v2314, 2139095040
      %v4996 = vshrl.u32 %v4995, 23
      %v4997 = vsub.s32 %v4996, 127
      %v4998 = vand.u32 2147483647, %v2314
      %v4999 = vand.u32 %v4998, 8388607
      %v5000 = vor.u32 %v4999, 8388608
      %v5001 = vsub.s32 0, %v5000
      %v5002 = vadd.s32 %v4997, 1
      %vm5003 = vcmp.gt.s32.totalorder %v5002, 0
      %v5004 = vsel %vm5003, %v5002, 0
      %v5005 = vshrl.u32 %v5004, 5
      %v5006 = vand.u32 %v5004, 31
      %v5007 = vsub.s32 32, %v5006
      %v5008 = vshrl.u32 683565275, %v5007
      %v5009 = vshll.u32 683565275, %v5006
      %v5010 = vshrl.u32 2475754826, %v5007
      %v5011 = vor.u32 %v5009, %v5010
      %v5012 = vshll.u32 2475754826, %v5006
      %v5013 = vshrl.u32 2131351028, %v5007
      %v5014 = vor.u32 %v5012, %v5013
      %v5015 = vshll.u32 2131351028, %v5006
      %v5016 = vshrl.u32 2102212464, %v5007
      %v5017 = vor.u32 %v5015, %v5016
      %v5018 = vshll.u32 2102212464, %v5006
      %v5019 = vshrl.u32 920167782, %v5007
      %v5020 = vor.u32 %v5018, %v5019
      %v5021 = vshll.u32 920167782, %v5006
      %v5022 = vshrl.u32 1326507024, %v5007
      %v5023 = vor.u32 %v5021, %v5022
      %vm5024 = vcmp.lt.s32.totalorder %v5005, 1
      %vm5025 = vcmp.lt.s32.totalorder %v5005, 2
      %vm5026 = vcmp.lt.s32.totalorder %v5005, 3
      %vm5027 = vcmp.lt.s32.totalorder %v5005, 4
      %v5028 = vsel %vm5024, %v5008, %v5011
      %v5029 = vsel %vm5027, %v5017, 2102212464
      %v5030 = vsel %vm5026, %v5014, %v5029
      %v5031 = vsel %vm5025, %v5028, %v5030
      %v5032 = vsel %vm5024, %v5011, %v5014
      %v5033 = vsel %vm5027, %v5020, 920167782
      %v5034 = vsel %vm5026, %v5017, %v5033
      %v5035 = vsel %vm5025, %v5032, %v5034
      %v5036 = vsel %vm5024, %v5014, %v5017
      %v5037 = vsel %vm5027, %v5023, 1326507024
      %v5038 = vsel %vm5026, %v5020, %v5037
      %v5039 = vsel %vm5025, %v5036, %v5038
      %v5040 = vshll.u32 %v5000, 8
      %v5041 = vand.u32 %v5040, 65535
      %v5042 = vshrl.u32 %v5040, 16
      %v5043 = vand.u32 %v5039, 65535
      %v5044 = vshrl.u32 %v5039, 16
      %v5045 = vmul.u32 %v5041, %v5043
      %v5046 = vmul.u32 %v5041, %v5044
      %v5047 = vmul.u32 %v5042, %v5043
      %v5048 = vmul.u32 %v5042, %v5044
      %v5049 = vshll.u32 %v5046, 16
      %v5050 = vshrl.u32 %v5046, 16
      %v5051 = vshll.u32 %v5047, 16
      %v5052 = vshrl.u32 %v5047, 16
      %vm5053 = vc.u32 %v5045, %v5049
      %v5054 = vsel %vm5053, 1, 0
      %v5055 = vadd.s32 %v5045, %v5049
      %v5056 = vadd.s32 %v5048, %v5054
      %vm5057 = vc.u32 %v5055, %v5051
      %v5058 = vsel %vm5057, 1, 0
      %v5059 = vadd.s32 %v5055, %v5051
      %v5060 = vadd.s32 %v5056, %v5058
      %v5061 = vadd.s32 %v5060, %v5050
      %v5062 = vadd.s32 %v5061, %v5052
      %v5063 = vand.u32 %v5040, 65535
      %v5064 = vshrl.u32 %v5040, 16
      %v5065 = vand.u32 %v5035, 65535
      %v5066 = vshrl.u32 %v5035, 16
      %v5067 = vmul.u32 %v5063, %v5065
      %v5068 = vmul.u32 %v5063, %v5066
      %v5069 = vmul.u32 %v5064, %v5065
      %v5070 = vmul.u32 %v5064, %v5066
      %v5071 = vshll.u32 %v5068, 16
      %v5072 = vshrl.u32 %v5068, 16
      %v5073 = vshll.u32 %v5069, 16
      %v5074 = vshrl.u32 %v5069, 16
      %vm5075 = vc.u32 %v5067, %v5071
      %v5076 = vsel %vm5075, 1, 0
      %v5077 = vadd.s32 %v5067, %v5071
      %v5078 = vadd.s32 %v5070, %v5076
      %vm5079 = vc.u32 %v5077, %v5073
      %v5080 = vsel %vm5079, 1, 0
      %v5081 = vadd.s32 %v5077, %v5073
      %v5082 = vadd.s32 %v5078, %v5080
      %v5083 = vadd.s32 %v5082, %v5072
      %v5084 = vadd.s32 %v5083, %v5074
      %v5085 = vmul.u32 %v5040, %v5031
      %v5086 = vadd.s32 %v5062, %v5081
      %vm5087 = vc.u32 %v5062, %v5081
      %v5088 = vadd.s32 %v5084, 1
      %v5089 = vsel %vm5087, %v5088, %v5084
      %v5090 = vadd.s32 %v5085, %v5089
      %v5091 = vadd.s32 %v5090, 536870912
      %v5092 = vshrl.u32 %v5091, 30
      %v5093 = vshll.u32 %v5092, 30
      %v5094 = vsub.s32 %v5090, %v5093
      %vm5095 = vcmp.lt.s32.totalorder %v5094, 0
      %v5096 = vsub.s32 0, %v5094
      %v5097 = vsel %vm5095, %v5096, %v5094
      %v5098 = vclz %v5097
      %v5099 = vsub.s32 %v5098, 2
      %vm5100 = vcmp.gt.s32.totalorder 0, %v5099
      %v5101 = vsel %vm5100, 0, %v5099
      %v5102 = vsub.s32 32, %v5101
      %v5103 = vshll.u32 %v5094, %v5101
      %v5104 = vshrl.u32 %v5086, %v5102
      %v5105 = vor.u32 %v5103, %v5104
      %v5106 = vsub.s32 4294967266, %v5101
      %v5107 = vadd.s32 %v5106, 127
      %v5108 = vshll.u32 %v5107, 23
      %v5109 = vor.u32 4788187, %v5108
      %v5110 = vand.u32 2147483647, %v5109
      %v5112 = vcvt.s32.f32 %v5105
      %v5113 = vmul.f32 %v5112, %v5110
      %v5114 = vxor.u32 %v5113, 2147483648
      %v5115 = vsel %vm4994, %v5114, %v5113
      %v5116 = vsub.s32 4, %v5092
      %v5117 = vsel %vm4994, %v5116, %v5092
      %v5118 = vsel %vm4993, %v2314, %v5115
      %v5119 = vsel %vm4993, 0, %v5117
      %v5120 = vmul.f32 %v5118, %v5118
      %v5121 = vmul.f32 %v5120, -0.001358992
      %v5122 = vadd.f32 %v5121, 0.041655596
      %v5123 = vmul.f32 %v5120, %v5122
      %v5124 = vadd.f32 %v5123, -0.4999988
      %v5125 = vmul.f32 %v5120, %v5124
      %v5126 = vadd.f32 1.0, %v5125
      %v5127 = vmul.f32 %v5118, %v5118
      %v5128 = vmul.f32 %v5127, -0.00019511016
      %v5129 = vadd.f32 %v5128, 0.008332121
      %v5130 = vmul.f32 %v5127, %v5129
      %v5131 = vadd.f32 %v5130, -0.16666654
      %v5132 = vmul.f32 %v5127, %v5131
      %v5133 = vadd.f32 %v5132, 1.0
      %v5134 = vmul.f32 %v5133, %v5118
      %vm5135 = vweird.f32 %v2314
      %v5136 = vand.u32 %v5119, 3
      %vm5137 = vcmp.lt.s32.totalorder %v5136, 2
      %vm5138 = vcmp.eq.s32.totalorder %v5136, 0
      %v5139 = vxor.u32 %v5134, 2147483648
      %v5140 = vsel %vm5138, %v5126, %v5139
      %vm5141 = vcmp.eq.s32.totalorder %v5136, 2
      %v5142 = vxor.u32 %v5126, 2147483648
      %v5143 = vsel %vm5141, %v5142, %v5134
      %v5144 = vsel %vm5137, %v5140, %v5143
      %v5145 = vsel %vm5135, nan, %v5144
      %v5146 = vand.u32 2147483647, %v2317
      %vm5147 = vcmp.le.f32.partialorder %v5146, 0.7853982
      %vm5148 = vcmp.lt.s32.totalorder %v2317, 0
      %v5149 = vand.u32 %v2317, 2139095040
      %v5150 = vshrl.u32 %v5149, 23
      %v5151 = vsub.s32 %v5150, 127
      %v5152 = vand.u32 2147483647, %v2317
      %v5153 = vand.u32 %v5152, 8388607
      %v5154 = vor.u32 %v5153, 8388608
      %v5155 = vsub.s32 0, %v5154
      %v5156 = vadd.s32 %v5151, 1
      %vm5157 = vcmp.gt.s32.totalorder %v5156, 0
      %v5158 = vsel %vm5157, %v5156, 0
      %v5159 = vshrl.u32 %v5158, 5
      %v5160 = vand.u32 %v5158, 31
      %v5161 = vsub.s32 32, %v5160
      %v5162 = vshrl.u32 683565275, %v5161
      %v5163 = vshll.u32 683565275, %v5160
      %v5164 = vshrl.u32 2475754826, %v5161
      %v5165 = vor.u32 %v5163, %v5164
      %v5166 = vshll.u32 2475754826, %v5160
      %v5167 = vshrl.u32 2131351028, %v5161
      %v5168 = vor.u32 %v5166, %v5167
      %v5169 = vshll.u32 2131351028, %v5160
      %v5170 = vshrl.u32 2102212464, %v5161
      %v5171 = vor.u32 %v5169, %v5170
      %v5172 = vshll.u32 2102212464, %v5160
      %v5173 = vshrl.u32 920167782, %v5161
      %v5174 = vor.u32 %v5172, %v5173
      %v5175 = vshll.u32 920167782, %v5160
      %v5176 = vshrl.u32 1326507024, %v5161
      %v5177 = vor.u32 %v5175, %v5176
      %vm5178 = vcmp.lt.s32.totalorder %v5159, 1
      %vm5179 = vcmp.lt.s32.totalorder %v5159, 2
      %vm5180 = vcmp.lt.s32.totalorder %v5159, 3
      %vm5181 = vcmp.lt.s32.totalorder %v5159, 4
      %v5182 = vsel %vm5178, %v5162, %v5165
      %v5183 = vsel %vm5181, %v5171, 2102212464
      %v5184 = vsel %vm5180, %v5168, %v5183
      %v5185 = vsel %vm5179, %v5182, %v5184
      %v5186 = vsel %vm5178, %v5165, %v5168
      %v5187 = vsel %vm5181, %v5174, 920167782
      %v5188 = vsel %vm5180, %v5171, %v5187
      %v5189 = vsel %vm5179, %v5186, %v5188
      %v5190 = vsel %vm5178, %v5168, %v5171
      %v5191 = vsel %vm5181, %v5177, 1326507024
      %v5192 = vsel %vm5180, %v5174, %v5191
      %v5193 = vsel %vm5179, %v5190, %v5192
      %v5194 = vshll.u32 %v5154, 8
      %v5195 = vand.u32 %v5194, 65535
      %v5196 = vshrl.u32 %v5194, 16
      %v5197 = vand.u32 %v5193, 65535
      %v5198 = vshrl.u32 %v5193, 16
      %v5199 = vmul.u32 %v5195, %v5197
      %v5200 = vmul.u32 %v5195, %v5198
      %v5201 = vmul.u32 %v5196, %v5197
      %v5202 = vmul.u32 %v5196, %v5198
      %v5203 = vshll.u32 %v5200, 16
      %v5204 = vshrl.u32 %v5200, 16
      %v5205 = vshll.u32 %v5201, 16
      %v5206 = vshrl.u32 %v5201, 16
      %vm5207 = vc.u32 %v5199, %v5203
      %v5208 = vsel %vm5207, 1, 0
      %v5209 = vadd.s32 %v5199, %v5203
      %v5210 = vadd.s32 %v5202, %v5208
      %vm5211 = vc.u32 %v5209, %v5205
      %v5212 = vsel %vm5211, 1, 0
      %v5213 = vadd.s32 %v5209, %v5205
      %v5214 = vadd.s32 %v5210, %v5212
      %v5215 = vadd.s32 %v5214, %v5204
      %v5216 = vadd.s32 %v5215, %v5206
      %v5217 = vand.u32 %v5194, 65535
      %v5218 = vshrl.u32 %v5194, 16
      %v5219 = vand.u32 %v5189, 65535
      %v5220 = vshrl.u32 %v5189, 16
      %v5221 = vmul.u32 %v5217, %v5219
      %v5222 = vmul.u32 %v5217, %v5220
      %v5223 = vmul.u32 %v5218, %v5219
      %v5224 = vmul.u32 %v5218, %v5220
      %v5225 = vshll.u32 %v5222, 16
      %v5226 = vshrl.u32 %v5222, 16
      %v5227 = vshll.u32 %v5223, 16
      %v5228 = vshrl.u32 %v5223, 16
      %vm5229 = vc.u32 %v5221, %v5225
      %v5230 = vsel %vm5229, 1, 0
      %v5231 = vadd.s32 %v5221, %v5225
      %v5232 = vadd.s32 %v5224, %v5230
      %vm5233 = vc.u32 %v5231, %v5227
      %v5234 = vsel %vm5233, 1, 0
      %v5235 = vadd.s32 %v5231, %v5227
      %v5236 = vadd.s32 %v5232, %v5234
      %v5237 = vadd.s32 %v5236, %v5226
      %v5238 = vadd.s32 %v5237, %v5228
      %v5239 = vmul.u32 %v5194, %v5185
      %v5240 = vadd.s32 %v5216, %v5235
      %vm5241 = vc.u32 %v5216, %v5235
      %v5242 = vadd.s32 %v5238, 1
      %v5243 = vsel %vm5241, %v5242, %v5238
      %v5244 = vadd.s32 %v5239, %v5243
      %v5245 = vadd.s32 %v5244, 536870912
      %v5246 = vshrl.u32 %v5245, 30
      %v5247 = vshll.u32 %v5246, 30
      %v5248 = vsub.s32 %v5244, %v5247
      %vm5249 = vcmp.lt.s32.totalorder %v5248, 0
      %v5250 = vsub.s32 0, %v5248
      %v5251 = vsel %vm5249, %v5250, %v5248
      %v5252 = vclz %v5251
      %v5253 = vsub.s32 %v5252, 2
      %vm5254 = vcmp.gt.s32.totalorder 0, %v5253
      %v5255 = vsel %vm5254, 0, %v5253
      %v5256 = vsub.s32 32, %v5255
      %v5257 = vshll.u32 %v5248, %v5255
      %v5258 = vshrl.u32 %v5240, %v5256
      %v5259 = vor.u32 %v5257, %v5258
      %v5260 = vsub.s32 4294967266, %v5255
      %v5261 = vadd.s32 %v5260, 127
      %v5262 = vshll.u32 %v5261, 23
      %v5263 = vor.u32 4788187, %v5262
      %v5264 = vand.u32 2147483647, %v5263
      %v5266 = vcvt.s32.f32 %v5259
      %v5267 = vmul.f32 %v5266, %v5264
      %v5268 = vxor.u32 %v5267, 2147483648
      %v5269 = vsel %vm5148, %v5268, %v5267
      %v5270 = vsub.s32 4, %v5246
      %v5271 = vsel %vm5148, %v5270, %v5246
      %v5272 = vsel %vm5147, %v2317, %v5269
      %v5273 = vsel %vm5147, 0, %v5271
      %v5274 = vmul.f32 %v5272, %v5272
      %v5275 = vmul.f32 %v5274, -0.001358992
      %v5276 = vadd.f32 %v5275, 0.041655596
      %v5277 = vmul.f32 %v5274, %v5276
      %v5278 = vadd.f32 %v5277, -0.4999988
      %v5279 = vmul.f32 %v5274, %v5278
      %v5280 = vadd.f32 1.0, %v5279
      %v5281 = vmul.f32 %v5272, %v5272
      %v5282 = vmul.f32 %v5281, -0.00019511016
      %v5283 = vadd.f32 %v5282, 0.008332121
      %v5284 = vmul.f32 %v5281, %v5283
      %v5285 = vadd.f32 %v5284, -0.16666654
      %v5286 = vmul.f32 %v5281, %v5285
      %v5287 = vadd.f32 %v5286, 1.0
      %v5288 = vmul.f32 %v5287, %v5272
      %vm5289 = vweird.f32 %v2317
      %v5290 = vand.u32 %v5273, 3
      %vm5291 = vcmp.lt.s32.totalorder %v5290, 2
      %vm5292 = vcmp.eq.s32.totalorder %v5290, 0
      %v5293 = vxor.u32 %v5288, 2147483648
      %v5294 = vsel %vm5292, %v5280, %v5293
      %vm5295 = vcmp.eq.s32.totalorder %v5290, 2
      %v5296 = vxor.u32 %v5280, 2147483648
      %v5297 = vsel %vm5295, %v5296, %v5288
      %v5298 = vsel %vm5291, %v5294, %v5297
      %v5299 = vsel %vm5289, nan, %v5298
      %v5300 = vand.u32 2147483647, %v2320
      %vm5301 = vcmp.le.f32.partialorder %v5300, 0.7853982
      %vm5302 = vcmp.lt.s32.totalorder %v2320, 0
      %v5303 = vand.u32 %v2320, 2139095040
      %v5304 = vshrl.u32 %v5303, 23
      %v5305 = vsub.s32 %v5304, 127
      %v5306 = vand.u32 2147483647, %v2320
      %v5307 = vand.u32 %v5306, 8388607
      %v5308 = vor.u32 %v5307, 8388608
      %v5309 = vsub.s32 0, %v5308
      %v5310 = vadd.s32 %v5305, 1
      %vm5311 = vcmp.gt.s32.totalorder %v5310, 0
      %v5312 = vsel %vm5311, %v5310, 0
      %v5313 = vshrl.u32 %v5312, 5
      %v5314 = vand.u32 %v5312, 31
      %v5315 = vsub.s32 32, %v5314
      %v5316 = vshrl.u32 683565275, %v5315
      %v5317 = vshll.u32 683565275, %v5314
      %v5318 = vshrl.u32 2475754826, %v5315
      %v5319 = vor.u32 %v5317, %v5318
      %v5320 = vshll.u32 2475754826, %v5314
      %v5321 = vshrl.u32 2131351028, %v5315
      %v5322 = vor.u32 %v5320, %v5321
      %v5323 = vshll.u32 2131351028, %v5314
      %v5324 = vshrl.u32 2102212464, %v5315
      %v5325 = vor.u32 %v5323, %v5324
      %v5326 = vshll.u32 2102212464, %v5314
      %v5327 = vshrl.u32 920167782, %v5315
      %v5328 = vor.u32 %v5326, %v5327
      %v5329 = vshll.u32 920167782, %v5314
      %v5330 = vshrl.u32 1326507024, %v5315
      %v5331 = vor.u32 %v5329, %v5330
      %vm5332 = vcmp.lt.s32.totalorder %v5313, 1
      %vm5333 = vcmp.lt.s32.totalorder %v5313, 2
      %vm5334 = vcmp.lt.s32.totalorder %v5313, 3
      %vm5335 = vcmp.lt.s32.totalorder %v5313, 4
      %v5336 = vsel %vm5332, %v5316, %v5319
      %v5337 = vsel %vm5335, %v5325, 2102212464
      %v5338 = vsel %vm5334, %v5322, %v5337
      %v5339 = vsel %vm5333, %v5336, %v5338
      %v5340 = vsel %vm5332, %v5319, %v5322
      %v5341 = vsel %vm5335, %v5328, 920167782
      %v5342 = vsel %vm5334, %v5325, %v5341
      %v5343 = vsel %vm5333, %v5340, %v5342
      %v5344 = vsel %vm5332, %v5322, %v5325
      %v5345 = vsel %vm5335, %v5331, 1326507024
      %v5346 = vsel %vm5334, %v5328, %v5345
      %v5347 = vsel %vm5333, %v5344, %v5346
      %v5348 = vshll.u32 %v5308, 8
      %v5349 = vand.u32 %v5348, 65535
      %v5350 = vshrl.u32 %v5348, 16
      %v5351 = vand.u32 %v5347, 65535
      %v5352 = vshrl.u32 %v5347, 16
      %v5353 = vmul.u32 %v5349, %v5351
      %v5354 = vmul.u32 %v5349, %v5352
      %v5355 = vmul.u32 %v5350, %v5351
      %v5356 = vmul.u32 %v5350, %v5352
      %v5357 = vshll.u32 %v5354, 16
      %v5358 = vshrl.u32 %v5354, 16
      %v5359 = vshll.u32 %v5355, 16
      %v5360 = vshrl.u32 %v5355, 16
      %vm5361 = vc.u32 %v5353, %v5357
      %v5362 = vsel %vm5361, 1, 0
      %v5363 = vadd.s32 %v5353, %v5357
      %v5364 = vadd.s32 %v5356, %v5362
      %vm5365 = vc.u32 %v5363, %v5359
      %v5366 = vsel %vm5365, 1, 0
      %v5367 = vadd.s32 %v5363, %v5359
      %v5368 = vadd.s32 %v5364, %v5366
      %v5369 = vadd.s32 %v5368, %v5358
      %v5370 = vadd.s32 %v5369, %v5360
      %v5371 = vand.u32 %v5348, 65535
      %v5372 = vshrl.u32 %v5348, 16
      %v5373 = vand.u32 %v5343, 65535
      %v5374 = vshrl.u32 %v5343, 16
      %v5375 = vmul.u32 %v5371, %v5373
      %v5376 = vmul.u32 %v5371, %v5374
      %v5377 = vmul.u32 %v5372, %v5373
      %v5378 = vmul.u32 %v5372, %v5374
      %v5379 = vshll.u32 %v5376, 16
      %v5380 = vshrl.u32 %v5376, 16
      %v5381 = vshll.u32 %v5377, 16
      %v5382 = vshrl.u32 %v5377, 16
      %vm5383 = vc.u32 %v5375, %v5379
      %v5384 = vsel %vm5383, 1, 0
      %v5385 = vadd.s32 %v5375, %v5379
      %v5386 = vadd.s32 %v5378, %v5384
      %vm5387 = vc.u32 %v5385, %v5381
      %v5388 = vsel %vm5387, 1, 0
      %v5389 = vadd.s32 %v5385, %v5381
      %v5390 = vadd.s32 %v5386, %v5388
      %v5391 = vadd.s32 %v5390, %v5380
      %v5392 = vadd.s32 %v5391, %v5382
      %v5393 = vmul.u32 %v5348, %v5339
      %v5394 = vadd.s32 %v5370, %v5389
      %vm5395 = vc.u32 %v5370, %v5389
      %v5396 = vadd.s32 %v5392, 1
      %v5397 = vsel %vm5395, %v5396, %v5392
      %v5398 = vadd.s32 %v5393, %v5397
      %v5399 = vadd.s32 %v5398, 536870912
      %v5400 = vshrl.u32 %v5399, 30
      %v5401 = vshll.u32 %v5400, 30
      %v5402 = vsub.s32 %v5398, %v5401
      %vm5403 = vcmp.lt.s32.totalorder %v5402, 0
      %v5404 = vsub.s32 0, %v5402
      %v5405 = vsel %vm5403, %v5404, %v5402
      %v5406 = vclz %v5405
      %v5407 = vsub.s32 %v5406, 2
      %vm5408 = vcmp.gt.s32.totalorder 0, %v5407
      %v5409 = vsel %vm5408, 0, %v5407
      %v5410 = vsub.s32 32, %v5409
      %v5411 = vshll.u32 %v5402, %v5409
      %v5412 = vshrl.u32 %v5394, %v5410
      %v5413 = vor.u32 %v5411, %v5412
      %v5414 = vsub.s32 4294967266, %v5409
      %v5415 = vadd.s32 %v5414, 127
      %v5416 = vshll.u32 %v5415, 23
      %v5417 = vor.u32 4788187, %v5416
      %v5418 = vand.u32 2147483647, %v5417
      %v5420 = vcvt.s32.f32 %v5413
      %v5421 = vmul.f32 %v5420, %v5418
      %v5422 = vxor.u32 %v5421, 2147483648
      %v5423 = vsel %vm5302, %v5422, %v5421
      %v5424 = vsub.s32 4, %v5400
      %v5425 = vsel %vm5302, %v5424, %v5400
      %v5426 = vsel %vm5301, %v2320, %v5423
      %v5427 = vsel %vm5301, 0, %v5425
      %v5428 = vmul.f32 %v5426, %v5426
      %v5429 = vmul.f32 %v5428, -0.001358992
      %v5430 = vadd.f32 %v5429, 0.041655596
      %v5431 = vmul.f32 %v5428, %v5430
      %v5432 = vadd.f32 %v5431, -0.4999988
      %v5433 = vmul.f32 %v5428, %v5432
      %v5434 = vadd.f32 1.0, %v5433
      %v5435 = vmul.f32 %v5426, %v5426
      %v5436 = vmul.f32 %v5435, -0.00019511016
      %v5437 = vadd.f32 %v5436, 0.008332121
      %v5438 = vmul.f32 %v5435, %v5437
      %v5439 = vadd.f32 %v5438, -0.16666654
      %v5440 = vmul.f32 %v5435, %v5439
      %v5441 = vadd.f32 %v5440, 1.0
      %v5442 = vmul.f32 %v5441, %v5426
      %vm5443 = vweird.f32 %v2320
      %v5444 = vand.u32 %v5427, 3
      %vm5445 = vcmp.lt.s32.totalorder %v5444, 2
      %vm5446 = vcmp.eq.s32.totalorder %v5444, 0
      %v5447 = vxor.u32 %v5442, 2147483648
      %v5448 = vsel %vm5446, %v5434, %v5447
      %vm5449 = vcmp.eq.s32.totalorder %v5444, 2
      %v5450 = vxor.u32 %v5434, 2147483648
      %v5451 = vsel %vm5449, %v5450, %v5442
      %v5452 = vsel %vm5445, %v5448, %v5451
      %v5453 = vsel %vm5443, nan, %v5452
      %v5454 = vand.u32 2147483647, %v2323
      %vm5455 = vcmp.le.f32.partialorder %v5454, 0.7853982
      %vm5456 = vcmp.lt.s32.totalorder %v2323, 0
      %v5457 = vand.u32 %v2323, 2139095040
      %v5458 = vshrl.u32 %v5457, 23
      %v5459 = vsub.s32 %v5458, 127
      %v5460 = vand.u32 2147483647, %v2323
      %v5461 = vand.u32 %v5460, 8388607
      %v5462 = vor.u32 %v5461, 8388608
      %v5463 = vsub.s32 0, %v5462
      %v5464 = vadd.s32 %v5459, 1
      %vm5465 = vcmp.gt.s32.totalorder %v5464, 0
      %v5466 = vsel %vm5465, %v5464, 0
      %v5467 = vshrl.u32 %v5466, 5
      %v5468 = vand.u32 %v5466, 31
      %v5469 = vsub.s32 32, %v5468
      %v5470 = vshrl.u32 683565275, %v5469
      %v5471 = vshll.u32 683565275, %v5468
      %v5472 = vshrl.u32 2475754826, %v5469
      %v5473 = vor.u32 %v5471, %v5472
      %v5474 = vshll.u32 2475754826, %v5468
      %v5475 = vshrl.u32 2131351028, %v5469
      %v5476 = vor.u32 %v5474, %v5475
      %v5477 = vshll.u32 2131351028, %v5468
      %v5478 = vshrl.u32 2102212464, %v5469
      %v5479 = vor.u32 %v5477, %v5478
      %v5480 = vshll.u32 2102212464, %v5468
      %v5481 = vshrl.u32 920167782, %v5469
      %v5482 = vor.u32 %v5480, %v5481
      %v5483 = vshll.u32 920167782, %v5468
      %v5484 = vshrl.u32 1326507024, %v5469
      %v5485 = vor.u32 %v5483, %v5484
      %vm5486 = vcmp.lt.s32.totalorder %v5467, 1
      %vm5487 = vcmp.lt.s32.totalorder %v5467, 2
      %vm5488 = vcmp.lt.s32.totalorder %v5467, 3
      %vm5489 = vcmp.lt.s32.totalorder %v5467, 4
      %v5490 = vsel %vm5486, %v5470, %v5473
      %v5491 = vsel %vm5489, %v5479, 2102212464
      %v5492 = vsel %vm5488, %v5476, %v5491
      %v5493 = vsel %vm5487, %v5490, %v5492
      %v5494 = vsel %vm5486, %v5473, %v5476
      %v5495 = vsel %vm5489, %v5482, 920167782
      %v5496 = vsel %vm5488, %v5479, %v5495
      %v5497 = vsel %vm5487, %v5494, %v5496
      %v5498 = vsel %vm5486, %v5476, %v5479
      %v5499 = vsel %vm5489, %v5485, 1326507024
      %v5500 = vsel %vm5488, %v5482, %v5499
      %v5501 = vsel %vm5487, %v5498, %v5500
      %v5502 = vshll.u32 %v5462, 8
      %v5503 = vand.u32 %v5502, 65535
      %v5504 = vshrl.u32 %v5502, 16
      %v5505 = vand.u32 %v5501, 65535
      %v5506 = vshrl.u32 %v5501, 16
      %v5507 = vmul.u32 %v5503, %v5505
      %v5508 = vmul.u32 %v5503, %v5506
      %v5509 = vmul.u32 %v5504, %v5505
      %v5510 = vmul.u32 %v5504, %v5506
      %v5511 = vshll.u32 %v5508, 16
      %v5512 = vshrl.u32 %v5508, 16
      %v5513 = vshll.u32 %v5509, 16
      %v5514 = vshrl.u32 %v5509, 16
      %vm5515 = vc.u32 %v5507, %v5511
      %v5516 = vsel %vm5515, 1, 0
      %v5517 = vadd.s32 %v5507, %v5511
      %v5518 = vadd.s32 %v5510, %v5516
      %vm5519 = vc.u32 %v5517, %v5513
      %v5520 = vsel %vm5519, 1, 0
      %v5521 = vadd.s32 %v5517, %v5513
      %v5522 = vadd.s32 %v5518, %v5520
      %v5523 = vadd.s32 %v5522, %v5512
      %v5524 = vadd.s32 %v5523, %v5514
      %v5525 = vand.u32 %v5502, 65535
      %v5526 = vshrl.u32 %v5502, 16
      %v5527 = vand.u32 %v5497, 65535
      %v5528 = vshrl.u32 %v5497, 16
      %v5529 = vmul.u32 %v5525, %v5527
      %v5530 = vmul.u32 %v5525, %v5528
      %v5531 = vmul.u32 %v5526, %v5527
      %v5532 = vmul.u32 %v5526, %v5528
      %v5533 = vshll.u32 %v5530, 16
      %v5534 = vshrl.u32 %v5530, 16
      %v5535 = vshll.u32 %v5531, 16
      %v5536 = vshrl.u32 %v5531, 16
      %vm5537 = vc.u32 %v5529, %v5533
      %v5538 = vsel %vm5537, 1, 0
      %v5539 = vadd.s32 %v5529, %v5533
      %v5540 = vadd.s32 %v5532, %v5538
      %vm5541 = vc.u32 %v5539, %v5535
      %v5542 = vsel %vm5541, 1, 0
      %v5543 = vadd.s32 %v5539, %v5535
      %v5544 = vadd.s32 %v5540, %v5542
      %v5545 = vadd.s32 %v5544, %v5534
      %v5546 = vadd.s32 %v5545, %v5536
      %v5547 = vmul.u32 %v5502, %v5493
      %v5548 = vadd.s32 %v5524, %v5543
      %vm5549 = vc.u32 %v5524, %v5543
      %v5550 = vadd.s32 %v5546, 1
      %v5551 = vsel %vm5549, %v5550, %v5546
      %v5552 = vadd.s32 %v5547, %v5551
      %v5553 = vadd.s32 %v5552, 536870912
      %v5554 = vshrl.u32 %v5553, 30
      %v5555 = vshll.u32 %v5554, 30
      %v5556 = vsub.s32 %v5552, %v5555
      %vm5557 = vcmp.lt.s32.totalorder %v5556, 0
      %v5558 = vsub.s32 0, %v5556
      %v5559 = vsel %vm5557, %v5558, %v5556
      %v5560 = vclz %v5559
      %v5561 = vsub.s32 %v5560, 2
      %vm5562 = vcmp.gt.s32.totalorder 0, %v5561
      %v5563 = vsel %vm5562, 0, %v5561
      %v5564 = vsub.s32 32, %v5563
      %v5565 = vshll.u32 %v5556, %v5563
      %v5566 = vshrl.u32 %v5548, %v5564
      %v5567 = vor.u32 %v5565, %v5566
      %v5568 = vsub.s32 4294967266, %v5563
      %v5569 = vadd.s32 %v5568, 127
      %v5570 = vshll.u32 %v5569, 23
      %v5571 = vor.u32 4788187, %v5570
      %v5572 = vand.u32 2147483647, %v5571
      %v5574 = vcvt.s32.f32 %v5567
      %v5575 = vmul.f32 %v5574, %v5572
      %v5576 = vxor.u32 %v5575, 2147483648
      %v5577 = vsel %vm5456, %v5576, %v5575
      %v5578 = vsub.s32 4, %v5554
      %v5579 = vsel %vm5456, %v5578, %v5554
      %v5580 = vsel %vm5455, %v2323, %v5577
      %v5581 = vsel %vm5455, 0, %v5579
      %v5582 = vmul.f32 %v5580, %v5580
      %v5583 = vmul.f32 %v5582, -0.001358992
      %v5584 = vadd.f32 %v5583, 0.041655596
      %v5585 = vmul.f32 %v5582, %v5584
      %v5586 = vadd.f32 %v5585, -0.4999988
      %v5587 = vmul.f32 %v5582, %v5586
      %v5588 = vadd.f32 1.0, %v5587
      %v5589 = vmul.f32 %v5580, %v5580
      %v5590 = vmul.f32 %v5589, -0.00019511016
      %v5591 = vadd.f32 %v5590, 0.008332121
      %v5592 = vmul.f32 %v5589, %v5591
      %v5593 = vadd.f32 %v5592, -0.16666654
      %v5594 = vmul.f32 %v5589, %v5593
      %v5595 = vadd.f32 %v5594, 1.0
      %v5596 = vmul.f32 %v5595, %v5580
      %vm5597 = vweird.f32 %v2323
      %v5598 = vand.u32 %v5581, 3
      %vm5599 = vcmp.lt.s32.totalorder %v5598, 2
      %vm5600 = vcmp.eq.s32.totalorder %v5598, 0
      %v5601 = vxor.u32 %v5596, 2147483648
      %v5602 = vsel %vm5600, %v5588, %v5601
      %vm5603 = vcmp.eq.s32.totalorder %v5598, 2
      %v5604 = vxor.u32 %v5588, 2147483648
      %v5605 = vsel %vm5603, %v5604, %v5596
      %v5606 = vsel %vm5599, %v5602, %v5605
      %v5607 = vsel %vm5597, nan, %v5606
      %v5608 = vand.u32 2147483647, %v2326
      %vm5609 = vcmp.le.f32.partialorder %v5608, 0.7853982
      %vm5610 = vcmp.lt.s32.totalorder %v2326, 0
      %v5611 = vand.u32 %v2326, 2139095040
      %v5612 = vshrl.u32 %v5611, 23
      %v5613 = vsub.s32 %v5612, 127
      %v5614 = vand.u32 2147483647, %v2326
      %v5615 = vand.u32 %v5614, 8388607
      %v5616 = vor.u32 %v5615, 8388608
      %v5617 = vsub.s32 0, %v5616
      %v5618 = vadd.s32 %v5613, 1
      %vm5619 = vcmp.gt.s32.totalorder %v5618, 0
      %v5620 = vsel %vm5619, %v5618, 0
      %v5621 = vshrl.u32 %v5620, 5
      %v5622 = vand.u32 %v5620, 31
      %v5623 = vsub.s32 32, %v5622
      %v5624 = vshrl.u32 683565275, %v5623
      %v5625 = vshll.u32 683565275, %v5622
      %v5626 = vshrl.u32 2475754826, %v5623
      %v5627 = vor.u32 %v5625, %v5626
      %v5628 = vshll.u32 2475754826, %v5622
      %v5629 = vshrl.u32 2131351028, %v5623
      %v5630 = vor.u32 %v5628, %v5629
      %v5631 = vshll.u32 2131351028, %v5622
      %v5632 = vshrl.u32 2102212464, %v5623
      %v5633 = vor.u32 %v5631, %v5632
      %v5634 = vshll.u32 2102212464, %v5622
      %v5635 = vshrl.u32 920167782, %v5623
      %v5636 = vor.u32 %v5634, %v5635
      %v5637 = vshll.u32 920167782, %v5622
      %v5638 = vshrl.u32 1326507024, %v5623
      %v5639 = vor.u32 %v5637, %v5638
      %vm5640 = vcmp.lt.s32.totalorder %v5621, 1
      %vm5641 = vcmp.lt.s32.totalorder %v5621, 2
      %vm5642 = vcmp.lt.s32.totalorder %v5621, 3
      %vm5643 = vcmp.lt.s32.totalorder %v5621, 4
      %v5644 = vsel %vm5640, %v5624, %v5627
      %v5645 = vsel %vm5643, %v5633, 2102212464
      %v5646 = vsel %vm5642, %v5630, %v5645
      %v5647 = vsel %vm5641, %v5644, %v5646
      %v5648 = vsel %vm5640, %v5627, %v5630
      %v5649 = vsel %vm5643, %v5636, 920167782
      %v5650 = vsel %vm5642, %v5633, %v5649
      %v5651 = vsel %vm5641, %v5648, %v5650
      %v5652 = vsel %vm5640, %v5630, %v5633
      %v5653 = vsel %vm5643, %v5639, 1326507024
      %v5654 = vsel %vm5642, %v5636, %v5653
      %v5655 = vsel %vm5641, %v5652, %v5654
      %v5656 = vshll.u32 %v5616, 8
      %v5657 = vand.u32 %v5656, 65535
      %v5658 = vshrl.u32 %v5656, 16
      %v5659 = vand.u32 %v5655, 65535
      %v5660 = vshrl.u32 %v5655, 16
      %v5661 = vmul.u32 %v5657, %v5659
      %v5662 = vmul.u32 %v5657, %v5660
      %v5663 = vmul.u32 %v5658, %v5659
      %v5664 = vmul.u32 %v5658, %v5660
      %v5665 = vshll.u32 %v5662, 16
      %v5666 = vshrl.u32 %v5662, 16
      %v5667 = vshll.u32 %v5663, 16
      %v5668 = vshrl.u32 %v5663, 16
      %vm5669 = vc.u32 %v5661, %v5665
      %v5670 = vsel %vm5669, 1, 0
      %v5671 = vadd.s32 %v5661, %v5665
      %v5672 = vadd.s32 %v5664, %v5670
      %vm5673 = vc.u32 %v5671, %v5667
      %v5674 = vsel %vm5673, 1, 0
      %v5675 = vadd.s32 %v5671, %v5667
      %v5676 = vadd.s32 %v5672, %v5674
      %v5677 = vadd.s32 %v5676, %v5666
      %v5678 = vadd.s32 %v5677, %v5668
      %v5679 = vand.u32 %v5656, 65535
      %v5680 = vshrl.u32 %v5656, 16
      %v5681 = vand.u32 %v5651, 65535
      %v5682 = vshrl.u32 %v5651, 16
      %v5683 = vmul.u32 %v5679, %v5681
      %v5684 = vmul.u32 %v5679, %v5682
      %v5685 = vmul.u32 %v5680, %v5681
      %v5686 = vmul.u32 %v5680, %v5682
      %v5687 = vshll.u32 %v5684, 16
      %v5688 = vshrl.u32 %v5684, 16
      %v5689 = vshll.u32 %v5685, 16
      %v5690 = vshrl.u32 %v5685, 16
      %vm5691 = vc.u32 %v5683, %v5687
      %v5692 = vsel %vm5691, 1, 0
      %v5693 = vadd.s32 %v5683, %v5687
      %v5694 = vadd.s32 %v5686, %v5692
      %vm5695 = vc.u32 %v5693, %v5689
      %v5696 = vsel %vm5695, 1, 0
      %v5697 = vadd.s32 %v5693, %v5689
      %v5698 = vadd.s32 %v5694, %v5696
      %v5699 = vadd.s32 %v5698, %v5688
      %v5700 = vadd.s32 %v5699, %v5690
      %v5701 = vmul.u32 %v5656, %v5647
      %v5702 = vadd.s32 %v5678, %v5697
      %vm5703 = vc.u32 %v5678, %v5697
      %v5704 = vadd.s32 %v5700, 1
      %v5705 = vsel %vm5703, %v5704, %v5700
      %v5706 = vadd.s32 %v5701, %v5705
      %v5707 = vadd.s32 %v5706, 536870912
      %v5708 = vshrl.u32 %v5707, 30
      %v5709 = vshll.u32 %v5708, 30
      %v5710 = vsub.s32 %v5706, %v5709
      %vm5711 = vcmp.lt.s32.totalorder %v5710, 0
      %v5712 = vsub.s32 0, %v5710
      %v5713 = vsel %vm5711, %v5712, %v5710
      %v5714 = vclz %v5713
      %v5715 = vsub.s32 %v5714, 2
      %vm5716 = vcmp.gt.s32.totalorder 0, %v5715
      %v5717 = vsel %vm5716, 0, %v5715
      %v5718 = vsub.s32 32, %v5717
      %v5719 = vshll.u32 %v5710, %v5717
      %v5720 = vshrl.u32 %v5702, %v5718
      %v5721 = vor.u32 %v5719, %v5720
      %v5722 = vsub.s32 4294967266, %v5717
      %v5723 = vadd.s32 %v5722, 127
      %v5724 = vshll.u32 %v5723, 23
      %v5725 = vor.u32 4788187, %v5724
      %v5726 = vand.u32 2147483647, %v5725
      %v5728 = vcvt.s32.f32 %v5721
      %v5729 = vmul.f32 %v5728, %v5726
      %v5730 = vxor.u32 %v5729, 2147483648
      %v5731 = vsel %vm5610, %v5730, %v5729
      %v5732 = vsub.s32 4, %v5708
      %v5733 = vsel %vm5610, %v5732, %v5708
      %v5734 = vsel %vm5609, %v2326, %v5731
      %v5735 = vsel %vm5609, 0, %v5733
      %v5736 = vmul.f32 %v5734, %v5734
      %v5737 = vmul.f32 %v5736, -0.001358992
      %v5738 = vadd.f32 %v5737, 0.041655596
      %v5739 = vmul.f32 %v5736, %v5738
      %v5740 = vadd.f32 %v5739, -0.4999988
      %v5741 = vmul.f32 %v5736, %v5740
      %v5742 = vadd.f32 1.0, %v5741
      %v5743 = vmul.f32 %v5734, %v5734
      %v5744 = vmul.f32 %v5743, -0.00019511016
      %v5745 = vadd.f32 %v5744, 0.008332121
      %v5746 = vmul.f32 %v5743, %v5745
      %v5747 = vadd.f32 %v5746, -0.16666654
      %v5748 = vmul.f32 %v5743, %v5747
      %v5749 = vadd.f32 %v5748, 1.0
      %v5750 = vmul.f32 %v5749, %v5734
      %vm5751 = vweird.f32 %v2326
      %v5752 = vand.u32 %v5735, 3
      %vm5753 = vcmp.lt.s32.totalorder %v5752, 2
      %vm5754 = vcmp.eq.s32.totalorder %v5752, 0
      %v5755 = vxor.u32 %v5750, 2147483648
      %v5756 = vsel %vm5754, %v5742, %v5755
      %vm5757 = vcmp.eq.s32.totalorder %v5752, 2
      %v5758 = vxor.u32 %v5742, 2147483648
      %v5759 = vsel %vm5757, %v5758, %v5750
      %v5760 = vsel %vm5753, %v5756, %v5759
      %v5761 = vsel %vm5751, nan, %v5760
      %v5762 = vand.u32 2147483647, %v2329
      %vm5763 = vcmp.le.f32.partialorder %v5762, 0.7853982
      %vm5764 = vcmp.lt.s32.totalorder %v2329, 0
      %v5765 = vand.u32 %v2329, 2139095040
      %v5766 = vshrl.u32 %v5765, 23
      %v5767 = vsub.s32 %v5766, 127
      %v5768 = vand.u32 2147483647, %v2329
      %v5769 = vand.u32 %v5768, 8388607
      %v5770 = vor.u32 %v5769, 8388608
      %v5771 = vsub.s32 0, %v5770
      %v5772 = vadd.s32 %v5767, 1
      %vm5773 = vcmp.gt.s32.totalorder %v5772, 0
      %v5774 = vsel %vm5773, %v5772, 0
      %v5775 = vshrl.u32 %v5774, 5
      %v5776 = vand.u32 %v5774, 31
      %v5777 = vsub.s32 32, %v5776
      %v5778 = vshrl.u32 683565275, %v5777
      %v5779 = vshll.u32 683565275, %v5776
      %v5780 = vshrl.u32 2475754826, %v5777
      %v5781 = vor.u32 %v5779, %v5780
      %v5782 = vshll.u32 2475754826, %v5776
      %v5783 = vshrl.u32 2131351028, %v5777
      %v5784 = vor.u32 %v5782, %v5783
      %v5785 = vshll.u32 2131351028, %v5776
      %v5786 = vshrl.u32 2102212464, %v5777
      %v5787 = vor.u32 %v5785, %v5786
      %v5788 = vshll.u32 2102212464, %v5776
      %v5789 = vshrl.u32 920167782, %v5777
      %v5790 = vor.u32 %v5788, %v5789
      %v5791 = vshll.u32 920167782, %v5776
      %v5792 = vshrl.u32 1326507024, %v5777
      %v5793 = vor.u32 %v5791, %v5792
      %vm5794 = vcmp.lt.s32.totalorder %v5775, 1
      %vm5795 = vcmp.lt.s32.totalorder %v5775, 2
      %vm5796 = vcmp.lt.s32.totalorder %v5775, 3
      %vm5797 = vcmp.lt.s32.totalorder %v5775, 4
      %v5798 = vsel %vm5794, %v5778, %v5781
      %v5799 = vsel %vm5797, %v5787, 2102212464
      %v5800 = vsel %vm5796, %v5784, %v5799
      %v5801 = vsel %vm5795, %v5798, %v5800
      %v5802 = vsel %vm5794, %v5781, %v5784
      %v5803 = vsel %vm5797, %v5790, 920167782
      %v5804 = vsel %vm5796, %v5787, %v5803
      %v5805 = vsel %vm5795, %v5802, %v5804
      %v5806 = vsel %vm5794, %v5784, %v5787
      %v5807 = vsel %vm5797, %v5793, 1326507024
      %v5808 = vsel %vm5796, %v5790, %v5807
      %v5809 = vsel %vm5795, %v5806, %v5808
      %v5810 = vshll.u32 %v5770, 8
      %v5811 = vand.u32 %v5810, 65535
      %v5812 = vshrl.u32 %v5810, 16
      %v5813 = vand.u32 %v5809, 65535
      %v5814 = vshrl.u32 %v5809, 16
      %v5815 = vmul.u32 %v5811, %v5813
      %v5816 = vmul.u32 %v5811, %v5814
      %v5817 = vmul.u32 %v5812, %v5813
      %v5818 = vmul.u32 %v5812, %v5814
      %v5819 = vshll.u32 %v5816, 16
      %v5820 = vshrl.u32 %v5816, 16
      %v5821 = vshll.u32 %v5817, 16
      %v5822 = vshrl.u32 %v5817, 16
      %vm5823 = vc.u32 %v5815, %v5819
      %v5824 = vsel %vm5823, 1, 0
      %v5825 = vadd.s32 %v5815, %v5819
      %v5826 = vadd.s32 %v5818, %v5824
      %vm5827 = vc.u32 %v5825, %v5821
      %v5828 = vsel %vm5827, 1, 0
      %v5829 = vadd.s32 %v5825, %v5821
      %v5830 = vadd.s32 %v5826, %v5828
      %v5831 = vadd.s32 %v5830, %v5820
      %v5832 = vadd.s32 %v5831, %v5822
      %v5833 = vand.u32 %v5810, 65535
      %v5834 = vshrl.u32 %v5810, 16
      %v5835 = vand.u32 %v5805, 65535
      %v5836 = vshrl.u32 %v5805, 16
      %v5837 = vmul.u32 %v5833, %v5835
      %v5838 = vmul.u32 %v5833, %v5836
      %v5839 = vmul.u32 %v5834, %v5835
      %v5840 = vmul.u32 %v5834, %v5836
      %v5841 = vshll.u32 %v5838, 16
      %v5842 = vshrl.u32 %v5838, 16
      %v5843 = vshll.u32 %v5839, 16
      %v5844 = vshrl.u32 %v5839, 16
      %vm5845 = vc.u32 %v5837, %v5841
      %v5846 = vsel %vm5845, 1, 0
      %v5847 = vadd.s32 %v5837, %v5841
      %v5848 = vadd.s32 %v5840, %v5846
      %vm5849 = vc.u32 %v5847, %v5843
      %v5850 = vsel %vm5849, 1, 0
      %v5851 = vadd.s32 %v5847, %v5843
      %v5852 = vadd.s32 %v5848, %v5850
      %v5853 = vadd.s32 %v5852, %v5842
      %v5854 = vadd.s32 %v5853, %v5844
      %v5855 = vmul.u32 %v5810, %v5801
      %v5856 = vadd.s32 %v5832, %v5851
      %vm5857 = vc.u32 %v5832, %v5851
      %v5858 = vadd.s32 %v5854, 1
      %v5859 = vsel %vm5857, %v5858, %v5854
      %v5860 = vadd.s32 %v5855, %v5859
      %v5861 = vadd.s32 %v5860, 536870912
      %v5862 = vshrl.u32 %v5861, 30
      %v5863 = vshll.u32 %v5862, 30
      %v5864 = vsub.s32 %v5860, %v5863
      %vm5865 = vcmp.lt.s32.totalorder %v5864, 0
      %v5866 = vsub.s32 0, %v5864
      %v5867 = vsel %vm5865, %v5866, %v5864
      %v5868 = vclz %v5867
      %v5869 = vsub.s32 %v5868, 2
      %vm5870 = vcmp.gt.s32.totalorder 0, %v5869
      %v5871 = vsel %vm5870, 0, %v5869
      %v5872 = vsub.s32 32, %v5871
      %v5873 = vshll.u32 %v5864, %v5871
      %v5874 = vshrl.u32 %v5856, %v5872
      %v5875 = vor.u32 %v5873, %v5874
      %v5876 = vsub.s32 4294967266, %v5871
      %v5877 = vadd.s32 %v5876, 127
      %v5878 = vshll.u32 %v5877, 23
      %v5879 = vor.u32 4788187, %v5878
      %v5880 = vand.u32 2147483647, %v5879
      %v5882 = vcvt.s32.f32 %v5875
      %v5883 = vmul.f32 %v5882, %v5880
      %v5884 = vxor.u32 %v5883, 2147483648
      %v5885 = vsel %vm5764, %v5884, %v5883
      %v5886 = vsub.s32 4, %v5862
      %v5887 = vsel %vm5764, %v5886, %v5862
      %v5888 = vsel %vm5763, %v2329, %v5885
      %v5889 = vsel %vm5763, 0, %v5887
      %v5890 = vmul.f32 %v5888, %v5888
      %v5891 = vmul.f32 %v5890, -0.001358992
      %v5892 = vadd.f32 %v5891, 0.041655596
      %v5893 = vmul.f32 %v5890, %v5892
      %v5894 = vadd.f32 %v5893, -0.4999988
      %v5895 = vmul.f32 %v5890, %v5894
      %v5896 = vadd.f32 1.0, %v5895
      %v5897 = vmul.f32 %v5888, %v5888
      %v5898 = vmul.f32 %v5897, -0.00019511016
      %v5899 = vadd.f32 %v5898, 0.008332121
      %v5900 = vmul.f32 %v5897, %v5899
      %v5901 = vadd.f32 %v5900, -0.16666654
      %v5902 = vmul.f32 %v5897, %v5901
      %v5903 = vadd.f32 %v5902, 1.0
      %v5904 = vmul.f32 %v5903, %v5888
      %vm5905 = vweird.f32 %v2329
      %v5906 = vand.u32 %v5889, 3
      %vm5907 = vcmp.lt.s32.totalorder %v5906, 2
      %vm5908 = vcmp.eq.s32.totalorder %v5906, 0
      %v5909 = vxor.u32 %v5904, 2147483648
      %v5910 = vsel %vm5908, %v5896, %v5909
      %vm5911 = vcmp.eq.s32.totalorder %v5906, 2
      %v5912 = vxor.u32 %v5896, 2147483648
      %v5913 = vsel %vm5911, %v5912, %v5904
      %v5914 = vsel %vm5907, %v5910, %v5913
      %v5915 = vsel %vm5905, nan, %v5914
      %v5916 = vand.u32 2147483647, %v2332
      %vm5917 = vcmp.le.f32.partialorder %v5916, 0.7853982
      %vm5918 = vcmp.lt.s32.totalorder %v2332, 0
      %v5919 = vand.u32 %v2332, 2139095040
      %v5920 = vshrl.u32 %v5919, 23
      %v5921 = vsub.s32 %v5920, 127
      %v5922 = vand.u32 2147483647, %v2332
      %v5923 = vand.u32 %v5922, 8388607
      %v5924 = vor.u32 %v5923, 8388608
      %v5925 = vsub.s32 0, %v5924
      %v5926 = vadd.s32 %v5921, 1
      %vm5927 = vcmp.gt.s32.totalorder %v5926, 0
      %v5928 = vsel %vm5927, %v5926, 0
      %v5929 = vshrl.u32 %v5928, 5
      %v5930 = vand.u32 %v5928, 31
      %v5931 = vsub.s32 32, %v5930
      %v5932 = vshrl.u32 683565275, %v5931
      %v5933 = vshll.u32 683565275, %v5930
      %v5934 = vshrl.u32 2475754826, %v5931
      %v5935 = vor.u32 %v5933, %v5934
      %v5936 = vshll.u32 2475754826, %v5930
      %v5937 = vshrl.u32 2131351028, %v5931
      %v5938 = vor.u32 %v5936, %v5937
      %v5939 = vshll.u32 2131351028, %v5930
      %v5940 = vshrl.u32 2102212464, %v5931
      %v5941 = vor.u32 %v5939, %v5940
      %v5942 = vshll.u32 2102212464, %v5930
      %v5943 = vshrl.u32 920167782, %v5931
      %v5944 = vor.u32 %v5942, %v5943
      %v5945 = vshll.u32 920167782, %v5930
      %v5946 = vshrl.u32 1326507024, %v5931
      %v5947 = vor.u32 %v5945, %v5946
      %vm5948 = vcmp.lt.s32.totalorder %v5929, 1
      %vm5949 = vcmp.lt.s32.totalorder %v5929, 2
      %vm5950 = vcmp.lt.s32.totalorder %v5929, 3
      %vm5951 = vcmp.lt.s32.totalorder %v5929, 4
      %v5952 = vsel %vm5948, %v5932, %v5935
      %v5953 = vsel %vm5951, %v5941, 2102212464
      %v5954 = vsel %vm5950, %v5938, %v5953
      %v5955 = vsel %vm5949, %v5952, %v5954
      %v5956 = vsel %vm5948, %v5935, %v5938
      %v5957 = vsel %vm5951, %v5944, 920167782
      %v5958 = vsel %vm5950, %v5941, %v5957
      %v5959 = vsel %vm5949, %v5956, %v5958
      %v5960 = vsel %vm5948, %v5938, %v5941
      %v5961 = vsel %vm5951, %v5947, 1326507024
      %v5962 = vsel %vm5950, %v5944, %v5961
      %v5963 = vsel %vm5949, %v5960, %v5962
      %v5964 = vshll.u32 %v5924, 8
      %v5965 = vand.u32 %v5964, 65535
      %v5966 = vshrl.u32 %v5964, 16
      %v5967 = vand.u32 %v5963, 65535
      %v5968 = vshrl.u32 %v5963, 16
      %v5969 = vmul.u32 %v5965, %v5967
      %v5970 = vmul.u32 %v5965, %v5968
      %v5971 = vmul.u32 %v5966, %v5967
      %v5972 = vmul.u32 %v5966, %v5968
      %v5973 = vshll.u32 %v5970, 16
      %v5974 = vshrl.u32 %v5970, 16
      %v5975 = vshll.u32 %v5971, 16
      %v5976 = vshrl.u32 %v5971, 16
      %vm5977 = vc.u32 %v5969, %v5973
      %v5978 = vsel %vm5977, 1, 0
      %v5979 = vadd.s32 %v5969, %v5973
      %v5980 = vadd.s32 %v5972, %v5978
      %vm5981 = vc.u32 %v5979, %v5975
      %v5982 = vsel %vm5981, 1, 0
      %v5983 = vadd.s32 %v5979, %v5975
      %v5984 = vadd.s32 %v5980, %v5982
      %v5985 = vadd.s32 %v5984, %v5974
      %v5986 = vadd.s32 %v5985, %v5976
      %v5987 = vand.u32 %v5964, 65535
      %v5988 = vshrl.u32 %v5964, 16
      %v5989 = vand.u32 %v5959, 65535
      %v5990 = vshrl.u32 %v5959, 16
      %v5991 = vmul.u32 %v5987, %v5989
      %v5992 = vmul.u32 %v5987, %v5990
      %v5993 = vmul.u32 %v5988, %v5989
      %v5994 = vmul.u32 %v5988, %v5990
      %v5995 = vshll.u32 %v5992, 16
      %v5996 = vshrl.u32 %v5992, 16
      %v5997 = vshll.u32 %v5993, 16
      %v5998 = vshrl.u32 %v5993, 16
      %vm5999 = vc.u32 %v5991, %v5995
      %v6000 = vsel %vm5999, 1, 0
      %v6001 = vadd.s32 %v5991, %v5995
      %v6002 = vadd.s32 %v5994, %v6000
      %vm6003 = vc.u32 %v6001, %v5997
      %v6004 = vsel %vm6003, 1, 0
      %v6005 = vadd.s32 %v6001, %v5997
      %v6006 = vadd.s32 %v6002, %v6004
      %v6007 = vadd.s32 %v6006, %v5996
      %v6008 = vadd.s32 %v6007, %v5998
      %v6009 = vmul.u32 %v5964, %v5955
      %v6010 = vadd.s32 %v5986, %v6005
      %vm6011 = vc.u32 %v5986, %v6005
      %v6012 = vadd.s32 %v6008, 1
      %v6013 = vsel %vm6011, %v6012, %v6008
      %v6014 = vadd.s32 %v6009, %v6013
      %v6015 = vadd.s32 %v6014, 536870912
      %v6016 = vshrl.u32 %v6015, 30
      %v6017 = vshll.u32 %v6016, 30
      %v6018 = vsub.s32 %v6014, %v6017
      %vm6019 = vcmp.lt.s32.totalorder %v6018, 0
      %v6020 = vsub.s32 0, %v6018
      %v6021 = vsel %vm6019, %v6020, %v6018
      %v6022 = vclz %v6021
      %v6023 = vsub.s32 %v6022, 2
      %vm6024 = vcmp.gt.s32.totalorder 0, %v6023
      %v6025 = vsel %vm6024, 0, %v6023
      %v6026 = vsub.s32 32, %v6025
      %v6027 = vshll.u32 %v6018, %v6025
      %v6028 = vshrl.u32 %v6010, %v6026
      %v6029 = vor.u32 %v6027, %v6028
      %v6030 = vsub.s32 4294967266, %v6025
      %v6031 = vadd.s32 %v6030, 127
      %v6032 = vshll.u32 %v6031, 23
      %v6033 = vor.u32 4788187, %v6032
      %v6034 = vand.u32 2147483647, %v6033
      %v6036 = vcvt.s32.f32 %v6029
      %v6037 = vmul.f32 %v6036, %v6034
      %v6038 = vxor.u32 %v6037, 2147483648
      %v6039 = vsel %vm5918, %v6038, %v6037
      %v6040 = vsub.s32 4, %v6016
      %v6041 = vsel %vm5918, %v6040, %v6016
      %v6042 = vsel %vm5917, %v2332, %v6039
      %v6043 = vsel %vm5917, 0, %v6041
      %v6044 = vmul.f32 %v6042, %v6042
      %v6045 = vmul.f32 %v6044, -0.001358992
      %v6046 = vadd.f32 %v6045, 0.041655596
      %v6047 = vmul.f32 %v6044, %v6046
      %v6048 = vadd.f32 %v6047, -0.4999988
      %v6049 = vmul.f32 %v6044, %v6048
      %v6050 = vadd.f32 1.0, %v6049
      %v6051 = vmul.f32 %v6042, %v6042
      %v6052 = vmul.f32 %v6051, -0.00019511016
      %v6053 = vadd.f32 %v6052, 0.008332121
      %v6054 = vmul.f32 %v6051, %v6053
      %v6055 = vadd.f32 %v6054, -0.16666654
      %v6056 = vmul.f32 %v6051, %v6055
      %v6057 = vadd.f32 %v6056, 1.0
      %v6058 = vmul.f32 %v6057, %v6042
      %vm6059 = vweird.f32 %v2332
      %v6060 = vand.u32 %v6043, 3
      %vm6061 = vcmp.lt.s32.totalorder %v6060, 2
      %vm6062 = vcmp.eq.s32.totalorder %v6060, 0
      %v6063 = vxor.u32 %v6058, 2147483648
      %v6064 = vsel %vm6062, %v6050, %v6063
      %vm6065 = vcmp.eq.s32.totalorder %v6060, 2
      %v6066 = vxor.u32 %v6050, 2147483648
      %v6067 = vsel %vm6065, %v6066, %v6058
      %v6068 = vsel %vm6061, %v6064, %v6067
      %v6069 = vsel %vm6059, nan, %v6068
      %v6070 = vand.u32 2147483647, %v2335
      %vm6071 = vcmp.le.f32.partialorder %v6070, 0.7853982
      %vm6072 = vcmp.lt.s32.totalorder %v2335, 0
      %v6073 = vand.u32 %v2335, 2139095040
      %v6074 = vshrl.u32 %v6073, 23
      %v6075 = vsub.s32 %v6074, 127
      %v6076 = vand.u32 2147483647, %v2335
      %v6077 = vand.u32 %v6076, 8388607
      %v6078 = vor.u32 %v6077, 8388608
      %v6079 = vsub.s32 0, %v6078
      %v6080 = vadd.s32 %v6075, 1
      %vm6081 = vcmp.gt.s32.totalorder %v6080, 0
      %v6082 = vsel %vm6081, %v6080, 0
      %v6083 = vshrl.u32 %v6082, 5
      %v6084 = vand.u32 %v6082, 31
      %v6085 = vsub.s32 32, %v6084
      %v6086 = vshrl.u32 683565275, %v6085
      %v6087 = vshll.u32 683565275, %v6084
      %v6088 = vshrl.u32 2475754826, %v6085
      %v6089 = vor.u32 %v6087, %v6088
      %v6090 = vshll.u32 2475754826, %v6084
      %v6091 = vshrl.u32 2131351028, %v6085
      %v6092 = vor.u32 %v6090, %v6091
      %v6093 = vshll.u32 2131351028, %v6084
      %v6094 = vshrl.u32 2102212464, %v6085
      %v6095 = vor.u32 %v6093, %v6094
      %v6096 = vshll.u32 2102212464, %v6084
      %v6097 = vshrl.u32 920167782, %v6085
      %v6098 = vor.u32 %v6096, %v6097
      %v6099 = vshll.u32 920167782, %v6084
      %v6100 = vshrl.u32 1326507024, %v6085
      %v6101 = vor.u32 %v6099, %v6100
      %vm6102 = vcmp.lt.s32.totalorder %v6083, 1
      %vm6103 = vcmp.lt.s32.totalorder %v6083, 2
      %vm6104 = vcmp.lt.s32.totalorder %v6083, 3
      %vm6105 = vcmp.lt.s32.totalorder %v6083, 4
      %v6106 = vsel %vm6102, %v6086, %v6089
      %v6107 = vsel %vm6105, %v6095, 2102212464
      %v6108 = vsel %vm6104, %v6092, %v6107
      %v6109 = vsel %vm6103, %v6106, %v6108
      %v6110 = vsel %vm6102, %v6089, %v6092
      %v6111 = vsel %vm6105, %v6098, 920167782
      %v6112 = vsel %vm6104, %v6095, %v6111
      %v6113 = vsel %vm6103, %v6110, %v6112
      %v6114 = vsel %vm6102, %v6092, %v6095
      %v6115 = vsel %vm6105, %v6101, 1326507024
      %v6116 = vsel %vm6104, %v6098, %v6115
      %v6117 = vsel %vm6103, %v6114, %v6116
      %v6118 = vshll.u32 %v6078, 8
      %v6119 = vand.u32 %v6118, 65535
      %v6120 = vshrl.u32 %v6118, 16
      %v6121 = vand.u32 %v6117, 65535
      %v6122 = vshrl.u32 %v6117, 16
      %v6123 = vmul.u32 %v6119, %v6121
      %v6124 = vmul.u32 %v6119, %v6122
      %v6125 = vmul.u32 %v6120, %v6121
      %v6126 = vmul.u32 %v6120, %v6122
      %v6127 = vshll.u32 %v6124, 16
      %v6128 = vshrl.u32 %v6124, 16
      %v6129 = vshll.u32 %v6125, 16
      %v6130 = vshrl.u32 %v6125, 16
      %vm6131 = vc.u32 %v6123, %v6127
      %v6132 = vsel %vm6131, 1, 0
      %v6133 = vadd.s32 %v6123, %v6127
      %v6134 = vadd.s32 %v6126, %v6132
      %vm6135 = vc.u32 %v6133, %v6129
      %v6136 = vsel %vm6135, 1, 0
      %v6137 = vadd.s32 %v6133, %v6129
      %v6138 = vadd.s32 %v6134, %v6136
      %v6139 = vadd.s32 %v6138, %v6128
      %v6140 = vadd.s32 %v6139, %v6130
      %v6141 = vand.u32 %v6118, 65535
      %v6142 = vshrl.u32 %v6118, 16
      %v6143 = vand.u32 %v6113, 65535
      %v6144 = vshrl.u32 %v6113, 16
      %v6145 = vmul.u32 %v6141, %v6143
      %v6146 = vmul.u32 %v6141, %v6144
      %v6147 = vmul.u32 %v6142, %v6143
      %v6148 = vmul.u32 %v6142, %v6144
      %v6149 = vshll.u32 %v6146, 16
      %v6150 = vshrl.u32 %v6146, 16
      %v6151 = vshll.u32 %v6147, 16
      %v6152 = vshrl.u32 %v6147, 16
      %vm6153 = vc.u32 %v6145, %v6149
      %v6154 = vsel %vm6153, 1, 0
      %v6155 = vadd.s32 %v6145, %v6149
      %v6156 = vadd.s32 %v6148, %v6154
      %vm6157 = vc.u32 %v6155, %v6151
      %v6158 = vsel %vm6157, 1, 0
      %v6159 = vadd.s32 %v6155, %v6151
      %v6160 = vadd.s32 %v6156, %v6158
      %v6161 = vadd.s32 %v6160, %v6150
      %v6162 = vadd.s32 %v6161, %v6152
      %v6163 = vmul.u32 %v6118, %v6109
      %v6164 = vadd.s32 %v6140, %v6159
      %vm6165 = vc.u32 %v6140, %v6159
      %v6166 = vadd.s32 %v6162, 1
      %v6167 = vsel %vm6165, %v6166, %v6162
      %v6168 = vadd.s32 %v6163, %v6167
      %v6169 = vadd.s32 %v6168, 536870912
      %v6170 = vshrl.u32 %v6169, 30
      %v6171 = vshll.u32 %v6170, 30
      %v6172 = vsub.s32 %v6168, %v6171
      %vm6173 = vcmp.lt.s32.totalorder %v6172, 0
      %v6174 = vsub.s32 0, %v6172
      %v6175 = vsel %vm6173, %v6174, %v6172
      %v6176 = vclz %v6175
      %v6177 = vsub.s32 %v6176, 2
      %vm6178 = vcmp.gt.s32.totalorder 0, %v6177
      %v6179 = vsel %vm6178, 0, %v6177
      %v6180 = vsub.s32 32, %v6179
      %v6181 = vshll.u32 %v6172, %v6179
      %v6182 = vshrl.u32 %v6164, %v6180
      %v6183 = vor.u32 %v6181, %v6182
      %v6184 = vsub.s32 4294967266, %v6179
      %v6185 = vadd.s32 %v6184, 127
      %v6186 = vshll.u32 %v6185, 23
      %v6187 = vor.u32 4788187, %v6186
      %v6188 = vand.u32 2147483647, %v6187
      %v6190 = vcvt.s32.f32 %v6183
      %v6191 = vmul.f32 %v6190, %v6188
      %v6192 = vxor.u32 %v6191, 2147483648
      %v6193 = vsel %vm6072, %v6192, %v6191
      %v6194 = vsub.s32 4, %v6170
      %v6195 = vsel %vm6072, %v6194, %v6170
      %v6196 = vsel %vm6071, %v2335, %v6193
      %v6197 = vsel %vm6071, 0, %v6195
      %v6198 = vmul.f32 %v6196, %v6196
      %v6199 = vmul.f32 %v6198, -0.001358992
      %v6200 = vadd.f32 %v6199, 0.041655596
      %v6201 = vmul.f32 %v6198, %v6200
      %v6202 = vadd.f32 %v6201, -0.4999988
      %v6203 = vmul.f32 %v6198, %v6202
      %v6204 = vadd.f32 1.0, %v6203
      %v6205 = vmul.f32 %v6196, %v6196
      %v6206 = vmul.f32 %v6205, -0.00019511016
      %v6207 = vadd.f32 %v6206, 0.008332121
      %v6208 = vmul.f32 %v6205, %v6207
      %v6209 = vadd.f32 %v6208, -0.16666654
      %v6210 = vmul.f32 %v6205, %v6209
      %v6211 = vadd.f32 %v6210, 1.0
      %v6212 = vmul.f32 %v6211, %v6196
      %vm6213 = vweird.f32 %v2335
      %v6214 = vand.u32 %v6197, 3
      %vm6215 = vcmp.lt.s32.totalorder %v6214, 2
      %vm6216 = vcmp.eq.s32.totalorder %v6214, 0
      %v6217 = vxor.u32 %v6212, 2147483648
      %v6218 = vsel %vm6216, %v6204, %v6217
      %vm6219 = vcmp.eq.s32.totalorder %v6214, 2
      %v6220 = vxor.u32 %v6204, 2147483648
      %v6221 = vsel %vm6219, %v6220, %v6212
      %v6222 = vsel %vm6215, %v6218, %v6221
      %v6223 = vsel %vm6213, nan, %v6222
      %v6224 = vand.u32 2147483647, %v2338
      %vm6225 = vcmp.le.f32.partialorder %v6224, 0.7853982
      %vm6226 = vcmp.lt.s32.totalorder %v2338, 0
      %v6227 = vand.u32 %v2338, 2139095040
      %v6228 = vshrl.u32 %v6227, 23
      %v6229 = vsub.s32 %v6228, 127
      %v6230 = vand.u32 2147483647, %v2338
      %v6231 = vand.u32 %v6230, 8388607
      %v6232 = vor.u32 %v6231, 8388608
      %v6233 = vsub.s32 0, %v6232
      %v6234 = vadd.s32 %v6229, 1
      %vm6235 = vcmp.gt.s32.totalorder %v6234, 0
      %v6236 = vsel %vm6235, %v6234, 0
      %v6237 = vshrl.u32 %v6236, 5
      %v6238 = vand.u32 %v6236, 31
      %v6239 = vsub.s32 32, %v6238
      %v6240 = vshrl.u32 683565275, %v6239
      %v6241 = vshll.u32 683565275, %v6238
      %v6242 = vshrl.u32 2475754826, %v6239
      %v6243 = vor.u32 %v6241, %v6242
      %v6244 = vshll.u32 2475754826, %v6238
      %v6245 = vshrl.u32 2131351028, %v6239
      %v6246 = vor.u32 %v6244, %v6245
      %v6247 = vshll.u32 2131351028, %v6238
      %v6248 = vshrl.u32 2102212464, %v6239
      %v6249 = vor.u32 %v6247, %v6248
      %v6250 = vshll.u32 2102212464, %v6238
      %v6251 = vshrl.u32 920167782, %v6239
      %v6252 = vor.u32 %v6250, %v6251
      %v6253 = vshll.u32 920167782, %v6238
      %v6254 = vshrl.u32 1326507024, %v6239
      %v6255 = vor.u32 %v6253, %v6254
      %vm6256 = vcmp.lt.s32.totalorder %v6237, 1
      %vm6257 = vcmp.lt.s32.totalorder %v6237, 2
      %vm6258 = vcmp.lt.s32.totalorder %v6237, 3
      %vm6259 = vcmp.lt.s32.totalorder %v6237, 4
      %v6260 = vsel %vm6256, %v6240, %v6243
      %v6261 = vsel %vm6259, %v6249, 2102212464
      %v6262 = vsel %vm6258, %v6246, %v6261
      %v6263 = vsel %vm6257, %v6260, %v6262
      %v6264 = vsel %vm6256, %v6243, %v6246
      %v6265 = vsel %vm6259, %v6252, 920167782
      %v6266 = vsel %vm6258, %v6249, %v6265
      %v6267 = vsel %vm6257, %v6264, %v6266
      %v6268 = vsel %vm6256, %v6246, %v6249
      %v6269 = vsel %vm6259, %v6255, 1326507024
      %v6270 = vsel %vm6258, %v6252, %v6269
      %v6271 = vsel %vm6257, %v6268, %v6270
      %v6272 = vshll.u32 %v6232, 8
      %v6273 = vand.u32 %v6272, 65535
      %v6274 = vshrl.u32 %v6272, 16
      %v6275 = vand.u32 %v6271, 65535
      %v6276 = vshrl.u32 %v6271, 16
      %v6277 = vmul.u32 %v6273, %v6275
      %v6278 = vmul.u32 %v6273, %v6276
      %v6279 = vmul.u32 %v6274, %v6275
      %v6280 = vmul.u32 %v6274, %v6276
      %v6281 = vshll.u32 %v6278, 16
      %v6282 = vshrl.u32 %v6278, 16
      %v6283 = vshll.u32 %v6279, 16
      %v6284 = vshrl.u32 %v6279, 16
      %vm6285 = vc.u32 %v6277, %v6281
      %v6286 = vsel %vm6285, 1, 0
      %v6287 = vadd.s32 %v6277, %v6281
      %v6288 = vadd.s32 %v6280, %v6286
      %vm6289 = vc.u32 %v6287, %v6283
      %v6290 = vsel %vm6289, 1, 0
      %v6291 = vadd.s32 %v6287, %v6283
      %v6292 = vadd.s32 %v6288, %v6290
      %v6293 = vadd.s32 %v6292, %v6282
      %v6294 = vadd.s32 %v6293, %v6284
      %v6295 = vand.u32 %v6272, 65535
      %v6296 = vshrl.u32 %v6272, 16
      %v6297 = vand.u32 %v6267, 65535
      %v6298 = vshrl.u32 %v6267, 16
      %v6299 = vmul.u32 %v6295, %v6297
      %v6300 = vmul.u32 %v6295, %v6298
      %v6301 = vmul.u32 %v6296, %v6297
      %v6302 = vmul.u32 %v6296, %v6298
      %v6303 = vshll.u32 %v6300, 16
      %v6304 = vshrl.u32 %v6300, 16
      %v6305 = vshll.u32 %v6301, 16
      %v6306 = vshrl.u32 %v6301, 16
      %vm6307 = vc.u32 %v6299, %v6303
      %v6308 = vsel %vm6307, 1, 0
      %v6309 = vadd.s32 %v6299, %v6303
      %v6310 = vadd.s32 %v6302, %v6308
      %vm6311 = vc.u32 %v6309, %v6305
      %v6312 = vsel %vm6311, 1, 0
      %v6313 = vadd.s32 %v6309, %v6305
      %v6314 = vadd.s32 %v6310, %v6312
      %v6315 = vadd.s32 %v6314, %v6304
      %v6316 = vadd.s32 %v6315, %v6306
      %v6317 = vmul.u32 %v6272, %v6263
      %v6318 = vadd.s32 %v6294, %v6313
      %vm6319 = vc.u32 %v6294, %v6313
      %v6320 = vadd.s32 %v6316, 1
      %v6321 = vsel %vm6319, %v6320, %v6316
      %v6322 = vadd.s32 %v6317, %v6321
      %v6323 = vadd.s32 %v6322, 536870912
      %v6324 = vshrl.u32 %v6323, 30
      %v6325 = vshll.u32 %v6324, 30
      %v6326 = vsub.s32 %v6322, %v6325
      %vm6327 = vcmp.lt.s32.totalorder %v6326, 0
      %v6328 = vsub.s32 0, %v6326
      %v6329 = vsel %vm6327, %v6328, %v6326
      %v6330 = vclz %v6329
      %v6331 = vsub.s32 %v6330, 2
      %vm6332 = vcmp.gt.s32.totalorder 0, %v6331
      %v6333 = vsel %vm6332, 0, %v6331
      %v6334 = vsub.s32 32, %v6333
      %v6335 = vshll.u32 %v6326, %v6333
      %v6336 = vshrl.u32 %v6318, %v6334
      %v6337 = vor.u32 %v6335, %v6336
      %v6338 = vsub.s32 4294967266, %v6333
      %v6339 = vadd.s32 %v6338, 127
      %v6340 = vshll.u32 %v6339, 23
      %v6341 = vor.u32 4788187, %v6340
      %v6342 = vand.u32 2147483647, %v6341
      %v6344 = vcvt.s32.f32 %v6337
      %v6345 = vmul.f32 %v6344, %v6342
      %v6346 = vxor.u32 %v6345, 2147483648
      %v6347 = vsel %vm6226, %v6346, %v6345
      %v6348 = vsub.s32 4, %v6324
      %v6349 = vsel %vm6226, %v6348, %v6324
      %v6350 = vsel %vm6225, %v2338, %v6347
      %v6351 = vsel %vm6225, 0, %v6349
      %v6352 = vmul.f32 %v6350, %v6350
      %v6353 = vmul.f32 %v6352, -0.001358992
      %v6354 = vadd.f32 %v6353, 0.041655596
      %v6355 = vmul.f32 %v6352, %v6354
      %v6356 = vadd.f32 %v6355, -0.4999988
      %v6357 = vmul.f32 %v6352, %v6356
      %v6358 = vadd.f32 1.0, %v6357
      %v6359 = vmul.f32 %v6350, %v6350
      %v6360 = vmul.f32 %v6359, -0.00019511016
      %v6361 = vadd.f32 %v6360, 0.008332121
      %v6362 = vmul.f32 %v6359, %v6361
      %v6363 = vadd.f32 %v6362, -0.16666654
      %v6364 = vmul.f32 %v6359, %v6363
      %v6365 = vadd.f32 %v6364, 1.0
      %v6366 = vmul.f32 %v6365, %v6350
      %vm6367 = vweird.f32 %v2338
      %v6368 = vand.u32 %v6351, 3
      %vm6369 = vcmp.lt.s32.totalorder %v6368, 2
      %vm6370 = vcmp.eq.s32.totalorder %v6368, 0
      %v6371 = vxor.u32 %v6366, 2147483648
      %v6372 = vsel %vm6370, %v6358, %v6371
      %vm6373 = vcmp.eq.s32.totalorder %v6368, 2
      %v6374 = vxor.u32 %v6358, 2147483648
      %v6375 = vsel %vm6373, %v6374, %v6366
      %v6376 = vsel %vm6369, %v6372, %v6375
      %v6377 = vsel %vm6367, nan, %v6376
      %v6378 = vand.u32 2147483647, %v2341
      %vm6379 = vcmp.le.f32.partialorder %v6378, 0.7853982
      %vm6380 = vcmp.lt.s32.totalorder %v2341, 0
      %v6381 = vand.u32 %v2341, 2139095040
      %v6382 = vshrl.u32 %v6381, 23
      %v6383 = vsub.s32 %v6382, 127
      %v6384 = vand.u32 2147483647, %v2341
      %v6385 = vand.u32 %v6384, 8388607
      %v6386 = vor.u32 %v6385, 8388608
      %v6387 = vsub.s32 0, %v6386
      %v6388 = vadd.s32 %v6383, 1
      %vm6389 = vcmp.gt.s32.totalorder %v6388, 0
      %v6390 = vsel %vm6389, %v6388, 0
      %v6391 = vshrl.u32 %v6390, 5
      %v6392 = vand.u32 %v6390, 31
      %v6393 = vsub.s32 32, %v6392
      %v6394 = vshrl.u32 683565275, %v6393
      %v6395 = vshll.u32 683565275, %v6392
      %v6396 = vshrl.u32 2475754826, %v6393
      %v6397 = vor.u32 %v6395, %v6396
      %v6398 = vshll.u32 2475754826, %v6392
      %v6399 = vshrl.u32 2131351028, %v6393
      %v6400 = vor.u32 %v6398, %v6399
      %v6401 = vshll.u32 2131351028, %v6392
      %v6402 = vshrl.u32 2102212464, %v6393
      %v6403 = vor.u32 %v6401, %v6402
      %v6404 = vshll.u32 2102212464, %v6392
      %v6405 = vshrl.u32 920167782, %v6393
      %v6406 = vor.u32 %v6404, %v6405
      %v6407 = vshll.u32 920167782, %v6392
      %v6408 = vshrl.u32 1326507024, %v6393
      %v6409 = vor.u32 %v6407, %v6408
      %vm6410 = vcmp.lt.s32.totalorder %v6391, 1
      %vm6411 = vcmp.lt.s32.totalorder %v6391, 2
      %vm6412 = vcmp.lt.s32.totalorder %v6391, 3
      %vm6413 = vcmp.lt.s32.totalorder %v6391, 4
      %v6414 = vsel %vm6410, %v6394, %v6397
      %v6415 = vsel %vm6413, %v6403, 2102212464
      %v6416 = vsel %vm6412, %v6400, %v6415
      %v6417 = vsel %vm6411, %v6414, %v6416
      %v6418 = vsel %vm6410, %v6397, %v6400
      %v6419 = vsel %vm6413, %v6406, 920167782
      %v6420 = vsel %vm6412, %v6403, %v6419
      %v6421 = vsel %vm6411, %v6418, %v6420
      %v6422 = vsel %vm6410, %v6400, %v6403
      %v6423 = vsel %vm6413, %v6409, 1326507024
      %v6424 = vsel %vm6412, %v6406, %v6423
      %v6425 = vsel %vm6411, %v6422, %v6424
      %v6426 = vshll.u32 %v6386, 8
      %v6427 = vand.u32 %v6426, 65535
      %v6428 = vshrl.u32 %v6426, 16
      %v6429 = vand.u32 %v6425, 65535
      %v6430 = vshrl.u32 %v6425, 16
      %v6431 = vmul.u32 %v6427, %v6429
      %v6432 = vmul.u32 %v6427, %v6430
      %v6433 = vmul.u32 %v6428, %v6429
      %v6434 = vmul.u32 %v6428, %v6430
      %v6435 = vshll.u32 %v6432, 16
      %v6436 = vshrl.u32 %v6432, 16
      %v6437 = vshll.u32 %v6433, 16
      %v6438 = vshrl.u32 %v6433, 16
      %vm6439 = vc.u32 %v6431, %v6435
      %v6440 = vsel %vm6439, 1, 0
      %v6441 = vadd.s32 %v6431, %v6435
      %v6442 = vadd.s32 %v6434, %v6440
      %vm6443 = vc.u32 %v6441, %v6437
      %v6444 = vsel %vm6443, 1, 0
      %v6445 = vadd.s32 %v6441, %v6437
      %v6446 = vadd.s32 %v6442, %v6444
      %v6447 = vadd.s32 %v6446, %v6436
      %v6448 = vadd.s32 %v6447, %v6438
      %v6449 = vand.u32 %v6426, 65535
      %v6450 = vshrl.u32 %v6426, 16
      %v6451 = vand.u32 %v6421, 65535
      %v6452 = vshrl.u32 %v6421, 16
      %v6453 = vmul.u32 %v6449, %v6451
      %v6454 = vmul.u32 %v6449, %v6452
      %v6455 = vmul.u32 %v6450, %v6451
      %v6456 = vmul.u32 %v6450, %v6452
      %v6457 = vshll.u32 %v6454, 16
      %v6458 = vshrl.u32 %v6454, 16
      %v6459 = vshll.u32 %v6455, 16
      %v6460 = vshrl.u32 %v6455, 16
      %vm6461 = vc.u32 %v6453, %v6457
      %v6462 = vsel %vm6461, 1, 0
      %v6463 = vadd.s32 %v6453, %v6457
      %v6464 = vadd.s32 %v6456, %v6462
      %vm6465 = vc.u32 %v6463, %v6459
      %v6466 = vsel %vm6465, 1, 0
      %v6467 = vadd.s32 %v6463, %v6459
      %v6468 = vadd.s32 %v6464, %v6466
      %v6469 = vadd.s32 %v6468, %v6458
      %v6470 = vadd.s32 %v6469, %v6460
      %v6471 = vmul.u32 %v6426, %v6417
      %v6472 = vadd.s32 %v6448, %v6467
      %vm6473 = vc.u32 %v6448, %v6467
      %v6474 = vadd.s32 %v6470, 1
      %v6475 = vsel %vm6473, %v6474, %v6470
      %v6476 = vadd.s32 %v6471, %v6475
      %v6477 = vadd.s32 %v6476, 536870912
      %v6478 = vshrl.u32 %v6477, 30
      %v6479 = vshll.u32 %v6478, 30
      %v6480 = vsub.s32 %v6476, %v6479
      %vm6481 = vcmp.lt.s32.totalorder %v6480, 0
      %v6482 = vsub.s32 0, %v6480
      %v6483 = vsel %vm6481, %v6482, %v6480
      %v6484 = vclz %v6483
      %v6485 = vsub.s32 %v6484, 2
      %vm6486 = vcmp.gt.s32.totalorder 0, %v6485
      %v6487 = vsel %vm6486, 0, %v6485
      %v6488 = vsub.s32 32, %v6487
      %v6489 = vshll.u32 %v6480, %v6487
      %v6490 = vshrl.u32 %v6472, %v6488
      %v6491 = vor.u32 %v6489, %v6490
      %v6492 = vsub.s32 4294967266, %v6487
      %v6493 = vadd.s32 %v6492, 127
      %v6494 = vshll.u32 %v6493, 23
      %v6495 = vor.u32 4788187, %v6494
      %v6496 = vand.u32 2147483647, %v6495
      %v6498 = vcvt.s32.f32 %v6491
      %v6499 = vmul.f32 %v6498, %v6496
      %v6500 = vxor.u32 %v6499, 2147483648
      %v6501 = vsel %vm6380, %v6500, %v6499
      %v6502 = vsub.s32 4, %v6478
      %v6503 = vsel %vm6380, %v6502, %v6478
      %v6504 = vsel %vm6379, %v2341, %v6501
      %v6505 = vsel %vm6379, 0, %v6503
      %v6506 = vmul.f32 %v6504, %v6504
      %v6507 = vmul.f32 %v6506, -0.001358992
      %v6508 = vadd.f32 %v6507, 0.041655596
      %v6509 = vmul.f32 %v6506, %v6508
      %v6510 = vadd.f32 %v6509, -0.4999988
      %v6511 = vmul.f32 %v6506, %v6510
      %v6512 = vadd.f32 1.0, %v6511
      %v6513 = vmul.f32 %v6504, %v6504
      %v6514 = vmul.f32 %v6513, -0.00019511016
      %v6515 = vadd.f32 %v6514, 0.008332121
      %v6516 = vmul.f32 %v6513, %v6515
      %v6517 = vadd.f32 %v6516, -0.16666654
      %v6518 = vmul.f32 %v6513, %v6517
      %v6519 = vadd.f32 %v6518, 1.0
      %v6520 = vmul.f32 %v6519, %v6504
      %vm6521 = vweird.f32 %v2341
      %v6522 = vand.u32 %v6505, 3
      %vm6523 = vcmp.lt.s32.totalorder %v6522, 2
      %vm6524 = vcmp.eq.s32.totalorder %v6522, 0
      %v6525 = vxor.u32 %v6520, 2147483648
      %v6526 = vsel %vm6524, %v6512, %v6525
      %vm6527 = vcmp.eq.s32.totalorder %v6522, 2
      %v6528 = vxor.u32 %v6512, 2147483648
      %v6529 = vsel %vm6527, %v6528, %v6520
      %v6530 = vsel %vm6523, %v6526, %v6529
      %v6531 = vsel %vm6521, nan, %v6530
      %v6532 = vand.u32 2147483647, %v2344
      %vm6533 = vcmp.le.f32.partialorder %v6532, 0.7853982
      %vm6534 = vcmp.lt.s32.totalorder %v2344, 0
      %v6535 = vand.u32 %v2344, 2139095040
      %v6536 = vshrl.u32 %v6535, 23
      %v6537 = vsub.s32 %v6536, 127
      %v6538 = vand.u32 2147483647, %v2344
      %v6539 = vand.u32 %v6538, 8388607
      %v6540 = vor.u32 %v6539, 8388608
      %v6541 = vsub.s32 0, %v6540
      %v6542 = vadd.s32 %v6537, 1
      %vm6543 = vcmp.gt.s32.totalorder %v6542, 0
      %v6544 = vsel %vm6543, %v6542, 0
      %v6545 = vshrl.u32 %v6544, 5
      %v6546 = vand.u32 %v6544, 31
      %v6547 = vsub.s32 32, %v6546
      %v6548 = vshrl.u32 683565275, %v6547
      %v6549 = vshll.u32 683565275, %v6546
      %v6550 = vshrl.u32 2475754826, %v6547
      %v6551 = vor.u32 %v6549, %v6550
      %v6552 = vshll.u32 2475754826, %v6546
      %v6553 = vshrl.u32 2131351028, %v6547
      %v6554 = vor.u32 %v6552, %v6553
      %v6555 = vshll.u32 2131351028, %v6546
      %v6556 = vshrl.u32 2102212464, %v6547
      %v6557 = vor.u32 %v6555, %v6556
      %v6558 = vshll.u32 2102212464, %v6546
      %v6559 = vshrl.u32 920167782, %v6547
      %v6560 = vor.u32 %v6558, %v6559
      %v6561 = vshll.u32 920167782, %v6546
      %v6562 = vshrl.u32 1326507024, %v6547
      %v6563 = vor.u32 %v6561, %v6562
      %vm6564 = vcmp.lt.s32.totalorder %v6545, 1
      %vm6565 = vcmp.lt.s32.totalorder %v6545, 2
      %vm6566 = vcmp.lt.s32.totalorder %v6545, 3
      %vm6567 = vcmp.lt.s32.totalorder %v6545, 4
      %v6568 = vsel %vm6564, %v6548, %v6551
      %v6569 = vsel %vm6567, %v6557, 2102212464
      %v6570 = vsel %vm6566, %v6554, %v6569
      %v6571 = vsel %vm6565, %v6568, %v6570
      %v6572 = vsel %vm6564, %v6551, %v6554
      %v6573 = vsel %vm6567, %v6560, 920167782
      %v6574 = vsel %vm6566, %v6557, %v6573
      %v6575 = vsel %vm6565, %v6572, %v6574
      %v6576 = vsel %vm6564, %v6554, %v6557
      %v6577 = vsel %vm6567, %v6563, 1326507024
      %v6578 = vsel %vm6566, %v6560, %v6577
      %v6579 = vsel %vm6565, %v6576, %v6578
      %v6580 = vshll.u32 %v6540, 8
      %v6581 = vand.u32 %v6580, 65535
      %v6582 = vshrl.u32 %v6580, 16
      %v6583 = vand.u32 %v6579, 65535
      %v6584 = vshrl.u32 %v6579, 16
      %v6585 = vmul.u32 %v6581, %v6583
      %v6586 = vmul.u32 %v6581, %v6584
      %v6587 = vmul.u32 %v6582, %v6583
      %v6588 = vmul.u32 %v6582, %v6584
      %v6589 = vshll.u32 %v6586, 16
      %v6590 = vshrl.u32 %v6586, 16
      %v6591 = vshll.u32 %v6587, 16
      %v6592 = vshrl.u32 %v6587, 16
      %vm6593 = vc.u32 %v6585, %v6589
      %v6594 = vsel %vm6593, 1, 0
      %v6595 = vadd.s32 %v6585, %v6589
      %v6596 = vadd.s32 %v6588, %v6594
      %vm6597 = vc.u32 %v6595, %v6591
      %v6598 = vsel %vm6597, 1, 0
      %v6599 = vadd.s32 %v6595, %v6591
      %v6600 = vadd.s32 %v6596, %v6598
      %v6601 = vadd.s32 %v6600, %v6590
      %v6602 = vadd.s32 %v6601, %v6592
      %v6603 = vand.u32 %v6580, 65535
      %v6604 = vshrl.u32 %v6580, 16
      %v6605 = vand.u32 %v6575, 65535
      %v6606 = vshrl.u32 %v6575, 16
      %v6607 = vmul.u32 %v6603, %v6605
      %v6608 = vmul.u32 %v6603, %v6606
      %v6609 = vmul.u32 %v6604, %v6605
      %v6610 = vmul.u32 %v6604, %v6606
      %v6611 = vshll.u32 %v6608, 16
      %v6612 = vshrl.u32 %v6608, 16
      %v6613 = vshll.u32 %v6609, 16
      %v6614 = vshrl.u32 %v6609, 16
      %vm6615 = vc.u32 %v6607, %v6611
      %v6616 = vsel %vm6615, 1, 0
      %v6617 = vadd.s32 %v6607, %v6611
      %v6618 = vadd.s32 %v6610, %v6616
      %vm6619 = vc.u32 %v6617, %v6613
      %v6620 = vsel %vm6619, 1, 0
      %v6621 = vadd.s32 %v6617, %v6613
      %v6622 = vadd.s32 %v6618, %v6620
      %v6623 = vadd.s32 %v6622, %v6612
      %v6624 = vadd.s32 %v6623, %v6614
      %v6625 = vmul.u32 %v6580, %v6571
      %v6626 = vadd.s32 %v6602, %v6621
      %vm6627 = vc.u32 %v6602, %v6621
      %v6628 = vadd.s32 %v6624, 1
      %v6629 = vsel %vm6627, %v6628, %v6624
      %v6630 = vadd.s32 %v6625, %v6629
      %v6631 = vadd.s32 %v6630, 536870912
      %v6632 = vshrl.u32 %v6631, 30
      %v6633 = vshll.u32 %v6632, 30
      %v6634 = vsub.s32 %v6630, %v6633
      %vm6635 = vcmp.lt.s32.totalorder %v6634, 0
      %v6636 = vsub.s32 0, %v6634
      %v6637 = vsel %vm6635, %v6636, %v6634
      %v6638 = vclz %v6637
      %v6639 = vsub.s32 %v6638, 2
      %vm6640 = vcmp.gt.s32.totalorder 0, %v6639
      %v6641 = vsel %vm6640, 0, %v6639
      %v6642 = vsub.s32 32, %v6641
      %v6643 = vshll.u32 %v6634, %v6641
      %v6644 = vshrl.u32 %v6626, %v6642
      %v6645 = vor.u32 %v6643, %v6644
      %v6646 = vsub.s32 4294967266, %v6641
      %v6647 = vadd.s32 %v6646, 127
      %v6648 = vshll.u32 %v6647, 23
      %v6649 = vor.u32 4788187, %v6648
      %v6650 = vand.u32 2147483647, %v6649
      %v6652 = vcvt.s32.f32 %v6645
      %v6653 = vmul.f32 %v6652, %v6650
      %v6654 = vxor.u32 %v6653, 2147483648
      %v6655 = vsel %vm6534, %v6654, %v6653
      %v6656 = vsub.s32 4, %v6632
      %v6657 = vsel %vm6534, %v6656, %v6632
      %v6658 = vsel %vm6533, %v2344, %v6655
      %v6659 = vsel %vm6533, 0, %v6657
      %v6660 = vmul.f32 %v6658, %v6658
      %v6661 = vmul.f32 %v6660, -0.001358992
      %v6662 = vadd.f32 %v6661, 0.041655596
      %v6663 = vmul.f32 %v6660, %v6662
      %v6664 = vadd.f32 %v6663, -0.4999988
      %v6665 = vmul.f32 %v6660, %v6664
      %v6666 = vadd.f32 1.0, %v6665
      %v6667 = vmul.f32 %v6658, %v6658
      %v6668 = vmul.f32 %v6667, -0.00019511016
      %v6669 = vadd.f32 %v6668, 0.008332121
      %v6670 = vmul.f32 %v6667, %v6669
      %v6671 = vadd.f32 %v6670, -0.16666654
      %v6672 = vmul.f32 %v6667, %v6671
      %v6673 = vadd.f32 %v6672, 1.0
      %v6674 = vmul.f32 %v6673, %v6658
      %vm6675 = vweird.f32 %v2344
      %v6676 = vand.u32 %v6659, 3
      %vm6677 = vcmp.lt.s32.totalorder %v6676, 2
      %vm6678 = vcmp.eq.s32.totalorder %v6676, 0
      %v6679 = vxor.u32 %v6674, 2147483648
      %v6680 = vsel %vm6678, %v6666, %v6679
      %vm6681 = vcmp.eq.s32.totalorder %v6676, 2
      %v6682 = vxor.u32 %v6666, 2147483648
      %v6683 = vsel %vm6681, %v6682, %v6674
      %v6684 = vsel %vm6677, %v6680, %v6683
      %v6685 = vsel %vm6675, nan, %v6684
      %v6686 = vand.u32 2147483647, %v2347
      %vm6687 = vcmp.le.f32.partialorder %v6686, 0.7853982
      %vm6688 = vcmp.lt.s32.totalorder %v2347, 0
      %v6689 = vand.u32 %v2347, 2139095040
      %v6690 = vshrl.u32 %v6689, 23
      %v6691 = vsub.s32 %v6690, 127
      %v6692 = vand.u32 2147483647, %v2347
      %v6693 = vand.u32 %v6692, 8388607
      %v6694 = vor.u32 %v6693, 8388608
      %v6695 = vsub.s32 0, %v6694
      %v6696 = vadd.s32 %v6691, 1
      %vm6697 = vcmp.gt.s32.totalorder %v6696, 0
      %v6698 = vsel %vm6697, %v6696, 0
      %v6699 = vshrl.u32 %v6698, 5
      %v6700 = vand.u32 %v6698, 31
      %v6701 = vsub.s32 32, %v6700
      %v6702 = vshrl.u32 683565275, %v6701
      %v6703 = vshll.u32 683565275, %v6700
      %v6704 = vshrl.u32 2475754826, %v6701
      %v6705 = vor.u32 %v6703, %v6704
      %v6706 = vshll.u32 2475754826, %v6700
      %v6707 = vshrl.u32 2131351028, %v6701
      %v6708 = vor.u32 %v6706, %v6707
      %v6709 = vshll.u32 2131351028, %v6700
      %v6710 = vshrl.u32 2102212464, %v6701
      %v6711 = vor.u32 %v6709, %v6710
      %v6712 = vshll.u32 2102212464, %v6700
      %v6713 = vshrl.u32 920167782, %v6701
      %v6714 = vor.u32 %v6712, %v6713
      %v6715 = vshll.u32 920167782, %v6700
      %v6716 = vshrl.u32 1326507024, %v6701
      %v6717 = vor.u32 %v6715, %v6716
      %vm6718 = vcmp.lt.s32.totalorder %v6699, 1
      %vm6719 = vcmp.lt.s32.totalorder %v6699, 2
      %vm6720 = vcmp.lt.s32.totalorder %v6699, 3
      %vm6721 = vcmp.lt.s32.totalorder %v6699, 4
      %v6722 = vsel %vm6718, %v6702, %v6705
      %v6723 = vsel %vm6721, %v6711, 2102212464
      %v6724 = vsel %vm6720, %v6708, %v6723
      %v6725 = vsel %vm6719, %v6722, %v6724
      %v6726 = vsel %vm6718, %v6705, %v6708
      %v6727 = vsel %vm6721, %v6714, 920167782
      %v6728 = vsel %vm6720, %v6711, %v6727
      %v6729 = vsel %vm6719, %v6726, %v6728
      %v6730 = vsel %vm6718, %v6708, %v6711
      %v6731 = vsel %vm6721, %v6717, 1326507024
      %v6732 = vsel %vm6720, %v6714, %v6731
      %v6733 = vsel %vm6719, %v6730, %v6732
      %v6734 = vshll.u32 %v6694, 8
      %v6735 = vand.u32 %v6734, 65535
      %v6736 = vshrl.u32 %v6734, 16
      %v6737 = vand.u32 %v6733, 65535
      %v6738 = vshrl.u32 %v6733, 16
      %v6739 = vmul.u32 %v6735, %v6737
      %v6740 = vmul.u32 %v6735, %v6738
      %v6741 = vmul.u32 %v6736, %v6737
      %v6742 = vmul.u32 %v6736, %v6738
      %v6743 = vshll.u32 %v6740, 16
      %v6744 = vshrl.u32 %v6740, 16
      %v6745 = vshll.u32 %v6741, 16
      %v6746 = vshrl.u32 %v6741, 16
      %vm6747 = vc.u32 %v6739, %v6743
      %v6748 = vsel %vm6747, 1, 0
      %v6749 = vadd.s32 %v6739, %v6743
      %v6750 = vadd.s32 %v6742, %v6748
      %vm6751 = vc.u32 %v6749, %v6745
      %v6752 = vsel %vm6751, 1, 0
      %v6753 = vadd.s32 %v6749, %v6745
      %v6754 = vadd.s32 %v6750, %v6752
      %v6755 = vadd.s32 %v6754, %v6744
      %v6756 = vadd.s32 %v6755, %v6746
      %v6757 = vand.u32 %v6734, 65535
      %v6758 = vshrl.u32 %v6734, 16
      %v6759 = vand.u32 %v6729, 65535
      %v6760 = vshrl.u32 %v6729, 16
      %v6761 = vmul.u32 %v6757, %v6759
      %v6762 = vmul.u32 %v6757, %v6760
      %v6763 = vmul.u32 %v6758, %v6759
      %v6764 = vmul.u32 %v6758, %v6760
      %v6765 = vshll.u32 %v6762, 16
      %v6766 = vshrl.u32 %v6762, 16
      %v6767 = vshll.u32 %v6763, 16
      %v6768 = vshrl.u32 %v6763, 16
      %vm6769 = vc.u32 %v6761, %v6765
      %v6770 = vsel %vm6769, 1, 0
      %v6771 = vadd.s32 %v6761, %v6765
      %v6772 = vadd.s32 %v6764, %v6770
      %vm6773 = vc.u32 %v6771, %v6767
      %v6774 = vsel %vm6773, 1, 0
      %v6775 = vadd.s32 %v6771, %v6767
      %v6776 = vadd.s32 %v6772, %v6774
      %v6777 = vadd.s32 %v6776, %v6766
      %v6778 = vadd.s32 %v6777, %v6768
      %v6779 = vmul.u32 %v6734, %v6725
      %v6780 = vadd.s32 %v6756, %v6775
      %vm6781 = vc.u32 %v6756, %v6775
      %v6782 = vadd.s32 %v6778, 1
      %v6783 = vsel %vm6781, %v6782, %v6778
      %v6784 = vadd.s32 %v6779, %v6783
      %v6785 = vadd.s32 %v6784, 536870912
      %v6786 = vshrl.u32 %v6785, 30
      %v6787 = vshll.u32 %v6786, 30
      %v6788 = vsub.s32 %v6784, %v6787
      %vm6789 = vcmp.lt.s32.totalorder %v6788, 0
      %v6790 = vsub.s32 0, %v6788
      %v6791 = vsel %vm6789, %v6790, %v6788
      %v6792 = vclz %v6791
      %v6793 = vsub.s32 %v6792, 2
      %vm6794 = vcmp.gt.s32.totalorder 0, %v6793
      %v6795 = vsel %vm6794, 0, %v6793
      %v6796 = vsub.s32 32, %v6795
      %v6797 = vshll.u32 %v6788, %v6795
      %v6798 = vshrl.u32 %v6780, %v6796
      %v6799 = vor.u32 %v6797, %v6798
      %v6800 = vsub.s32 4294967266, %v6795
      %v6801 = vadd.s32 %v6800, 127
      %v6802 = vshll.u32 %v6801, 23
      %v6803 = vor.u32 4788187, %v6802
      %v6804 = vand.u32 2147483647, %v6803
      %v6806 = vcvt.s32.f32 %v6799
      %v6807 = vmul.f32 %v6806, %v6804
      %v6808 = vxor.u32 %v6807, 2147483648
      %v6809 = vsel %vm6688, %v6808, %v6807
      %v6810 = vsub.s32 4, %v6786
      %v6811 = vsel %vm6688, %v6810, %v6786
      %v6812 = vsel %vm6687, %v2347, %v6809
      %v6813 = vsel %vm6687, 0, %v6811
      %v6814 = vmul.f32 %v6812, %v6812
      %v6815 = vmul.f32 %v6814, -0.001358992
      %v6816 = vadd.f32 %v6815, 0.041655596
      %v6817 = vmul.f32 %v6814, %v6816
      %v6818 = vadd.f32 %v6817, -0.4999988
      %v6819 = vmul.f32 %v6814, %v6818
      %v6820 = vadd.f32 1.0, %v6819
      %v6821 = vmul.f32 %v6812, %v6812
      %v6822 = vmul.f32 %v6821, -0.00019511016
      %v6823 = vadd.f32 %v6822, 0.008332121
      %v6824 = vmul.f32 %v6821, %v6823
      %v6825 = vadd.f32 %v6824, -0.16666654
      %v6826 = vmul.f32 %v6821, %v6825
      %v6827 = vadd.f32 %v6826, 1.0
      %v6828 = vmul.f32 %v6827, %v6812
      %vm6829 = vweird.f32 %v2347
      %v6830 = vand.u32 %v6813, 3
      %vm6831 = vcmp.lt.s32.totalorder %v6830, 2
      %vm6832 = vcmp.eq.s32.totalorder %v6830, 0
      %v6833 = vxor.u32 %v6828, 2147483648
      %v6834 = vsel %vm6832, %v6820, %v6833
      %vm6835 = vcmp.eq.s32.totalorder %v6830, 2
      %v6836 = vxor.u32 %v6820, 2147483648
      %v6837 = vsel %vm6835, %v6836, %v6828
      %v6838 = vsel %vm6831, %v6834, %v6837
      %v6839 = vsel %vm6829, nan, %v6838
      %v6840 = vand.u32 2147483647, %v2350
      %vm6841 = vcmp.le.f32.partialorder %v6840, 0.7853982
      %vm6842 = vcmp.lt.s32.totalorder %v2350, 0
      %v6843 = vand.u32 %v2350, 2139095040
      %v6844 = vshrl.u32 %v6843, 23
      %v6845 = vsub.s32 %v6844, 127
      %v6846 = vand.u32 2147483647, %v2350
      %v6847 = vand.u32 %v6846, 8388607
      %v6848 = vor.u32 %v6847, 8388608
      %v6849 = vsub.s32 0, %v6848
      %v6850 = vadd.s32 %v6845, 1
      %vm6851 = vcmp.gt.s32.totalorder %v6850, 0
      %v6852 = vsel %vm6851, %v6850, 0
      %v6853 = vshrl.u32 %v6852, 5
      %v6854 = vand.u32 %v6852, 31
      %v6855 = vsub.s32 32, %v6854
      %v6856 = vshrl.u32 683565275, %v6855
      %v6857 = vshll.u32 683565275, %v6854
      %v6858 = vshrl.u32 2475754826, %v6855
      %v6859 = vor.u32 %v6857, %v6858
      %v6860 = vshll.u32 2475754826, %v6854
      %v6861 = vshrl.u32 2131351028, %v6855
      %v6862 = vor.u32 %v6860, %v6861
      %v6863 = vshll.u32 2131351028, %v6854
      %v6864 = vshrl.u32 2102212464, %v6855
      %v6865 = vor.u32 %v6863, %v6864
      %v6866 = vshll.u32 2102212464, %v6854
      %v6867 = vshrl.u32 920167782, %v6855
      %v6868 = vor.u32 %v6866, %v6867
      %v6869 = vshll.u32 920167782, %v6854
      %v6870 = vshrl.u32 1326507024, %v6855
      %v6871 = vor.u32 %v6869, %v6870
      %vm6872 = vcmp.lt.s32.totalorder %v6853, 1
      %vm6873 = vcmp.lt.s32.totalorder %v6853, 2
      %vm6874 = vcmp.lt.s32.totalorder %v6853, 3
      %vm6875 = vcmp.lt.s32.totalorder %v6853, 4
      %v6876 = vsel %vm6872, %v6856, %v6859
      %v6877 = vsel %vm6875, %v6865, 2102212464
      %v6878 = vsel %vm6874, %v6862, %v6877
      %v6879 = vsel %vm6873, %v6876, %v6878
      %v6880 = vsel %vm6872, %v6859, %v6862
      %v6881 = vsel %vm6875, %v6868, 920167782
      %v6882 = vsel %vm6874, %v6865, %v6881
      %v6883 = vsel %vm6873, %v6880, %v6882
      %v6884 = vsel %vm6872, %v6862, %v6865
      %v6885 = vsel %vm6875, %v6871, 1326507024
      %v6886 = vsel %vm6874, %v6868, %v6885
      %v6887 = vsel %vm6873, %v6884, %v6886
      %v6888 = vshll.u32 %v6848, 8
      %v6889 = vand.u32 %v6888, 65535
      %v6890 = vshrl.u32 %v6888, 16
      %v6891 = vand.u32 %v6887, 65535
      %v6892 = vshrl.u32 %v6887, 16
      %v6893 = vmul.u32 %v6889, %v6891
      %v6894 = vmul.u32 %v6889, %v6892
      %v6895 = vmul.u32 %v6890, %v6891
      %v6896 = vmul.u32 %v6890, %v6892
      %v6897 = vshll.u32 %v6894, 16
      %v6898 = vshrl.u32 %v6894, 16
      %v6899 = vshll.u32 %v6895, 16
      %v6900 = vshrl.u32 %v6895, 16
      %vm6901 = vc.u32 %v6893, %v6897
      %v6902 = vsel %vm6901, 1, 0
      %v6903 = vadd.s32 %v6893, %v6897
      %v6904 = vadd.s32 %v6896, %v6902
      %vm6905 = vc.u32 %v6903, %v6899
      %v6906 = vsel %vm6905, 1, 0
      %v6907 = vadd.s32 %v6903, %v6899
      %v6908 = vadd.s32 %v6904, %v6906
      %v6909 = vadd.s32 %v6908, %v6898
      %v6910 = vadd.s32 %v6909, %v6900
      %v6911 = vand.u32 %v6888, 65535
      %v6912 = vshrl.u32 %v6888, 16
      %v6913 = vand.u32 %v6883, 65535
      %v6914 = vshrl.u32 %v6883, 16
      %v6915 = vmul.u32 %v6911, %v6913
      %v6916 = vmul.u32 %v6911, %v6914
      %v6917 = vmul.u32 %v6912, %v6913
      %v6918 = vmul.u32 %v6912, %v6914
      %v6919 = vshll.u32 %v6916, 16
      %v6920 = vshrl.u32 %v6916, 16
      %v6921 = vshll.u32 %v6917, 16
      %v6922 = vshrl.u32 %v6917, 16
      %vm6923 = vc.u32 %v6915, %v6919
      %v6924 = vsel %vm6923, 1, 0
      %v6925 = vadd.s32 %v6915, %v6919
      %v6926 = vadd.s32 %v6918, %v6924
      %vm6927 = vc.u32 %v6925, %v6921
      %v6928 = vsel %vm6927, 1, 0
      %v6929 = vadd.s32 %v6925, %v6921
      %v6930 = vadd.s32 %v6926, %v6928
      %v6931 = vadd.s32 %v6930, %v6920
      %v6932 = vadd.s32 %v6931, %v6922
      %v6933 = vmul.u32 %v6888, %v6879
      %v6934 = vadd.s32 %v6910, %v6929
      %vm6935 = vc.u32 %v6910, %v6929
      %v6936 = vadd.s32 %v6932, 1
      %v6937 = vsel %vm6935, %v6936, %v6932
      %v6938 = vadd.s32 %v6933, %v6937
      %v6939 = vadd.s32 %v6938, 536870912
      %v6940 = vshrl.u32 %v6939, 30
      %v6941 = vshll.u32 %v6940, 30
      %v6942 = vsub.s32 %v6938, %v6941
      %vm6943 = vcmp.lt.s32.totalorder %v6942, 0
      %v6944 = vsub.s32 0, %v6942
      %v6945 = vsel %vm6943, %v6944, %v6942
      %v6946 = vclz %v6945
      %v6947 = vsub.s32 %v6946, 2
      %vm6948 = vcmp.gt.s32.totalorder 0, %v6947
      %v6949 = vsel %vm6948, 0, %v6947
      %v6950 = vsub.s32 32, %v6949
      %v6951 = vshll.u32 %v6942, %v6949
      %v6952 = vshrl.u32 %v6934, %v6950
      %v6953 = vor.u32 %v6951, %v6952
      %v6954 = vsub.s32 4294967266, %v6949
      %v6955 = vadd.s32 %v6954, 127
      %v6956 = vshll.u32 %v6955, 23
      %v6957 = vor.u32 4788187, %v6956
      %v6958 = vand.u32 2147483647, %v6957
      %v6960 = vcvt.s32.f32 %v6953
      %v6961 = vmul.f32 %v6960, %v6958
      %v6962 = vxor.u32 %v6961, 2147483648
      %v6963 = vsel %vm6842, %v6962, %v6961
      %v6964 = vsub.s32 4, %v6940
      %v6965 = vsel %vm6842, %v6964, %v6940
      %v6966 = vsel %vm6841, %v2350, %v6963
      %v6967 = vsel %vm6841, 0, %v6965
      %v6968 = vmul.f32 %v6966, %v6966
      %v6969 = vmul.f32 %v6968, -0.001358992
      %v6970 = vadd.f32 %v6969, 0.041655596
      %v6971 = vmul.f32 %v6968, %v6970
      %v6972 = vadd.f32 %v6971, -0.4999988
      %v6973 = vmul.f32 %v6968, %v6972
      %v6974 = vadd.f32 1.0, %v6973
      %v6975 = vmul.f32 %v6966, %v6966
      %v6976 = vmul.f32 %v6975, -0.00019511016
      %v6977 = vadd.f32 %v6976, 0.008332121
      %v6978 = vmul.f32 %v6975, %v6977
      %v6979 = vadd.f32 %v6978, -0.16666654
      %v6980 = vmul.f32 %v6975, %v6979
      %v6981 = vadd.f32 %v6980, 1.0
      %v6982 = vmul.f32 %v6981, %v6966
      %vm6983 = vweird.f32 %v2350
      %v6984 = vand.u32 %v6967, 3
      %vm6985 = vcmp.lt.s32.totalorder %v6984, 2
      %vm6986 = vcmp.eq.s32.totalorder %v6984, 0
      %v6987 = vxor.u32 %v6982, 2147483648
      %v6988 = vsel %vm6986, %v6974, %v6987
      %vm6989 = vcmp.eq.s32.totalorder %v6984, 2
      %v6990 = vxor.u32 %v6974, 2147483648
      %v6991 = vsel %vm6989, %v6990, %v6982
      %v6992 = vsel %vm6985, %v6988, %v6991
      %v6993 = vsel %vm6983, nan, %v6992
      %v6994 = vand.u32 2147483647, %v2353
      %vm6995 = vcmp.le.f32.partialorder %v6994, 0.7853982
      %vm6996 = vcmp.lt.s32.totalorder %v2353, 0
      %v6997 = vand.u32 %v2353, 2139095040
      %v6998 = vshrl.u32 %v6997, 23
      %v6999 = vsub.s32 %v6998, 127
      %v7000 = vand.u32 2147483647, %v2353
      %v7001 = vand.u32 %v7000, 8388607
      %v7002 = vor.u32 %v7001, 8388608
      %v7003 = vsub.s32 0, %v7002
      %v7004 = vadd.s32 %v6999, 1
      %vm7005 = vcmp.gt.s32.totalorder %v7004, 0
      %v7006 = vsel %vm7005, %v7004, 0
      %v7007 = vshrl.u32 %v7006, 5
      %v7008 = vand.u32 %v7006, 31
      %v7009 = vsub.s32 32, %v7008
      %v7010 = vshrl.u32 683565275, %v7009
      %v7011 = vshll.u32 683565275, %v7008
      %v7012 = vshrl.u32 2475754826, %v7009
      %v7013 = vor.u32 %v7011, %v7012
      %v7014 = vshll.u32 2475754826, %v7008
      %v7015 = vshrl.u32 2131351028, %v7009
      %v7016 = vor.u32 %v7014, %v7015
      %v7017 = vshll.u32 2131351028, %v7008
      %v7018 = vshrl.u32 2102212464, %v7009
      %v7019 = vor.u32 %v7017, %v7018
      %v7020 = vshll.u32 2102212464, %v7008
      %v7021 = vshrl.u32 920167782, %v7009
      %v7022 = vor.u32 %v7020, %v7021
      %v7023 = vshll.u32 920167782, %v7008
      %v7024 = vshrl.u32 1326507024, %v7009
      %v7025 = vor.u32 %v7023, %v7024
      %vm7026 = vcmp.lt.s32.totalorder %v7007, 1
      %vm7027 = vcmp.lt.s32.totalorder %v7007, 2
      %vm7028 = vcmp.lt.s32.totalorder %v7007, 3
      %vm7029 = vcmp.lt.s32.totalorder %v7007, 4
      %v7030 = vsel %vm7026, %v7010, %v7013
      %v7031 = vsel %vm7029, %v7019, 2102212464
      %v7032 = vsel %vm7028, %v7016, %v7031
      %v7033 = vsel %vm7027, %v7030, %v7032
      %v7034 = vsel %vm7026, %v7013, %v7016
      %v7035 = vsel %vm7029, %v7022, 920167782
      %v7036 = vsel %vm7028, %v7019, %v7035
      %v7037 = vsel %vm7027, %v7034, %v7036
      %v7038 = vsel %vm7026, %v7016, %v7019
      %v7039 = vsel %vm7029, %v7025, 1326507024
      %v7040 = vsel %vm7028, %v7022, %v7039
      %v7041 = vsel %vm7027, %v7038, %v7040
      %v7042 = vshll.u32 %v7002, 8
      %v7043 = vand.u32 %v7042, 65535
      %v7044 = vshrl.u32 %v7042, 16
      %v7045 = vand.u32 %v7041, 65535
      %v7046 = vshrl.u32 %v7041, 16
      %v7047 = vmul.u32 %v7043, %v7045
      %v7048 = vmul.u32 %v7043, %v7046
      %v7049 = vmul.u32 %v7044, %v7045
      %v7050 = vmul.u32 %v7044, %v7046
      %v7051 = vshll.u32 %v7048, 16
      %v7052 = vshrl.u32 %v7048, 16
      %v7053 = vshll.u32 %v7049, 16
      %v7054 = vshrl.u32 %v7049, 16
      %vm7055 = vc.u32 %v7047, %v7051
      %v7056 = vsel %vm7055, 1, 0
      %v7057 = vadd.s32 %v7047, %v7051
      %v7058 = vadd.s32 %v7050, %v7056
      %vm7059 = vc.u32 %v7057, %v7053
      %v7060 = vsel %vm7059, 1, 0
      %v7061 = vadd.s32 %v7057, %v7053
      %v7062 = vadd.s32 %v7058, %v7060
      %v7063 = vadd.s32 %v7062, %v7052
      %v7064 = vadd.s32 %v7063, %v7054
      %v7065 = vand.u32 %v7042, 65535
      %v7066 = vshrl.u32 %v7042, 16
      %v7067 = vand.u32 %v7037, 65535
      %v7068 = vshrl.u32 %v7037, 16
      %v7069 = vmul.u32 %v7065, %v7067
      %v7070 = vmul.u32 %v7065, %v7068
      %v7071 = vmul.u32 %v7066, %v7067
      %v7072 = vmul.u32 %v7066, %v7068
      %v7073 = vshll.u32 %v7070, 16
      %v7074 = vshrl.u32 %v7070, 16
      %v7075 = vshll.u32 %v7071, 16
      %v7076 = vshrl.u32 %v7071, 16
      %vm7077 = vc.u32 %v7069, %v7073
      %v7078 = vsel %vm7077, 1, 0
      %v7079 = vadd.s32 %v7069, %v7073
      %v7080 = vadd.s32 %v7072, %v7078
      %vm7081 = vc.u32 %v7079, %v7075
      %v7082 = vsel %vm7081, 1, 0
      %v7083 = vadd.s32 %v7079, %v7075
      %v7084 = vadd.s32 %v7080, %v7082
      %v7085 = vadd.s32 %v7084, %v7074
      %v7086 = vadd.s32 %v7085, %v7076
      %v7087 = vmul.u32 %v7042, %v7033
      %v7088 = vadd.s32 %v7064, %v7083
      %vm7089 = vc.u32 %v7064, %v7083
      %v7090 = vadd.s32 %v7086, 1
      %v7091 = vsel %vm7089, %v7090, %v7086
      %v7092 = vadd.s32 %v7087, %v7091
      %v7093 = vadd.s32 %v7092, 536870912
      %v7094 = vshrl.u32 %v7093, 30
      %v7095 = vshll.u32 %v7094, 30
      %v7096 = vsub.s32 %v7092, %v7095
      %vm7097 = vcmp.lt.s32.totalorder %v7096, 0
      %v7098 = vsub.s32 0, %v7096
      %v7099 = vsel %vm7097, %v7098, %v7096
      %v7100 = vclz %v7099
      %v7101 = vsub.s32 %v7100, 2
      %vm7102 = vcmp.gt.s32.totalorder 0, %v7101
      %v7103 = vsel %vm7102, 0, %v7101
      %v7104 = vsub.s32 32, %v7103
      %v7105 = vshll.u32 %v7096, %v7103
      %v7106 = vshrl.u32 %v7088, %v7104
      %v7107 = vor.u32 %v7105, %v7106
      %v7108 = vsub.s32 4294967266, %v7103
      %v7109 = vadd.s32 %v7108, 127
      %v7110 = vshll.u32 %v7109, 23
      %v7111 = vor.u32 4788187, %v7110
      %v7112 = vand.u32 2147483647, %v7111
      %v7114 = vcvt.s32.f32 %v7107
      %v7115 = vmul.f32 %v7114, %v7112
      %v7116 = vxor.u32 %v7115, 2147483648
      %v7117 = vsel %vm6996, %v7116, %v7115
      %v7118 = vsub.s32 4, %v7094
      %v7119 = vsel %vm6996, %v7118, %v7094
      %v7120 = vsel %vm6995, %v2353, %v7117
      %v7121 = vsel %vm6995, 0, %v7119
      %v7122 = vmul.f32 %v7120, %v7120
      %v7123 = vmul.f32 %v7122, -0.001358992
      %v7124 = vadd.f32 %v7123, 0.041655596
      %v7125 = vmul.f32 %v7122, %v7124
      %v7126 = vadd.f32 %v7125, -0.4999988
      %v7127 = vmul.f32 %v7122, %v7126
      %v7128 = vadd.f32 1.0, %v7127
      %v7129 = vmul.f32 %v7120, %v7120
      %v7130 = vmul.f32 %v7129, -0.00019511016
      %v7131 = vadd.f32 %v7130, 0.008332121
      %v7132 = vmul.f32 %v7129, %v7131
      %v7133 = vadd.f32 %v7132, -0.16666654
      %v7134 = vmul.f32 %v7129, %v7133
      %v7135 = vadd.f32 %v7134, 1.0
      %v7136 = vmul.f32 %v7135, %v7120
      %vm7137 = vweird.f32 %v2353
      %v7138 = vand.u32 %v7121, 3
      %vm7139 = vcmp.lt.s32.totalorder %v7138, 2
      %vm7140 = vcmp.eq.s32.totalorder %v7138, 0
      %v7141 = vxor.u32 %v7136, 2147483648
      %v7142 = vsel %vm7140, %v7128, %v7141
      %vm7143 = vcmp.eq.s32.totalorder %v7138, 2
      %v7144 = vxor.u32 %v7128, 2147483648
      %v7145 = vsel %vm7143, %v7144, %v7136
      %v7146 = vsel %vm7139, %v7142, %v7145
      %v7147 = vsel %vm7137, nan, %v7146
      %v7148 = vand.u32 2147483647, %v2356
      %vm7149 = vcmp.le.f32.partialorder %v7148, 0.7853982
      %vm7150 = vcmp.lt.s32.totalorder %v2356, 0
      %v7151 = vand.u32 %v2356, 2139095040
      %v7152 = vshrl.u32 %v7151, 23
      %v7153 = vsub.s32 %v7152, 127
      %v7154 = vand.u32 2147483647, %v2356
      %v7155 = vand.u32 %v7154, 8388607
      %v7156 = vor.u32 %v7155, 8388608
      %v7157 = vsub.s32 0, %v7156
      %v7158 = vadd.s32 %v7153, 1
      %vm7159 = vcmp.gt.s32.totalorder %v7158, 0
      %v7160 = vsel %vm7159, %v7158, 0
      %v7161 = vshrl.u32 %v7160, 5
      %v7162 = vand.u32 %v7160, 31
      %v7163 = vsub.s32 32, %v7162
      %v7164 = vshrl.u32 683565275, %v7163
      %v7165 = vshll.u32 683565275, %v7162
      %v7166 = vshrl.u32 2475754826, %v7163
      %v7167 = vor.u32 %v7165, %v7166
      %v7168 = vshll.u32 2475754826, %v7162
      %v7169 = vshrl.u32 2131351028, %v7163
      %v7170 = vor.u32 %v7168, %v7169
      %v7171 = vshll.u32 2131351028, %v7162
      %v7172 = vshrl.u32 2102212464, %v7163
      %v7173 = vor.u32 %v7171, %v7172
      %v7174 = vshll.u32 2102212464, %v7162
      %v7175 = vshrl.u32 920167782, %v7163
      %v7176 = vor.u32 %v7174, %v7175
      %v7177 = vshll.u32 920167782, %v7162
      %v7178 = vshrl.u32 1326507024, %v7163
      %v7179 = vor.u32 %v7177, %v7178
      %vm7180 = vcmp.lt.s32.totalorder %v7161, 1
      %vm7181 = vcmp.lt.s32.totalorder %v7161, 2
      %vm7182 = vcmp.lt.s32.totalorder %v7161, 3
      %vm7183 = vcmp.lt.s32.totalorder %v7161, 4
      %v7184 = vsel %vm7180, %v7164, %v7167
      %v7185 = vsel %vm7183, %v7173, 2102212464
      %v7186 = vsel %vm7182, %v7170, %v7185
      %v7187 = vsel %vm7181, %v7184, %v7186
      %v7188 = vsel %vm7180, %v7167, %v7170
      %v7189 = vsel %vm7183, %v7176, 920167782
      %v7190 = vsel %vm7182, %v7173, %v7189
      %v7191 = vsel %vm7181, %v7188, %v7190
      %v7192 = vsel %vm7180, %v7170, %v7173
      %v7193 = vsel %vm7183, %v7179, 1326507024
      %v7194 = vsel %vm7182, %v7176, %v7193
      %v7195 = vsel %vm7181, %v7192, %v7194
      %v7196 = vshll.u32 %v7156, 8
      %v7197 = vand.u32 %v7196, 65535
      %v7198 = vshrl.u32 %v7196, 16
      %v7199 = vand.u32 %v7195, 65535
      %v7200 = vshrl.u32 %v7195, 16
      %v7201 = vmul.u32 %v7197, %v7199
      %v7202 = vmul.u32 %v7197, %v7200
      %v7203 = vmul.u32 %v7198, %v7199
      %v7204 = vmul.u32 %v7198, %v7200
      %v7205 = vshll.u32 %v7202, 16
      %v7206 = vshrl.u32 %v7202, 16
      %v7207 = vshll.u32 %v7203, 16
      %v7208 = vshrl.u32 %v7203, 16
      %vm7209 = vc.u32 %v7201, %v7205
      %v7210 = vsel %vm7209, 1, 0
      %v7211 = vadd.s32 %v7201, %v7205
      %v7212 = vadd.s32 %v7204, %v7210
      %vm7213 = vc.u32 %v7211, %v7207
      %v7214 = vsel %vm7213, 1, 0
      %v7215 = vadd.s32 %v7211, %v7207
      %v7216 = vadd.s32 %v7212, %v7214
      %v7217 = vadd.s32 %v7216, %v7206
      %v7218 = vadd.s32 %v7217, %v7208
      %v7219 = vand.u32 %v7196, 65535
      %v7220 = vshrl.u32 %v7196, 16
      %v7221 = vand.u32 %v7191, 65535
      %v7222 = vshrl.u32 %v7191, 16
      %v7223 = vmul.u32 %v7219, %v7221
      %v7224 = vmul.u32 %v7219, %v7222
      %v7225 = vmul.u32 %v7220, %v7221
      %v7226 = vmul.u32 %v7220, %v7222
      %v7227 = vshll.u32 %v7224, 16
      %v7228 = vshrl.u32 %v7224, 16
      %v7229 = vshll.u32 %v7225, 16
      %v7230 = vshrl.u32 %v7225, 16
      %vm7231 = vc.u32 %v7223, %v7227
      %v7232 = vsel %vm7231, 1, 0
      %v7233 = vadd.s32 %v7223, %v7227
      %v7234 = vadd.s32 %v7226, %v7232
      %vm7235 = vc.u32 %v7233, %v7229
      %v7236 = vsel %vm7235, 1, 0
      %v7237 = vadd.s32 %v7233, %v7229
      %v7238 = vadd.s32 %v7234, %v7236
      %v7239 = vadd.s32 %v7238, %v7228
      %v7240 = vadd.s32 %v7239, %v7230
      %v7241 = vmul.u32 %v7196, %v7187
      %v7242 = vadd.s32 %v7218, %v7237
      %vm7243 = vc.u32 %v7218, %v7237
      %v7244 = vadd.s32 %v7240, 1
      %v7245 = vsel %vm7243, %v7244, %v7240
      %v7246 = vadd.s32 %v7241, %v7245
      %v7247 = vadd.s32 %v7246, 536870912
      %v7248 = vshrl.u32 %v7247, 30
      %v7249 = vshll.u32 %v7248, 30
      %v7250 = vsub.s32 %v7246, %v7249
      %vm7251 = vcmp.lt.s32.totalorder %v7250, 0
      %v7252 = vsub.s32 0, %v7250
      %v7253 = vsel %vm7251, %v7252, %v7250
      %v7254 = vclz %v7253
      %v7255 = vsub.s32 %v7254, 2
      %vm7256 = vcmp.gt.s32.totalorder 0, %v7255
      %v7257 = vsel %vm7256, 0, %v7255
      %v7258 = vsub.s32 32, %v7257
      %v7259 = vshll.u32 %v7250, %v7257
      %v7260 = vshrl.u32 %v7242, %v7258
      %v7261 = vor.u32 %v7259, %v7260
      %v7262 = vsub.s32 4294967266, %v7257
      %v7263 = vadd.s32 %v7262, 127
      %v7264 = vshll.u32 %v7263, 23
      %v7265 = vor.u32 4788187, %v7264
      %v7266 = vand.u32 2147483647, %v7265
      %v7268 = vcvt.s32.f32 %v7261
      %v7269 = vmul.f32 %v7268, %v7266
      %v7270 = vxor.u32 %v7269, 2147483648
      %v7271 = vsel %vm7150, %v7270, %v7269
      %v7272 = vsub.s32 4, %v7248
      %v7273 = vsel %vm7150, %v7272, %v7248
      %v7274 = vsel %vm7149, %v2356, %v7271
      %v7275 = vsel %vm7149, 0, %v7273
      %v7276 = vmul.f32 %v7274, %v7274
      %v7277 = vmul.f32 %v7276, -0.001358992
      %v7278 = vadd.f32 %v7277, 0.041655596
      %v7279 = vmul.f32 %v7276, %v7278
      %v7280 = vadd.f32 %v7279, -0.4999988
      %v7281 = vmul.f32 %v7276, %v7280
      %v7282 = vadd.f32 1.0, %v7281
      %v7283 = vmul.f32 %v7274, %v7274
      %v7284 = vmul.f32 %v7283, -0.00019511016
      %v7285 = vadd.f32 %v7284, 0.008332121
      %v7286 = vmul.f32 %v7283, %v7285
      %v7287 = vadd.f32 %v7286, -0.16666654
      %v7288 = vmul.f32 %v7283, %v7287
      %v7289 = vadd.f32 %v7288, 1.0
      %v7290 = vmul.f32 %v7289, %v7274
      %vm7291 = vweird.f32 %v2356
      %v7292 = vand.u32 %v7275, 3
      %vm7293 = vcmp.lt.s32.totalorder %v7292, 2
      %vm7294 = vcmp.eq.s32.totalorder %v7292, 0
      %v7295 = vxor.u32 %v7290, 2147483648
      %v7296 = vsel %vm7294, %v7282, %v7295
      %vm7297 = vcmp.eq.s32.totalorder %v7292, 2
      %v7298 = vxor.u32 %v7282, 2147483648
      %v7299 = vsel %vm7297, %v7298, %v7290
      %v7300 = vsel %vm7293, %v7296, %v7299
      %v7301 = vsel %vm7291, nan, %v7300
      %v7302 = vmul.f32 %v2512, 2.0
      %v7303 = vmul.f32 %v2667, 2.0
      %v7304 = vmul.f32 %v2822, 2.0
      %v7305 = vmul.f32 %v2977, 2.0
      %v7306 = vmul.f32 %v3132, 2.0
      %v7307 = vmul.f32 %v3287, 2.0
      %v7308 = vmul.f32 %v3442, 2.0
      %v7309 = vmul.f32 %v3597, 2.0
      %v7310 = vmul.f32 %v3752, 2.0
      %v7311 = vmul.f32 %v3907, 2.0
      %v7312 = vmul.f32 %v4062, 2.0
      %v7313 = vmul.f32 %v4217, 2.0
      %v7314 = vmul.f32 %v4372, 2.0
      %v7315 = vmul.f32 %v4527, 2.0
      %v7316 = vmul.f32 %v4682, 2.0
      %v7317 = vmul.f32 %v4837, 2.0
      %v7318 = vmul.f32 %v7302, %v4991
      %v7319 = vmul.f32 %v7303, %v5145
      %v7320 = vmul.f32 %v7304, %v5299
      %v7321 = vmul.f32 %v7305, %v5453
      %v7322 = vmul.f32 %v7306, %v5607
      %v7323 = vmul.f32 %v7307, %v5761
      %v7324 = vmul.f32 %v7308, %v5915
      %v7325 = vmul.f32 %v7309, %v6069
      %v7326 = vmul.f32 %v7310, %v6223
      %v7327 = vmul.f32 %v7311, %v6377
      %v7328 = vmul.f32 %v7312, %v6531
      %v7329 = vmul.f32 %v7313, %v6685
      %v7330 = vmul.f32 %v7314, %v6839
      %v7331 = vmul.f32 %v7315, %v6993
      %v7332 = vmul.f32 %v7316, %v7147
      %v7333 = vmul.f32 %v7317, %v7301
      %v7334 = vmul.f32 %v7302, %v2512
      %v7335 = vmul.f32 %v7303, %v2667
      %v7336 = vmul.f32 %v7304, %v2822
      %v7337 = vmul.f32 %v7305, %v2977
      %v7338 = vmul.f32 %v7306, %v3132
      %v7339 = vmul.f32 %v7307, %v3287
      %v7340 = vmul.f32 %v7308, %v3442
      %v7341 = vmul.f32 %v7309, %v3597
      %v7342 = vmul.f32 %v7310, %v3752
      %v7343 = vmul.f32 %v7311, %v3907
      %v7344 = vmul.f32 %v7312, %v4062
      %v7345 = vmul.f32 %v7313, %v4217
      %v7346 = vmul.f32 %v7314, %v4372
      %v7347 = vmul.f32 %v7315, %v4527
      %v7348 = vmul.f32 %v7316, %v4682
      %v7349 = vmul.f32 %v7317, %v4837
      %v7350 = vsub.f32 1.0, %v7334
      %v7351 = vsub.f32 1.0, %v7335
      %v7352 = vsub.f32 1.0, %v7336
      %v7353 = vsub.f32 1.0, %v7337
      %v7354 = vsub.f32 1.0, %v7338
      %v7355 = vsub.f32 1.0, %v7339
      %v7356 = vsub.f32 1.0, %v7340
      %v7357 = vsub.f32 1.0, %v7341
      %v7358 = vsub.f32 1.0, %v7342
      %v7359 = vsub.f32 1.0, %v7343
      %v7360 = vsub.f32 1.0, %v7344
      %v7361 = vsub.f32 1.0, %v7345
      %v7362 = vsub.f32 1.0, %v7346
      %v7363 = vsub.f32 1.0, %v7347
      %v7364 = vsub.f32 1.0, %v7348
      %v7365 = vsub.f32 1.0, %v7349
      %v7366 = vmul.f32 %v7318, 2.0
      %v7367 = vmul.f32 %v7319, 2.0
      %v7368 = vmul.f32 %v7320, 2.0
      %v7369 = vmul.f32 %v7321, 2.0
      %v7370 = vmul.f32 %v7322, 2.0
      %v7371 = vmul.f32 %v7323, 2.0
      %v7372 = vmul.f32 %v7324, 2.0
      %v7373 = vmul.f32 %v7325, 2.0
      %v7374 = vmul.f32 %v7326, 2.0
      %v7375 = vmul.f32 %v7327, 2.0
      %v7376 = vmul.f32 %v7328, 2.0
      %v7377 = vmul.f32 %v7329, 2.0
      %v7378 = vmul.f32 %v7330, 2.0
      %v7379 = vmul.f32 %v7331, 2.0
      %v7380 = vmul.f32 %v7332, 2.0
      %v7381 = vmul.f32 %v7333, 2.0
      %v7382 = vmul.f32 %v7366, %v7350
      %v7383 = vmul.f32 %v7367, %v7351
      %v7384 = vmul.f32 %v7368, %v7352
      %v7385 = vmul.f32 %v7369, %v7353
      %v7386 = vmul.f32 %v7370, %v7354
      %v7387 = vmul.f32 %v7371, %v7355
      %v7388 = vmul.f32 %v7372, %v7356
      %v7389 = vmul.f32 %v7373, %v7357
      %v7390 = vmul.f32 %v7374, %v7358
      %v7391 = vmul.f32 %v7375, %v7359
      %v7392 = vmul.f32 %v7376, %v7360
      %v7393 = vmul.f32 %v7377, %v7361
      %v7394 = vmul.f32 %v7378, %v7362
      %v7395 = vmul.f32 %v7379, %v7363
      %v7396 = vmul.f32 %v7380, %v7364
      %v7397 = vmul.f32 %v7381, %v7365
      %v7398 = vmul.f32 %v7366, %v7318
      %v7399 = vmul.f32 %v7367, %v7319
      %v7400 = vmul.f32 %v7368, %v7320
      %v7401 = vmul.f32 %v7369, %v7321
      %v7402 = vmul.f32 %v7370, %v7322
      %v7403 = vmul.f32 %v7371, %v7323
      %v7404 = vmul.f32 %v7372, %v7324
      %v7405 = vmul.f32 %v7373, %v7325
      %v7406 = vmul.f32 %v7374, %v7326
      %v7407 = vmul.f32 %v7375, %v7327
      %v7408 = vmul.f32 %v7376, %v7328
      %v7409 = vmul.f32 %v7377, %v7329
      %v7410 = vmul.f32 %v7378, %v7330
      %v7411 = vmul.f32 %v7379, %v7331
      %v7412 = vmul.f32 %v7380, %v7332
      %v7413 = vmul.f32 %v7381, %v7333
      %v7414 = vsub.f32 1.0, %v7398
      %v7415 = vsub.f32 1.0, %v7399
      %v7416 = vsub.f32 1.0, %v7400
      %v7417 = vsub.f32 1.0, %v7401
      %v7418 = vsub.f32 1.0, %v7402
      %v7419 = vsub.f32 1.0, %v7403
      %v7420 = vsub.f32 1.0, %v7404
      %v7421 = vsub.f32 1.0, %v7405
      %v7422 = vsub.f32 1.0, %v7406
      %v7423 = vsub.f32 1.0, %v7407
      %v7424 = vsub.f32 1.0, %v7408
      %v7425 = vsub.f32 1.0, %v7409
      %v7426 = vsub.f32 1.0, %v7410
      %v7427 = vsub.f32 1.0, %v7411
      %v7428 = vsub.f32 1.0, %v7412
      %v7429 = vsub.f32 1.0, %v7413
      %7446 = vrot.lane.b32.xlu0 %v4991, 32
      %v7447 = vpop.permute.xlu0 %7446
      %7448 = vrot.lane.b32.xlu0 %v5145, 32
      %v7449 = vpop.permute.xlu0 %7448
      %7450 = vrot.lane.b32.xlu0 %v5299, 32
      %v7451 = vpop.permute.xlu0 %7450
      %7452 = vrot.lane.b32.xlu0 %v5453, 32
      %v7453 = vpop.permute.xlu0 %7452
      %7454 = vrot.lane.b32.xlu0 %v5607, 32
      %v7455 = vpop.permute.xlu0 %7454
      %7456 = vrot.lane.b32.xlu0 %v5761, 32
      %v7457 = vpop.permute.xlu0 %7456
      %7458 = vrot.lane.b32.xlu0 %v5915, 32
      %v7459 = vpop.permute.xlu0 %7458
      %7460 = vrot.lane.b32.xlu0 %v6069, 32
      %v7461 = vpop.permute.xlu0 %7460
      %7462 = vrot.lane.b32.xlu0 %v6223, 32
      %v7463 = vpop.permute.xlu0 %7462
      %7464 = vrot.lane.b32.xlu0 %v6377, 32
      %v7465 = vpop.permute.xlu0 %7464
      %7466 = vrot.lane.b32.xlu0 %v6531, 32
      %v7467 = vpop.permute.xlu0 %7466
      %7468 = vrot.lane.b32.xlu0 %v6685, 32
      %v7469 = vpop.permute.xlu0 %7468
      %7470 = vrot.lane.b32.xlu0 %v6839, 32
      %v7471 = vpop.permute.xlu0 %7470
      %7472 = vrot.lane.b32.xlu0 %v6993, 32
      %v7473 = vpop.permute.xlu0 %7472
      %7474 = vrot.lane.b32.xlu0 %v7147, 32
      %v7475 = vpop.permute.xlu0 %7474
      %7476 = vrot.lane.b32.xlu0 %v7301, 32
      %v7477 = vpop.permute.xlu0 %7476
      %7510 = vrot.lane.b32.xlu0 %v7318, 64
      %v7511 = vpop.permute.xlu0 %7510
      %7512 = vrot.lane.b32.xlu0 %v7319, 64
      %v7513 = vpop.permute.xlu0 %7512
      %7514 = vrot.lane.b32.xlu0 %v7320, 64
      %v7515 = vpop.permute.xlu0 %7514
      %7516 = vrot.lane.b32.xlu0 %v7321, 64
      %v7517 = vpop.permute.xlu0 %7516
      %7518 = vrot.lane.b32.xlu0 %v7322, 64
      %v7519 = vpop.permute.xlu0 %7518
      %7520 = vrot.lane.b32.xlu0 %v7323, 64
      %v7521 = vpop.permute.xlu0 %7520
      %7522 = vrot.lane.b32.xlu0 %v7324, 64
      %v7523 = vpop.permute.xlu0 %7522
      %7524 = vrot.lane.b32.xlu0 %v7325, 64
      %v7525 = vpop.permute.xlu0 %7524
      %7526 = vrot.lane.b32.xlu0 %v7326, 64
      %v7527 = vpop.permute.xlu0 %7526
      %7528 = vrot.lane.b32.xlu0 %v7327, 64
      %v7529 = vpop.permute.xlu0 %7528
      %7530 = vrot.lane.b32.xlu0 %v7328, 64
      %v7531 = vpop.permute.xlu0 %7530
      %7532 = vrot.lane.b32.xlu0 %v7329, 64
      %v7533 = vpop.permute.xlu0 %7532
      %7534 = vrot.lane.b32.xlu0 %v7330, 64
      %v7535 = vpop.permute.xlu0 %7534
      %7536 = vrot.lane.b32.xlu0 %v7331, 64
      %v7537 = vpop.permute.xlu0 %7536
      %7538 = vrot.lane.b32.xlu0 %v7332, 64
      %v7539 = vpop.permute.xlu0 %7538
      %7540 = vrot.lane.b32.xlu0 %v7333, 64
      %v7541 = vpop.permute.xlu0 %7540
      %7574 = vrot.lane.b32.xlu0 %v7350, 96
      %v7575 = vpop.permute.xlu0 %7574
      %7576 = vrot.lane.b32.xlu0 %v7351, 96
      %v7577 = vpop.permute.xlu0 %7576
      %7578 = vrot.lane.b32.xlu0 %v7352, 96
      %v7579 = vpop.permute.xlu0 %7578
      %7580 = vrot.lane.b32.xlu0 %v7353, 96
      %v7581 = vpop.permute.xlu0 %7580
      %7582 = vrot.lane.b32.xlu0 %v7354, 96
      %v7583 = vpop.permute.xlu0 %7582
      %7584 = vrot.lane.b32.xlu0 %v7355, 96
      %v7585 = vpop.permute.xlu0 %7584
      %7586 = vrot.lane.b32.xlu0 %v7356, 96
      %v7587 = vpop.permute.xlu0 %7586
      %7588 = vrot.lane.b32.xlu0 %v7357, 96
      %v7589 = vpop.permute.xlu0 %7588
      %7590 = vrot.lane.b32.xlu0 %v7358, 96
      %v7591 = vpop.permute.xlu0 %7590
      %7592 = vrot.lane.b32.xlu0 %v7359, 96
      %v7593 = vpop.permute.xlu0 %7592
      %7594 = vrot.lane.b32.xlu0 %v7360, 96
      %v7595 = vpop.permute.xlu0 %7594
      %7596 = vrot.lane.b32.xlu0 %v7361, 96
      %v7597 = vpop.permute.xlu0 %7596
      %7598 = vrot.lane.b32.xlu0 %v7362, 96
      %v7599 = vpop.permute.xlu0 %7598
      %7600 = vrot.lane.b32.xlu0 %v7363, 96
      %v7601 = vpop.permute.xlu0 %7600
      %7602 = vrot.lane.b32.xlu0 %v7364, 96
      %v7603 = vpop.permute.xlu0 %7602
      %7604 = vrot.lane.b32.xlu0 %v7365, 96
      %v7605 = vpop.permute.xlu0 %7604
      %7638 = vrot.lane.b32.xlu0 %v7414, 32
      %v7639 = vpop.permute.xlu0 %7638
      %7640 = vrot.lane.b32.xlu0 %v7415, 32
      %v7641 = vpop.permute.xlu0 %7640
      %7642 = vrot.lane.b32.xlu0 %v7416, 32
      %v7643 = vpop.permute.xlu0 %7642
      %7644 = vrot.lane.b32.xlu0 %v7417, 32
      %v7645 = vpop.permute.xlu0 %7644
      %7646 = vrot.lane.b32.xlu0 %v7418, 32
      %v7647 = vpop.permute.xlu0 %7646
      %7648 = vrot.lane.b32.xlu0 %v7419, 32
      %v7649 = vpop.permute.xlu0 %7648
      %7650 = vrot.lane.b32.xlu0 %v7420, 32
      %v7651 = vpop.permute.xlu0 %7650
      %7652 = vrot.lane.b32.xlu0 %v7421, 32
      %v7653 = vpop.permute.xlu0 %7652
      %7654 = vrot.lane.b32.xlu0 %v7422, 32
      %v7655 = vpop.permute.xlu0 %7654
      %7656 = vrot.lane.b32.xlu0 %v7423, 32
      %v7657 = vpop.permute.xlu0 %7656
      %7658 = vrot.lane.b32.xlu0 %v7424, 32
      %v7659 = vpop.permute.xlu0 %7658
      %7660 = vrot.lane.b32.xlu0 %v7425, 32
      %v7661 = vpop.permute.xlu0 %7660
      %7662 = vrot.lane.b32.xlu0 %v7426, 32
      %v7663 = vpop.permute.xlu0 %7662
      %7664 = vrot.lane.b32.xlu0 %v7427, 32
      %v7665 = vpop.permute.xlu0 %7664
      %7666 = vrot.lane.b32.xlu0 %v7428, 32
      %v7667 = vpop.permute.xlu0 %7666
      %7668 = vrot.lane.b32.xlu0 %v7429, 32
      %v7669 = vpop.permute.xlu0 %7668
      %v7686 = vsel %vm413, %v2512, %v7447
      %v7687 = vsel %vm413, %v2667, %v7449
      %v7688 = vsel %vm413, %v2822, %v7451
      %v7689 = vsel %vm413, %v2977, %v7453
      %v7690 = vsel %vm413, %v3132, %v7455
      %v7691 = vsel %vm413, %v3287, %v7457
      %v7692 = vsel %vm413, %v3442, %v7459
      %v7693 = vsel %vm413, %v3597, %v7461
      %v7694 = vsel %vm413, %v3752, %v7463
      %v7695 = vsel %vm413, %v3907, %v7465
      %v7696 = vsel %vm413, %v4062, %v7467
      %v7697 = vsel %vm413, %v4217, %v7469
      %v7698 = vsel %vm413, %v4372, %v7471
      %v7699 = vsel %vm413, %v4527, %v7473
      %v7700 = vsel %vm413, %v4682, %v7475
      %v7701 = vsel %vm413, %v4837, %v7477
      %vm7702 = vcmask 523264
      %v7703 = vsel %vm7702, %v7686, %v7511
      %v7704 = vsel %vm7702, %v7687, %v7513
      %v7705 = vsel %vm7702, %v7688, %v7515
      %v7706 = vsel %vm7702, %v7689, %v7517
      %v7707 = vsel %vm7702, %v7690, %v7519
      %v7708 = vsel %vm7702, %v7691, %v7521
      %v7709 = vsel %vm7702, %v7692, %v7523
      %v7710 = vsel %vm7702, %v7693, %v7525
      %v7711 = vsel %vm7702, %v7694, %v7527
      %v7712 = vsel %vm7702, %v7695, %v7529
      %v7713 = vsel %vm7702, %v7696, %v7531
      %v7714 = vsel %vm7702, %v7697, %v7533
      %v7715 = vsel %vm7702, %v7698, %v7535
      %v7716 = vsel %vm7702, %v7699, %v7537
      %v7717 = vsel %vm7702, %v7700, %v7539
      %v7718 = vsel %vm7702, %v7701, %v7541
      %vm7719 = vcmask 785408
      %v7720 = vsel %vm7719, %v7703, %v7575
      %v7721 = vsel %vm7719, %v7704, %v7577
      %v7722 = vsel %vm7719, %v7705, %v7579
      %v7723 = vsel %vm7719, %v7706, %v7581
      %v7724 = vsel %vm7719, %v7707, %v7583
      %v7725 = vsel %vm7719, %v7708, %v7585
      %v7726 = vsel %vm7719, %v7709, %v7587
      %v7727 = vsel %vm7719, %v7710, %v7589
      %v7728 = vsel %vm7719, %v7711, %v7591
      %v7729 = vsel %vm7719, %v7712, %v7593
      %v7730 = vsel %vm7719, %v7713, %v7595
      %v7731 = vsel %vm7719, %v7714, %v7597
      %v7732 = vsel %vm7719, %v7715, %v7599
      %v7733 = vsel %vm7719, %v7716, %v7601
      %v7734 = vsel %vm7719, %v7717, %v7603
      %v7735 = vsel %vm7719, %v7718, %v7605
      %v7736 = vsel %vm413, %v7382, %v7639
      %v7737 = vsel %vm413, %v7383, %v7641
      %v7738 = vsel %vm413, %v7384, %v7643
      %v7739 = vsel %vm413, %v7385, %v7645
      %v7740 = vsel %vm413, %v7386, %v7647
      %v7741 = vsel %vm413, %v7387, %v7649
      %v7742 = vsel %vm413, %v7388, %v7651
      %v7743 = vsel %vm413, %v7389, %v7653
      %v7744 = vsel %vm413, %v7390, %v7655
      %v7745 = vsel %vm413, %v7391, %v7657
      %v7746 = vsel %vm413, %v7392, %v7659
      %v7747 = vsel %vm413, %v7393, %v7661
      %v7748 = vsel %vm413, %v7394, %v7663
      %v7749 = vsel %vm413, %v7395, %v7665
      %v7750 = vsel %vm413, %v7396, %v7667
      %v7751 = vsel %vm413, %v7397, %v7669
      %v7752 = vld [vmem:[%s6] sm:$0xff]
      %v7753 = vld [vmem:[%s6 + $0x8] sm:$0xff]
      %v7754 = vld [vmem:[%s6 + $0x10] sm:$0xff]
      %v7755 = vld [vmem:[%s6 + $0x18] sm:$0xff]
      %v7756 = vld [vmem:[%s6 + $0x20] sm:$0xff]
      %v7757 = vld [vmem:[%s6 + $0x28] sm:$0xff]
      %v7758 = vld [vmem:[%s6 + $0x30] sm:$0xff]
      %v7759 = vld [vmem:[%s6 + $0x38] sm:$0xff]
      %v7760 = vld [vmem:[%s6 + $0x40] sm:$0xff]
      %v7761 = vld [vmem:[%s6 + $0x48] sm:$0xff]
      %v7762 = vld [vmem:[%s6 + $0x50] sm:$0xff]
      %v7763 = vld [vmem:[%s6 + $0x58] sm:$0xff]
      %v7764 = vld [vmem:[%s6 + $0x60] sm:$0xff]
      %v7765 = vld [vmem:[%s6 + $0x68] sm:$0xff]
      %v7766 = vld [vmem:[%s6 + $0x70] sm:$0xff]
      %v7767 = vld [vmem:[%s6 + $0x78] sm:$0xff]
      %v7768 = vld [vmem:[%s6 + $0x80] sm:$0xff]
      %v7769 = vld [vmem:[%s6 + $0x88] sm:$0xff]
      %v7770 = vld [vmem:[%s6 + $0x90] sm:$0xff]
      %v7771 = vld [vmem:[%s6 + $0x98] sm:$0xff]
      %v7772 = vld [vmem:[%s6 + $0xa0] sm:$0xff]
      %v7773 = vld [vmem:[%s6 + $0xa8] sm:$0xff]
      %v7774 = vld [vmem:[%s6 + $0xb0] sm:$0xff]
      %v7775 = vld [vmem:[%s6 + $0xb8] sm:$0xff]
      %v7776 = vld [vmem:[%s7] sm:$0x1]
      %v7778 = vperm.slane %v7776, 0
      %v7781 = vsel %vm7702, %v7736, 0
      %v7784 = vsel %vm7702, %v7737, 0
      %v7787 = vsel %vm7702, %v7738, 0
      %v7790 = vsel %vm7702, %v7739, 0
      %v7793 = vsel %vm7702, %v7740, 0
      %v7796 = vsel %vm7702, %v7741, 0
      %v7799 = vsel %vm7702, %v7742, 0
      %v7802 = vsel %vm7702, %v7743, 0
      %v7805 = vsel %vm7702, %v7744, 0
      %v7808 = vsel %vm7702, %v7745, 0
      %v7811 = vsel %vm7702, %v7746, 0
      %v7814 = vsel %vm7702, %v7747, 0
      %v7817 = vsel %vm7702, %v7748, 0
      %v7820 = vsel %vm7702, %v7749, 0
      %v7823 = vsel %vm7702, %v7750, 0
      %v7826 = vsel %vm7702, %v7751, 0
      %7828 = vmatpush.msra.mxu0 %v7767
      %7829 = vmatpush.msra.mxu0 %v7766
      %7830 = vmatpush.msra.mxu0 %v7765
      %7831 = vmatpush.msra.mxu0 %v7764
      %7832 = vmatpush.msra.mxu0 %v7763
      %7833 = vmatpush.msra.mxu0 %v7762
      %7834 = vmatpush.msra.mxu0 %v7761
      %7835 = vmatpush.msra.mxu0 %v7760
      %7836 = vmatpush.msra.mxu0 %v7759
      %7837 = vmatpush.msra.mxu0 %v7758
      %7838 = vmatpush.msra.mxu0 %v7757
      %7839 = vmatpush.msra.mxu0 %v7756
      %7840 = vmatpush.msra.mxu0 %v7755
      %7841 = vmatpush.msra.mxu0 %v7754
      %7842 = vmatpush.msra.mxu0 %v7753
      %7843 = vmatpush.msra.mxu0 %v7752
      %7844 = vmatmul.f32.gmra.mxu0 %v7720
      %v7845 = vpop.f32.mrf.mxu0
      %v7846 = vadd.f32 %v7778, %v7845
      %7847 = vmatmul.f32.gmra.mxu0 %v7721
      %v7848 = vpop.f32.mrf.mxu0
      %v7849 = vadd.f32 %v7778, %v7848
      %7850 = vmatmul.f32.gmra.mxu0 %v7722
      %v7851 = vpop.f32.mrf.mxu0
      %v7852 = vadd.f32 %v7778, %v7851
      %7853 = vmatmul.f32.gmra.mxu0 %v7723
      %v7854 = vpop.f32.mrf.mxu0
      %v7855 = vadd.f32 %v7778, %v7854
      %7856 = vmatmul.f32.gmra.mxu0 %v7724
      %v7857 = vpop.f32.mrf.mxu0
      %v7858 = vadd.f32 %v7778, %v7857
      %7859 = vmatmul.f32.gmra.mxu0 %v7725
      %v7860 = vpop.f32.mrf.mxu0
      %v7861 = vadd.f32 %v7778, %v7860
      %7862 = vmatmul.f32.gmra.mxu0 %v7726
      %v7863 = vpop.f32.mrf.mxu0
      %v7864 = vadd.f32 %v7778, %v7863
      %7865 = vmatmul.f32.gmra.mxu0 %v7727
      %v7866 = vpop.f32.mrf.mxu0
      %v7867 = vadd.f32 %v7778, %v7866
      %7868 = vmatmul.f32.gmra.mxu0 %v7728
      %v7869 = vpop.f32.mrf.mxu0
      %v7870 = vadd.f32 %v7778, %v7869
      %7871 = vmatmul.f32.gmra.mxu0 %v7729
      %v7872 = vpop.f32.mrf.mxu0
      %v7873 = vadd.f32 %v7778, %v7872
      %7874 = vmatmul.f32.gmra.mxu0 %v7730
      %v7875 = vpop.f32.mrf.mxu0
      %v7876 = vadd.f32 %v7778, %v7875
      %7877 = vmatmul.f32.gmra.mxu0 %v7731
      %v7878 = vpop.f32.mrf.mxu0
      %v7879 = vadd.f32 %v7778, %v7878
      %7880 = vmatmul.f32.gmra.mxu0 %v7732
      %v7881 = vpop.f32.mrf.mxu0
      %v7882 = vadd.f32 %v7778, %v7881
      %7883 = vmatmul.f32.gmra.mxu0 %v7733
      %v7884 = vpop.f32.mrf.mxu0
      %v7885 = vadd.f32 %v7778, %v7884
      %7886 = vmatmul.f32.gmra.mxu0 %v7734
      %v7887 = vpop.f32.mrf.mxu0
      %v7888 = vadd.f32 %v7778, %v7887
      %7889 = vmatmul.f32.gmra.mxu0 %v7735
      %v7890 = vpop.f32.mrf.mxu0
      %v7891 = vadd.f32 %v7778, %v7890
      %7892 = vdwg.mxu0
      %7893 = vmatpush.msra.mxu0 0.0
      %7894 = vmatpush.msra.mxu0 0.0
      %7895 = vmatpush.msra.mxu0 0.0
      %7896 = vmatpush.msra.mxu0 0.0
      %7897 = vmatpush.msra.mxu0 0.0
      %7898 = vmatpush.msra.mxu0 0.0
      %7899 = vmatpush.msra.mxu0 0.0
      %7900 = vmatpush.msra.mxu0 0.0
      %7901 = vmatpush.msra.mxu0 %v7775
      %7902 = vmatpush.msra.mxu0 %v7774
      %7903 = vmatpush.msra.mxu0 %v7773
      %7904 = vmatpush.msra.mxu0 %v7772
      %7905 = vmatpush.msra.mxu0 %v7771
      %7906 = vmatpush.msra.mxu0 %v7770
      %7907 = vmatpush.msra.mxu0 %v7769
      %7908 = vmatpush.msra.mxu0 %v7768
      %7909 = vmatmul.f32.gmra.mxu0 %v7781
      %v7910 = vpop.f32.mrf.mxu0
      %v7911 = vadd.f32 %v7846, %v7910
      %7912 = vmatmul.f32.gmra.mxu0 %v7784
      %v7913 = vpop.f32.mrf.mxu0
      %v7914 = vadd.f32 %v7849, %v7913
      %7915 = vmatmul.f32.gmra.mxu0 %v7787
      %v7916 = vpop.f32.mrf.mxu0
      %v7917 = vadd.f32 %v7852, %v7916
      %7918 = vmatmul.f32.gmra.mxu0 %v7790
      %v7919 = vpop.f32.mrf.mxu0
      %v7920 = vadd.f32 %v7855, %v7919
      %7921 = vmatmul.f32.gmra.mxu0 %v7793
      %v7922 = vpop.f32.mrf.mxu0
      %v7923 = vadd.f32 %v7858, %v7922
      %7924 = vmatmul.f32.gmra.mxu0 %v7796
      %v7925 = vpop.f32.mrf.mxu0
      %v7926 = vadd.f32 %v7861, %v7925
      %7927 = vmatmul.f32.gmra.mxu0 %v7799
      %v7928 = vpop.f32.mrf.mxu0
      %v7929 = vadd.f32 %v7864, %v7928
      %7930 = vmatmul.f32.gmra.mxu0 %v7802
      %v7931 = vpop.f32.mrf.mxu0
      %v7932 = vadd.f32 %v7867, %v7931
      %7933 = vmatmul.f32.gmra.mxu0 %v7805
      %v7934 = vpop.f32.mrf.mxu0
      %v7935 = vadd.f32 %v7870, %v7934
      %7936 = vmatmul.f32.gmra.mxu0 %v7808
      %v7937 = vpop.f32.mrf.mxu0
      %v7938 = vadd.f32 %v7873, %v7937
      %7939 = vmatmul.f32.gmra.mxu0 %v7811
      %v7940 = vpop.f32.mrf.mxu0
      %v7941 = vadd.f32 %v7876, %v7940
      %7942 = vmatmul.f32.gmra.mxu0 %v7814
      %v7943 = vpop.f32.mrf.mxu0
      %v7944 = vadd.f32 %v7879, %v7943
      %7945 = vmatmul.f32.gmra.mxu0 %v7817
      %v7946 = vpop.f32.mrf.mxu0
      %v7947 = vadd.f32 %v7882, %v7946
      %7948 = vmatmul.f32.gmra.mxu0 %v7820
      %v7949 = vpop.f32.mrf.mxu0
      %v7950 = vadd.f32 %v7885, %v7949
      %7951 = vmatmul.f32.gmra.mxu0 %v7823
      %v7952 = vpop.f32.mrf.mxu0
      %v7953 = vadd.f32 %v7888, %v7952
      %7954 = vmatmul.f32.gmra.mxu0 %v7826
      %v7955 = vpop.f32.mrf.mxu0
      %v7956 = vadd.f32 %v7891, %v7955
      %7957 = vdwg.mxu0
      %7958 = vst.msk [vmem:[%s329] sm:$0xff] %vm413, %v7911
      %7959 = vst.msk [vmem:[%s329 + $0x8] sm:$0xff] %vm413, %v7914
      %7960 = vst.msk [vmem:[%s329 + $0x10] sm:$0xff] %vm413, %v7917
      %7961 = vst.msk [vmem:[%s329 + $0x18] sm:$0xff] %vm413, %v7920
      %7962 = vst.msk [vmem:[%s329 + $0x20] sm:$0xff] %vm413, %v7923
      %7963 = vst.msk [vmem:[%s329 + $0x28] sm:$0xff] %vm413, %v7926
      %7964 = vst.msk [vmem:[%s329 + $0x30] sm:$0xff] %vm413, %v7929
      %7965 = vst.msk [vmem:[%s329 + $0x38] sm:$0xff] %vm413, %v7932
      %7966 = vst.msk [vmem:[%s329 + $0x40] sm:$0xff] %vm413, %v7935
      %7967 = vst.msk [vmem:[%s329 + $0x48] sm:$0xff] %vm413, %v7938
      %7968 = vst.msk [vmem:[%s329 + $0x50] sm:$0xff] %vm413, %v7941
      %7969 = vst.msk [vmem:[%s329 + $0x58] sm:$0xff] %vm413, %v7944
      %7970 = vst.msk [vmem:[%s329 + $0x60] sm:$0xff] %vm413, %v7947
      %7971 = vst.msk [vmem:[%s329 + $0x68] sm:$0xff] %vm413, %v7950
      %7972 = vst.msk [vmem:[%s329 + $0x70] sm:$0xff] %vm413, %v7953
      %7973 = vst.msk [vmem:[%s329 + $0x78] sm:$0xff] %vm413, %v7956
      %s7974 = smul.u32 16, %s19
      %p7975 = scmp.lt.s32.totalorder %s7974, 31
      %s7976 = scalar_select %p7975, %s7974, 31
      %s7977 = smul.addr %s7976, 8
      %s7978 = scalar_lea.vmem %s8, %s7977
      // Predicated region
      $region53: #{fourier_base_dynamic.1} parent=51 // pred_check
        %p7979 = pneg %p215
      $region54: #{fourier_base_dynamic.1} parent=51 // pred_check_branch
        %7981 = sbr.rel (%p7979) target = $region56
      $region55: #{fourier_base_dynamic.1} parent=51 // pred_region
        %s7982 = smul.u32 16, %s19
      $region56: #{fourier_base_dynamic.1} parent=51 // pred_fallthru
        _
    $region52: #{fourier_base_dynamic.1} parent=5 // pred_fallthru
      _
    %p7983 = scmp.le.s32.totalorder 2, %s14
    // Predicated region
    $region57: #{fourier_base_dynamic.1} parent=5 // pred_check
      %p7984 = pneg %p7983
    $region58: #{fourier_base_dynamic.1} parent=5 // pred_check_branch
      %7986 = sbr.rel (%p7984) target = $region60
    $region59: #{fourier_base_dynamic.1} parent=5 // pred_region
      %s7987 = ssub.s32 %s14, 2
      // Predicated region
      $region61: #{fourier_base_dynamic.1} parent=59 // pred_check
        %p7988 = pneg %p221
      $region62: #{fourier_base_dynamic.1} parent=59 // pred_check_branch
        %7990 = sbr.rel (%p7988) target = $region64
      $region63: #{fourier_base_dynamic.1} parent=59 // pred_region
        %s7991 = smul.u32 16, %s20
        %p7992 = scmp.lt.s32.totalorder %s7991, 31
        %s7993 = scalar_select %p7992, %s7991, 31
        %s7994 = smul.addr %s7993, 8
        %s7995 = scalar_lea.vmem %s8, %s7994
      $region64: #{fourier_base_dynamic.1} parent=59 // pred_fallthru
        _
    $region60: #{fourier_base_dynamic.1} parent=5 // pred_fallthru
      _
  $region6: #{fourier_base_dynamic.1} parent=0 // loop_footer
    %s18 = sadd.s32 1, %s14
  $region7: #{fourier_base_dynamic.1} parent=0 // loop_footer_branch
    %13 = sbr.rel target = $region3
  $region8: #{fourier_base_dynamic.1} parent=0 // loop_exit
    _

</llo_original>
